<compile_context>
chip_gen: v7x
topology: tpu7x:2x2x1
jax: 0.10.0
libtpu: 0.0.40
codegen_flags: <defaults>
</compile_context>

<pallas_src>
import functools

import jax
import jax.numpy as jnp
from jax.experimental import pallas as pl
from jax.experimental.pallas import tpu as pltpu  # noqa: F401  (kept for parity)


# ----------------------------------------------------------------------------
# Single fused Pallas kernel (no grid): everything VMEM-resident, L x T ARMA
# recursion fully unrolled.
#   per layer l:
#     rootb = X0a @ RWB[l]                      (all T root terms + biases)
#     t=0 :  H = relu( A @ (X0a @ W0[l]) + rootb[:, 0:KC] )
#     t>0 :  H = relu( A @ (H  @ Wbd[l,t-1]) + rootb[:, t*KC:(t+1)*KC] )
#     X0a = relu( H @ Sbn[l] + shift[l] )       (mean over K + BN + ReLU,
#                                                ones-lane regenerated)
# ----------------------------------------------------------------------------
def _arma_gnn_kernel(a_ref, x_ref, w0_ref, wbd_ref, rwb_ref, sbn_ref, shift_ref,
                     o_ref, *, L, T, KC):
    f32 = jnp.float32
    a = a_ref[...]                  # (N, N)    gcn-normalized dense adjacency
    x0a = x_ref[...]                # (N, C+1)  layer input; column C == 1.0

    for l in range(L):
        # all T root terms + biases of this layer in one MXU call
        rootb = jnp.dot(x0a, rwb_ref[l], preferred_element_type=f32)  # (N, T*KC)

        # t = 0: state seeded from X0 through the lane-folded init weights
        hw = jnp.dot(x0a, w0_ref[l], preferred_element_type=f32)      # (N, KC)
        h = jnp.maximum(jnp.dot(a, hw, preferred_element_type=f32)
                        + rootb[:, :KC], 0.0)

        # t = 1 .. T-1: H <- relu(A @ (H Wbd) + X0 RW + b), all K stacks folded
        for t in range(1, T):
            hw = jnp.dot(h, wbd_ref[l * (T - 1) + t - 1],
                         preferred_element_type=f32)                  # (N, KC)
            h = jnp.maximum(jnp.dot(a, hw, preferred_element_type=f32)
                            + rootb[:, t * KC:(t + 1) * KC], 0.0)

        # layer epilogue: mean over K + BatchNorm(eval) + ReLU fused into one
        # matmul; shift[l] also re-creates the constant ones lane (col C).
        x0a = jnp.maximum(jnp.dot(h, sbn_ref[l], preferred_element_type=f32)
                          + shift_ref[l], 0.0)

    o_ref[...] = x0a                # (N, C+1); only channel 0 is real (Fout=1)


def arma_gnn_stack(x_aug, a, w0, wbd, rwb, sbn, shift, *, L, T, KC):
    N, Cp = x_aug.shape
    flops = L * (2 * N * Cp * T * KC                        # rootb
                 + T * (2 * N * KC * KC + 2 * N * N * KC)   # hw + A @ hw
                 + 2 * N * KC * Cp)                         # BN/mean epilogue
    bytes_accessed = 4 * int(a.size + x_aug.size + w0.size + wbd.size
                             + rwb.size + sbn.size + shift.size + N * Cp)
    # No grid / BlockSpecs: every operand and the output are whole-array VMEM
    # blocks (total ~1.6 MiB), so there is exactly one kernel step.
    return pl.pallas_call(
        functools.partial(_arma_gnn_kernel, L=L, T=T, KC=KC),
        out_shape=jax.ShapeDtypeStruct((N, Cp), jnp.float32),
        cost_estimate=pl.CostEstimate(flops=int(flops), transcendentals=0,
                                      bytes_accessed=bytes_accessed),
    )(a, x_aug, w0, wbd, rwb, sbn, shift)


# ----------------------------------------------------------------------------
# Host-side parameter fusion.
#   * channels padded to C, stacks padded K=3 -> Kp=4 (lane-dense KC = 128);
#     all padding rows/cols are zero => mathematically exact.
#   * w0 [l]    : (C+1, KC)     lane-concat of per-stack init weights
#   * wbd[l,t]  : (KC, KC)      block-diagonal per-stack recurrent weights
#   * rwb[l]    : (C+1, T*KC)   per-t lane-concat of root weights; last row
#                               holds the biases (picked up by the ones lane)
#   * sbn[l]    : (KC, C+1)     mean-over-K + BN scale as one matrix
#   * shift[l]  : (1, C+1)      BN shift; element C = 1.0 regenerates the
#                               ones lane in the epilogue
# ----------------------------------------------------------------------------
def fuse_params(params, *, C, K, Kp, T, L, eps=1e-5):
    KC = Kp * C
    Cp = C + 1
    w0_all, wbd_all, rwb_all, sbn_all, shift_all = [], [], [], [], []
    for li in range(1, L + 1):
        p = params[f"arma{li}"]
        init_w = p["init_weight"]      # (K, Fin, Fout)
        ws = p["weight"]               # (T-1, K, Fout, Fout)
        rws = p["root_weight"]         # (T, K, Fin, Fout)
        bs = p["bias"]                 # (T, K, 1, Fout)
        fin, fout = init_w.shape[1], init_w.shape[2]

        w0 = jnp.zeros((Cp, KC), jnp.float32)
        rwb = jnp.zeros((Cp, T * KC), jnp.float32)
        for k in range(K):
            w0 = w0.at[:fin, k * C:k * C + fout].set(init_w[k])
            for t in range(T):
                c0 = t * KC + k * C
                rwb = rwb.at[:fin, c0:c0 + fout].set(rws[t, k])
                rwb = rwb.at[C, c0:c0 + fout].set(bs[t, k, 0])
        w0_all.append(w0)
        rwb_all.append(rwb)

        for t in range(T - 1):
            wbd = jnp.zeros((KC, KC), jnp.float32)
            for k in range(K):
                wbd = wbd.at[k * C:k * C + fout,
                             k * C:k * C + fout].set(ws[t, k])
            wbd_all.append(wbd)

        gamma, beta, mean, var = params[f"bn{li}"]
        scale = gamma * jax.lax.rsqrt(var + eps)
        shift = beta - mean * scale
        sbn = jnp.zeros((KC, Cp), jnp.float32)
        for k in range(K):
            sbn = sbn.at[k * C:k * C + fout, :fout].set(jnp.diag(scale / K))
        shift_full = (jnp.zeros((1, Cp), jnp.float32)
                      .at[0, :fout].set(shift).at[0, C].set(1.0))
        sbn_all.append(sbn)
        shift_all.append(shift_full)

    return {
        "w0": jnp.stack(w0_all),           # (L, C+1, Kp*C)
        "wbd": jnp.stack(wbd_all),         # (L*(T-1), Kp*C, Kp*C)
        "rwb": jnp.stack(rwb_all),         # (L, C+1, T*Kp*C)
        "sbn": jnp.stack(sbn_all),         # (L, Kp*C, C+1)
        "shift": jnp.stack(shift_all),     # (L, 1, C+1)
        "clf_w": params["clf_w"],
        "clf_b": params["clf_b"],
    }


# ----------------------------------------------------------------------------
# Glue: gcn_norm (add_self_loops=False) densified, to_dense_batch.
# TODO(synk): sparse edge scatter/gather propagation has no clean Pallas TPU
#   equivalent at this scale; it is densified to an (N,N) matmul in the kernel.
# ----------------------------------------------------------------------------
def gcn_norm_dense(edge_index, edge_weight, num_nodes):
    row, col = edge_index[0], edge_index[1]
    deg = jnp.zeros((num_nodes,), jnp.float32).at[col].add(edge_weight)
    dinv = jnp.where(deg > 0, 1.0 / jnp.sqrt(deg), 0.0)
    norm = dinv[row] * edge_weight * dinv[col]
    # aggregation at target: out[i] = sum_{(j->i)} norm * h[j]  =>  A[i, j]
    return jnp.zeros((num_nodes, num_nodes), jnp.float32).at[col, row].add(norm)


def to_dense_batch(x, batch, batch_size, max_num_nodes):
    counts = jnp.bincount(batch, length=batch_size)
    starts = jnp.concatenate([jnp.zeros((1,), counts.dtype),
                              jnp.cumsum(counts)])[:-1]
    pos = jnp.arange(x.shape[0]) - starts[batch]
    dense = jnp.zeros((batch_size, max_num_nodes, x.shape[1]), x.dtype)
    dense = dense.at[batch, pos].set(x)
    mask = jnp.zeros((batch_size, max_num_nodes), bool).at[batch, pos].set(True)
    return dense, mask


# ----------------------------------------------------------------------------
# Full forward (eval mode).  Classifier / per-graph max stay as tiny XLA ops
# because to_dense_batch is a data-dependent scatter; as in the torch
# reference, zero-padded slots contribute the classifier bias to the max.
# ----------------------------------------------------------------------------
def gnn_arma_forward(fused, x, a, batch, *, batch_size, max_num_nodes, C, T, L):
    n, fin = x.shape
    KC = fused["wbd"].shape[-1]
    # pad features to C and append the constant ones lane (column C)
    x_aug = jnp.concatenate(
        [x.astype(jnp.float32),
         jnp.zeros((n, C - fin), jnp.float32),
         jnp.ones((n, 1), jnp.float32)], axis=-1)
    feats = arma_gnn_stack(x_aug, a.astype(jnp.float32),
                           fused["w0"], fused["wbd"], fused["rwb"],
                           fused["sbn"], fused["shift"], L=L, T=T, KC=KC)
    node_feat = feats[:, :1]                                   # (N, 1)
    dense, _ = to_dense_batch(node_feat, batch, batch_size, max_num_nodes)
    logits_nodes = (dense * fused["clf_w"] + fused["clf_b"]).squeeze(-1)
    logits_graph = logits_nodes.max(axis=1)
    return logits_nodes, logits_graph


# ----------------------------------------------------------------------------
# Pure-JAX reference of the original (unfused, per-stack) math for validation.
# ----------------------------------------------------------------------------
def reference_forward(params, x, a, batch, *, batch_size, max_num_nodes):
    hp = jax.lax.Precision.HIGHEST

    def arma(p, x0):
        K = p["init_weight"].shape[0]
        T = p["root_weight"].shape[0]
        h = jnp.broadcast_to(x0[None], (K,) + x0.shape)
        for t in range(T):
            w = p["init_weight"] if t == 0 else p["weight"][t - 1]
            hw = jnp.einsum("knf,kfg->kng", h, w, precision=hp)
            prop = jnp.einsum("nm,kmg->kng", a, hw, precision=hp)
            root = jnp.einsum("nf,kfg->kng", x0, p["root_weight"][t],
                              precision=hp)
            h = jax.nn.relu(prop + root + p["bias"][t])
        return h.mean(axis=0)

    def bn_relu(xx, bn):
        g, b, m, v = bn
        return jax.nn.relu((xx - m) * jax.lax.rsqrt(v + 1e-5) * g + b)

    h = x.astype(jnp.float32)
    for i in range(1, 5):
        h = arma(params[f"arma{i}"], h)
        h = bn_relu(h, params[f"bn{i}"])
    dense, _ = to_dense_batch(h, batch, batch_size, max_num_nodes)
    ln = (dense * params["clf_w"] + params["clf_b"]).squeeze(-1)
    return ln, ln.max(axis=1)


# ----------------------------------------------------------------------------
# Deterministic parameter init (shapes per torch_geometric ARMAConv.__init__)
# ----------------------------------------------------------------------------
def _glorot(key, shape):
    fan_in, fan_out = shape[-2], shape[-1]
    a = jnp.sqrt(6.0 / (fan_in + fan_out))
    return jax.random.uniform(key, shape, jnp.float32, -a, a)


def make_arma_params(key, fin, fout, K, T):
    k1, k2, k3 = jax.random.split(key, 3)
    return {
        "init_weight": _glorot(k1, (K, fin, fout)),
        "weight": _glorot(k2, (max(1, T - 1), K, fout, fout)),
        "root_weight": _glorot(k3, (T, K, fin, fout)),
        "bias": jnp.zeros((T, K, 1, fout), jnp.float32),
    }


def make_bn_params(c):
    # fresh torch BatchNorm init: gamma=1, beta=0, running_mean=0, running_var=1
    return (jnp.ones((c,), jnp.float32), jnp.zeros((c,), jnp.float32),
            jnp.zeros((c,), jnp.float32), jnp.ones((c,), jnp.float32))


if __name__ == "__main__":
    key = jax.random.PRNGKey(0)
    (k_x, k_e1, k_e2, k_w, k_p1, k_p2, k_p3, k_p4, k_clf) = jax.random.split(key, 9)

    # small shapes: 2 graphs x 64 nodes, in_channels=2, hidden=32, K=3, T=5, L=4
    B, nodes_per_graph = 2, 64
    N = B * nodes_per_graph
    FIN, HID, K, KP, T, L = 2, 32, 3, 4, 5, 4
    E_per = 256

    x = jax.random.normal(k_x, (N, FIN), jnp.float32)
    src = jax.random.randint(k_e1, (B, E_per), 0, nodes_per_graph)
    dst = jax.random.randint(k_e2, (B, E_per), 0, nodes_per_graph)
    offs = (jnp.arange(B) * nodes_per_graph)[:, None]
    edge_index = jnp.stack([(src + offs).reshape(-1),
                            (dst + offs).reshape(-1)]).astype(jnp.int32)
    weights = jax.random.uniform(k_w, (B * E_per,), jnp.float32, 0.5, 1.5)
    batch = jnp.repeat(jnp.arange(B, dtype=jnp.int32), nodes_per_graph)

    params = {
        "arma1": make_arma_params(k_p1, FIN, HID, K, T),
        "arma2": make_arma_params(k_p2, HID, HID, K, T),
        "arma3": make_arma_params(k_p3, HID, HID, K, T),
        "arma4": make_arma_params(k_p4, HID, 1, K, T),
        "bn1": make_bn_params(HID),
        "bn2": make_bn_params(HID),
        "bn3": make_bn_params(HID),
        "bn4": make_bn_params(1),
        "clf_w": jax.random.uniform(jax.random.fold_in(k_clf, 0), (),
                                    jnp.float32, -1.0, 1.0),
        "clf_b": jax.random.uniform(jax.random.fold_in(k_clf, 1), (),
                                    jnp.float32, -1.0, 1.0),
    }

    a = gcn_norm_dense(edge_index, weights, N)
    fused = fuse_params(params, C=HID, K=K, Kp=KP, T=T, L=L)

    fwd = jax.jit(functools.partial(gnn_arma_forward, batch_size=B,
                                    max_num_nodes=nodes_per_graph,
                                    C=HID, T=T, L=L))
    logits_nodes, logits_graph = fwd(fused, x, a, batch)
    jax.block_until_ready((logits_nodes, logits_graph))

    assert logits_nodes.shape == (B, nodes_per_graph)
    assert logits_graph.shape == (B,)
    assert bool(jnp.all(jnp.isfinite(logits_nodes)))

    # validate the fused/padded kernel against the plain per-stack math
    # (tolerance tightened 5x vs. the previous 1e-2; the remaining slack only
    #  covers MXU f32 multi-pass / accumulation-order differences vs. the
    #  HIGHEST-precision XLA reference, while still catching any bf16 storage
    #  or fusion regressions, which show up at >=1e-2.)
    ref_nodes, ref_graph = reference_forward(params, x, a, batch,
                                             batch_size=B,
                                             max_num_nodes=nodes_per_graph)
    assert bool(jnp.allclose(logits_nodes, ref_nodes, atol=2e-3, rtol=2e-3))
    assert bool(jnp.allclose(logits_graph, ref_graph, atol=2e-3, rtol=2e-3))
    print("KERNEL_OK")
</pallas_src>

<mosaic_0001>
module attributes {stable_mosaic.version = 11 : i64} {
  func.func private @main(%arg0: i32) attributes {dimension_semantics = [#tpu.dimension_semantics<core_parallel>], iteration_bounds = array<i64: 2>, tpu.core_type = #tpu.core_type<sc_scalar_subcore>, window_params = []} {
    return
  }
}

module attributes {stable_mosaic.version = 11 : i64} {
  func.func private @main(%arg0: i32) attributes {dimension_semantics = [#tpu.dimension_semantics<core_parallel>], iteration_bounds = array<i64: 2>, tpu.core_type = #tpu.core_type<sc_scalar_subcore>, window_params = []} {
    return
  }
}

module attributes {stable_mosaic.version = 11 : i64} {
  func.func @_arma_gnn_kernel(%arg0: memref<128x128xf32, #tpu.memory_space<vmem>>, %arg1: memref<128x33xf32, #tpu.memory_space<vmem>>, %arg2: memref<4x33x128xf32, #tpu.memory_space<vmem>>, %arg3: memref<16x128x128xf32, #tpu.memory_space<vmem>>, %arg4: memref<4x33x640xf32, #tpu.memory_space<vmem>>, %arg5: memref<4x128x33xf32, #tpu.memory_space<vmem>>, %arg6: memref<4x1x33xf32, #tpu.memory_space<vmem>>, %arg7: memref<128x33xf32, #tpu.memory_space<vmem>>) attributes {dimension_semantics = [], scalar_prefetch = 0 : i64, scratch_operands = 0 : i64, tpu.core_type = #tpu.core_type<tc>} {
    %c0 = arith.constant 0 : index
    %c0_0 = arith.constant 0 : index
    %0 = vector.load %arg0[%c0, %c0_0] : memref<128x128xf32, #tpu.memory_space<vmem>>, vector<128x128xf32>
    %c0_1 = arith.constant 0 : index
    %c0_2 = arith.constant 0 : index
    %1 = vector.load %arg1[%c0_1, %c0_2] : memref<128x33xf32, #tpu.memory_space<vmem>>, vector<128x33xf32>
    %c0_3 = arith.constant 0 : index
    %c0_4 = arith.constant 0 : index
    %c0_5 = arith.constant 0 : index
    %2 = vector.load %arg4[%c0_3, %c0_4, %c0_5] : memref<4x33x640xf32, #tpu.memory_space<vmem>>, vector<1x33x640xf32>
    %3 = vector.shape_cast %2 : vector<1x33x640xf32> to vector<33x640xf32>
    %cst = arith.constant dense<0.000000e+00> : vector<128x640xf32>
    %4 = tpu.matmul %1, %3, %cst {dimension_numbers = #tpu.dot_dimension_numbers<[1], [0], [0], [1], [0, 0, 1, 1], [], []>} : vector<128x33xf32>, vector<33x640xf32>, vector<128x640xf32> -> vector<128x640xf32>
    %c0_6 = arith.constant 0 : index
    %c0_7 = arith.constant 0 : index
    %c0_8 = arith.constant 0 : index
    %5 = vector.load %arg2[%c0_6, %c0_7, %c0_8] : memref<4x33x128xf32, #tpu.memory_space<vmem>>, vector<1x33x128xf32>
    %6 = vector.shape_cast %5 : vector<1x33x128xf32> to vector<33x128xf32>
    %cst_9 = arith.constant dense<0.000000e+00> : vector<128x128xf32>
    %7 = tpu.matmul %1, %6, %cst_9 {dimension_numbers = #tpu.dot_dimension_numbers<[1], [0], [0], [1], [0, 0, 1, 1], [], []>} : vector<128x33xf32>, vector<33x128xf32>, vector<128x128xf32> -> vector<128x128xf32>
    %cst_10 = arith.constant dense<0.000000e+00> : vector<128x128xf32>
    %8 = tpu.matmul %0, %7, %cst_10 {dimension_numbers = #tpu.dot_dimension_numbers<[1], [0], [0], [1], [0, 0, 1, 1], [], []>} : vector<128x128xf32>, vector<128x128xf32>, vector<128x128xf32> -> vector<128x128xf32>
    %9 = vector.extract_strided_slice %4 {offsets = [0, 0], sizes = [128, 128], strides = [1, 1]} : vector<128x640xf32> to vector<128x128xf32>
    %10 = arith.addf %8, %9 : vector<128x128xf32>
    %cst_11 = arith.constant 0.000000e+00 : f32
    %11 = vector.broadcast %cst_11 : f32 to vector<128x128xf32>
    %12 = arith.maximumf %10, %11 : vector<128x128xf32>
    %c0_12 = arith.constant 0 : index
    %c0_13 = arith.constant 0 : index
    %c0_14 = arith.constant 0 : index
    %13 = vector.load %arg3[%c0_12, %c0_13, %c0_14] : memref<16x128x128xf32, #tpu.memory_space<vmem>>, vector<1x128x128xf32>
    %14 = vector.shape_cast %13 : vector<1x128x128xf32> to vector<128x128xf32>
    %cst_15 = arith.constant dense<0.000000e+00> : vector<128x128xf32>
    %15 = tpu.matmul %12, %14, %cst_15 {dimension_numbers = #tpu.dot_dimension_numbers<[1], [0], [0], [1], [0, 0, 1, 1], [], []>} : vector<128x128xf32>, vector<128x128xf32>, vector<128x128xf32> -> vector<128x128xf32>
    %cst_16 = arith.constant dense<0.000000e+00> : vector<128x128xf32>
    %16 = tpu.matmul %0, %15, %cst_16 {dimension_numbers = #tpu.dot_dimension_numbers<[1], [0], [0], [1], [0, 0, 1, 1], [], []>} : vector<128x128xf32>, vector<128x128xf32>, vector<128x128xf32> -> vector<128x128xf32>
    %17 = vector.extract_strided_slice %4 {offsets = [0, 128], sizes = [128, 128], strides = [1, 1]} : vector<128x640xf32> to vector<128x128xf32>
    %18 = arith.addf %16, %17 : vector<128x128xf32>
    %cst_17 = arith.constant 0.000000e+00 : f32
    %19 = vector.broadcast %cst_17 : f32 to vector<128x128xf32>
    %20 = arith.maximumf %18, %19 : vector<128x128xf32>
    %c1 = arith.constant 1 : index
    %c0_18 = arith.constant 0 : index
    %c0_19 = arith.constant 0 : index
    %21 = vector.load %arg3[%c1, %c0_18, %c0_19] : memref<16x128x128xf32, #tpu.memory_space<vmem>>, vector<1x128x128xf32>
    %22 = vector.shape_cast %21 : vector<1x128x128xf32> to vector<128x128xf32>
    %cst_20 = arith.constant dense<0.000000e+00> : vector<128x128xf32>
    %23 = tpu.matmul %20, %22, %cst_20 {dimension_numbers = #tpu.dot_dimension_numbers<[1], [0], [0], [1], [0, 0, 1, 1], [], []>} : vector<128x128xf32>, vector<128x128xf32>, vector<128x128xf32> -> vector<128x128xf32>
    %cst_21 = arith.constant dense<0.000000e+00> : vector<128x128xf32>
    %24 = tpu.matmul %0, %23, %cst_21 {dimension_numbers = #tpu.dot_dimension_numbers<[1], [0], [0], [1], [0, 0, 1, 1], [], []>} : vector<128x128xf32>, vector<128x128xf32>, vector<128x128xf32> -> vector<128x128xf32>
    %25 = vector.extract_strided_slice %4 {offsets = [0, 256], sizes = [128, 128], strides = [1, 1]} : vector<128x640xf32> to vector<128x128xf32>
    %26 = arith.addf %24, %25 : vector<128x128xf32>
    %cst_22 = arith.constant 0.000000e+00 : f32
    %27 = vector.broadcast %cst_22 : f32 to vector<128x128xf32>
    %28 = arith.maximumf %26, %27 : vector<128x128xf32>
    %c2 = arith.constant 2 : index
    %c0_23 = arith.constant 0 : index
    %c0_24 = arith.constant 0 : index
    %29 = vector.load %arg3[%c2, %c0_23, %c0_24] : memref<16x128x128xf32, #tpu.memory_space<vmem>>, vector<1x128x128xf32>
    %30 = vector.shape_cast %29 : vector<1x128x128xf32> to vector<128x128xf32>
    %cst_25 = arith.constant dense<0.000000e+00> : vector<128x128xf32>
    %31 = tpu.matmul %28, %30, %cst_25 {dimension_numbers = #tpu.dot_dimension_numbers<[1], [0], [0], [1], [0, 0, 1, 1], [], []>} : vector<128x128xf32>, vector<128x128xf32>, vector<128x128xf32> -> vector<128x128xf32>
    %cst_26 = arith.constant dense<0.000000e+00> : vector<128x128xf32>
    %32 = tpu.matmul %0, %31, %cst_26 {dimension_numbers = #tpu.dot_dimension_numbers<[1], [0], [0], [1], [0, 0, 1, 1], [], []>} : vector<128x128xf32>, vector<128x128xf32>, vector<128x128xf32> -> vector<128x128xf32>
    %33 = vector.extract_strided_slice %4 {offsets = [0, 384], sizes = [128, 128], strides = [1, 1]} : vector<128x640xf32> to vector<128x128xf32>
    %34 = arith.addf %32, %33 : vector<128x128xf32>
    %cst_27 = arith.constant 0.000000e+00 : f32
    %35 = vector.broadcast %cst_27 : f32 to vector<128x128xf32>
    %36 = arith.maximumf %34, %35 : vector<128x128xf32>
    %c3 = arith.constant 3 : index
    %c0_28 = arith.constant 0 : index
    %c0_29 = arith.constant 0 : index
    %37 = vector.load %arg3[%c3, %c0_28, %c0_29] : memref<16x128x128xf32, #tpu.memory_space<vmem>>, vector<1x128x128xf32>
    %38 = vector.shape_cast %37 : vector<1x128x128xf32> to vector<128x128xf32>
    %cst_30 = arith.constant dense<0.000000e+00> : vector<128x128xf32>
    %39 = tpu.matmul %36, %38, %cst_30 {dimension_numbers = #tpu.dot_dimension_numbers<[1], [0], [0], [1], [0, 0, 1, 1], [], []>} : vector<128x128xf32>, vector<128x128xf32>, vector<128x128xf32> -> vector<128x128xf32>
    %cst_31 = arith.constant dense<0.000000e+00> : vector<128x128xf32>
    %40 = tpu.matmul %0, %39, %cst_31 {dimension_numbers = #tpu.dot_dimension_numbers<[1], [0], [0], [1], [0, 0, 1, 1], [], []>} : vector<128x128xf32>, vector<128x128xf32>, vector<128x128xf32> -> vector<128x128xf32>
    %41 = vector.extract_strided_slice %4 {offsets = [0, 512], sizes = [128, 128], strides = [1, 1]} : vector<128x640xf32> to vector<128x128xf32>
    %42 = arith.addf %40, %41 : vector<128x128xf32>
    %cst_32 = arith.constant 0.000000e+00 : f32
    %43 = vector.broadcast %cst_32 : f32 to vector<128x128xf32>
    %44 = arith.maximumf %42, %43 : vector<128x128xf32>
    %c0_33 = arith.constant 0 : index
    %c0_34 = arith.constant 0 : index
    %c0_35 = arith.constant 0 : index
    %45 = vector.load %arg5[%c0_33, %c0_34, %c0_35] : memref<4x128x33xf32, #tpu.memory_space<vmem>>, vector<1x128x33xf32>
    %46 = vector.shape_cast %45 : vector<1x128x33xf32> to vector<128x33xf32>
    %cst_36 = arith.constant dense<0.000000e+00> : vector<128x33xf32>
    %47 = tpu.matmul %44, %46, %cst_36 {dimension_numbers = #tpu.dot_dimension_numbers<[1], [0], [0], [1], [0, 0, 1, 1], [], []>} : vector<128x128xf32>, vector<128x33xf32>, vector<128x33xf32> -> vector<128x33xf32>
    %c0_37 = arith.constant 0 : index
    %c0_38 = arith.constant 0 : index
    %c0_39 = arith.constant 0 : index
    %48 = vector.load %arg6[%c0_37, %c0_38, %c0_39] : memref<4x1x33xf32, #tpu.memory_space<vmem>>, vector<1x1x33xf32>
    %49 = vector.shape_cast %48 : vector<1x1x33xf32> to vector<1x33xf32>
    %50 = vector.broadcast %49 : vector<1x33xf32> to vector<128x33xf32>
    %51 = arith.addf %47, %50 : vector<128x33xf32>
    %cst_40 = arith.constant 0.000000e+00 : f32
    %52 = vector.broadcast %cst_40 : f32 to vector<128x33xf32>
    %53 = arith.maximumf %51, %52 : vector<128x33xf32>
    %c1_41 = arith.constant 1 : index
    %c0_42 = arith.constant 0 : index
    %c0_43 = arith.constant 0 : index
    %54 = vector.load %arg4[%c1_41, %c0_42, %c0_43] : memref<4x33x640xf32, #tpu.memory_space<vmem>>, vector<1x33x640xf32>
    %55 = vector.shape_cast %54 : vector<1x33x640xf32> to vector<33x640xf32>
    %cst_44 = arith.constant dense<0.000000e+00> : vector<128x640xf32>
    %56 = tpu.matmul %53, %55, %cst_44 {dimension_numbers = #tpu.dot_dimension_numbers<[1], [0], [0], [1], [0, 0, 1, 1], [], []>} : vector<128x33xf32>, vector<33x640xf32>, vector<128x640xf32> -> vector<128x640xf32>
    %c1_45 = arith.constant 1 : index
    %c0_46 = arith.constant 0 : index
    %c0_47 = arith.constant 0 : index
    %57 = vector.load %arg2[%c1_45, %c0_46, %c0_47] : memref<4x33x128xf32, #tpu.memory_space<vmem>>, vector<1x33x128xf32>
    %58 = vector.shape_cast %57 : vector<1x33x128xf32> to vector<33x128xf32>
    %cst_48 = arith.constant dense<0.000000e+00> : vector<128x128xf32>
    %59 = tpu.matmul %53, %58, %cst_48 {dimension_numbers = #tpu.dot_dimension_numbers<[1], [0], [0], [1], [0, 0, 1, 1], [], []>} : vector<128x33xf32>, vector<33x128xf32>, vector<128x128xf32> -> vector<128x128xf32>
    %cst_49 = arith.constant dense<0.000000e+00> : vector<128x128xf32>
    %60 = tpu.matmul %0, %59, %cst_49 {dimension_numbers = #tpu.dot_dimension_numbers<[1], [0], [0], [1], [0, 0, 1, 1], [], []>} : vector<128x128xf32>, vector<128x128xf32>, vector<128x128xf32> -> vector<128x128xf32>
    %61 = vector.extract_strided_slice %56 {offsets = [0, 0], sizes = [128, 128], strides = [1, 1]} : vector<128x640xf32> to vector<128x128xf32>
    %62 = arith.addf %60, %61 : vector<128x128xf32>
    %cst_50 = arith.constant 0.000000e+00 : f32
    %63 = vector.broadcast %cst_50 : f32 to vector<128x128xf32>
    %64 = arith.maximumf %62, %63 : vector<128x128xf32>
    %c4 = arith.constant 4 : index
    %c0_51 = arith.constant 0 : index
    %c0_52 = arith.constant 0 : index
    %65 = vector.load %arg3[%c4, %c0_51, %c0_52] : memref<16x128x128xf32, #tpu.memory_space<vmem>>, vector<1x128x128xf32>
    %66 = vector.shape_cast %65 : vector<1x128x128xf32> to vector<128x128xf32>
    %cst_53 = arith.constant dense<0.000000e+00> : vector<128x128xf32>
    %67 = tpu.matmul %64, %66, %cst_53 {dimension_numbers = #tpu.dot_dimension_numbers<[1], [0], [0], [1], [0, 0, 1, 1], [], []>} : vector<128x128xf32>, vector<128x128xf32>, vector<128x128xf32> -> vector<128x128xf32>
    %cst_54 = arith.constant dense<0.000000e+00> : vector<128x128xf32>
    %68 = tpu.matmul %0, %67, %cst_54 {dimension_numbers = #tpu.dot_dimension_numbers<[1], [0], [0], [1], [0, 0, 1, 1], [], []>} : vector<128x128xf32>, vector<128x128xf32>, vector<128x128xf32> -> vector<128x128xf32>
    %69 = vector.extract_strided_slice %56 {offsets = [0, 128], sizes = [128, 128], strides = [1, 1]} : vector<128x640xf32> to vector<128x128xf32>
    %70 = arith.addf %68, %69 : vector<128x128xf32>
    %cst_55 = arith.constant 0.000000e+00 : f32
    %71 = vector.broadcast %cst_55 : f32 to vector<128x128xf32>
    %72 = arith.maximumf %70, %71 : vector<128x128xf32>
    %c5 = arith.constant 5 : index
    %c0_56 = arith.constant 0 : index
    %c0_57 = arith.constant 0 : index
    %73 = vector.load %arg3[%c5, %c0_56, %c0_57] : memref<16x128x128xf32, #tpu.memory_space<vmem>>, vector<1x128x128xf32>
    %74 = vector.shape_cast %73 : vector<1x128x128xf32> to vector<128x128xf32>
    %cst_58 = arith.constant dense<0.000000e+00> : vector<128x128xf32>
    %75 = tpu.matmul %72, %74, %cst_58 {dimension_numbers = #tpu.dot_dimension_numbers<[1], [0], [0], [1], [0, 0, 1, 1], [], []>} : vector<128x128xf32>, vector<128x128xf32>, vector<128x128xf32> -> vector<128x128xf32>
    %cst_59 = arith.constant dense<0.000000e+00> : vector<128x128xf32>
    %76 = tpu.matmul %0, %75, %cst_59 {dimension_numbers = #tpu.dot_dimension_numbers<[1], [0], [0], [1], [0, 0, 1, 1], [], []>} : vector<128x128xf32>, vector<128x128xf32>, vector<128x128xf32> -> vector<128x128xf32>
    %77 = vector.extract_strided_slice %56 {offsets = [0, 256], sizes = [128, 128], strides = [1, 1]} : vector<128x640xf32> to vector<128x128xf32>
    %78 = arith.addf %76, %77 : vector<128x128xf32>
    %cst_60 = arith.constant 0.000000e+00 : f32
    %79 = vector.broadcast %cst_60 : f32 to vector<128x128xf32>
    %80 = arith.maximumf %78, %79 : vector<128x128xf32>
    %c6 = arith.constant 6 : index
    %c0_61 = arith.constant 0 : index
    %c0_62 = arith.constant 0 : index
    %81 = vector.load %arg3[%c6, %c0_61, %c0_62] : memref<16x128x128xf32, #tpu.memory_space<vmem>>, vector<1x128x128xf32>
    %82 = vector.shape_cast %81 : vector<1x128x128xf32> to vector<128x128xf32>
    %cst_63 = arith.constant dense<0.000000e+00> : vector<128x128xf32>
    %83 = tpu.matmul %80, %82, %cst_63 {dimension_numbers = #tpu.dot_dimension_numbers<[1], [0], [0], [1], [0, 0, 1, 1], [], []>} : vector<128x128xf32>, vector<128x128xf32>, vector<128x128xf32> -> vector<128x128xf32>
    %cst_64 = arith.constant dense<0.000000e+00> : vector<128x128xf32>
    %84 = tpu.matmul %0, %83, %cst_64 {dimension_numbers = #tpu.dot_dimension_numbers<[1], [0], [0], [1], [0, 0, 1, 1], [], []>} : vector<128x128xf32>, vector<128x128xf32>, vector<128x128xf32> -> vector<128x128xf32>
    %85 = vector.extract_strided_slice %56 {offsets = [0, 384], sizes = [128, 128], strides = [1, 1]} : vector<128x640xf32> to vector<128x128xf32>
    %86 = arith.addf %84, %85 : vector<128x128xf32>
    %cst_65 = arith.constant 0.000000e+00 : f32
    %87 = vector.broadcast %cst_65 : f32 to vector<128x128xf32>
    %88 = arith.maximumf %86, %87 : vector<128x128xf32>
    %c7 = arith.constant 7 : index
    %c0_66 = arith.constant 0 : index
    %c0_67 = arith.constant 0 : index
    %89 = vector.load %arg3[%c7, %c0_66, %c0_67] : memref<16x128x128xf32, #tpu.memory_space<vmem>>, vector<1x128x128xf32>
    %90 = vector.shape_cast %89 : vector<1x128x128xf32> to vector<128x128xf32>
    %cst_68 = arith.constant dense<0.000000e+00> : vector<128x128xf32>
    %91 = tpu.matmul %88, %90, %cst_68 {dimension_numbers = #tpu.dot_dimension_numbers<[1], [0], [0], [1], [0, 0, 1, 1], [], []>} : vector<128x128xf32>, vector<128x128xf32>, vector<128x128xf32> -> vector<128x128xf32>
    %cst_69 = arith.constant dense<0.000000e+00> : vector<128x128xf32>
    %92 = tpu.matmul %0, %91, %cst_69 {dimension_numbers = #tpu.dot_dimension_numbers<[1], [0], [0], [1], [0, 0, 1, 1], [], []>} : vector<128x128xf32>, vector<128x128xf32>, vector<128x128xf32> -> vector<128x128xf32>
    %93 = vector.extract_strided_slice %56 {offsets = [0, 512], sizes = [128, 128], strides = [1, 1]} : vector<128x640xf32> to vector<128x128xf32>
    %94 = arith.addf %92, %93 : vector<128x128xf32>
    %cst_70 = arith.constant 0.000000e+00 : f32
    %95 = vector.broadcast %cst_70 : f32 to vector<128x128xf32>
    %96 = arith.maximumf %94, %95 : vector<128x128xf32>
    %c1_71 = arith.constant 1 : index
    %c0_72 = arith.constant 0 : index
    %c0_73 = arith.constant 0 : index
    %97 = vector.load %arg5[%c1_71, %c0_72, %c0_73] : memref<4x128x33xf32, #tpu.memory_space<vmem>>, vector<1x128x33xf32>
    %98 = vector.shape_cast %97 : vector<1x128x33xf32> to vector<128x33xf32>
    %cst_74 = arith.constant dense<0.000000e+00> : vector<128x33xf32>
    %99 = tpu.matmul %96, %98, %cst_74 {dimension_numbers = #tpu.dot_dimension_numbers<[1], [0], [0], [1], [0, 0, 1, 1], [], []>} : vector<128x128xf32>, vector<128x33xf32>, vector<128x33xf32> -> vector<128x33xf32>
    %c1_75 = arith.constant 1 : index
    %c0_76 = arith.constant 0 : index
    %c0_77 = arith.constant 0 : index
    %100 = vector.load %arg6[%c1_75, %c0_76, %c0_77] : memref<4x1x33xf32, #tpu.memory_space<vmem>>, vector<1x1x33xf32>
    %101 = vector.shape_cast %100 : vector<1x1x33xf32> to vector<1x33xf32>
    %102 = vector.broadcast %101 : vector<1x33xf32> to vector<128x33xf32>
    %103 = arith.addf %99, %102 : vector<128x33xf32>
    %cst_78 = arith.constant 0.000000e+00 : f32
    %104 = vector.broadcast %cst_78 : f32 to vector<128x33xf32>
    %105 = arith.maximumf %103, %104 : vector<128x33xf32>
    %c2_79 = arith.constant 2 : index
    %c0_80 = arith.constant 0 : index
    %c0_81 = arith.constant 0 : index
    %106 = vector.load %arg4[%c2_79, %c0_80, %c0_81] : memref<4x33x640xf32, #tpu.memory_space<vmem>>, vector<1x33x640xf32>
    %107 = vector.shape_cast %106 : vector<1x33x640xf32> to vector<33x640xf32>
    %cst_82 = arith.constant dense<0.000000e+00> : vector<128x640xf32>
    %108 = tpu.matmul %105, %107, %cst_82 {dimension_numbers = #tpu.dot_dimension_numbers<[1], [0], [0], [1], [0, 0, 1, 1], [], []>} : vector<128x33xf32>, vector<33x640xf32>, vector<128x640xf32> -> vector<128x640xf32>
    %c2_83 = arith.constant 2 : index
    %c0_84 = arith.constant 0 : index
    %c0_85 = arith.constant 0 : index
    %109 = vector.load %arg2[%c2_83, %c0_84, %c0_85] : memref<4x33x128xf32, #tpu.memory_space<vmem>>, vector<1x33x128xf32>
    %110 = vector.shape_cast %109 : vector<1x33x128xf32> to vector<33x128xf32>
    %cst_86 = arith.constant dense<0.000000e+00> : vector<128x128xf32>
    %111 = tpu.matmul %105, %110, %cst_86 {dimension_numbers = #tpu.dot_dimension_numbers<[1], [0], [0], [1], [0, 0, 1, 1], [], []>} : vector<128x33xf32>, vector<33x128xf32>, vector<128x128xf32> -> vector<128x128xf32>
    %cst_87 = arith.constant dense<0.000000e+00> : vector<128x128xf32>
    %112 = tpu.matmul %0, %111, %cst_87 {dimension_numbers = #tpu.dot_dimension_numbers<[1], [0], [0], [1], [0, 0, 1, 1], [], []>} : vector<128x128xf32>, vector<128x128xf32>, vector<128x128xf32> -> vector<128x128xf32>
    %113 = vector.extract_strided_slice %108 {offsets = [0, 0], sizes = [128, 128], strides = [1, 1]} : vector<128x640xf32> to vector<128x128xf32>
    %114 = arith.addf %112, %113 : vector<128x128xf32>
    %cst_88 = arith.constant 0.000000e+00 : f32
    %115 = vector.broadcast %cst_88 : f32 to vector<128x128xf32>
    %116 = arith.maximumf %114, %115 : vector<128x128xf32>
    %c8 = arith.constant 8 : index
    %c0_89 = arith.constant 0 : index
    %c0_90 = arith.constant 0 : index
    %117 = vector.load %arg3[%c8, %c0_89, %c0_90] : memref<16x128x128xf32, #tpu.memory_space<vmem>>, vector<1x128x128xf32>
    %118 = vector.shape_cast %117 : vector<1x128x128xf32> to vector<128x128xf32>
    %cst_91 = arith.constant dense<0.000000e+00> : vector<128x128xf32>
    %119 = tpu.matmul %116, %118, %cst_91 {dimension_numbers = #tpu.dot_dimension_numbers<[1], [0], [0], [1], [0, 0, 1, 1], [], []>} : vector<128x128xf32>, vector<128x128xf32>, vector<128x128xf32> -> vector<128x128xf32>
    %cst_92 = arith.constant dense<0.000000e+00> : vector<128x128xf32>
    %120 = tpu.matmul %0, %119, %cst_92 {dimension_numbers = #tpu.dot_dimension_numbers<[1], [0], [0], [1], [0, 0, 1, 1], [], []>} : vector<128x128xf32>, vector<128x128xf32>, vector<128x128xf32> -> vector<128x128xf32>
    %121 = vector.extract_strided_slice %108 {offsets = [0, 128], sizes = [128, 128], strides = [1, 1]} : vector<128x640xf32> to vector<128x128xf32>
    %122 = arith.addf %120, %121 : vector<128x128xf32>
    %cst_93 = arith.constant 0.000000e+00 : f32
    %123 = vector.broadcast %cst_93 : f32 to vector<128x128xf32>
    %124 = arith.maximumf %122, %123 : vector<128x128xf32>
    %c9 = arith.constant 9 : index
    %c0_94 = arith.constant 0 : index
    %c0_95 = arith.constant 0 : index
    %125 = vector.load %arg3[%c9, %c0_94, %c0_95] : memref<16x128x128xf32, #tpu.memory_space<vmem>>, vector<1x128x128xf32>
    %126 = vector.shape_cast %125 : vector<1x128x128xf32> to vector<128x128xf32>
    %cst_96 = arith.constant dense<0.000000e+00> : vector<128x128xf32>
    %127 = tpu.matmul %124, %126, %cst_96 {dimension_numbers = #tpu.dot_dimension_numbers<[1], [0], [0], [1], [0, 0, 1, 1], [], []>} : vector<128x128xf32>, vector<128x128xf32>, vector<128x128xf32> -> vector<128x128xf32>
    %cst_97 = arith.constant dense<0.000000e+00> : vector<128x128xf32>
    %128 = tpu.matmul %0, %127, %cst_97 {dimension_numbers = #tpu.dot_dimension_numbers<[1], [0], [0], [1], [0, 0, 1, 1], [], []>} : vector<128x128xf32>, vector<128x128xf32>, vector<128x128xf32> -> vector<128x128xf32>
    %129 = vector.extract_strided_slice %108 {offsets = [0, 256], sizes = [128, 128], strides = [1, 1]} : vector<128x640xf32> to vector<128x128xf32>
    %130 = arith.addf %128, %129 : vector<128x128xf32>
    %cst_98 = arith.constant 0.000000e+00 : f32
    %131 = vector.broadcast %cst_98 : f32 to vector<128x128xf32>
    %132 = arith.maximumf %130, %131 : vector<128x128xf32>
    %c10 = arith.constant 10 : index
    %c0_99 = arith.constant 0 : index
    %c0_100 = arith.constant 0 : index
    %133 = vector.load %arg3[%c10, %c0_99, %c0_100] : memref<16x128x128xf32, #tpu.memory_space<vmem>>, vector<1x128x128xf32>
    %134 = vector.shape_cast %133 : vector<1x128x128xf32> to vector<128x128xf32>
    %cst_101 = arith.constant dense<0.000000e+00> : vector<128x128xf32>
    %135 = tpu.matmul %132, %134, %cst_101 {dimension_numbers = #tpu.dot_dimension_numbers<[1], [0], [0], [1], [0, 0, 1, 1], [], []>} : vector<128x128xf32>, vector<128x128xf32>, vector<128x128xf32> -> vector<128x128xf32>
    %cst_102 = arith.constant dense<0.000000e+00> : vector<128x128xf32>
    %136 = tpu.matmul %0, %135, %cst_102 {dimension_numbers = #tpu.dot_dimension_numbers<[1], [0], [0], [1], [0, 0, 1, 1], [], []>} : vector<128x128xf32>, vector<128x128xf32>, vector<128x128xf32> -> vector<128x128xf32>
    %137 = vector.extract_strided_slice %108 {offsets = [0, 384], sizes = [128, 128], strides = [1, 1]} : vector<128x640xf32> to vector<128x128xf32>
    %138 = arith.addf %136, %137 : vector<128x128xf32>
    %cst_103 = arith.constant 0.000000e+00 : f32
    %139 = vector.broadcast %cst_103 : f32 to vector<128x128xf32>
    %140 = arith.maximumf %138, %139 : vector<128x128xf32>
    %c11 = arith.constant 11 : index
    %c0_104 = arith.constant 0 : index
    %c0_105 = arith.constant 0 : index
    %141 = vector.load %arg3[%c11, %c0_104, %c0_105] : memref<16x128x128xf32, #tpu.memory_space<vmem>>, vector<1x128x128xf32>
    %142 = vector.shape_cast %141 : vector<1x128x128xf32> to vector<128x128xf32>
    %cst_106 = arith.constant dense<0.000000e+00> : vector<128x128xf32>
    %143 = tpu.matmul %140, %142, %cst_106 {dimension_numbers = #tpu.dot_dimension_numbers<[1], [0], [0], [1], [0, 0, 1, 1], [], []>} : vector<128x128xf32>, vector<128x128xf32>, vector<128x128xf32> -> vector<128x128xf32>
    %cst_107 = arith.constant dense<0.000000e+00> : vector<128x128xf32>
    %144 = tpu.matmul %0, %143, %cst_107 {dimension_numbers = #tpu.dot_dimension_numbers<[1], [0], [0], [1], [0, 0, 1, 1], [], []>} : vector<128x128xf32>, vector<128x128xf32>, vector<128x128xf32> -> vector<128x128xf32>
    %145 = vector.extract_strided_slice %108 {offsets = [0, 512], sizes = [128, 128], strides = [1, 1]} : vector<128x640xf32> to vector<128x128xf32>
    %146 = arith.addf %144, %145 : vector<128x128xf32>
    %cst_108 = arith.constant 0.000000e+00 : f32
    %147 = vector.broadcast %cst_108 : f32 to vector<128x128xf32>
    %148 = arith.maximumf %146, %147 : vector<128x128xf32>
    %c2_109 = arith.constant 2 : index
    %c0_110 = arith.constant 0 : index
    %c0_111 = arith.constant 0 : index
    %149 = vector.load %arg5[%c2_109, %c0_110, %c0_111] : memref<4x128x33xf32, #tpu.memory_space<vmem>>, vector<1x128x33xf32>
    %150 = vector.shape_cast %149 : vector<1x128x33xf32> to vector<128x33xf32>
    %cst_112 = arith.constant dense<0.000000e+00> : vector<128x33xf32>
    %151 = tpu.matmul %148, %150, %cst_112 {dimension_numbers = #tpu.dot_dimension_numbers<[1], [0], [0], [1], [0, 0, 1, 1], [], []>} : vector<128x128xf32>, vector<128x33xf32>, vector<128x33xf32> -> vector<128x33xf32>
    %c2_113 = arith.constant 2 : index
    %c0_114 = arith.constant 0 : index
    %c0_115 = arith.constant 0 : index
    %152 = vector.load %arg6[%c2_113, %c0_114, %c0_115] : memref<4x1x33xf32, #tpu.memory_space<vmem>>, vector<1x1x33xf32>
    %153 = vector.shape_cast %152 : vector<1x1x33xf32> to vector<1x33xf32>
    %154 = vector.broadcast %153 : vector<1x33xf32> to vector<128x33xf32>
    %155 = arith.addf %151, %154 : vector<128x33xf32>
    %cst_116 = arith.constant 0.000000e+00 : f32
    %156 = vector.broadcast %cst_116 : f32 to vector<128x33xf32>
    %157 = arith.maximumf %155, %156 : vector<128x33xf32>
    %c3_117 = arith.constant 3 : index
    %c0_118 = arith.constant 0 : index
    %c0_119 = arith.constant 0 : index
    %158 = vector.load %arg4[%c3_117, %c0_118, %c0_119] : memref<4x33x640xf32, #tpu.memory_space<vmem>>, vector<1x33x640xf32>
    %159 = vector.shape_cast %158 : vector<1x33x640xf32> to vector<33x640xf32>
    %cst_120 = arith.constant dense<0.000000e+00> : vector<128x640xf32>
    %160 = tpu.matmul %157, %159, %cst_120 {dimension_numbers = #tpu.dot_dimension_numbers<[1], [0], [0], [1], [0, 0, 1, 1], [], []>} : vector<128x33xf32>, vector<33x640xf32>, vector<128x640xf32> -> vector<128x640xf32>
    %c3_121 = arith.constant 3 : index
    %c0_122 = arith.constant 0 : index
    %c0_123 = arith.constant 0 : index
    %161 = vector.load %arg2[%c3_121, %c0_122, %c0_123] : memref<4x33x128xf32, #tpu.memory_space<vmem>>, vector<1x33x128xf32>
    %162 = vector.shape_cast %161 : vector<1x33x128xf32> to vector<33x128xf32>
    %cst_124 = arith.constant dense<0.000000e+00> : vector<128x128xf32>
    %163 = tpu.matmul %157, %162, %cst_124 {dimension_numbers = #tpu.dot_dimension_numbers<[1], [0], [0], [1], [0, 0, 1, 1], [], []>} : vector<128x33xf32>, vector<33x128xf32>, vector<128x128xf32> -> vector<128x128xf32>
    %cst_125 = arith.constant dense<0.000000e+00> : vector<128x128xf32>
    %164 = tpu.matmul %0, %163, %cst_125 {dimension_numbers = #tpu.dot_dimension_numbers<[1], [0], [0], [1], [0, 0, 1, 1], [], []>} : vector<128x128xf32>, vector<128x128xf32>, vector<128x128xf32> -> vector<128x128xf32>
    %165 = vector.extract_strided_slice %160 {offsets = [0, 0], sizes = [128, 128], strides = [1, 1]} : vector<128x640xf32> to vector<128x128xf32>
    %166 = arith.addf %164, %165 : vector<128x128xf32>
    %cst_126 = arith.constant 0.000000e+00 : f32
    %167 = vector.broadcast %cst_126 : f32 to vector<128x128xf32>
    %168 = arith.maximumf %166, %167 : vector<128x128xf32>
    %c12 = arith.constant 12 : index
    %c0_127 = arith.constant 0 : index
    %c0_128 = arith.constant 0 : index
    %169 = vector.load %arg3[%c12, %c0_127, %c0_128] : memref<16x128x128xf32, #tpu.memory_space<vmem>>, vector<1x128x128xf32>
    %170 = vector.shape_cast %169 : vector<1x128x128xf32> to vector<128x128xf32>
    %cst_129 = arith.constant dense<0.000000e+00> : vector<128x128xf32>
    %171 = tpu.matmul %168, %170, %cst_129 {dimension_numbers = #tpu.dot_dimension_numbers<[1], [0], [0], [1], [0, 0, 1, 1], [], []>} : vector<128x128xf32>, vector<128x128xf32>, vector<128x128xf32> -> vector<128x128xf32>
    %cst_130 = arith.constant dense<0.000000e+00> : vector<128x128xf32>
    %172 = tpu.matmul %0, %171, %cst_130 {dimension_numbers = #tpu.dot_dimension_numbers<[1], [0], [0], [1], [0, 0, 1, 1], [], []>} : vector<128x128xf32>, vector<128x128xf32>, vector<128x128xf32> -> vector<128x128xf32>
    %173 = vector.extract_strided_slice %160 {offsets = [0, 128], sizes = [128, 128], strides = [1, 1]} : vector<128x640xf32> to vector<128x128xf32>
    %174 = arith.addf %172, %173 : vector<128x128xf32>
    %cst_131 = arith.constant 0.000000e+00 : f32
    %175 = vector.broadcast %cst_131 : f32 to vector<128x128xf32>
    %176 = arith.maximumf %174, %175 : vector<128x128xf32>
    %c13 = arith.constant 13 : index
    %c0_132 = arith.constant 0 : index
    %c0_133 = arith.constant 0 : index
    %177 = vector.load %arg3[%c13, %c0_132, %c0_133] : memref<16x128x128xf32, #tpu.memory_space<vmem>>, vector<1x128x128xf32>
    %178 = vector.shape_cast %177 : vector<1x128x128xf32> to vector<128x128xf32>
    %cst_134 = arith.constant dense<0.000000e+00> : vector<128x128xf32>
    %179 = tpu.matmul %176, %178, %cst_134 {dimension_numbers = #tpu.dot_dimension_numbers<[1], [0], [0], [1], [0, 0, 1, 1], [], []>} : vector<128x128xf32>, vector<128x128xf32>, vector<128x128xf32> -> vector<128x128xf32>
    %cst_135 = arith.constant dense<0.000000e+00> : vector<128x128xf32>
    %180 = tpu.matmul %0, %179, %cst_135 {dimension_numbers = #tpu.dot_dimension_numbers<[1], [0], [0], [1], [0, 0, 1, 1], [], []>} : vector<128x128xf32>, vector<128x128xf32>, vector<128x128xf32> -> vector<128x128xf32>
    %181 = vector.extract_strided_slice %160 {offsets = [0, 256], sizes = [128, 128], strides = [1, 1]} : vector<128x640xf32> to vector<128x128xf32>
    %182 = arith.addf %180, %181 : vector<128x128xf32>
    %cst_136 = arith.constant 0.000000e+00 : f32
    %183 = vector.broadcast %cst_136 : f32 to vector<128x128xf32>
    %184 = arith.maximumf %182, %183 : vector<128x128xf32>
    %c14 = arith.constant 14 : index
    %c0_137 = arith.constant 0 : index
    %c0_138 = arith.constant 0 : index
    %185 = vector.load %arg3[%c14, %c0_137, %c0_138] : memref<16x128x128xf32, #tpu.memory_space<vmem>>, vector<1x128x128xf32>
    %186 = vector.shape_cast %185 : vector<1x128x128xf32> to vector<128x128xf32>
    %cst_139 = arith.constant dense<0.000000e+00> : vector<128x128xf32>
    %187 = tpu.matmul %184, %186, %cst_139 {dimension_numbers = #tpu.dot_dimension_numbers<[1], [0], [0], [1], [0, 0, 1, 1], [], []>} : vector<128x128xf32>, vector<128x128xf32>, vector<128x128xf32> -> vector<128x128xf32>
    %cst_140 = arith.constant dense<0.000000e+00> : vector<128x128xf32>
    %188 = tpu.matmul %0, %187, %cst_140 {dimension_numbers = #tpu.dot_dimension_numbers<[1], [0], [0], [1], [0, 0, 1, 1], [], []>} : vector<128x128xf32>, vector<128x128xf32>, vector<128x128xf32> -> vector<128x128xf32>
    %189 = vector.extract_strided_slice %160 {offsets = [0, 384], sizes = [128, 128], strides = [1, 1]} : vector<128x640xf32> to vector<128x128xf32>
    %190 = arith.addf %188, %189 : vector<128x128xf32>
    %cst_141 = arith.constant 0.000000e+00 : f32
    %191 = vector.broadcast %cst_141 : f32 to vector<128x128xf32>
    %192 = arith.maximumf %190, %191 : vector<128x128xf32>
    %c15 = arith.constant 15 : index
    %c0_142 = arith.constant 0 : index
    %c0_143 = arith.constant 0 : index
    %193 = vector.load %arg3[%c15, %c0_142, %c0_143] : memref<16x128x128xf32, #tpu.memory_space<vmem>>, vector<1x128x128xf32>
    %194 = vector.shape_cast %193 : vector<1x128x128xf32> to vector<128x128xf32>
    %cst_144 = arith.constant dense<0.000000e+00> : vector<128x128xf32>
    %195 = tpu.matmul %192, %194, %cst_144 {dimension_numbers = #tpu.dot_dimension_numbers<[1], [0], [0], [1], [0, 0, 1, 1], [], []>} : vector<128x128xf32>, vector<128x128xf32>, vector<128x128xf32> -> vector<128x128xf32>
    %cst_145 = arith.constant dense<0.000000e+00> : vector<128x128xf32>
    %196 = tpu.matmul %0, %195, %cst_145 {dimension_numbers = #tpu.dot_dimension_numbers<[1], [0], [0], [1], [0, 0, 1, 1], [], []>} : vector<128x128xf32>, vector<128x128xf32>, vector<128x128xf32> -> vector<128x128xf32>
    %197 = vector.extract_strided_slice %160 {offsets = [0, 512], sizes = [128, 128], strides = [1, 1]} : vector<128x640xf32> to vector<128x128xf32>
    %198 = arith.addf %196, %197 : vector<128x128xf32>
    %cst_146 = arith.constant 0.000000e+00 : f32
    %199 = vector.broadcast %cst_146 : f32 to vector<128x128xf32>
    %200 = arith.maximumf %198, %199 : vector<128x128xf32>
    %c3_147 = arith.constant 3 : index
    %c0_148 = arith.constant 0 : index
    %c0_149 = arith.constant 0 : index
    %201 = vector.load %arg5[%c3_147, %c0_148, %c0_149] : memref<4x128x33xf32, #tpu.memory_space<vmem>>, vector<1x128x33xf32>
    %202 = vector.shape_cast %201 : vector<1x128x33xf32> to vector<128x33xf32>
    %cst_150 = arith.constant dense<0.000000e+00> : vector<128x33xf32>
    %203 = tpu.matmul %200, %202, %cst_150 {dimension_numbers = #tpu.dot_dimension_numbers<[1], [0], [0], [1], [0, 0, 1, 1], [], []>} : vector<128x128xf32>, vector<128x33xf32>, vector<128x33xf32> -> vector<128x33xf32>
    %c3_151 = arith.constant 3 : index
    %c0_152 = arith.constant 0 : index
    %c0_153 = arith.constant 0 : index
    %204 = vector.load %arg6[%c3_151, %c0_152, %c0_153] : memref<4x1x33xf32, #tpu.memory_space<vmem>>, vector<1x1x33xf32>
    %205 = vector.shape_cast %204 : vector<1x1x33xf32> to vector<1x33xf32>
    %206 = vector.broadcast %205 : vector<1x33xf32> to vector<128x33xf32>
    %207 = arith.addf %203, %206 : vector<128x33xf32>
    %cst_154 = arith.constant 0.000000e+00 : f32
    %208 = vector.broadcast %cst_154 : f32 to vector<128x33xf32>
    %209 = arith.maximumf %207, %208 : vector<128x33xf32>
    %c0_155 = arith.constant 0 : index
    %c0_156 = arith.constant 0 : index
    %210 = vector.load %arg7[%c0_155, %c0_156] : memref<128x33xf32, #tpu.memory_space<vmem>>, vector<128x33xf32>
    tpu.vector_store %arg7[%c0_155, %c0_156], %209 {strides = array<i32>} : memref<128x33xf32, #tpu.memory_space<vmem>>, vector<128x33xf32>,
    return
  }
}

</mosaic_0001>

<llo_original>
// kernel: gnn_arma_forward.1
$region0: #{gnn_arma_forward.1}
  #allocation0 [shape = 'u32[]', space=smem, size = 0x4, offset = 0x4, fixed_abs, tag = 'smem constant byte address 0x4 - core index']
  #allocation1 [shape = 'u32[144,128]{1,0:T(1,128)}', space=vmem, size = 0x12000, scoped, tag = 'internal scratch']
  %s0 = inlined_call_operand.vmem [shape: f32[128,128], index: 0, kind: input, shape index: {}]
  %s1 = inlined_call_operand.vmem [shape: f32[128,33], index: 1, kind: input, shape index: {}]
  %s2 = inlined_call_operand.vmem [shape: f32[4,33,128], index: 2, kind: input, shape index: {}]
  %s3 = inlined_call_operand.vmem [shape: f32[16,128,128], index: 3, kind: input, shape index: {}]
  %s4 = inlined_call_operand.vmem [shape: f32[4,33,640], index: 4, kind: input, shape index: {}]
  %s5 = inlined_call_operand.vmem [shape: f32[4,128,33], index: 5, kind: input, shape index: {}]
  %s6 = inlined_call_operand.vmem [shape: f32[4,1,33], index: 6, kind: input, shape index: {}]
  %s7 = inlined_call_operand.vmem [shape: f32[128,33], index: 7, kind: output, shape index: {}]
  %s8 = sld [smem:[#allocation0]]
  $region38: #{gnn_arma_forward.1} parent=0
    _
  %s10 = ssub.s32 1, %s8
  %s11 = scalar_select 0, %s10, %s8
  // Predicated region
  $region2: #{gnn_arma_forward.1} parent=0 // pred_check
    _
  $region3: #{gnn_arma_forward.1} parent=0 // pred_check_branch
    %13 = sbr.rel (0) target = $region5
  $region4: #{gnn_arma_forward.1} parent=0 // pred_region
    _
  $region5: #{gnn_arma_forward.1} parent=0 // pred_fallthru
    _
  // Predicated region
  $region6: #{gnn_arma_forward.1} parent=0 // pred_check
    _
  $region7: #{gnn_arma_forward.1} parent=0 // pred_check_branch
    %15 = sbr.rel (0) target = $region9
  $region8: #{gnn_arma_forward.1} parent=0 // pred_region
    _
  $region9: #{gnn_arma_forward.1} parent=0 // pred_fallthru
    _
  // Predicated region
  $region10: #{gnn_arma_forward.1} parent=0 // pred_check
    _
  $region11: #{gnn_arma_forward.1} parent=0 // pred_check_branch
    %17 = sbr.rel (0) target = $region13
  $region12: #{gnn_arma_forward.1} parent=0 // pred_region
    _
  $region13: #{gnn_arma_forward.1} parent=0 // pred_fallthru
    _
  // Predicated region
  $region14: #{gnn_arma_forward.1} parent=0 // pred_check
    _
  $region15: #{gnn_arma_forward.1} parent=0 // pred_check_branch
    %19 = sbr.rel (0) target = $region17
  $region16: #{gnn_arma_forward.1} parent=0 // pred_region
    _
  $region17: #{gnn_arma_forward.1} parent=0 // pred_fallthru
    _
  // Predicated region
  $region18: #{gnn_arma_forward.1} parent=0 // pred_check
    _
  $region19: #{gnn_arma_forward.1} parent=0 // pred_check_branch
    %21 = sbr.rel (0) target = $region21
  $region20: #{gnn_arma_forward.1} parent=0 // pred_region
    _
  $region21: #{gnn_arma_forward.1} parent=0 // pred_fallthru
    _
  // Predicated region
  $region22: #{gnn_arma_forward.1} parent=0 // pred_check
    _
  $region23: #{gnn_arma_forward.1} parent=0 // pred_check_branch
    %23 = sbr.rel (0) target = $region25
  $region24: #{gnn_arma_forward.1} parent=0 // pred_region
    _
  $region25: #{gnn_arma_forward.1} parent=0 // pred_fallthru
    _
  // Predicated region
  $region26: #{gnn_arma_forward.1} parent=0 // pred_check
    _
  $region27: #{gnn_arma_forward.1} parent=0 // pred_check_branch
    %25 = sbr.rel (0) target = $region29
  $region28: #{gnn_arma_forward.1} parent=0 // pred_region
    _
  $region29: #{gnn_arma_forward.1} parent=0 // pred_fallthru
    _
  %v26 = vld [vmem:[%s0] sm:$0xff]
  %v27 = vld [vmem:[%s0 + $0x8] sm:$0xff]
  %v28 = vld [vmem:[%s0 + $0x10] sm:$0xff]
  %v29 = vld [vmem:[%s0 + $0x18] sm:$0xff]
  %v30 = vld [vmem:[%s0 + $0x20] sm:$0xff]
  %v31 = vld [vmem:[%s0 + $0x28] sm:$0xff]
  %v32 = vld [vmem:[%s0 + $0x30] sm:$0xff]
  %v33 = vld [vmem:[%s0 + $0x38] sm:$0xff]
  %v34 = vld [vmem:[%s0 + $0x40] sm:$0xff]
  %v35 = vld [vmem:[%s0 + $0x48] sm:$0xff]
  %v36 = vld [vmem:[%s0 + $0x50] sm:$0xff]
  %v37 = vld [vmem:[%s0 + $0x58] sm:$0xff]
  %v38 = vld [vmem:[%s0 + $0x60] sm:$0xff]
  %v39 = vld [vmem:[%s0 + $0x68] sm:$0xff]
  %v40 = vld [vmem:[%s0 + $0x70] sm:$0xff]
  %v41 = vld [vmem:[%s0 + $0x78] sm:$0xff]
  %v42 = vld [vmem:[%s1] sm:$0xff]
  %v43 = vld [vmem:[%s1 + $0x8] sm:$0xff]
  %v44 = vld [vmem:[%s1 + $0x10] sm:$0xff]
  %v45 = vld [vmem:[%s1 + $0x18] sm:$0xff]
  %v46 = vld [vmem:[%s1 + $0x20] sm:$0xff]
  %v47 = vld [vmem:[%s1 + $0x28] sm:$0xff]
  %v48 = vld [vmem:[%s1 + $0x30] sm:$0xff]
  %v49 = vld [vmem:[%s1 + $0x38] sm:$0xff]
  %v50 = vld [vmem:[%s1 + $0x40] sm:$0xff]
  %v51 = vld [vmem:[%s1 + $0x48] sm:$0xff]
  %v52 = vld [vmem:[%s1 + $0x50] sm:$0xff]
  %v53 = vld [vmem:[%s1 + $0x58] sm:$0xff]
  %v54 = vld [vmem:[%s1 + $0x60] sm:$0xff]
  %v55 = vld [vmem:[%s1 + $0x68] sm:$0xff]
  %v56 = vld [vmem:[%s1 + $0x70] sm:$0xff]
  %v57 = vld [vmem:[%s1 + $0x78] sm:$0xff]
  %v58 = vld [vmem:[%s4] sm:$0xff]
  %v59 = vld [vmem:[%s4 + $0x8] sm:$0xff]
  %v60 = vld [vmem:[%s4 + $0x10] sm:$0xff]
  %v61 = vld [vmem:[%s4 + $0x18] sm:$0xff]
  %v62 = vld [vmem:[%s4 + $0x20] sm:$0xff]
  %v63 = vld [vmem:[%s4 + $0x28] sm:$0xff]
  %v64 = vld [vmem:[%s4 + $0x30] sm:$0xff]
  %v65 = vld [vmem:[%s4 + $0x38] sm:$0xff]
  %v66 = vld [vmem:[%s4 + $0x40] sm:$0xff]
  %v67 = vld [vmem:[%s4 + $0x48] sm:$0xff]
  %v68 = vld [vmem:[%s4 + $0x50] sm:$0xff]
  %v69 = vld [vmem:[%s4 + $0x58] sm:$0xff]
  %v70 = vld [vmem:[%s4 + $0x60] sm:$0xff]
  %v71 = vld [vmem:[%s4 + $0x68] sm:$0xff]
  %v72 = vld [vmem:[%s4 + $0x70] sm:$0xff]
  %v73 = vld [vmem:[%s4 + $0x78] sm:$0xff]
  %v74 = vld [vmem:[%s4 + $0x80] sm:$0xff]
  %v75 = vld [vmem:[%s4 + $0x88] sm:$0xff]
  %v76 = vld [vmem:[%s4 + $0x90] sm:$0xff]
  %v77 = vld [vmem:[%s4 + $0x98] sm:$0xff]
  %v78 = vld [vmem:[%s4 + $0xa0] sm:$0x1]
  %v79 = vld [vmem:[%s4 + $0xa8] sm:$0x1]
  %v80 = vld [vmem:[%s4 + $0xb0] sm:$0x1]
  %v81 = vld [vmem:[%s4 + $0xb8] sm:$0x1]
  %v82 = vld [vmem:[%s4 + $0xc0] sm:$0x1]
  %vm83 = vcmask 269312
  %v85 = vsel %vm83, %v42, 0
  %v88 = vsel %vm83, %v43, 0
  %v91 = vsel %vm83, %v44, 0
  %v94 = vsel %vm83, %v45, 0
  %v97 = vsel %vm83, %v46, 0
  %v100 = vsel %vm83, %v47, 0
  %v103 = vsel %vm83, %v48, 0
  %v106 = vsel %vm83, %v49, 0
  %v109 = vsel %vm83, %v50, 0
  %v112 = vsel %vm83, %v51, 0
  %v115 = vsel %vm83, %v52, 0
  %v118 = vsel %vm83, %v53, 0
  %v121 = vsel %vm83, %v54, 0
  %v124 = vsel %vm83, %v55, 0
  %v127 = vsel %vm83, %v56, 0
  %v130 = vsel %vm83, %v57, 0
  %vm132 = vcmask 1040384
  %v134 = vsel %vm132, %v78, 0
  %v137 = vsel %vm132, %v79, 0
  %v140 = vsel %vm132, %v80, 0
  %v143 = vsel %vm132, %v81, 0
  %v146 = vsel %vm132, %v82, 0
  %148 = vmatprep.subr.mxu0 %v59
  %149 = vmatpush1.msra.mxu0 %v58
  %150 = vmatprep.subr.mxu0 %v64
  %151 = vmatpush1.msra.mxu0 %v63
  %152 = vmatprep.subr.mxu0 %v69
  %153 = vmatpush1.msra.mxu0 %v68
  %154 = vmatprep.subr.mxu0 %v74
  %155 = vmatpush1.msra.mxu0 %v73
  %156 = vmatprep.subr.mxu0 %v137
  %157 = vmatpush1.msra.mxu0 %v134
  %158 = vmatprep.subr.mxu0 0.0
  %159 = vmatpush1.msra.mxu0 0.0
  %160 = vmatprep.subr.mxu0 0.0
  %161 = vmatpush1.msra.mxu0 0.0
  %162 = vmatprep.subr.mxu0 0.0
  %163 = vmatpush1.msra.mxu0 0.0
  %164 = vmatprep.subr.mxu0 0.0
  %165 = vmatpush1.msra.mxu0 0.0
  %166 = vmatprep.subr.mxu0 0.0
  %167 = vmatpush1.msra.mxu0 0.0
  %168 = vmatprep.subr.mxu0 0.0
  %169 = vmatpush1.msra.mxu0 0.0
  %170 = vmatprep.subr.mxu0 0.0
  %171 = vmatpush1.msra.mxu0 0.0
  %172 = vmatprep.subr.mxu0 0.0
  %173 = vmatpush1.msra.mxu0 0.0
  %174 = vmatprep.subr.mxu0 0.0
  %175 = vmatpush1.msra.mxu0 0.0
  %176 = vmatprep.subr.mxu0 0.0
  %177 = vmatpush1.msra.mxu0 0.0
  %178 = vmatprep.subr.mxu0 0.0
  %179 = vmatpush1.msra.mxu0 0.0
  %180 = vmatprep.subr.mxu0 0.0
  %181 = vmatpush1.msra.mxu0 0.0
  %182 = vmatprep.subr.mxu0 0.0
  %183 = vmatpush1.msra.mxu0 0.0
  %184 = vmatprep.subr.mxu0 0.0
  %185 = vmatpush1.msra.mxu0 0.0
  %186 = vmatprep.subr.mxu0 0.0
  %187 = vmatpush1.msra.mxu0 0.0
  %188 = vmatprep.subr.mxu0 0.0
  %189 = vmatpush1.msra.mxu0 0.0
  %190 = vmatprep.subr.mxu0 0.0
  %191 = vmatpush1.msra.mxu0 0.0
  %192 = vmatprep.subr.mxu0 0.0
  %193 = vmatpush1.msra.mxu0 0.0
  %194 = vmatprep.subr.mxu0 0.0
  %195 = vmatpush1.msra.mxu0 0.0
  %196 = vmatprep.subr.mxu0 0.0
  %197 = vmatpush1.msra.mxu0 0.0
  %198 = vmatprep.subr.mxu0 0.0
  %199 = vmatpush1.msra.mxu0 0.0
  %200 = vmatprep.subr.mxu0 0.0
  %201 = vmatpush1.msra.mxu0 0.0
  %202 = vmatprep.subr.mxu0 0.0
  %203 = vmatpush1.msra.mxu0 0.0
  %204 = vmatprep.subr.mxu0 0.0
  %205 = vmatpush1.msra.mxu0 0.0
  %206 = vmatprep.subr.mxu0 0.0
  %207 = vmatpush1.msra.mxu0 0.0
  %208 = vmatprep.subr.mxu0 0.0
  %209 = vmatpush1.msra.mxu0 0.0
  %210 = vmatprep.subr.mxu0 0.0
  %211 = vmatpush1.msra.mxu0 0.0
  %212 = vmatprep.mubr.f32.mxu0 0.0
  %213 = vmatmul.mubr.f32.gmra.mrb[0].mxu0 %v85
  %v214 = vpop.f32.mrb[0].mxu0
  %v215 = vadd.f32 0.0, %v214
  %v216 = vpop.f32.mrb[0].mxu0
  %v217 = vadd.f32 0.0, %v216
  %218 = vmatprep.mubr.f32.mxu0 0.0
  %219 = vmatmul.mubr.f32.gmra.mrb[0].mxu0 %v88
  %v220 = vpop.f32.mrb[0].mxu0
  %v221 = vadd.f32 0.0, %v220
  %v222 = vpop.f32.mrb[0].mxu0
  %v223 = vadd.f32 0.0, %v222
  %224 = vmatprep.mubr.f32.mxu0 0.0
  %225 = vmatmul.mubr.f32.gmra.mrb[0].mxu0 %v91
  %v226 = vpop.f32.mrb[0].mxu0
  %v227 = vadd.f32 0.0, %v226
  %v228 = vpop.f32.mrb[0].mxu0
  %v229 = vadd.f32 0.0, %v228
  %230 = vmatprep.mubr.f32.mxu0 0.0
  %231 = vmatmul.mubr.f32.gmra.mrb[0].mxu0 %v94
  %v232 = vpop.f32.mrb[0].mxu0
  %v233 = vadd.f32 0.0, %v232
  %v234 = vpop.f32.mrb[0].mxu0
  %v235 = vadd.f32 0.0, %v234
  %236 = vmatprep.mubr.f32.mxu0 0.0
  %237 = vmatmul.mubr.f32.gmra.mrb[0].mxu0 %v97
  %v238 = vpop.f32.mrb[0].mxu0
  %v239 = vadd.f32 0.0, %v238
  %v240 = vpop.f32.mrb[0].mxu0
  %v241 = vadd.f32 0.0, %v240
  %242 = vmatprep.mubr.f32.mxu0 0.0
  %243 = vmatmul.mubr.f32.gmra.mrb[0].mxu0 %v100
  %v244 = vpop.f32.mrb[0].mxu0
  %v245 = vadd.f32 0.0, %v244
  %v246 = vpop.f32.mrb[0].mxu0
  %v247 = vadd.f32 0.0, %v246
  %248 = vmatprep.mubr.f32.mxu0 0.0
  %249 = vmatmul.mubr.f32.gmra.mrb[0].mxu0 %v103
  %v250 = vpop.f32.mrb[0].mxu0
  %v251 = vadd.f32 0.0, %v250
  %v252 = vpop.f32.mrb[0].mxu0
  %v253 = vadd.f32 0.0, %v252
  %254 = vmatprep.mubr.f32.mxu0 0.0
  %255 = vmatmul.mubr.f32.gmra.mrb[0].mxu0 %v106
  %v256 = vpop.f32.mrb[0].mxu0
  %v257 = vadd.f32 0.0, %v256
  %v258 = vpop.f32.mrb[0].mxu0
  %v259 = vadd.f32 0.0, %v258
  %260 = vmatprep.mubr.f32.mxu0 0.0
  %261 = vmatmul.mubr.f32.gmra.mrb[0].mxu0 %v109
  %v262 = vpop.f32.mrb[0].mxu0
  %v263 = vadd.f32 0.0, %v262
  %v264 = vpop.f32.mrb[0].mxu0
  %v265 = vadd.f32 0.0, %v264
  %266 = vmatprep.mubr.f32.mxu0 0.0
  %267 = vmatmul.mubr.f32.gmra.mrb[0].mxu0 %v112
  %v268 = vpop.f32.mrb[0].mxu0
  %v269 = vadd.f32 0.0, %v268
  %v270 = vpop.f32.mrb[0].mxu0
  %v271 = vadd.f32 0.0, %v270
  %272 = vmatprep.mubr.f32.mxu0 0.0
  %273 = vmatmul.mubr.f32.gmra.mrb[0].mxu0 %v115
  %v274 = vpop.f32.mrb[0].mxu0
  %v275 = vadd.f32 0.0, %v274
  %v276 = vpop.f32.mrb[0].mxu0
  %v277 = vadd.f32 0.0, %v276
  %278 = vmatprep.mubr.f32.mxu0 0.0
  %279 = vmatmul.mubr.f32.gmra.mrb[0].mxu0 %v118
  %v280 = vpop.f32.mrb[0].mxu0
  %v281 = vadd.f32 0.0, %v280
  %v282 = vpop.f32.mrb[0].mxu0
  %v283 = vadd.f32 0.0, %v282
  %284 = vmatprep.mubr.f32.mxu0 0.0
  %285 = vmatmul.mubr.f32.gmra.mrb[0].mxu0 %v121
  %v286 = vpop.f32.mrb[0].mxu0
  %v287 = vadd.f32 0.0, %v286
  %v288 = vpop.f32.mrb[0].mxu0
  %v289 = vadd.f32 0.0, %v288
  %290 = vmatprep.mubr.f32.mxu0 0.0
  %291 = vmatmul.mubr.f32.gmra.mrb[0].mxu0 %v124
  %v292 = vpop.f32.mrb[0].mxu0
  %v293 = vadd.f32 0.0, %v292
  %v294 = vpop.f32.mrb[0].mxu0
  %v295 = vadd.f32 0.0, %v294
  %296 = vmatprep.mubr.f32.mxu0 0.0
  %297 = vmatmul.mubr.f32.gmra.mrb[0].mxu0 %v127
  %v298 = vpop.f32.mrb[0].mxu0
  %v299 = vadd.f32 0.0, %v298
  %v300 = vpop.f32.mrb[0].mxu0
  %v301 = vadd.f32 0.0, %v300
  %302 = vmatprep.mubr.f32.mxu0 0.0
  %303 = vmatmul.mubr.f32.gmra.mrb[0].mxu0 %v130
  %v304 = vpop.f32.mrb[0].mxu0
  %v305 = vadd.f32 0.0, %v304
  %v306 = vpop.f32.mrb[0].mxu0
  %v307 = vadd.f32 0.0, %v306
  %308 = vdwg.mxu0
  %309 = vmatprep.subr.mxu0 %v61
  %310 = vmatpush1.msra.mxu0 %v60
  %311 = vmatprep.subr.mxu0 %v66
  %312 = vmatpush1.msra.mxu0 %v65
  %313 = vmatprep.subr.mxu0 %v71
  %314 = vmatpush1.msra.mxu0 %v70
  %315 = vmatprep.subr.mxu0 %v76
  %316 = vmatpush1.msra.mxu0 %v75
  %317 = vmatprep.subr.mxu0 %v143
  %318 = vmatpush1.msra.mxu0 %v140
  %319 = vmatprep.subr.mxu0 0.0
  %320 = vmatpush1.msra.mxu0 0.0
  %321 = vmatprep.subr.mxu0 0.0
  %322 = vmatpush1.msra.mxu0 0.0
  %323 = vmatprep.subr.mxu0 0.0
  %324 = vmatpush1.msra.mxu0 0.0
  %325 = vmatprep.subr.mxu0 0.0
  %326 = vmatpush1.msra.mxu0 0.0
  %327 = vmatprep.subr.mxu0 0.0
  %328 = vmatpush1.msra.mxu0 0.0
  %329 = vmatprep.subr.mxu0 0.0
  %330 = vmatpush1.msra.mxu0 0.0
  %331 = vmatprep.subr.mxu0 0.0
  %332 = vmatpush1.msra.mxu0 0.0
  %333 = vmatprep.subr.mxu0 0.0
  %334 = vmatpush1.msra.mxu0 0.0
  %335 = vmatprep.subr.mxu0 0.0
  %336 = vmatpush1.msra.mxu0 0.0
  %337 = vmatprep.subr.mxu0 0.0
  %338 = vmatpush1.msra.mxu0 0.0
  %339 = vmatprep.subr.mxu0 0.0
  %340 = vmatpush1.msra.mxu0 0.0
  %341 = vmatprep.subr.mxu0 0.0
  %342 = vmatpush1.msra.mxu0 0.0
  %343 = vmatprep.subr.mxu0 0.0
  %344 = vmatpush1.msra.mxu0 0.0
  %345 = vmatprep.subr.mxu0 0.0
  %346 = vmatpush1.msra.mxu0 0.0
  %347 = vmatprep.subr.mxu0 0.0
  %348 = vmatpush1.msra.mxu0 0.0
  %349 = vmatprep.subr.mxu0 0.0
  %350 = vmatpush1.msra.mxu0 0.0
  %351 = vmatprep.subr.mxu0 0.0
  %352 = vmatpush1.msra.mxu0 0.0
  %353 = vmatprep.subr.mxu0 0.0
  %354 = vmatpush1.msra.mxu0 0.0
  %355 = vmatprep.subr.mxu0 0.0
  %356 = vmatpush1.msra.mxu0 0.0
  %357 = vmatprep.subr.mxu0 0.0
  %358 = vmatpush1.msra.mxu0 0.0
  %359 = vmatprep.subr.mxu0 0.0
  %360 = vmatpush1.msra.mxu0 0.0
  %361 = vmatprep.subr.mxu0 0.0
  %362 = vmatpush1.msra.mxu0 0.0
  %363 = vmatprep.subr.mxu0 0.0
  %364 = vmatpush1.msra.mxu0 0.0
  %365 = vmatprep.subr.mxu0 0.0
  %366 = vmatpush1.msra.mxu0 0.0
  %367 = vmatprep.subr.mxu0 0.0
  %368 = vmatpush1.msra.mxu0 0.0
  %369 = vmatprep.subr.mxu0 0.0
  %370 = vmatpush1.msra.mxu0 0.0
  %371 = vmatprep.subr.mxu0 0.0
  %372 = vmatpush1.msra.mxu0 0.0
  %373 = vmatprep.mubr.f32.mxu0 0.0
  %374 = vmatmul.mubr.f32.gmra.mrb[0].mxu0 %v85
  %v375 = vpop.f32.mrb[0].mxu0
  %v376 = vadd.f32 0.0, %v375
  %v377 = vpop.f32.mrb[0].mxu0
  %v378 = vadd.f32 0.0, %v377
  %379 = vmatprep.mubr.f32.mxu0 0.0
  %380 = vmatmul.mubr.f32.gmra.mrb[0].mxu0 %v88
  %v381 = vpop.f32.mrb[0].mxu0
  %v382 = vadd.f32 0.0, %v381
  %v383 = vpop.f32.mrb[0].mxu0
  %v384 = vadd.f32 0.0, %v383
  %385 = vmatprep.mubr.f32.mxu0 0.0
  %386 = vmatmul.mubr.f32.gmra.mrb[0].mxu0 %v91
  %v387 = vpop.f32.mrb[0].mxu0
  %v388 = vadd.f32 0.0, %v387
  %v389 = vpop.f32.mrb[0].mxu0
  %v390 = vadd.f32 0.0, %v389
  %391 = vmatprep.mubr.f32.mxu0 0.0
  %392 = vmatmul.mubr.f32.gmra.mrb[0].mxu0 %v94
  %v393 = vpop.f32.mrb[0].mxu0
  %v394 = vadd.f32 0.0, %v393
  %v395 = vpop.f32.mrb[0].mxu0
  %v396 = vadd.f32 0.0, %v395
  %397 = vmatprep.mubr.f32.mxu0 0.0
  %398 = vmatmul.mubr.f32.gmra.mrb[0].mxu0 %v97
  %v399 = vpop.f32.mrb[0].mxu0
  %v400 = vadd.f32 0.0, %v399
  %v401 = vpop.f32.mrb[0].mxu0
  %v402 = vadd.f32 0.0, %v401
  %403 = vmatprep.mubr.f32.mxu0 0.0
  %404 = vmatmul.mubr.f32.gmra.mrb[0].mxu0 %v100
  %v405 = vpop.f32.mrb[0].mxu0
  %v406 = vadd.f32 0.0, %v405
  %v407 = vpop.f32.mrb[0].mxu0
  %v408 = vadd.f32 0.0, %v407
  %409 = vmatprep.mubr.f32.mxu0 0.0
  %410 = vmatmul.mubr.f32.gmra.mrb[0].mxu0 %v103
  %v411 = vpop.f32.mrb[0].mxu0
  %v412 = vadd.f32 0.0, %v411
  %v413 = vpop.f32.mrb[0].mxu0
  %v414 = vadd.f32 0.0, %v413
  %415 = vmatprep.mubr.f32.mxu0 0.0
  %416 = vmatmul.mubr.f32.gmra.mrb[0].mxu0 %v106
  %v417 = vpop.f32.mrb[0].mxu0
  %v418 = vadd.f32 0.0, %v417
  %v419 = vpop.f32.mrb[0].mxu0
  %v420 = vadd.f32 0.0, %v419
  %421 = vmatprep.mubr.f32.mxu0 0.0
  %422 = vmatmul.mubr.f32.gmra.mrb[0].mxu0 %v109
  %v423 = vpop.f32.mrb[0].mxu0
  %v424 = vadd.f32 0.0, %v423
  %v425 = vpop.f32.mrb[0].mxu0
  %v426 = vadd.f32 0.0, %v425
  %427 = vmatprep.mubr.f32.mxu0 0.0
  %428 = vmatmul.mubr.f32.gmra.mrb[0].mxu0 %v112
  %v429 = vpop.f32.mrb[0].mxu0
  %v430 = vadd.f32 0.0, %v429
  %v431 = vpop.f32.mrb[0].mxu0
  %v432 = vadd.f32 0.0, %v431
  %433 = vmatprep.mubr.f32.mxu0 0.0
  %434 = vmatmul.mubr.f32.gmra.mrb[0].mxu0 %v115
  %v435 = vpop.f32.mrb[0].mxu0
  %v436 = vadd.f32 0.0, %v435
  %v437 = vpop.f32.mrb[0].mxu0
  %v438 = vadd.f32 0.0, %v437
  %439 = vmatprep.mubr.f32.mxu0 0.0
  %440 = vmatmul.mubr.f32.gmra.mrb[0].mxu0 %v118
  %v441 = vpop.f32.mrb[0].mxu0
  %v442 = vadd.f32 0.0, %v441
  %v443 = vpop.f32.mrb[0].mxu0
  %v444 = vadd.f32 0.0, %v443
  %445 = vmatprep.mubr.f32.mxu0 0.0
  %446 = vmatmul.mubr.f32.gmra.mrb[0].mxu0 %v121
  %v447 = vpop.f32.mrb[0].mxu0
  %v448 = vadd.f32 0.0, %v447
  %v449 = vpop.f32.mrb[0].mxu0
  %v450 = vadd.f32 0.0, %v449
  %451 = vmatprep.mubr.f32.mxu0 0.0
  %452 = vmatmul.mubr.f32.gmra.mrb[0].mxu0 %v124
  %v453 = vpop.f32.mrb[0].mxu0
  %v454 = vadd.f32 0.0, %v453
  %v455 = vpop.f32.mrb[0].mxu0
  %v456 = vadd.f32 0.0, %v455
  %457 = vmatprep.mubr.f32.mxu0 0.0
  %458 = vmatmul.mubr.f32.gmra.mrb[0].mxu0 %v127
  %v459 = vpop.f32.mrb[0].mxu0
  %v460 = vadd.f32 0.0, %v459
  %v461 = vpop.f32.mrb[0].mxu0
  %v462 = vadd.f32 0.0, %v461
  %463 = vmatprep.mubr.f32.mxu0 0.0
  %464 = vmatmul.mubr.f32.gmra.mrb[0].mxu0 %v130
  %v465 = vpop.f32.mrb[0].mxu0
  %v466 = vadd.f32 0.0, %v465
  %v467 = vpop.f32.mrb[0].mxu0
  %v468 = vadd.f32 0.0, %v467
  %469 = vdwg.mxu0
  %470 = vmatprep.subr.mxu0 0.0
  %471 = vmatpush1.msra.mxu0 %v62
  %472 = vmatprep.subr.mxu0 0.0
  %473 = vmatpush1.msra.mxu0 %v67
  %474 = vmatprep.subr.mxu0 0.0
  %475 = vmatpush1.msra.mxu0 %v72
  %476 = vmatprep.subr.mxu0 0.0
  %477 = vmatpush1.msra.mxu0 %v77
  %478 = vmatprep.subr.mxu0 0.0
  %479 = vmatpush1.msra.mxu0 %v146
  %480 = vmatprep.subr.mxu0 0.0
  %481 = vmatpush1.msra.mxu0 0.0
  %482 = vmatprep.subr.mxu0 0.0
  %483 = vmatpush1.msra.mxu0 0.0
  %484 = vmatprep.subr.mxu0 0.0
  %485 = vmatpush1.msra.mxu0 0.0
  %486 = vmatprep.subr.mxu0 0.0
  %487 = vmatpush1.msra.mxu0 0.0
  %488 = vmatprep.subr.mxu0 0.0
  %489 = vmatpush1.msra.mxu0 0.0
  %490 = vmatprep.subr.mxu0 0.0
  %491 = vmatpush1.msra.mxu0 0.0
  %492 = vmatprep.subr.mxu0 0.0
  %493 = vmatpush1.msra.mxu0 0.0
  %494 = vmatprep.subr.mxu0 0.0
  %495 = vmatpush1.msra.mxu0 0.0
  %496 = vmatprep.subr.mxu0 0.0
  %497 = vmatpush1.msra.mxu0 0.0
  %498 = vmatprep.subr.mxu0 0.0
  %499 = vmatpush1.msra.mxu0 0.0
  %500 = vmatprep.subr.mxu0 0.0
  %501 = vmatpush1.msra.mxu0 0.0
  %502 = vmatprep.subr.mxu0 0.0
  %503 = vmatpush1.msra.mxu0 0.0
  %504 = vmatprep.subr.mxu0 0.0
  %505 = vmatpush1.msra.mxu0 0.0
  %506 = vmatprep.subr.mxu0 0.0
  %507 = vmatpush1.msra.mxu0 0.0
  %508 = vmatprep.subr.mxu0 0.0
  %509 = vmatpush1.msra.mxu0 0.0
  %510 = vmatprep.subr.mxu0 0.0
  %511 = vmatpush1.msra.mxu0 0.0
  %512 = vmatprep.subr.mxu0 0.0
  %513 = vmatpush1.msra.mxu0 0.0
  %514 = vmatprep.subr.mxu0 0.0
  %515 = vmatpush1.msra.mxu0 0.0
  %516 = vmatprep.subr.mxu0 0.0
  %517 = vmatpush1.msra.mxu0 0.0
  %518 = vmatprep.subr.mxu0 0.0
  %519 = vmatpush1.msra.mxu0 0.0
  %520 = vmatprep.subr.mxu0 0.0
  %521 = vmatpush1.msra.mxu0 0.0
  %522 = vmatprep.subr.mxu0 0.0
  %523 = vmatpush1.msra.mxu0 0.0
  %524 = vmatprep.subr.mxu0 0.0
  %525 = vmatpush1.msra.mxu0 0.0
  %526 = vmatprep.subr.mxu0 0.0
  %527 = vmatpush1.msra.mxu0 0.0
  %528 = vmatprep.subr.mxu0 0.0
  %529 = vmatpush1.msra.mxu0 0.0
  %530 = vmatprep.subr.mxu0 0.0
  %531 = vmatpush1.msra.mxu0 0.0
  %532 = vmatprep.subr.mxu0 0.0
  %533 = vmatpush1.msra.mxu0 0.0
  %534 = vmatprep.mubr.f32.mxu0 0.0
  %535 = vmatmul.mubr.f32.gmra.mrb[0].mxu0 %v85
  %v536 = vpop.f32.mrb[0].mxu0
  %v537 = vadd.f32 0.0, %v536
  %v538 = vpop.f32.mrb[0].mxu0
  %539 = vmatprep.mubr.f32.mxu0 0.0
  %540 = vmatmul.mubr.f32.gmra.mrb[0].mxu0 %v88
  %v541 = vpop.f32.mrb[0].mxu0
  %v542 = vadd.f32 0.0, %v541
  %v543 = vpop.f32.mrb[0].mxu0
  %544 = vmatprep.mubr.f32.mxu0 0.0
  %545 = vmatmul.mubr.f32.gmra.mrb[0].mxu0 %v91
  %v546 = vpop.f32.mrb[0].mxu0
  %v547 = vadd.f32 0.0, %v546
  %v548 = vpop.f32.mrb[0].mxu0
  %549 = vmatprep.mubr.f32.mxu0 0.0
  %550 = vmatmul.mubr.f32.gmra.mrb[0].mxu0 %v94
  %v551 = vpop.f32.mrb[0].mxu0
  %v552 = vadd.f32 0.0, %v551
  %v553 = vpop.f32.mrb[0].mxu0
  %554 = vmatprep.mubr.f32.mxu0 0.0
  %555 = vmatmul.mubr.f32.gmra.mrb[0].mxu0 %v97
  %v556 = vpop.f32.mrb[0].mxu0
  %v557 = vadd.f32 0.0, %v556
  %v558 = vpop.f32.mrb[0].mxu0
  %559 = vmatprep.mubr.f32.mxu0 0.0
  %560 = vmatmul.mubr.f32.gmra.mrb[0].mxu0 %v100
  %v561 = vpop.f32.mrb[0].mxu0
  %v562 = vadd.f32 0.0, %v561
  %v563 = vpop.f32.mrb[0].mxu0
  %564 = vmatprep.mubr.f32.mxu0 0.0
  %565 = vmatmul.mubr.f32.gmra.mrb[0].mxu0 %v103
  %v566 = vpop.f32.mrb[0].mxu0
  %v567 = vadd.f32 0.0, %v566
  %v568 = vpop.f32.mrb[0].mxu0
  %569 = vmatprep.mubr.f32.mxu0 0.0
  %570 = vmatmul.mubr.f32.gmra.mrb[0].mxu0 %v106
  %v571 = vpop.f32.mrb[0].mxu0
  %v572 = vadd.f32 0.0, %v571
  %v573 = vpop.f32.mrb[0].mxu0
  %574 = vmatprep.mubr.f32.mxu0 0.0
  %575 = vmatmul.mubr.f32.gmra.mrb[0].mxu0 %v109
  %v576 = vpop.f32.mrb[0].mxu0
  %v577 = vadd.f32 0.0, %v576
  %v578 = vpop.f32.mrb[0].mxu0
  %579 = vmatprep.mubr.f32.mxu0 0.0
  %580 = vmatmul.mubr.f32.gmra.mrb[0].mxu0 %v112
  %v581 = vpop.f32.mrb[0].mxu0
  %v582 = vadd.f32 0.0, %v581
  %v583 = vpop.f32.mrb[0].mxu0
  %584 = vmatprep.mubr.f32.mxu0 0.0
  %585 = vmatmul.mubr.f32.gmra.mrb[0].mxu0 %v115
  %v586 = vpop.f32.mrb[0].mxu0
  %v587 = vadd.f32 0.0, %v586
  %v588 = vpop.f32.mrb[0].mxu0
  %589 = vmatprep.mubr.f32.mxu0 0.0
  %590 = vmatmul.mubr.f32.gmra.mrb[0].mxu0 %v118
  %v591 = vpop.f32.mrb[0].mxu0
  %v592 = vadd.f32 0.0, %v591
  %v593 = vpop.f32.mrb[0].mxu0
  %594 = vmatprep.mubr.f32.mxu0 0.0
  %595 = vmatmul.mubr.f32.gmra.mrb[0].mxu0 %v121
  %v596 = vpop.f32.mrb[0].mxu0
  %v597 = vadd.f32 0.0, %v596
  %v598 = vpop.f32.mrb[0].mxu0
  %599 = vmatprep.mubr.f32.mxu0 0.0
  %600 = vmatmul.mubr.f32.gmra.mrb[0].mxu0 %v124
  %v601 = vpop.f32.mrb[0].mxu0
  %v602 = vadd.f32 0.0, %v601
  %v603 = vpop.f32.mrb[0].mxu0
  %604 = vmatprep.mubr.f32.mxu0 0.0
  %605 = vmatmul.mubr.f32.gmra.mrb[0].mxu0 %v127
  %v606 = vpop.f32.mrb[0].mxu0
  %v607 = vadd.f32 0.0, %v606
  %v608 = vpop.f32.mrb[0].mxu0
  %609 = vmatprep.mubr.f32.mxu0 0.0
  %610 = vmatmul.mubr.f32.gmra.mrb[0].mxu0 %v130
  %v611 = vpop.f32.mrb[0].mxu0
  %v612 = vadd.f32 0.0, %v611
  %v613 = vpop.f32.mrb[0].mxu0
  %614 = vdwg.mxu0
  %v615 = vld [vmem:[%s2] sm:$0xff]
  %v616 = vld [vmem:[%s2 + $0x8] sm:$0xff]
  %v617 = vld [vmem:[%s2 + $0x10] sm:$0xff]
  %v618 = vld [vmem:[%s2 + $0x18] sm:$0xff]
  %v619 = vld [vmem:[%s2 + $0x20] sm:$0x1]
  %v621 = vsel %vm132, %v619, 0
  %623 = vmatprep.subr.mxu0 0.0
  %624 = vmatpush1.msra.mxu0 %v615
  %625 = vmatprep.subr.mxu0 0.0
  %626 = vmatpush1.msra.mxu0 %v616
  %627 = vmatprep.subr.mxu0 0.0
  %628 = vmatpush1.msra.mxu0 %v617
  %629 = vmatprep.subr.mxu0 0.0
  %630 = vmatpush1.msra.mxu0 %v618
  %631 = vmatprep.subr.mxu0 0.0
  %632 = vmatpush1.msra.mxu0 %v621
  %633 = vmatprep.subr.mxu0 0.0
  %634 = vmatpush1.msra.mxu0 0.0
  %635 = vmatprep.subr.mxu0 0.0
  %636 = vmatpush1.msra.mxu0 0.0
  %637 = vmatprep.subr.mxu0 0.0
  %638 = vmatpush1.msra.mxu0 0.0
  %639 = vmatprep.subr.mxu0 0.0
  %640 = vmatpush1.msra.mxu0 0.0
  %641 = vmatprep.subr.mxu0 0.0
  %642 = vmatpush1.msra.mxu0 0.0
  %643 = vmatprep.subr.mxu0 0.0
  %644 = vmatpush1.msra.mxu0 0.0
  %645 = vmatprep.subr.mxu0 0.0
  %646 = vmatpush1.msra.mxu0 0.0
  %647 = vmatprep.subr.mxu0 0.0
  %648 = vmatpush1.msra.mxu0 0.0
  %649 = vmatprep.subr.mxu0 0.0
  %650 = vmatpush1.msra.mxu0 0.0
  %651 = vmatprep.subr.mxu0 0.0
  %652 = vmatpush1.msra.mxu0 0.0
  %653 = vmatprep.subr.mxu0 0.0
  %654 = vmatpush1.msra.mxu0 0.0
  %655 = vmatprep.subr.mxu0 0.0
  %656 = vmatpush1.msra.mxu0 0.0
  %657 = vmatprep.subr.mxu0 0.0
  %658 = vmatpush1.msra.mxu0 0.0
  %659 = vmatprep.subr.mxu0 0.0
  %660 = vmatpush1.msra.mxu0 0.0
  %661 = vmatprep.subr.mxu0 0.0
  %662 = vmatpush1.msra.mxu0 0.0
  %663 = vmatprep.subr.mxu0 0.0
  %664 = vmatpush1.msra.mxu0 0.0
  %665 = vmatprep.subr.mxu0 0.0
  %666 = vmatpush1.msra.mxu0 0.0
  %667 = vmatprep.subr.mxu0 0.0
  %668 = vmatpush1.msra.mxu0 0.0
  %669 = vmatprep.subr.mxu0 0.0
  %670 = vmatpush1.msra.mxu0 0.0
  %671 = vmatprep.subr.mxu0 0.0
  %672 = vmatpush1.msra.mxu0 0.0
  %673 = vmatprep.subr.mxu0 0.0
  %674 = vmatpush1.msra.mxu0 0.0
  %675 = vmatprep.subr.mxu0 0.0
  %676 = vmatpush1.msra.mxu0 0.0
  %677 = vmatprep.subr.mxu0 0.0
  %678 = vmatpush1.msra.mxu0 0.0
  %679 = vmatprep.subr.mxu0 0.0
  %680 = vmatpush1.msra.mxu0 0.0
  %681 = vmatprep.subr.mxu0 0.0
  %682 = vmatpush1.msra.mxu0 0.0
  %683 = vmatprep.subr.mxu0 0.0
  %684 = vmatpush1.msra.mxu0 0.0
  %685 = vmatprep.subr.mxu0 0.0
  %686 = vmatpush1.msra.mxu0 0.0
  %687 = vmatprep.mubr.f32.mxu0 0.0
  %688 = vmatmul.mubr.f32.gmra.mrb[0].mxu0 %v85
  %v689 = vpop.f32.mrb[0].mxu0
  %v690 = vadd.f32 0.0, %v689
  %v691 = vpop.f32.mrb[0].mxu0
  %692 = vmatprep.mubr.f32.mxu0 0.0
  %693 = vmatmul.mubr.f32.gmra.mrb[0].mxu0 %v88
  %v694 = vpop.f32.mrb[0].mxu0
  %v695 = vadd.f32 0.0, %v694
  %v696 = vpop.f32.mrb[0].mxu0
  %697 = vmatprep.mubr.f32.mxu0 0.0
  %698 = vmatmul.mubr.f32.gmra.mrb[0].mxu0 %v91
  %v699 = vpop.f32.mrb[0].mxu0
  %v700 = vadd.f32 0.0, %v699
  %v701 = vpop.f32.mrb[0].mxu0
  %702 = vmatprep.mubr.f32.mxu0 0.0
  %703 = vmatmul.mubr.f32.gmra.mrb[0].mxu0 %v94
  %v704 = vpop.f32.mrb[0].mxu0
  %v705 = vadd.f32 0.0, %v704
  %v706 = vpop.f32.mrb[0].mxu0
  %707 = vmatprep.mubr.f32.mxu0 0.0
  %708 = vmatmul.mubr.f32.gmra.mrb[0].mxu0 %v97
  %v709 = vpop.f32.mrb[0].mxu0
  %v710 = vadd.f32 0.0, %v709
  %v711 = vpop.f32.mrb[0].mxu0
  %712 = vmatprep.mubr.f32.mxu0 0.0
  %713 = vmatmul.mubr.f32.gmra.mrb[0].mxu0 %v100
  %v714 = vpop.f32.mrb[0].mxu0
  %v715 = vadd.f32 0.0, %v714
  %v716 = vpop.f32.mrb[0].mxu0
  %717 = vmatprep.mubr.f32.mxu0 0.0
  %718 = vmatmul.mubr.f32.gmra.mrb[0].mxu0 %v103
  %v719 = vpop.f32.mrb[0].mxu0
  %v720 = vadd.f32 0.0, %v719
  %v721 = vpop.f32.mrb[0].mxu0
  %722 = vmatprep.mubr.f32.mxu0 0.0
  %723 = vmatmul.mubr.f32.gmra.mrb[0].mxu0 %v106
  %v724 = vpop.f32.mrb[0].mxu0
  %v725 = vadd.f32 0.0, %v724
  %v726 = vpop.f32.mrb[0].mxu0
  %727 = vmatprep.mubr.f32.mxu0 0.0
  %728 = vmatmul.mubr.f32.gmra.mrb[0].mxu0 %v109
  %v729 = vpop.f32.mrb[0].mxu0
  %v730 = vadd.f32 0.0, %v729
  %v731 = vpop.f32.mrb[0].mxu0
  %732 = vmatprep.mubr.f32.mxu0 0.0
  %733 = vmatmul.mubr.f32.gmra.mrb[0].mxu0 %v112
  %v734 = vpop.f32.mrb[0].mxu0
  %v735 = vadd.f32 0.0, %v734
  %v736 = vpop.f32.mrb[0].mxu0
  %737 = vmatprep.mubr.f32.mxu0 0.0
  %738 = vmatmul.mubr.f32.gmra.mrb[0].mxu0 %v115
  %v739 = vpop.f32.mrb[0].mxu0
  %v740 = vadd.f32 0.0, %v739
  %v741 = vpop.f32.mrb[0].mxu0
  %742 = vmatprep.mubr.f32.mxu0 0.0
  %743 = vmatmul.mubr.f32.gmra.mrb[0].mxu0 %v118
  %v744 = vpop.f32.mrb[0].mxu0
  %v745 = vadd.f32 0.0, %v744
  %v746 = vpop.f32.mrb[0].mxu0
  %747 = vmatprep.mubr.f32.mxu0 0.0
  %748 = vmatmul.mubr.f32.gmra.mrb[0].mxu0 %v121
  %v749 = vpop.f32.mrb[0].mxu0
  %v750 = vadd.f32 0.0, %v749
  %v751 = vpop.f32.mrb[0].mxu0
  %752 = vmatprep.mubr.f32.mxu0 0.0
  %753 = vmatmul.mubr.f32.gmra.mrb[0].mxu0 %v124
  %v754 = vpop.f32.mrb[0].mxu0
  %v755 = vadd.f32 0.0, %v754
  %v756 = vpop.f32.mrb[0].mxu0
  %757 = vmatprep.mubr.f32.mxu0 0.0
  %758 = vmatmul.mubr.f32.gmra.mrb[0].mxu0 %v127
  %v759 = vpop.f32.mrb[0].mxu0
  %v760 = vadd.f32 0.0, %v759
  %v761 = vpop.f32.mrb[0].mxu0
  %762 = vmatprep.mubr.f32.mxu0 0.0
  %763 = vmatmul.mubr.f32.gmra.mrb[0].mxu0 %v130
  %v764 = vpop.f32.mrb[0].mxu0
  %v765 = vadd.f32 0.0, %v764
  %v766 = vpop.f32.mrb[0].mxu0
  %767 = vdwg.mxu0
  %768 = vmatprep.subr.mxu0 0.0
  %769 = vmatpush1.msra.mxu0 %v690
  %770 = vmatprep.subr.mxu0 0.0
  %771 = vmatpush1.msra.mxu0 %v695
  %772 = vmatprep.subr.mxu0 0.0
  %773 = vmatpush1.msra.mxu0 %v700
  %774 = vmatprep.subr.mxu0 0.0
  %775 = vmatpush1.msra.mxu0 %v705
  %776 = vmatprep.subr.mxu0 0.0
  %777 = vmatpush1.msra.mxu0 %v710
  %778 = vmatprep.subr.mxu0 0.0
  %779 = vmatpush1.msra.mxu0 %v715
  %780 = vmatprep.subr.mxu0 0.0
  %781 = vmatpush1.msra.mxu0 %v720
  %782 = vmatprep.subr.mxu0 0.0
  %783 = vmatpush1.msra.mxu0 %v725
  %784 = vmatprep.subr.mxu0 0.0
  %785 = vmatpush1.msra.mxu0 %v730
  %786 = vmatprep.subr.mxu0 0.0
  %787 = vmatpush1.msra.mxu0 %v735
  %788 = vmatprep.subr.mxu0 0.0
  %789 = vmatpush1.msra.mxu0 %v740
  %790 = vmatprep.subr.mxu0 0.0
  %791 = vmatpush1.msra.mxu0 %v745
  %792 = vmatprep.subr.mxu0 0.0
  %793 = vmatpush1.msra.mxu0 %v750
  %794 = vmatprep.subr.mxu0 0.0
  %795 = vmatpush1.msra.mxu0 %v755
  %796 = vmatprep.subr.mxu0 0.0
  %797 = vmatpush1.msra.mxu0 %v760
  %798 = vmatprep.subr.mxu0 0.0
  %799 = vmatpush1.msra.mxu0 %v765
  %800 = vmatprep.subr.mxu0 0.0
  %801 = vmatpush1.msra.mxu0 0.0
  %802 = vmatprep.subr.mxu0 0.0
  %803 = vmatpush1.msra.mxu0 0.0
  %804 = vmatprep.subr.mxu0 0.0
  %805 = vmatpush1.msra.mxu0 0.0
  %806 = vmatprep.subr.mxu0 0.0
  %807 = vmatpush1.msra.mxu0 0.0
  %808 = vmatprep.subr.mxu0 0.0
  %809 = vmatpush1.msra.mxu0 0.0
  %810 = vmatprep.subr.mxu0 0.0
  %811 = vmatpush1.msra.mxu0 0.0
  %812 = vmatprep.subr.mxu0 0.0
  %813 = vmatpush1.msra.mxu0 0.0
  %814 = vmatprep.subr.mxu0 0.0
  %815 = vmatpush1.msra.mxu0 0.0
  %816 = vmatprep.subr.mxu0 0.0
  %817 = vmatpush1.msra.mxu0 0.0
  %818 = vmatprep.subr.mxu0 0.0
  %819 = vmatpush1.msra.mxu0 0.0
  %820 = vmatprep.subr.mxu0 0.0
  %821 = vmatpush1.msra.mxu0 0.0
  %822 = vmatprep.subr.mxu0 0.0
  %823 = vmatpush1.msra.mxu0 0.0
  %824 = vmatprep.subr.mxu0 0.0
  %825 = vmatpush1.msra.mxu0 0.0
  %826 = vmatprep.subr.mxu0 0.0
  %827 = vmatpush1.msra.mxu0 0.0
  %828 = vmatprep.subr.mxu0 0.0
  %829 = vmatpush1.msra.mxu0 0.0
  %830 = vmatprep.subr.mxu0 0.0
  %831 = vmatpush1.msra.mxu0 0.0
  %832 = vmatprep.mubr.f32.mxu0 0.0
  %833 = vmatmul.mubr.f32.gmra.mrb[0].mxu0 %v26
  %v834 = vpop.f32.mrb[0].mxu0
  %v835 = vadd.f32 %v215, %v834
  %v836 = vpop.f32.mrb[0].mxu0
  %837 = vmatprep.mubr.f32.mxu0 0.0
  %838 = vmatmul.mubr.f32.gmra.mrb[0].mxu0 %v27
  %v839 = vpop.f32.mrb[0].mxu0
  %v840 = vadd.f32 %v221, %v839
  %v841 = vpop.f32.mrb[0].mxu0
  %842 = vmatprep.mubr.f32.mxu0 0.0
  %843 = vmatmul.mubr.f32.gmra.mrb[0].mxu0 %v28
  %v844 = vpop.f32.mrb[0].mxu0
  %v845 = vadd.f32 %v227, %v844
  %v846 = vpop.f32.mrb[0].mxu0
  %847 = vmatprep.mubr.f32.mxu0 0.0
  %848 = vmatmul.mubr.f32.gmra.mrb[0].mxu0 %v29
  %v849 = vpop.f32.mrb[0].mxu0
  %v850 = vadd.f32 %v233, %v849
  %v851 = vpop.f32.mrb[0].mxu0
  %852 = vmatprep.mubr.f32.mxu0 0.0
  %853 = vmatmul.mubr.f32.gmra.mrb[0].mxu0 %v30
  %v854 = vpop.f32.mrb[0].mxu0
  %v855 = vadd.f32 %v239, %v854
  %v856 = vpop.f32.mrb[0].mxu0
  %857 = vmatprep.mubr.f32.mxu0 0.0
  %858 = vmatmul.mubr.f32.gmra.mrb[0].mxu0 %v31
  %v859 = vpop.f32.mrb[0].mxu0
  %v860 = vadd.f32 %v245, %v859
  %v861 = vpop.f32.mrb[0].mxu0
  %862 = vmatprep.mubr.f32.mxu0 0.0
  %863 = vmatmul.mubr.f32.gmra.mrb[0].mxu0 %v32
  %v864 = vpop.f32.mrb[0].mxu0
  %v865 = vadd.f32 %v251, %v864
  %v866 = vpop.f32.mrb[0].mxu0
  %867 = vmatprep.mubr.f32.mxu0 0.0
  %868 = vmatmul.mubr.f32.gmra.mrb[0].mxu0 %v33
  %v869 = vpop.f32.mrb[0].mxu0
  %v870 = vadd.f32 %v257, %v869
  %v871 = vpop.f32.mrb[0].mxu0
  %872 = vmatprep.mubr.f32.mxu0 0.0
  %873 = vmatmul.mubr.f32.gmra.mrb[0].mxu0 %v34
  %v874 = vpop.f32.mrb[0].mxu0
  %v875 = vadd.f32 %v263, %v874
  %v876 = vpop.f32.mrb[0].mxu0
  %877 = vmatprep.mubr.f32.mxu0 0.0
  %878 = vmatmul.mubr.f32.gmra.mrb[0].mxu0 %v35
  %v879 = vpop.f32.mrb[0].mxu0
  %v880 = vadd.f32 %v269, %v879
  %v881 = vpop.f32.mrb[0].mxu0
  %882 = vmatprep.mubr.f32.mxu0 0.0
  %883 = vmatmul.mubr.f32.gmra.mrb[0].mxu0 %v36
  %v884 = vpop.f32.mrb[0].mxu0
  %v885 = vadd.f32 %v275, %v884
  %v886 = vpop.f32.mrb[0].mxu0
  %887 = vmatprep.mubr.f32.mxu0 0.0
  %888 = vmatmul.mubr.f32.gmra.mrb[0].mxu0 %v37
  %v889 = vpop.f32.mrb[0].mxu0
  %v890 = vadd.f32 %v281, %v889
  %v891 = vpop.f32.mrb[0].mxu0
  %892 = vmatprep.mubr.f32.mxu0 0.0
  %893 = vmatmul.mubr.f32.gmra.mrb[0].mxu0 %v38
  %v894 = vpop.f32.mrb[0].mxu0
  %v895 = vadd.f32 %v287, %v894
  %v896 = vpop.f32.mrb[0].mxu0
  %897 = vmatprep.mubr.f32.mxu0 0.0
  %898 = vmatmul.mubr.f32.gmra.mrb[0].mxu0 %v39
  %v899 = vpop.f32.mrb[0].mxu0
  %v900 = vadd.f32 %v293, %v899
  %v901 = vpop.f32.mrb[0].mxu0
  %902 = vmatprep.mubr.f32.mxu0 0.0
  %903 = vmatmul.mubr.f32.gmra.mrb[0].mxu0 %v40
  %v904 = vpop.f32.mrb[0].mxu0
  %v905 = vadd.f32 %v299, %v904
  %v906 = vpop.f32.mrb[0].mxu0
  %907 = vmatprep.mubr.f32.mxu0 0.0
  %908 = vmatmul.mubr.f32.gmra.mrb[0].mxu0 %v41
  %v909 = vpop.f32.mrb[0].mxu0
  %v910 = vadd.f32 %v305, %v909
  %v911 = vpop.f32.mrb[0].mxu0
  %912 = vdwg.mxu0
  %v913 = vmax.f32 %v835, 0.0
  %v914 = vmax.f32 %v840, 0.0
  %v915 = vmax.f32 %v845, 0.0
  %v916 = vmax.f32 %v850, 0.0
  %v917 = vmax.f32 %v855, 0.0
  %v918 = vmax.f32 %v860, 0.0
  %v919 = vmax.f32 %v865, 0.0
  %v920 = vmax.f32 %v870, 0.0
  %v921 = vmax.f32 %v875, 0.0
  %v922 = vmax.f32 %v880, 0.0
  %v923 = vmax.f32 %v885, 0.0
  %v924 = vmax.f32 %v890, 0.0
  %v925 = vmax.f32 %v895, 0.0
  %v926 = vmax.f32 %v900, 0.0
  %v927 = vmax.f32 %v905, 0.0
  %v928 = vmax.f32 %v910, 0.0
  %v929 = vld [vmem:[%s3] sm:$0xff]
  %v930 = vld [vmem:[%s3 + $0x8] sm:$0xff]
  %v931 = vld [vmem:[%s3 + $0x10] sm:$0xff]
  %v932 = vld [vmem:[%s3 + $0x18] sm:$0xff]
  %v933 = vld [vmem:[%s3 + $0x20] sm:$0xff]
  %v934 = vld [vmem:[%s3 + $0x28] sm:$0xff]
  %v935 = vld [vmem:[%s3 + $0x30] sm:$0xff]
  %v936 = vld [vmem:[%s3 + $0x38] sm:$0xff]
  %v937 = vld [vmem:[%s3 + $0x40] sm:$0xff]
  %v938 = vld [vmem:[%s3 + $0x48] sm:$0xff]
  %v939 = vld [vmem:[%s3 + $0x50] sm:$0xff]
  %v940 = vld [vmem:[%s3 + $0x58] sm:$0xff]
  %v941 = vld [vmem:[%s3 + $0x60] sm:$0xff]
  %v942 = vld [vmem:[%s3 + $0x68] sm:$0xff]
  %v943 = vld [vmem:[%s3 + $0x70] sm:$0xff]
  %v944 = vld [vmem:[%s3 + $0x78] sm:$0xff]
  %945 = vmatprep.subr.mxu0 0.0
  %946 = vmatpush1.msra.mxu0 %v929
  %947 = vmatprep.subr.mxu0 0.0
  %948 = vmatpush1.msra.mxu0 %v930
  %949 = vmatprep.subr.mxu0 0.0
  %950 = vmatpush1.msra.mxu0 %v931
  %951 = vmatprep.subr.mxu0 0.0
  %952 = vmatpush1.msra.mxu0 %v932
  %953 = vmatprep.subr.mxu0 0.0
  %954 = vmatpush1.msra.mxu0 %v933
  %955 = vmatprep.subr.mxu0 0.0
  %956 = vmatpush1.msra.mxu0 %v934
  %957 = vmatprep.subr.mxu0 0.0
  %958 = vmatpush1.msra.mxu0 %v935
  %959 = vmatprep.subr.mxu0 0.0
  %960 = vmatpush1.msra.mxu0 %v936
  %961 = vmatprep.subr.mxu0 0.0
  %962 = vmatpush1.msra.mxu0 %v937
  %963 = vmatprep.subr.mxu0 0.0
  %964 = vmatpush1.msra.mxu0 %v938
  %965 = vmatprep.subr.mxu0 0.0
  %966 = vmatpush1.msra.mxu0 %v939
  %967 = vmatprep.subr.mxu0 0.0
  %968 = vmatpush1.msra.mxu0 %v940
  %969 = vmatprep.subr.mxu0 0.0
  %970 = vmatpush1.msra.mxu0 %v941
  %971 = vmatprep.subr.mxu0 0.0
  %972 = vmatpush1.msra.mxu0 %v942
  %973 = vmatprep.subr.mxu0 0.0
  %974 = vmatpush1.msra.mxu0 %v943
  %975 = vmatprep.subr.mxu0 0.0
  %976 = vmatpush1.msra.mxu0 %v944
  %977 = vmatprep.subr.mxu0 0.0
  %978 = vmatpush1.msra.mxu0 0.0
  %979 = vmatprep.subr.mxu0 0.0
  %980 = vmatpush1.msra.mxu0 0.0
  %981 = vmatprep.subr.mxu0 0.0
  %982 = vmatpush1.msra.mxu0 0.0
  %983 = vmatprep.subr.mxu0 0.0
  %984 = vmatpush1.msra.mxu0 0.0
  %985 = vmatprep.subr.mxu0 0.0
  %986 = vmatpush1.msra.mxu0 0.0
  %987 = vmatprep.subr.mxu0 0.0
  %988 = vmatpush1.msra.mxu0 0.0
  %989 = vmatprep.subr.mxu0 0.0
  %990 = vmatpush1.msra.mxu0 0.0
  %991 = vmatprep.subr.mxu0 0.0
  %992 = vmatpush1.msra.mxu0 0.0
  %993 = vmatprep.subr.mxu0 0.0
  %994 = vmatpush1.msra.mxu0 0.0
  %995 = vmatprep.subr.mxu0 0.0
  %996 = vmatpush1.msra.mxu0 0.0
  %997 = vmatprep.subr.mxu0 0.0
  %998 = vmatpush1.msra.mxu0 0.0
  %999 = vmatprep.subr.mxu0 0.0
  %1000 = vmatpush1.msra.mxu0 0.0
  %1001 = vmatprep.subr.mxu0 0.0
  %1002 = vmatpush1.msra.mxu0 0.0
  %1003 = vmatprep.subr.mxu0 0.0
  %1004 = vmatpush1.msra.mxu0 0.0
  %1005 = vmatprep.subr.mxu0 0.0
  %1006 = vmatpush1.msra.mxu0 0.0
  %1007 = vmatprep.subr.mxu0 0.0
  %1008 = vmatpush1.msra.mxu0 0.0
  %1009 = vmatprep.mubr.f32.mxu0 0.0
  %1010 = vmatmul.mubr.f32.gmra.mrb[0].mxu0 %v913
  %v1011 = vpop.f32.mrb[0].mxu0
  %v1012 = vadd.f32 0.0, %v1011
  %v1013 = vpop.f32.mrb[0].mxu0
  %1014 = vmatprep.mubr.f32.mxu0 0.0
  %1015 = vmatmul.mubr.f32.gmra.mrb[0].mxu0 %v914
  %v1016 = vpop.f32.mrb[0].mxu0
  %v1017 = vadd.f32 0.0, %v1016
  %v1018 = vpop.f32.mrb[0].mxu0
  %1019 = vmatprep.mubr.f32.mxu0 0.0
  %1020 = vmatmul.mubr.f32.gmra.mrb[0].mxu0 %v915
  %v1021 = vpop.f32.mrb[0].mxu0
  %v1022 = vadd.f32 0.0, %v1021
  %v1023 = vpop.f32.mrb[0].mxu0
  %1024 = vmatprep.mubr.f32.mxu0 0.0
  %1025 = vmatmul.mubr.f32.gmra.mrb[0].mxu0 %v916
  %v1026 = vpop.f32.mrb[0].mxu0
  %v1027 = vadd.f32 0.0, %v1026
  %v1028 = vpop.f32.mrb[0].mxu0
  %1029 = vmatprep.mubr.f32.mxu0 0.0
  %1030 = vmatmul.mubr.f32.gmra.mrb[0].mxu0 %v917
  %v1031 = vpop.f32.mrb[0].mxu0
  %v1032 = vadd.f32 0.0, %v1031
  %v1033 = vpop.f32.mrb[0].mxu0
  %1034 = vmatprep.mubr.f32.mxu0 0.0
  %1035 = vmatmul.mubr.f32.gmra.mrb[0].mxu0 %v918
  %v1036 = vpop.f32.mrb[0].mxu0
  %v1037 = vadd.f32 0.0, %v1036
  %v1038 = vpop.f32.mrb[0].mxu0
  %1039 = vmatprep.mubr.f32.mxu0 0.0
  %1040 = vmatmul.mubr.f32.gmra.mrb[0].mxu0 %v919
  %v1041 = vpop.f32.mrb[0].mxu0
  %v1042 = vadd.f32 0.0, %v1041
  %v1043 = vpop.f32.mrb[0].mxu0
  %1044 = vmatprep.mubr.f32.mxu0 0.0
  %1045 = vmatmul.mubr.f32.gmra.mrb[0].mxu0 %v920
  %v1046 = vpop.f32.mrb[0].mxu0
  %v1047 = vadd.f32 0.0, %v1046
  %v1048 = vpop.f32.mrb[0].mxu0
  %1049 = vmatprep.mubr.f32.mxu0 0.0
  %1050 = vmatmul.mubr.f32.gmra.mrb[0].mxu0 %v921
  %v1051 = vpop.f32.mrb[0].mxu0
  %v1052 = vadd.f32 0.0, %v1051
  %v1053 = vpop.f32.mrb[0].mxu0
  %1054 = vmatprep.mubr.f32.mxu0 0.0
  %1055 = vmatmul.mubr.f32.gmra.mrb[0].mxu0 %v922
  %v1056 = vpop.f32.mrb[0].mxu0
  %v1057 = vadd.f32 0.0, %v1056
  %v1058 = vpop.f32.mrb[0].mxu0
  %1059 = vmatprep.mubr.f32.mxu0 0.0
  %1060 = vmatmul.mubr.f32.gmra.mrb[0].mxu0 %v923
  %v1061 = vpop.f32.mrb[0].mxu0
  %v1062 = vadd.f32 0.0, %v1061
  %v1063 = vpop.f32.mrb[0].mxu0
  %1064 = vmatprep.mubr.f32.mxu0 0.0
  %1065 = vmatmul.mubr.f32.gmra.mrb[0].mxu0 %v924
  %v1066 = vpop.f32.mrb[0].mxu0
  %v1067 = vadd.f32 0.0, %v1066
  %v1068 = vpop.f32.mrb[0].mxu0
  %1069 = vmatprep.mubr.f32.mxu0 0.0
  %1070 = vmatmul.mubr.f32.gmra.mrb[0].mxu0 %v925
  %v1071 = vpop.f32.mrb[0].mxu0
  %v1072 = vadd.f32 0.0, %v1071
  %v1073 = vpop.f32.mrb[0].mxu0
  %1074 = vmatprep.mubr.f32.mxu0 0.0
  %1075 = vmatmul.mubr.f32.gmra.mrb[0].mxu0 %v926
  %v1076 = vpop.f32.mrb[0].mxu0
  %v1077 = vadd.f32 0.0, %v1076
  %v1078 = vpop.f32.mrb[0].mxu0
  %1079 = vmatprep.mubr.f32.mxu0 0.0
  %1080 = vmatmul.mubr.f32.gmra.mrb[0].mxu0 %v927
  %v1081 = vpop.f32.mrb[0].mxu0
  %v1082 = vadd.f32 0.0, %v1081
  %v1083 = vpop.f32.mrb[0].mxu0
  %1084 = vmatprep.mubr.f32.mxu0 0.0
  %1085 = vmatmul.mubr.f32.gmra.mrb[0].mxu0 %v928
  %v1086 = vpop.f32.mrb[0].mxu0
  %v1087 = vadd.f32 0.0, %v1086
  %v1088 = vpop.f32.mrb[0].mxu0
  %1089 = vdwg.mxu0
  %1090 = vmatprep.subr.mxu0 0.0
  %1091 = vmatpush1.msra.mxu0 %v1012
  %1092 = vmatprep.subr.mxu0 0.0
  %1093 = vmatpush1.msra.mxu0 %v1017
  %1094 = vmatprep.subr.mxu0 0.0
  %1095 = vmatpush1.msra.mxu0 %v1022
  %1096 = vmatprep.subr.mxu0 0.0
  %1097 = vmatpush1.msra.mxu0 %v1027
  %1098 = vmatprep.subr.mxu0 0.0
  %1099 = vmatpush1.msra.mxu0 %v1032
  %1100 = vmatprep.subr.mxu0 0.0
  %1101 = vmatpush1.msra.mxu0 %v1037
  %1102 = vmatprep.subr.mxu0 0.0
  %1103 = vmatpush1.msra.mxu0 %v1042
  %1104 = vmatprep.subr.mxu0 0.0
  %1105 = vmatpush1.msra.mxu0 %v1047
  %1106 = vmatprep.subr.mxu0 0.0
  %1107 = vmatpush1.msra.mxu0 %v1052
  %1108 = vmatprep.subr.mxu0 0.0
  %1109 = vmatpush1.msra.mxu0 %v1057
  %1110 = vmatprep.subr.mxu0 0.0
  %1111 = vmatpush1.msra.mxu0 %v1062
  %1112 = vmatprep.subr.mxu0 0.0
  %1113 = vmatpush1.msra.mxu0 %v1067
  %1114 = vmatprep.subr.mxu0 0.0
  %1115 = vmatpush1.msra.mxu0 %v1072
  %1116 = vmatprep.subr.mxu0 0.0
  %1117 = vmatpush1.msra.mxu0 %v1077
  %1118 = vmatprep.subr.mxu0 0.0
  %1119 = vmatpush1.msra.mxu0 %v1082
  %1120 = vmatprep.subr.mxu0 0.0
  %1121 = vmatpush1.msra.mxu0 %v1087
  %1122 = vmatprep.subr.mxu0 0.0
  %1123 = vmatpush1.msra.mxu0 0.0
  %1124 = vmatprep.subr.mxu0 0.0
  %1125 = vmatpush1.msra.mxu0 0.0
  %1126 = vmatprep.subr.mxu0 0.0
  %1127 = vmatpush1.msra.mxu0 0.0
  %1128 = vmatprep.subr.mxu0 0.0
  %1129 = vmatpush1.msra.mxu0 0.0
  %1130 = vmatprep.subr.mxu0 0.0
  %1131 = vmatpush1.msra.mxu0 0.0
  %1132 = vmatprep.subr.mxu0 0.0
  %1133 = vmatpush1.msra.mxu0 0.0
  %1134 = vmatprep.subr.mxu0 0.0
  %1135 = vmatpush1.msra.mxu0 0.0
  %1136 = vmatprep.subr.mxu0 0.0
  %1137 = vmatpush1.msra.mxu0 0.0
  %1138 = vmatprep.subr.mxu0 0.0
  %1139 = vmatpush1.msra.mxu0 0.0
  %1140 = vmatprep.subr.mxu0 0.0
  %1141 = vmatpush1.msra.mxu0 0.0
  %1142 = vmatprep.subr.mxu0 0.0
  %1143 = vmatpush1.msra.mxu0 0.0
  %1144 = vmatprep.subr.mxu0 0.0
  %1145 = vmatpush1.msra.mxu0 0.0
  %1146 = vmatprep.subr.mxu0 0.0
  %1147 = vmatpush1.msra.mxu0 0.0
  %1148 = vmatprep.subr.mxu0 0.0
  %1149 = vmatpush1.msra.mxu0 0.0
  %1150 = vmatprep.subr.mxu0 0.0
  %1151 = vmatpush1.msra.mxu0 0.0
  %1152 = vmatprep.subr.mxu0 0.0
  %1153 = vmatpush1.msra.mxu0 0.0
  %1154 = vmatprep.mubr.f32.mxu0 0.0
  %1155 = vmatmul.mubr.f32.gmra.mrb[0].mxu0 %v26
  %v1156 = vpop.f32.mrb[0].mxu0
  %v1157 = vadd.f32 %v217, %v1156
  %v1158 = vpop.f32.mrb[0].mxu0
  %1159 = vmatprep.mubr.f32.mxu0 0.0
  %1160 = vmatmul.mubr.f32.gmra.mrb[0].mxu0 %v27
  %v1161 = vpop.f32.mrb[0].mxu0
  %v1162 = vadd.f32 %v223, %v1161
  %v1163 = vpop.f32.mrb[0].mxu0
  %1164 = vmatprep.mubr.f32.mxu0 0.0
  %1165 = vmatmul.mubr.f32.gmra.mrb[0].mxu0 %v28
  %v1166 = vpop.f32.mrb[0].mxu0
  %v1167 = vadd.f32 %v229, %v1166
  %v1168 = vpop.f32.mrb[0].mxu0
  %1169 = vmatprep.mubr.f32.mxu0 0.0
  %1170 = vmatmul.mubr.f32.gmra.mrb[0].mxu0 %v29
  %v1171 = vpop.f32.mrb[0].mxu0
  %v1172 = vadd.f32 %v235, %v1171
  %v1173 = vpop.f32.mrb[0].mxu0
  %1174 = vmatprep.mubr.f32.mxu0 0.0
  %1175 = vmatmul.mubr.f32.gmra.mrb[0].mxu0 %v30
  %v1176 = vpop.f32.mrb[0].mxu0
  %v1177 = vadd.f32 %v241, %v1176
  %v1178 = vpop.f32.mrb[0].mxu0
  %1179 = vmatprep.mubr.f32.mxu0 0.0
  %1180 = vmatmul.mubr.f32.gmra.mrb[0].mxu0 %v31
  %v1181 = vpop.f32.mrb[0].mxu0
  %v1182 = vadd.f32 %v247, %v1181
  %v1183 = vpop.f32.mrb[0].mxu0
  %1184 = vmatprep.mubr.f32.mxu0 0.0
  %1185 = vmatmul.mubr.f32.gmra.mrb[0].mxu0 %v32
  %v1186 = vpop.f32.mrb[0].mxu0
  %v1187 = vadd.f32 %v253, %v1186
  %v1188 = vpop.f32.mrb[0].mxu0
  %1189 = vmatprep.mubr.f32.mxu0 0.0
  %1190 = vmatmul.mubr.f32.gmra.mrb[0].mxu0 %v33
  %v1191 = vpop.f32.mrb[0].mxu0
  %v1192 = vadd.f32 %v259, %v1191
  %v1193 = vpop.f32.mrb[0].mxu0
  %1194 = vmatprep.mubr.f32.mxu0 0.0
  %1195 = vmatmul.mubr.f32.gmra.mrb[0].mxu0 %v34
  %v1196 = vpop.f32.mrb[0].mxu0
  %v1197 = vadd.f32 %v265, %v1196
  %v1198 = vpop.f32.mrb[0].mxu0
  %1199 = vmatprep.mubr.f32.mxu0 0.0
  %1200 = vmatmul.mubr.f32.gmra.mrb[0].mxu0 %v35
  %v1201 = vpop.f32.mrb[0].mxu0
  %v1202 = vadd.f32 %v271, %v1201
  %v1203 = vpop.f32.mrb[0].mxu0
  %1204 = vmatprep.mubr.f32.mxu0 0.0
  %1205 = vmatmul.mubr.f32.gmra.mrb[0].mxu0 %v36
  %v1206 = vpop.f32.mrb[0].mxu0
  %v1207 = vadd.f32 %v277, %v1206
  %v1208 = vpop.f32.mrb[0].mxu0
  %1209 = vmatprep.mubr.f32.mxu0 0.0
  %1210 = vmatmul.mubr.f32.gmra.mrb[0].mxu0 %v37
  %v1211 = vpop.f32.mrb[0].mxu0
  %v1212 = vadd.f32 %v283, %v1211
  %v1213 = vpop.f32.mrb[0].mxu0
  %1214 = vmatprep.mubr.f32.mxu0 0.0
  %1215 = vmatmul.mubr.f32.gmra.mrb[0].mxu0 %v38
  %v1216 = vpop.f32.mrb[0].mxu0
  %v1217 = vadd.f32 %v289, %v1216
  %v1218 = vpop.f32.mrb[0].mxu0
  %1219 = vmatprep.mubr.f32.mxu0 0.0
  %1220 = vmatmul.mubr.f32.gmra.mrb[0].mxu0 %v39
  %v1221 = vpop.f32.mrb[0].mxu0
  %v1222 = vadd.f32 %v295, %v1221
  %v1223 = vpop.f32.mrb[0].mxu0
  %1224 = vmatprep.mubr.f32.mxu0 0.0
  %1225 = vmatmul.mubr.f32.gmra.mrb[0].mxu0 %v40
  %v1226 = vpop.f32.mrb[0].mxu0
  %v1227 = vadd.f32 %v301, %v1226
  %v1228 = vpop.f32.mrb[0].mxu0
  %1229 = vmatprep.mubr.f32.mxu0 0.0
  %1230 = vmatmul.mubr.f32.gmra.mrb[0].mxu0 %v41
  %v1231 = vpop.f32.mrb[0].mxu0
  %v1232 = vadd.f32 %v307, %v1231
  %v1233 = vpop.f32.mrb[0].mxu0
  %1234 = vdwg.mxu0
  %v1235 = vmax.f32 %v1157, 0.0
  %v1236 = vmax.f32 %v1162, 0.0
  %v1237 = vmax.f32 %v1167, 0.0
  %v1238 = vmax.f32 %v1172, 0.0
  %v1239 = vmax.f32 %v1177, 0.0
  %v1240 = vmax.f32 %v1182, 0.0
  %v1241 = vmax.f32 %v1187, 0.0
  %v1242 = vmax.f32 %v1192, 0.0
  %v1243 = vmax.f32 %v1197, 0.0
  %v1244 = vmax.f32 %v1202, 0.0
  %v1245 = vmax.f32 %v1207, 0.0
  %v1246 = vmax.f32 %v1212, 0.0
  %v1247 = vmax.f32 %v1217, 0.0
  %v1248 = vmax.f32 %v1222, 0.0
  %v1249 = vmax.f32 %v1227, 0.0
  %v1250 = vmax.f32 %v1232, 0.0
  %s1251 = scalar_lea.vmem %s3, 128
  %v1252 = vld [vmem:[%s1251] sm:$0xff]
  %v1253 = vld [vmem:[%s1251 + $0x8] sm:$0xff]
  %v1254 = vld [vmem:[%s1251 + $0x10] sm:$0xff]
  %v1255 = vld [vmem:[%s1251 + $0x18] sm:$0xff]
  %v1256 = vld [vmem:[%s1251 + $0x20] sm:$0xff]
  %v1257 = vld [vmem:[%s1251 + $0x28] sm:$0xff]
  %v1258 = vld [vmem:[%s1251 + $0x30] sm:$0xff]
  %v1259 = vld [vmem:[%s1251 + $0x38] sm:$0xff]
  %v1260 = vld [vmem:[%s1251 + $0x40] sm:$0xff]
  %v1261 = vld [vmem:[%s1251 + $0x48] sm:$0xff]
  %v1262 = vld [vmem:[%s1251 + $0x50] sm:$0xff]
  %v1263 = vld [vmem:[%s1251 + $0x58] sm:$0xff]
  %v1264 = vld [vmem:[%s1251 + $0x60] sm:$0xff]
  %v1265 = vld [vmem:[%s1251 + $0x68] sm:$0xff]
  %v1266 = vld [vmem:[%s1251 + $0x70] sm:$0xff]
  %v1267 = vld [vmem:[%s1251 + $0x78] sm:$0xff]
  %1268 = vmatprep.subr.mxu0 0.0
  %1269 = vmatpush1.msra.mxu0 %v1252
  %1270 = vmatprep.subr.mxu0 0.0
  %1271 = vmatpush1.msra.mxu0 %v1253
  %1272 = vmatprep.subr.mxu0 0.0
  %1273 = vmatpush1.msra.mxu0 %v1254
  %1274 = vmatprep.subr.mxu0 0.0
  %1275 = vmatpush1.msra.mxu0 %v1255
  %1276 = vmatprep.subr.mxu0 0.0
  %1277 = vmatpush1.msra.mxu0 %v1256
  %1278 = vmatprep.subr.mxu0 0.0
  %1279 = vmatpush1.msra.mxu0 %v1257
  %1280 = vmatprep.subr.mxu0 0.0
  %1281 = vmatpush1.msra.mxu0 %v1258
  %1282 = vmatprep.subr.mxu0 0.0
  %1283 = vmatpush1.msra.mxu0 %v1259
  %1284 = vmatprep.subr.mxu0 0.0
  %1285 = vmatpush1.msra.mxu0 %v1260
  %1286 = vmatprep.subr.mxu0 0.0
  %1287 = vmatpush1.msra.mxu0 %v1261
  %1288 = vmatprep.subr.mxu0 0.0
  %1289 = vmatpush1.msra.mxu0 %v1262
  %1290 = vmatprep.subr.mxu0 0.0
  %1291 = vmatpush1.msra.mxu0 %v1263
  %1292 = vmatprep.subr.mxu0 0.0
  %1293 = vmatpush1.msra.mxu0 %v1264
  %1294 = vmatprep.subr.mxu0 0.0
  %1295 = vmatpush1.msra.mxu0 %v1265
  %1296 = vmatprep.subr.mxu0 0.0
  %1297 = vmatpush1.msra.mxu0 %v1266
  %1298 = vmatprep.subr.mxu0 0.0
  %1299 = vmatpush1.msra.mxu0 %v1267
  %1300 = vmatprep.subr.mxu0 0.0
  %1301 = vmatpush1.msra.mxu0 0.0
  %1302 = vmatprep.subr.mxu0 0.0
  %1303 = vmatpush1.msra.mxu0 0.0
  %1304 = vmatprep.subr.mxu0 0.0
  %1305 = vmatpush1.msra.mxu0 0.0
  %1306 = vmatprep.subr.mxu0 0.0
  %1307 = vmatpush1.msra.mxu0 0.0
  %1308 = vmatprep.subr.mxu0 0.0
  %1309 = vmatpush1.msra.mxu0 0.0
  %1310 = vmatprep.subr.mxu0 0.0
  %1311 = vmatpush1.msra.mxu0 0.0
  %1312 = vmatprep.subr.mxu0 0.0
  %1313 = vmatpush1.msra.mxu0 0.0
  %1314 = vmatprep.subr.mxu0 0.0
  %1315 = vmatpush1.msra.mxu0 0.0
  %1316 = vmatprep.subr.mxu0 0.0
  %1317 = vmatpush1.msra.mxu0 0.0
  %1318 = vmatprep.subr.mxu0 0.0
  %1319 = vmatpush1.msra.mxu0 0.0
  %1320 = vmatprep.subr.mxu0 0.0
  %1321 = vmatpush1.msra.mxu0 0.0
  %1322 = vmatprep.subr.mxu0 0.0
  %1323 = vmatpush1.msra.mxu0 0.0
  %1324 = vmatprep.subr.mxu0 0.0
  %1325 = vmatpush1.msra.mxu0 0.0
  %1326 = vmatprep.subr.mxu0 0.0
  %1327 = vmatpush1.msra.mxu0 0.0
  %1328 = vmatprep.subr.mxu0 0.0
  %1329 = vmatpush1.msra.mxu0 0.0
  %1330 = vmatprep.subr.mxu0 0.0
  %1331 = vmatpush1.msra.mxu0 0.0
  %1332 = vmatprep.mubr.f32.mxu0 0.0
  %1333 = vmatmul.mubr.f32.gmra.mrb[0].mxu0 %v1235
  %v1334 = vpop.f32.mrb[0].mxu0
  %v1335 = vadd.f32 0.0, %v1334
  %v1336 = vpop.f32.mrb[0].mxu0
  %1337 = vmatprep.mubr.f32.mxu0 0.0
  %1338 = vmatmul.mubr.f32.gmra.mrb[0].mxu0 %v1236
  %v1339 = vpop.f32.mrb[0].mxu0
  %v1340 = vadd.f32 0.0, %v1339
  %v1341 = vpop.f32.mrb[0].mxu0
  %1342 = vmatprep.mubr.f32.mxu0 0.0
  %1343 = vmatmul.mubr.f32.gmra.mrb[0].mxu0 %v1237
  %v1344 = vpop.f32.mrb[0].mxu0
  %v1345 = vadd.f32 0.0, %v1344
  %v1346 = vpop.f32.mrb[0].mxu0
  %1347 = vmatprep.mubr.f32.mxu0 0.0
  %1348 = vmatmul.mubr.f32.gmra.mrb[0].mxu0 %v1238
  %v1349 = vpop.f32.mrb[0].mxu0
  %v1350 = vadd.f32 0.0, %v1349
  %v1351 = vpop.f32.mrb[0].mxu0
  %1352 = vmatprep.mubr.f32.mxu0 0.0
  %1353 = vmatmul.mubr.f32.gmra.mrb[0].mxu0 %v1239
  %v1354 = vpop.f32.mrb[0].mxu0
  %v1355 = vadd.f32 0.0, %v1354
  %v1356 = vpop.f32.mrb[0].mxu0
  %1357 = vmatprep.mubr.f32.mxu0 0.0
  %1358 = vmatmul.mubr.f32.gmra.mrb[0].mxu0 %v1240
  %v1359 = vpop.f32.mrb[0].mxu0
  %v1360 = vadd.f32 0.0, %v1359
  %v1361 = vpop.f32.mrb[0].mxu0
  %1362 = vmatprep.mubr.f32.mxu0 0.0
  %1363 = vmatmul.mubr.f32.gmra.mrb[0].mxu0 %v1241
  %v1364 = vpop.f32.mrb[0].mxu0
  %v1365 = vadd.f32 0.0, %v1364
  %v1366 = vpop.f32.mrb[0].mxu0
  %1367 = vmatprep.mubr.f32.mxu0 0.0
  %1368 = vmatmul.mubr.f32.gmra.mrb[0].mxu0 %v1242
  %v1369 = vpop.f32.mrb[0].mxu0
  %v1370 = vadd.f32 0.0, %v1369
  %v1371 = vpop.f32.mrb[0].mxu0
  %1372 = vmatprep.mubr.f32.mxu0 0.0
  %1373 = vmatmul.mubr.f32.gmra.mrb[0].mxu0 %v1243
  %v1374 = vpop.f32.mrb[0].mxu0
  %v1375 = vadd.f32 0.0, %v1374
  %v1376 = vpop.f32.mrb[0].mxu0
  %1377 = vmatprep.mubr.f32.mxu0 0.0
  %1378 = vmatmul.mubr.f32.gmra.mrb[0].mxu0 %v1244
  %v1379 = vpop.f32.mrb[0].mxu0
  %v1380 = vadd.f32 0.0, %v1379
  %v1381 = vpop.f32.mrb[0].mxu0
  %1382 = vmatprep.mubr.f32.mxu0 0.0
  %1383 = vmatmul.mubr.f32.gmra.mrb[0].mxu0 %v1245
  %v1384 = vpop.f32.mrb[0].mxu0
  %v1385 = vadd.f32 0.0, %v1384
  %v1386 = vpop.f32.mrb[0].mxu0
  %1387 = vmatprep.mubr.f32.mxu0 0.0
  %1388 = vmatmul.mubr.f32.gmra.mrb[0].mxu0 %v1246
  %v1389 = vpop.f32.mrb[0].mxu0
  %v1390 = vadd.f32 0.0, %v1389
  %v1391 = vpop.f32.mrb[0].mxu0
  %1392 = vmatprep.mubr.f32.mxu0 0.0
  %1393 = vmatmul.mubr.f32.gmra.mrb[0].mxu0 %v1247
  %v1394 = vpop.f32.mrb[0].mxu0
  %v1395 = vadd.f32 0.0, %v1394
  %v1396 = vpop.f32.mrb[0].mxu0
  %1397 = vmatprep.mubr.f32.mxu0 0.0
  %1398 = vmatmul.mubr.f32.gmra.mrb[0].mxu0 %v1248
  %v1399 = vpop.f32.mrb[0].mxu0
  %v1400 = vadd.f32 0.0, %v1399
  %v1401 = vpop.f32.mrb[0].mxu0
  %1402 = vmatprep.mubr.f32.mxu0 0.0
  %1403 = vmatmul.mubr.f32.gmra.mrb[0].mxu0 %v1249
  %v1404 = vpop.f32.mrb[0].mxu0
  %v1405 = vadd.f32 0.0, %v1404
  %v1406 = vpop.f32.mrb[0].mxu0
  %1407 = vmatprep.mubr.f32.mxu0 0.0
  %1408 = vmatmul.mubr.f32.gmra.mrb[0].mxu0 %v1250
  %v1409 = vpop.f32.mrb[0].mxu0
  %v1410 = vadd.f32 0.0, %v1409
  %v1411 = vpop.f32.mrb[0].mxu0
  %1412 = vdwg.mxu0
  %1413 = vmatprep.subr.mxu0 0.0
  %1414 = vmatpush1.msra.mxu0 %v1335
  %1415 = vmatprep.subr.mxu0 0.0
  %1416 = vmatpush1.msra.mxu0 %v1340
  %1417 = vmatprep.subr.mxu0 0.0
  %1418 = vmatpush1.msra.mxu0 %v1345
  %1419 = vmatprep.subr.mxu0 0.0
  %1420 = vmatpush1.msra.mxu0 %v1350
  %1421 = vmatprep.subr.mxu0 0.0
  %1422 = vmatpush1.msra.mxu0 %v1355
  %1423 = vmatprep.subr.mxu0 0.0
  %1424 = vmatpush1.msra.mxu0 %v1360
  %1425 = vmatprep.subr.mxu0 0.0
  %1426 = vmatpush1.msra.mxu0 %v1365
  %1427 = vmatprep.subr.mxu0 0.0
  %1428 = vmatpush1.msra.mxu0 %v1370
  %1429 = vmatprep.subr.mxu0 0.0
  %1430 = vmatpush1.msra.mxu0 %v1375
  %1431 = vmatprep.subr.mxu0 0.0
  %1432 = vmatpush1.msra.mxu0 %v1380
  %1433 = vmatprep.subr.mxu0 0.0
  %1434 = vmatpush1.msra.mxu0 %v1385
  %1435 = vmatprep.subr.mxu0 0.0
  %1436 = vmatpush1.msra.mxu0 %v1390
  %1437 = vmatprep.subr.mxu0 0.0
  %1438 = vmatpush1.msra.mxu0 %v1395
  %1439 = vmatprep.subr.mxu0 0.0
  %1440 = vmatpush1.msra.mxu0 %v1400
  %1441 = vmatprep.subr.mxu0 0.0
  %1442 = vmatpush1.msra.mxu0 %v1405
  %1443 = vmatprep.subr.mxu0 0.0
  %1444 = vmatpush1.msra.mxu0 %v1410
  %1445 = vmatprep.subr.mxu0 0.0
  %1446 = vmatpush1.msra.mxu0 0.0
  %1447 = vmatprep.subr.mxu0 0.0
  %1448 = vmatpush1.msra.mxu0 0.0
  %1449 = vmatprep.subr.mxu0 0.0
  %1450 = vmatpush1.msra.mxu0 0.0
  %1451 = vmatprep.subr.mxu0 0.0
  %1452 = vmatpush1.msra.mxu0 0.0
  %1453 = vmatprep.subr.mxu0 0.0
  %1454 = vmatpush1.msra.mxu0 0.0
  %1455 = vmatprep.subr.mxu0 0.0
  %1456 = vmatpush1.msra.mxu0 0.0
  %1457 = vmatprep.subr.mxu0 0.0
  %1458 = vmatpush1.msra.mxu0 0.0
  %1459 = vmatprep.subr.mxu0 0.0
  %1460 = vmatpush1.msra.mxu0 0.0
  %1461 = vmatprep.subr.mxu0 0.0
  %1462 = vmatpush1.msra.mxu0 0.0
  %1463 = vmatprep.subr.mxu0 0.0
  %1464 = vmatpush1.msra.mxu0 0.0
  %1465 = vmatprep.subr.mxu0 0.0
  %1466 = vmatpush1.msra.mxu0 0.0
  %1467 = vmatprep.subr.mxu0 0.0
  %1468 = vmatpush1.msra.mxu0 0.0
  %1469 = vmatprep.subr.mxu0 0.0
  %1470 = vmatpush1.msra.mxu0 0.0
  %1471 = vmatprep.subr.mxu0 0.0
  %1472 = vmatpush1.msra.mxu0 0.0
  %1473 = vmatprep.subr.mxu0 0.0
  %1474 = vmatpush1.msra.mxu0 0.0
  %1475 = vmatprep.subr.mxu0 0.0
  %1476 = vmatpush1.msra.mxu0 0.0
  %1477 = vmatprep.mubr.f32.mxu0 0.0
  %1478 = vmatmul.mubr.f32.gmra.mrb[0].mxu0 %v26
  %v1479 = vpop.f32.mrb[0].mxu0
  %v1480 = vadd.f32 %v376, %v1479
  %v1481 = vpop.f32.mrb[0].mxu0
  %1482 = vmatprep.mubr.f32.mxu0 0.0
  %1483 = vmatmul.mubr.f32.gmra.mrb[0].mxu0 %v27
  %v1484 = vpop.f32.mrb[0].mxu0
  %v1485 = vadd.f32 %v382, %v1484
  %v1486 = vpop.f32.mrb[0].mxu0
  %1487 = vmatprep.mubr.f32.mxu0 0.0
  %1488 = vmatmul.mubr.f32.gmra.mrb[0].mxu0 %v28
  %v1489 = vpop.f32.mrb[0].mxu0
  %v1490 = vadd.f32 %v388, %v1489
  %v1491 = vpop.f32.mrb[0].mxu0
  %1492 = vmatprep.mubr.f32.mxu0 0.0
  %1493 = vmatmul.mubr.f32.gmra.mrb[0].mxu0 %v29
  %v1494 = vpop.f32.mrb[0].mxu0
  %v1495 = vadd.f32 %v394, %v1494
  %v1496 = vpop.f32.mrb[0].mxu0
  %1497 = vmatprep.mubr.f32.mxu0 0.0
  %1498 = vmatmul.mubr.f32.gmra.mrb[0].mxu0 %v30
  %v1499 = vpop.f32.mrb[0].mxu0
  %v1500 = vadd.f32 %v400, %v1499
  %v1501 = vpop.f32.mrb[0].mxu0
  %1502 = vmatprep.mubr.f32.mxu0 0.0
  %1503 = vmatmul.mubr.f32.gmra.mrb[0].mxu0 %v31
  %v1504 = vpop.f32.mrb[0].mxu0
  %v1505 = vadd.f32 %v406, %v1504
  %v1506 = vpop.f32.mrb[0].mxu0
  %1507 = vmatprep.mubr.f32.mxu0 0.0
  %1508 = vmatmul.mubr.f32.gmra.mrb[0].mxu0 %v32
  %v1509 = vpop.f32.mrb[0].mxu0
  %v1510 = vadd.f32 %v412, %v1509
  %v1511 = vpop.f32.mrb[0].mxu0
  %1512 = vmatprep.mubr.f32.mxu0 0.0
  %1513 = vmatmul.mubr.f32.gmra.mrb[0].mxu0 %v33
  %v1514 = vpop.f32.mrb[0].mxu0
  %v1515 = vadd.f32 %v418, %v1514
  %v1516 = vpop.f32.mrb[0].mxu0
  %1517 = vmatprep.mubr.f32.mxu0 0.0
  %1518 = vmatmul.mubr.f32.gmra.mrb[0].mxu0 %v34
  %v1519 = vpop.f32.mrb[0].mxu0
  %v1520 = vadd.f32 %v424, %v1519
  %v1521 = vpop.f32.mrb[0].mxu0
  %1522 = vmatprep.mubr.f32.mxu0 0.0
  %1523 = vmatmul.mubr.f32.gmra.mrb[0].mxu0 %v35
  %v1524 = vpop.f32.mrb[0].mxu0
  %v1525 = vadd.f32 %v430, %v1524
  %v1526 = vpop.f32.mrb[0].mxu0
  %1527 = vmatprep.mubr.f32.mxu0 0.0
  %1528 = vmatmul.mubr.f32.gmra.mrb[0].mxu0 %v36
  %v1529 = vpop.f32.mrb[0].mxu0
  %v1530 = vadd.f32 %v436, %v1529
  %v1531 = vpop.f32.mrb[0].mxu0
  %1532 = vmatprep.mubr.f32.mxu0 0.0
  %1533 = vmatmul.mubr.f32.gmra.mrb[0].mxu0 %v37
  %v1534 = vpop.f32.mrb[0].mxu0
  %v1535 = vadd.f32 %v442, %v1534
  %v1536 = vpop.f32.mrb[0].mxu0
  %1537 = vmatprep.mubr.f32.mxu0 0.0
  %1538 = vmatmul.mubr.f32.gmra.mrb[0].mxu0 %v38
  %v1539 = vpop.f32.mrb[0].mxu0
  %v1540 = vadd.f32 %v448, %v1539
  %v1541 = vpop.f32.mrb[0].mxu0
  %1542 = vmatprep.mubr.f32.mxu0 0.0
  %1543 = vmatmul.mubr.f32.gmra.mrb[0].mxu0 %v39
  %v1544 = vpop.f32.mrb[0].mxu0
  %v1545 = vadd.f32 %v454, %v1544
  %v1546 = vpop.f32.mrb[0].mxu0
  %1547 = vmatprep.mubr.f32.mxu0 0.0
  %1548 = vmatmul.mubr.f32.gmra.mrb[0].mxu0 %v40
  %v1549 = vpop.f32.mrb[0].mxu0
  %v1550 = vadd.f32 %v460, %v1549
  %v1551 = vpop.f32.mrb[0].mxu0
  %1552 = vmatprep.mubr.f32.mxu0 0.0
  %1553 = vmatmul.mubr.f32.gmra.mrb[0].mxu0 %v41
  %v1554 = vpop.f32.mrb[0].mxu0
  %v1555 = vadd.f32 %v466, %v1554
  %v1556 = vpop.f32.mrb[0].mxu0
  %1557 = vdwg.mxu0
  %v1558 = vmax.f32 %v1480, 0.0
  %v1559 = vmax.f32 %v1485, 0.0
  %v1560 = vmax.f32 %v1490, 0.0
  %v1561 = vmax.f32 %v1495, 0.0
  %v1562 = vmax.f32 %v1500, 0.0
  %v1563 = vmax.f32 %v1505, 0.0
  %v1564 = vmax.f32 %v1510, 0.0
  %v1565 = vmax.f32 %v1515, 0.0
  %v1566 = vmax.f32 %v1520, 0.0
  %v1567 = vmax.f32 %v1525, 0.0
  %v1568 = vmax.f32 %v1530, 0.0
  %v1569 = vmax.f32 %v1535, 0.0
  %v1570 = vmax.f32 %v1540, 0.0
  %v1571 = vmax.f32 %v1545, 0.0
  %v1572 = vmax.f32 %v1550, 0.0
  %v1573 = vmax.f32 %v1555, 0.0
  %s1574 = scalar_lea.vmem %s3, 256
  %v1575 = vld [vmem:[%s1574] sm:$0xff]
  %v1576 = vld [vmem:[%s1574 + $0x8] sm:$0xff]
  %v1577 = vld [vmem:[%s1574 + $0x10] sm:$0xff]
  %v1578 = vld [vmem:[%s1574 + $0x18] sm:$0xff]
  %v1579 = vld [vmem:[%s1574 + $0x20] sm:$0xff]
  %v1580 = vld [vmem:[%s1574 + $0x28] sm:$0xff]
  %v1581 = vld [vmem:[%s1574 + $0x30] sm:$0xff]
  %v1582 = vld [vmem:[%s1574 + $0x38] sm:$0xff]
  %v1583 = vld [vmem:[%s1574 + $0x40] sm:$0xff]
  %v1584 = vld [vmem:[%s1574 + $0x48] sm:$0xff]
  %v1585 = vld [vmem:[%s1574 + $0x50] sm:$0xff]
  %v1586 = vld [vmem:[%s1574 + $0x58] sm:$0xff]
  %v1587 = vld [vmem:[%s1574 + $0x60] sm:$0xff]
  %v1588 = vld [vmem:[%s1574 + $0x68] sm:$0xff]
  %v1589 = vld [vmem:[%s1574 + $0x70] sm:$0xff]
  %v1590 = vld [vmem:[%s1574 + $0x78] sm:$0xff]
  %1591 = vmatprep.subr.mxu0 0.0
  %1592 = vmatpush1.msra.mxu0 %v1575
  %1593 = vmatprep.subr.mxu0 0.0
  %1594 = vmatpush1.msra.mxu0 %v1576
  %1595 = vmatprep.subr.mxu0 0.0
  %1596 = vmatpush1.msra.mxu0 %v1577
  %1597 = vmatprep.subr.mxu0 0.0
  %1598 = vmatpush1.msra.mxu0 %v1578
  %1599 = vmatprep.subr.mxu0 0.0
  %1600 = vmatpush1.msra.mxu0 %v1579
  %1601 = vmatprep.subr.mxu0 0.0
  %1602 = vmatpush1.msra.mxu0 %v1580
  %1603 = vmatprep.subr.mxu0 0.0
  %1604 = vmatpush1.msra.mxu0 %v1581
  %1605 = vmatprep.subr.mxu0 0.0
  %1606 = vmatpush1.msra.mxu0 %v1582
  %1607 = vmatprep.subr.mxu0 0.0
  %1608 = vmatpush1.msra.mxu0 %v1583
  %1609 = vmatprep.subr.mxu0 0.0
  %1610 = vmatpush1.msra.mxu0 %v1584
  %1611 = vmatprep.subr.mxu0 0.0
  %1612 = vmatpush1.msra.mxu0 %v1585
  %1613 = vmatprep.subr.mxu0 0.0
  %1614 = vmatpush1.msra.mxu0 %v1586
  %1615 = vmatprep.subr.mxu0 0.0
  %1616 = vmatpush1.msra.mxu0 %v1587
  %1617 = vmatprep.subr.mxu0 0.0
  %1618 = vmatpush1.msra.mxu0 %v1588
  %1619 = vmatprep.subr.mxu0 0.0
  %1620 = vmatpush1.msra.mxu0 %v1589
  %1621 = vmatprep.subr.mxu0 0.0
  %1622 = vmatpush1.msra.mxu0 %v1590
  %1623 = vmatprep.subr.mxu0 0.0
  %1624 = vmatpush1.msra.mxu0 0.0
  %1625 = vmatprep.subr.mxu0 0.0
  %1626 = vmatpush1.msra.mxu0 0.0
  %1627 = vmatprep.subr.mxu0 0.0
  %1628 = vmatpush1.msra.mxu0 0.0
  %1629 = vmatprep.subr.mxu0 0.0
  %1630 = vmatpush1.msra.mxu0 0.0
  %1631 = vmatprep.subr.mxu0 0.0
  %1632 = vmatpush1.msra.mxu0 0.0
  %1633 = vmatprep.subr.mxu0 0.0
  %1634 = vmatpush1.msra.mxu0 0.0
  %1635 = vmatprep.subr.mxu0 0.0
  %1636 = vmatpush1.msra.mxu0 0.0
  %1637 = vmatprep.subr.mxu0 0.0
  %1638 = vmatpush1.msra.mxu0 0.0
  %1639 = vmatprep.subr.mxu0 0.0
  %1640 = vmatpush1.msra.mxu0 0.0
  %1641 = vmatprep.subr.mxu0 0.0
  %1642 = vmatpush1.msra.mxu0 0.0
  %1643 = vmatprep.subr.mxu0 0.0
  %1644 = vmatpush1.msra.mxu0 0.0
  %1645 = vmatprep.subr.mxu0 0.0
  %1646 = vmatpush1.msra.mxu0 0.0
  %1647 = vmatprep.subr.mxu0 0.0
  %1648 = vmatpush1.msra.mxu0 0.0
  %1649 = vmatprep.subr.mxu0 0.0
  %1650 = vmatpush1.msra.mxu0 0.0
  %1651 = vmatprep.subr.mxu0 0.0
  %1652 = vmatpush1.msra.mxu0 0.0
  %1653 = vmatprep.subr.mxu0 0.0
  %1654 = vmatpush1.msra.mxu0 0.0
  %1655 = vmatprep.mubr.f32.mxu0 0.0
  %1656 = vmatmul.mubr.f32.gmra.mrb[0].mxu0 %v1558
  %v1657 = vpop.f32.mrb[0].mxu0
  %v1658 = vadd.f32 0.0, %v1657
  %v1659 = vpop.f32.mrb[0].mxu0
  %1660 = vmatprep.mubr.f32.mxu0 0.0
  %1661 = vmatmul.mubr.f32.gmra.mrb[0].mxu0 %v1559
  %v1662 = vpop.f32.mrb[0].mxu0
  %v1663 = vadd.f32 0.0, %v1662
  %v1664 = vpop.f32.mrb[0].mxu0
  %1665 = vmatprep.mubr.f32.mxu0 0.0
  %1666 = vmatmul.mubr.f32.gmra.mrb[0].mxu0 %v1560
  %v1667 = vpop.f32.mrb[0].mxu0
  %v1668 = vadd.f32 0.0, %v1667
  %v1669 = vpop.f32.mrb[0].mxu0
  %1670 = vmatprep.mubr.f32.mxu0 0.0
  %1671 = vmatmul.mubr.f32.gmra.mrb[0].mxu0 %v1561
  %v1672 = vpop.f32.mrb[0].mxu0
  %v1673 = vadd.f32 0.0, %v1672
  %v1674 = vpop.f32.mrb[0].mxu0
  %1675 = vmatprep.mubr.f32.mxu0 0.0
  %1676 = vmatmul.mubr.f32.gmra.mrb[0].mxu0 %v1562
  %v1677 = vpop.f32.mrb[0].mxu0
  %v1678 = vadd.f32 0.0, %v1677
  %v1679 = vpop.f32.mrb[0].mxu0
  %1680 = vmatprep.mubr.f32.mxu0 0.0
  %1681 = vmatmul.mubr.f32.gmra.mrb[0].mxu0 %v1563
  %v1682 = vpop.f32.mrb[0].mxu0
  %v1683 = vadd.f32 0.0, %v1682
  %v1684 = vpop.f32.mrb[0].mxu0
  %1685 = vmatprep.mubr.f32.mxu0 0.0
  %1686 = vmatmul.mubr.f32.gmra.mrb[0].mxu0 %v1564
  %v1687 = vpop.f32.mrb[0].mxu0
  %v1688 = vadd.f32 0.0, %v1687
  %v1689 = vpop.f32.mrb[0].mxu0
  %1690 = vmatprep.mubr.f32.mxu0 0.0
  %1691 = vmatmul.mubr.f32.gmra.mrb[0].mxu0 %v1565
  %v1692 = vpop.f32.mrb[0].mxu0
  %v1693 = vadd.f32 0.0, %v1692
  %v1694 = vpop.f32.mrb[0].mxu0
  %1695 = vmatprep.mubr.f32.mxu0 0.0
  %1696 = vmatmul.mubr.f32.gmra.mrb[0].mxu0 %v1566
  %v1697 = vpop.f32.mrb[0].mxu0
  %v1698 = vadd.f32 0.0, %v1697
  %v1699 = vpop.f32.mrb[0].mxu0
  %1700 = vmatprep.mubr.f32.mxu0 0.0
  %1701 = vmatmul.mubr.f32.gmra.mrb[0].mxu0 %v1567
  %v1702 = vpop.f32.mrb[0].mxu0
  %v1703 = vadd.f32 0.0, %v1702
  %v1704 = vpop.f32.mrb[0].mxu0
  %1705 = vmatprep.mubr.f32.mxu0 0.0
  %1706 = vmatmul.mubr.f32.gmra.mrb[0].mxu0 %v1568
  %v1707 = vpop.f32.mrb[0].mxu0
  %v1708 = vadd.f32 0.0, %v1707
  %v1709 = vpop.f32.mrb[0].mxu0
  %1710 = vmatprep.mubr.f32.mxu0 0.0
  %1711 = vmatmul.mubr.f32.gmra.mrb[0].mxu0 %v1569
  %v1712 = vpop.f32.mrb[0].mxu0
  %v1713 = vadd.f32 0.0, %v1712
  %v1714 = vpop.f32.mrb[0].mxu0
  %1715 = vmatprep.mubr.f32.mxu0 0.0
  %1716 = vmatmul.mubr.f32.gmra.mrb[0].mxu0 %v1570
  %v1717 = vpop.f32.mrb[0].mxu0
  %v1718 = vadd.f32 0.0, %v1717
  %v1719 = vpop.f32.mrb[0].mxu0
  %1720 = vmatprep.mubr.f32.mxu0 0.0
  %1721 = vmatmul.mubr.f32.gmra.mrb[0].mxu0 %v1571
  %v1722 = vpop.f32.mrb[0].mxu0
  %v1723 = vadd.f32 0.0, %v1722
  %v1724 = vpop.f32.mrb[0].mxu0
  %1725 = vmatprep.mubr.f32.mxu0 0.0
  %1726 = vmatmul.mubr.f32.gmra.mrb[0].mxu0 %v1572
  %v1727 = vpop.f32.mrb[0].mxu0
  %v1728 = vadd.f32 0.0, %v1727
  %v1729 = vpop.f32.mrb[0].mxu0
  %1730 = vmatprep.mubr.f32.mxu0 0.0
  %1731 = vmatmul.mubr.f32.gmra.mrb[0].mxu0 %v1573
  %v1732 = vpop.f32.mrb[0].mxu0
  %v1733 = vadd.f32 0.0, %v1732
  %v1734 = vpop.f32.mrb[0].mxu0
  %1735 = vdwg.mxu0
  %1736 = vmatprep.subr.mxu0 0.0
  %1737 = vmatpush1.msra.mxu0 %v1658
  %1738 = vmatprep.subr.mxu0 0.0
  %1739 = vmatpush1.msra.mxu0 %v1663
  %1740 = vmatprep.subr.mxu0 0.0
  %1741 = vmatpush1.msra.mxu0 %v1668
  %1742 = vmatprep.subr.mxu0 0.0
  %1743 = vmatpush1.msra.mxu0 %v1673
  %1744 = vmatprep.subr.mxu0 0.0
  %1745 = vmatpush1.msra.mxu0 %v1678
  %1746 = vmatprep.subr.mxu0 0.0
  %1747 = vmatpush1.msra.mxu0 %v1683
  %1748 = vmatprep.subr.mxu0 0.0
  %1749 = vmatpush1.msra.mxu0 %v1688
  %1750 = vmatprep.subr.mxu0 0.0
  %1751 = vmatpush1.msra.mxu0 %v1693
  %1752 = vmatprep.subr.mxu0 0.0
  %1753 = vmatpush1.msra.mxu0 %v1698
  %1754 = vmatprep.subr.mxu0 0.0
  %1755 = vmatpush1.msra.mxu0 %v1703
  %1756 = vmatprep.subr.mxu0 0.0
  %1757 = vmatpush1.msra.mxu0 %v1708
  %1758 = vmatprep.subr.mxu0 0.0
  %1759 = vmatpush1.msra.mxu0 %v1713
  %1760 = vmatprep.subr.mxu0 0.0
  %1761 = vmatpush1.msra.mxu0 %v1718
  %1762 = vmatprep.subr.mxu0 0.0
  %1763 = vmatpush1.msra.mxu0 %v1723
  %1764 = vmatprep.subr.mxu0 0.0
  %1765 = vmatpush1.msra.mxu0 %v1728
  %1766 = vmatprep.subr.mxu0 0.0
  %1767 = vmatpush1.msra.mxu0 %v1733
  %1768 = vmatprep.subr.mxu0 0.0
  %1769 = vmatpush1.msra.mxu0 0.0
  %1770 = vmatprep.subr.mxu0 0.0
  %1771 = vmatpush1.msra.mxu0 0.0
  %1772 = vmatprep.subr.mxu0 0.0
  %1773 = vmatpush1.msra.mxu0 0.0
  %1774 = vmatprep.subr.mxu0 0.0
  %1775 = vmatpush1.msra.mxu0 0.0
  %1776 = vmatprep.subr.mxu0 0.0
  %1777 = vmatpush1.msra.mxu0 0.0
  %1778 = vmatprep.subr.mxu0 0.0
  %1779 = vmatpush1.msra.mxu0 0.0
  %1780 = vmatprep.subr.mxu0 0.0
  %1781 = vmatpush1.msra.mxu0 0.0
  %1782 = vmatprep.subr.mxu0 0.0
  %1783 = vmatpush1.msra.mxu0 0.0
  %1784 = vmatprep.subr.mxu0 0.0
  %1785 = vmatpush1.msra.mxu0 0.0
  %1786 = vmatprep.subr.mxu0 0.0
  %1787 = vmatpush1.msra.mxu0 0.0
  %1788 = vmatprep.subr.mxu0 0.0
  %1789 = vmatpush1.msra.mxu0 0.0
  %1790 = vmatprep.subr.mxu0 0.0
  %1791 = vmatpush1.msra.mxu0 0.0
  %1792 = vmatprep.subr.mxu0 0.0
  %1793 = vmatpush1.msra.mxu0 0.0
  %1794 = vmatprep.subr.mxu0 0.0
  %1795 = vmatpush1.msra.mxu0 0.0
  %1796 = vmatprep.subr.mxu0 0.0
  %1797 = vmatpush1.msra.mxu0 0.0
  %1798 = vmatprep.subr.mxu0 0.0
  %1799 = vmatpush1.msra.mxu0 0.0
  %1800 = vmatprep.mubr.f32.mxu0 0.0
  %1801 = vmatmul.mubr.f32.gmra.mrb[0].mxu0 %v26
  %v1802 = vpop.f32.mrb[0].mxu0
  %v1803 = vadd.f32 %v378, %v1802
  %v1804 = vpop.f32.mrb[0].mxu0
  %1805 = vmatprep.mubr.f32.mxu0 0.0
  %1806 = vmatmul.mubr.f32.gmra.mrb[0].mxu0 %v27
  %v1807 = vpop.f32.mrb[0].mxu0
  %v1808 = vadd.f32 %v384, %v1807
  %v1809 = vpop.f32.mrb[0].mxu0
  %1810 = vmatprep.mubr.f32.mxu0 0.0
  %1811 = vmatmul.mubr.f32.gmra.mrb[0].mxu0 %v28
  %v1812 = vpop.f32.mrb[0].mxu0
  %v1813 = vadd.f32 %v390, %v1812
  %v1814 = vpop.f32.mrb[0].mxu0
  %1815 = vmatprep.mubr.f32.mxu0 0.0
  %1816 = vmatmul.mubr.f32.gmra.mrb[0].mxu0 %v29
  %v1817 = vpop.f32.mrb[0].mxu0
  %v1818 = vadd.f32 %v396, %v1817
  %v1819 = vpop.f32.mrb[0].mxu0
  %1820 = vmatprep.mubr.f32.mxu0 0.0
  %1821 = vmatmul.mubr.f32.gmra.mrb[0].mxu0 %v30
  %v1822 = vpop.f32.mrb[0].mxu0
  %v1823 = vadd.f32 %v402, %v1822
  %v1824 = vpop.f32.mrb[0].mxu0
  %1825 = vmatprep.mubr.f32.mxu0 0.0
  %1826 = vmatmul.mubr.f32.gmra.mrb[0].mxu0 %v31
  %v1827 = vpop.f32.mrb[0].mxu0
  %v1828 = vadd.f32 %v408, %v1827
  %v1829 = vpop.f32.mrb[0].mxu0
  %1830 = vmatprep.mubr.f32.mxu0 0.0
  %1831 = vmatmul.mubr.f32.gmra.mrb[0].mxu0 %v32
  %v1832 = vpop.f32.mrb[0].mxu0
  %v1833 = vadd.f32 %v414, %v1832
  %v1834 = vpop.f32.mrb[0].mxu0
  %1835 = vmatprep.mubr.f32.mxu0 0.0
  %1836 = vmatmul.mubr.f32.gmra.mrb[0].mxu0 %v33
  %v1837 = vpop.f32.mrb[0].mxu0
  %v1838 = vadd.f32 %v420, %v1837
  %v1839 = vpop.f32.mrb[0].mxu0
  %1840 = vmatprep.mubr.f32.mxu0 0.0
  %1841 = vmatmul.mubr.f32.gmra.mrb[0].mxu0 %v34
  %v1842 = vpop.f32.mrb[0].mxu0
  %v1843 = vadd.f32 %v426, %v1842
  %v1844 = vpop.f32.mrb[0].mxu0
  %1845 = vmatprep.mubr.f32.mxu0 0.0
  %1846 = vmatmul.mubr.f32.gmra.mrb[0].mxu0 %v35
  %v1847 = vpop.f32.mrb[0].mxu0
  %v1848 = vadd.f32 %v432, %v1847
  %v1849 = vpop.f32.mrb[0].mxu0
  %1850 = vmatprep.mubr.f32.mxu0 0.0
  %1851 = vmatmul.mubr.f32.gmra.mrb[0].mxu0 %v36
  %v1852 = vpop.f32.mrb[0].mxu0
  %v1853 = vadd.f32 %v438, %v1852
  %v1854 = vpop.f32.mrb[0].mxu0
  %1855 = vmatprep.mubr.f32.mxu0 0.0
  %1856 = vmatmul.mubr.f32.gmra.mrb[0].mxu0 %v37
  %v1857 = vpop.f32.mrb[0].mxu0
  %v1858 = vadd.f32 %v444, %v1857
  %v1859 = vpop.f32.mrb[0].mxu0
  %1860 = vmatprep.mubr.f32.mxu0 0.0
  %1861 = vmatmul.mubr.f32.gmra.mrb[0].mxu0 %v38
  %v1862 = vpop.f32.mrb[0].mxu0
  %v1863 = vadd.f32 %v450, %v1862
  %v1864 = vpop.f32.mrb[0].mxu0
  %1865 = vmatprep.mubr.f32.mxu0 0.0
  %1866 = vmatmul.mubr.f32.gmra.mrb[0].mxu0 %v39
  %v1867 = vpop.f32.mrb[0].mxu0
  %v1868 = vadd.f32 %v456, %v1867
  %v1869 = vpop.f32.mrb[0].mxu0
  %1870 = vmatprep.mubr.f32.mxu0 0.0
  %1871 = vmatmul.mubr.f32.gmra.mrb[0].mxu0 %v40
  %v1872 = vpop.f32.mrb[0].mxu0
  %v1873 = vadd.f32 %v462, %v1872
  %v1874 = vpop.f32.mrb[0].mxu0
  %1875 = vmatprep.mubr.f32.mxu0 0.0
  %1876 = vmatmul.mubr.f32.gmra.mrb[0].mxu0 %v41
  %v1877 = vpop.f32.mrb[0].mxu0
  %v1878 = vadd.f32 %v468, %v1877
  %v1879 = vpop.f32.mrb[0].mxu0
  %1880 = vdwg.mxu0
  %v1881 = vmax.f32 %v1803, 0.0
  %v1882 = vmax.f32 %v1808, 0.0
  %v1883 = vmax.f32 %v1813, 0.0
  %v1884 = vmax.f32 %v1818, 0.0
  %v1885 = vmax.f32 %v1823, 0.0
  %v1886 = vmax.f32 %v1828, 0.0
  %v1887 = vmax.f32 %v1833, 0.0
  %v1888 = vmax.f32 %v1838, 0.0
  %v1889 = vmax.f32 %v1843, 0.0
  %v1890 = vmax.f32 %v1848, 0.0
  %v1891 = vmax.f32 %v1853, 0.0
  %v1892 = vmax.f32 %v1858, 0.0
  %v1893 = vmax.f32 %v1863, 0.0
  %v1894 = vmax.f32 %v1868, 0.0
  %v1895 = vmax.f32 %v1873, 0.0
  %v1896 = vmax.f32 %v1878, 0.0
  %s1897 = scalar_lea.vmem %s3, 384
  %v1898 = vld [vmem:[%s1897] sm:$0xff]
  %v1899 = vld [vmem:[%s1897 + $0x8] sm:$0xff]
  %v1900 = vld [vmem:[%s1897 + $0x10] sm:$0xff]
  %v1901 = vld [vmem:[%s1897 + $0x18] sm:$0xff]
  %v1902 = vld [vmem:[%s1897 + $0x20] sm:$0xff]
  %v1903 = vld [vmem:[%s1897 + $0x28] sm:$0xff]
  %v1904 = vld [vmem:[%s1897 + $0x30] sm:$0xff]
  %v1905 = vld [vmem:[%s1897 + $0x38] sm:$0xff]
  %v1906 = vld [vmem:[%s1897 + $0x40] sm:$0xff]
  %v1907 = vld [vmem:[%s1897 + $0x48] sm:$0xff]
  %v1908 = vld [vmem:[%s1897 + $0x50] sm:$0xff]
  %v1909 = vld [vmem:[%s1897 + $0x58] sm:$0xff]
  %v1910 = vld [vmem:[%s1897 + $0x60] sm:$0xff]
  %v1911 = vld [vmem:[%s1897 + $0x68] sm:$0xff]
  %v1912 = vld [vmem:[%s1897 + $0x70] sm:$0xff]
  %v1913 = vld [vmem:[%s1897 + $0x78] sm:$0xff]
  %1914 = vmatprep.subr.mxu0 0.0
  %1915 = vmatpush1.msra.mxu0 %v1898
  %1916 = vmatprep.subr.mxu0 0.0
  %1917 = vmatpush1.msra.mxu0 %v1899
  %1918 = vmatprep.subr.mxu0 0.0
  %1919 = vmatpush1.msra.mxu0 %v1900
  %1920 = vmatprep.subr.mxu0 0.0
  %1921 = vmatpush1.msra.mxu0 %v1901
  %1922 = vmatprep.subr.mxu0 0.0
  %1923 = vmatpush1.msra.mxu0 %v1902
  %1924 = vmatprep.subr.mxu0 0.0
  %1925 = vmatpush1.msra.mxu0 %v1903
  %1926 = vmatprep.subr.mxu0 0.0
  %1927 = vmatpush1.msra.mxu0 %v1904
  %1928 = vmatprep.subr.mxu0 0.0
  %1929 = vmatpush1.msra.mxu0 %v1905
  %1930 = vmatprep.subr.mxu0 0.0
  %1931 = vmatpush1.msra.mxu0 %v1906
  %1932 = vmatprep.subr.mxu0 0.0
  %1933 = vmatpush1.msra.mxu0 %v1907
  %1934 = vmatprep.subr.mxu0 0.0
  %1935 = vmatpush1.msra.mxu0 %v1908
  %1936 = vmatprep.subr.mxu0 0.0
  %1937 = vmatpush1.msra.mxu0 %v1909
  %1938 = vmatprep.subr.mxu0 0.0
  %1939 = vmatpush1.msra.mxu0 %v1910
  %1940 = vmatprep.subr.mxu0 0.0
  %1941 = vmatpush1.msra.mxu0 %v1911
  %1942 = vmatprep.subr.mxu0 0.0
  %1943 = vmatpush1.msra.mxu0 %v1912
  %1944 = vmatprep.subr.mxu0 0.0
  %1945 = vmatpush1.msra.mxu0 %v1913
  %1946 = vmatprep.subr.mxu0 0.0
  %1947 = vmatpush1.msra.mxu0 0.0
  %1948 = vmatprep.subr.mxu0 0.0
  %1949 = vmatpush1.msra.mxu0 0.0
  %1950 = vmatprep.subr.mxu0 0.0
  %1951 = vmatpush1.msra.mxu0 0.0
  %1952 = vmatprep.subr.mxu0 0.0
  %1953 = vmatpush1.msra.mxu0 0.0
  %1954 = vmatprep.subr.mxu0 0.0
  %1955 = vmatpush1.msra.mxu0 0.0
  %1956 = vmatprep.subr.mxu0 0.0
  %1957 = vmatpush1.msra.mxu0 0.0
  %1958 = vmatprep.subr.mxu0 0.0
  %1959 = vmatpush1.msra.mxu0 0.0
  %1960 = vmatprep.subr.mxu0 0.0
  %1961 = vmatpush1.msra.mxu0 0.0
  %1962 = vmatprep.subr.mxu0 0.0
  %1963 = vmatpush1.msra.mxu0 0.0
  %1964 = vmatprep.subr.mxu0 0.0
  %1965 = vmatpush1.msra.mxu0 0.0
  %1966 = vmatprep.subr.mxu0 0.0
  %1967 = vmatpush1.msra.mxu0 0.0
  %1968 = vmatprep.subr.mxu0 0.0
  %1969 = vmatpush1.msra.mxu0 0.0
  %1970 = vmatprep.subr.mxu0 0.0
  %1971 = vmatpush1.msra.mxu0 0.0
  %1972 = vmatprep.subr.mxu0 0.0
  %1973 = vmatpush1.msra.mxu0 0.0
  %1974 = vmatprep.subr.mxu0 0.0
  %1975 = vmatpush1.msra.mxu0 0.0
  %1976 = vmatprep.subr.mxu0 0.0
  %1977 = vmatpush1.msra.mxu0 0.0
  %1978 = vmatprep.mubr.f32.mxu0 0.0
  %1979 = vmatmul.mubr.f32.gmra.mrb[0].mxu0 %v1881
  %v1980 = vpop.f32.mrb[0].mxu0
  %v1981 = vadd.f32 0.0, %v1980
  %v1982 = vpop.f32.mrb[0].mxu0
  %1983 = vmatprep.mubr.f32.mxu0 0.0
  %1984 = vmatmul.mubr.f32.gmra.mrb[0].mxu0 %v1882
  %v1985 = vpop.f32.mrb[0].mxu0
  %v1986 = vadd.f32 0.0, %v1985
  %v1987 = vpop.f32.mrb[0].mxu0
  %1988 = vmatprep.mubr.f32.mxu0 0.0
  %1989 = vmatmul.mubr.f32.gmra.mrb[0].mxu0 %v1883
  %v1990 = vpop.f32.mrb[0].mxu0
  %v1991 = vadd.f32 0.0, %v1990
  %v1992 = vpop.f32.mrb[0].mxu0
  %1993 = vmatprep.mubr.f32.mxu0 0.0
  %1994 = vmatmul.mubr.f32.gmra.mrb[0].mxu0 %v1884
  %v1995 = vpop.f32.mrb[0].mxu0
  %v1996 = vadd.f32 0.0, %v1995
  %v1997 = vpop.f32.mrb[0].mxu0
  %1998 = vmatprep.mubr.f32.mxu0 0.0
  %1999 = vmatmul.mubr.f32.gmra.mrb[0].mxu0 %v1885
  %v2000 = vpop.f32.mrb[0].mxu0
  %v2001 = vadd.f32 0.0, %v2000
  %v2002 = vpop.f32.mrb[0].mxu0
  %2003 = vmatprep.mubr.f32.mxu0 0.0
  %2004 = vmatmul.mubr.f32.gmra.mrb[0].mxu0 %v1886
  %v2005 = vpop.f32.mrb[0].mxu0
  %v2006 = vadd.f32 0.0, %v2005
  %v2007 = vpop.f32.mrb[0].mxu0
  %2008 = vmatprep.mubr.f32.mxu0 0.0
  %2009 = vmatmul.mubr.f32.gmra.mrb[0].mxu0 %v1887
  %v2010 = vpop.f32.mrb[0].mxu0
  %v2011 = vadd.f32 0.0, %v2010
  %v2012 = vpop.f32.mrb[0].mxu0
  %2013 = vmatprep.mubr.f32.mxu0 0.0
  %2014 = vmatmul.mubr.f32.gmra.mrb[0].mxu0 %v1888
  %v2015 = vpop.f32.mrb[0].mxu0
  %v2016 = vadd.f32 0.0, %v2015
  %v2017 = vpop.f32.mrb[0].mxu0
  %2018 = vmatprep.mubr.f32.mxu0 0.0
  %2019 = vmatmul.mubr.f32.gmra.mrb[0].mxu0 %v1889
  %v2020 = vpop.f32.mrb[0].mxu0
  %v2021 = vadd.f32 0.0, %v2020
  %v2022 = vpop.f32.mrb[0].mxu0
  %2023 = vmatprep.mubr.f32.mxu0 0.0
  %2024 = vmatmul.mubr.f32.gmra.mrb[0].mxu0 %v1890
  %v2025 = vpop.f32.mrb[0].mxu0
  %v2026 = vadd.f32 0.0, %v2025
  %v2027 = vpop.f32.mrb[0].mxu0
  %2028 = vmatprep.mubr.f32.mxu0 0.0
  %2029 = vmatmul.mubr.f32.gmra.mrb[0].mxu0 %v1891
  %v2030 = vpop.f32.mrb[0].mxu0
  %v2031 = vadd.f32 0.0, %v2030
  %v2032 = vpop.f32.mrb[0].mxu0
  %2033 = vmatprep.mubr.f32.mxu0 0.0
  %2034 = vmatmul.mubr.f32.gmra.mrb[0].mxu0 %v1892
  %v2035 = vpop.f32.mrb[0].mxu0
  %v2036 = vadd.f32 0.0, %v2035
  %v2037 = vpop.f32.mrb[0].mxu0
  %2038 = vmatprep.mubr.f32.mxu0 0.0
  %2039 = vmatmul.mubr.f32.gmra.mrb[0].mxu0 %v1893
  %v2040 = vpop.f32.mrb[0].mxu0
  %v2041 = vadd.f32 0.0, %v2040
  %v2042 = vpop.f32.mrb[0].mxu0
  %2043 = vmatprep.mubr.f32.mxu0 0.0
  %2044 = vmatmul.mubr.f32.gmra.mrb[0].mxu0 %v1894
  %v2045 = vpop.f32.mrb[0].mxu0
  %v2046 = vadd.f32 0.0, %v2045
  %v2047 = vpop.f32.mrb[0].mxu0
  %2048 = vmatprep.mubr.f32.mxu0 0.0
  %2049 = vmatmul.mubr.f32.gmra.mrb[0].mxu0 %v1895
  %v2050 = vpop.f32.mrb[0].mxu0
  %v2051 = vadd.f32 0.0, %v2050
  %v2052 = vpop.f32.mrb[0].mxu0
  %2053 = vmatprep.mubr.f32.mxu0 0.0
  %2054 = vmatmul.mubr.f32.gmra.mrb[0].mxu0 %v1896
  %v2055 = vpop.f32.mrb[0].mxu0
  %v2056 = vadd.f32 0.0, %v2055
  %v2057 = vpop.f32.mrb[0].mxu0
  %2058 = vdwg.mxu0
  %2059 = vmatprep.subr.mxu0 0.0
  %2060 = vmatpush1.msra.mxu0 %v1981
  %2061 = vmatprep.subr.mxu0 0.0
  %2062 = vmatpush1.msra.mxu0 %v1986
  %2063 = vmatprep.subr.mxu0 0.0
  %2064 = vmatpush1.msra.mxu0 %v1991
  %2065 = vmatprep.subr.mxu0 0.0
  %2066 = vmatpush1.msra.mxu0 %v1996
  %2067 = vmatprep.subr.mxu0 0.0
  %2068 = vmatpush1.msra.mxu0 %v2001
  %2069 = vmatprep.subr.mxu0 0.0
  %2070 = vmatpush1.msra.mxu0 %v2006
  %2071 = vmatprep.subr.mxu0 0.0
  %2072 = vmatpush1.msra.mxu0 %v2011
  %2073 = vmatprep.subr.mxu0 0.0
  %2074 = vmatpush1.msra.mxu0 %v2016
  %2075 = vmatprep.subr.mxu0 0.0
  %2076 = vmatpush1.msra.mxu0 %v2021
  %2077 = vmatprep.subr.mxu0 0.0
  %2078 = vmatpush1.msra.mxu0 %v2026
  %2079 = vmatprep.subr.mxu0 0.0
  %2080 = vmatpush1.msra.mxu0 %v2031
  %2081 = vmatprep.subr.mxu0 0.0
  %2082 = vmatpush1.msra.mxu0 %v2036
  %2083 = vmatprep.subr.mxu0 0.0
  %2084 = vmatpush1.msra.mxu0 %v2041
  %2085 = vmatprep.subr.mxu0 0.0
  %2086 = vmatpush1.msra.mxu0 %v2046
  %2087 = vmatprep.subr.mxu0 0.0
  %2088 = vmatpush1.msra.mxu0 %v2051
  %2089 = vmatprep.subr.mxu0 0.0
  %2090 = vmatpush1.msra.mxu0 %v2056
  %2091 = vmatprep.subr.mxu0 0.0
  %2092 = vmatpush1.msra.mxu0 0.0
  %2093 = vmatprep.subr.mxu0 0.0
  %2094 = vmatpush1.msra.mxu0 0.0
  %2095 = vmatprep.subr.mxu0 0.0
  %2096 = vmatpush1.msra.mxu0 0.0
  %2097 = vmatprep.subr.mxu0 0.0
  %2098 = vmatpush1.msra.mxu0 0.0
  %2099 = vmatprep.subr.mxu0 0.0
  %2100 = vmatpush1.msra.mxu0 0.0
  %2101 = vmatprep.subr.mxu0 0.0
  %2102 = vmatpush1.msra.mxu0 0.0
  %2103 = vmatprep.subr.mxu0 0.0
  %2104 = vmatpush1.msra.mxu0 0.0
  %2105 = vmatprep.subr.mxu0 0.0
  %2106 = vmatpush1.msra.mxu0 0.0
  %2107 = vmatprep.subr.mxu0 0.0
  %2108 = vmatpush1.msra.mxu0 0.0
  %2109 = vmatprep.subr.mxu0 0.0
  %2110 = vmatpush1.msra.mxu0 0.0
  %2111 = vmatprep.subr.mxu0 0.0
  %2112 = vmatpush1.msra.mxu0 0.0
  %2113 = vmatprep.subr.mxu0 0.0
  %2114 = vmatpush1.msra.mxu0 0.0
  %2115 = vmatprep.subr.mxu0 0.0
  %2116 = vmatpush1.msra.mxu0 0.0
  %2117 = vmatprep.subr.mxu0 0.0
  %2118 = vmatpush1.msra.mxu0 0.0
  %2119 = vmatprep.subr.mxu0 0.0
  %2120 = vmatpush1.msra.mxu0 0.0
  %2121 = vmatprep.subr.mxu0 0.0
  %2122 = vmatpush1.msra.mxu0 0.0
  %2123 = vmatprep.mubr.f32.mxu0 0.0
  %2124 = vmatmul.mubr.f32.gmra.mrb[0].mxu0 %v26
  %v2125 = vpop.f32.mrb[0].mxu0
  %v2126 = vadd.f32 %v537, %v2125
  %v2127 = vpop.f32.mrb[0].mxu0
  %2128 = vmatprep.mubr.f32.mxu0 0.0
  %2129 = vmatmul.mubr.f32.gmra.mrb[0].mxu0 %v27
  %v2130 = vpop.f32.mrb[0].mxu0
  %v2131 = vadd.f32 %v542, %v2130
  %v2132 = vpop.f32.mrb[0].mxu0
  %2133 = vmatprep.mubr.f32.mxu0 0.0
  %2134 = vmatmul.mubr.f32.gmra.mrb[0].mxu0 %v28
  %v2135 = vpop.f32.mrb[0].mxu0
  %v2136 = vadd.f32 %v547, %v2135
  %v2137 = vpop.f32.mrb[0].mxu0
  %2138 = vmatprep.mubr.f32.mxu0 0.0
  %2139 = vmatmul.mubr.f32.gmra.mrb[0].mxu0 %v29
  %v2140 = vpop.f32.mrb[0].mxu0
  %v2141 = vadd.f32 %v552, %v2140
  %v2142 = vpop.f32.mrb[0].mxu0
  %2143 = vmatprep.mubr.f32.mxu0 0.0
  %2144 = vmatmul.mubr.f32.gmra.mrb[0].mxu0 %v30
  %v2145 = vpop.f32.mrb[0].mxu0
  %v2146 = vadd.f32 %v557, %v2145
  %v2147 = vpop.f32.mrb[0].mxu0
  %2148 = vmatprep.mubr.f32.mxu0 0.0
  %2149 = vmatmul.mubr.f32.gmra.mrb[0].mxu0 %v31
  %v2150 = vpop.f32.mrb[0].mxu0
  %v2151 = vadd.f32 %v562, %v2150
  %v2152 = vpop.f32.mrb[0].mxu0
  %2153 = vmatprep.mubr.f32.mxu0 0.0
  %2154 = vmatmul.mubr.f32.gmra.mrb[0].mxu0 %v32
  %v2155 = vpop.f32.mrb[0].mxu0
  %v2156 = vadd.f32 %v567, %v2155
  %v2157 = vpop.f32.mrb[0].mxu0
  %2158 = vmatprep.mubr.f32.mxu0 0.0
  %2159 = vmatmul.mubr.f32.gmra.mrb[0].mxu0 %v33
  %v2160 = vpop.f32.mrb[0].mxu0
  %v2161 = vadd.f32 %v572, %v2160
  %v2162 = vpop.f32.mrb[0].mxu0
  %2163 = vmatprep.mubr.f32.mxu0 0.0
  %2164 = vmatmul.mubr.f32.gmra.mrb[0].mxu0 %v34
  %v2165 = vpop.f32.mrb[0].mxu0
  %v2166 = vadd.f32 %v577, %v2165
  %v2167 = vpop.f32.mrb[0].mxu0
  %2168 = vmatprep.mubr.f32.mxu0 0.0
  %2169 = vmatmul.mubr.f32.gmra.mrb[0].mxu0 %v35
  %v2170 = vpop.f32.mrb[0].mxu0
  %v2171 = vadd.f32 %v582, %v2170
  %v2172 = vpop.f32.mrb[0].mxu0
  %2173 = vmatprep.mubr.f32.mxu0 0.0
  %2174 = vmatmul.mubr.f32.gmra.mrb[0].mxu0 %v36
  %v2175 = vpop.f32.mrb[0].mxu0
  %v2176 = vadd.f32 %v587, %v2175
  %v2177 = vpop.f32.mrb[0].mxu0
  %2178 = vmatprep.mubr.f32.mxu0 0.0
  %2179 = vmatmul.mubr.f32.gmra.mrb[0].mxu0 %v37
  %v2180 = vpop.f32.mrb[0].mxu0
  %v2181 = vadd.f32 %v592, %v2180
  %v2182 = vpop.f32.mrb[0].mxu0
  %2183 = vmatprep.mubr.f32.mxu0 0.0
  %2184 = vmatmul.mubr.f32.gmra.mrb[0].mxu0 %v38
  %v2185 = vpop.f32.mrb[0].mxu0
  %v2186 = vadd.f32 %v597, %v2185
  %v2187 = vpop.f32.mrb[0].mxu0
  %2188 = vmatprep.mubr.f32.mxu0 0.0
  %2189 = vmatmul.mubr.f32.gmra.mrb[0].mxu0 %v39
  %v2190 = vpop.f32.mrb[0].mxu0
  %v2191 = vadd.f32 %v602, %v2190
  %v2192 = vpop.f32.mrb[0].mxu0
  %2193 = vmatprep.mubr.f32.mxu0 0.0
  %2194 = vmatmul.mubr.f32.gmra.mrb[0].mxu0 %v40
  %v2195 = vpop.f32.mrb[0].mxu0
  %v2196 = vadd.f32 %v607, %v2195
  %v2197 = vpop.f32.mrb[0].mxu0
  %2198 = vmatprep.mubr.f32.mxu0 0.0
  %2199 = vmatmul.mubr.f32.gmra.mrb[0].mxu0 %v41
  %v2200 = vpop.f32.mrb[0].mxu0
  %v2201 = vadd.f32 %v612, %v2200
  %v2202 = vpop.f32.mrb[0].mxu0
  %2203 = vdwg.mxu0
  %v2204 = vmax.f32 %v2126, 0.0
  %v2205 = vmax.f32 %v2131, 0.0
  %v2206 = vmax.f32 %v2136, 0.0
  %v2207 = vmax.f32 %v2141, 0.0
  %v2208 = vmax.f32 %v2146, 0.0
  %v2209 = vmax.f32 %v2151, 0.0
  %v2210 = vmax.f32 %v2156, 0.0
  %v2211 = vmax.f32 %v2161, 0.0
  %v2212 = vmax.f32 %v2166, 0.0
  %v2213 = vmax.f32 %v2171, 0.0
  %v2214 = vmax.f32 %v2176, 0.0
  %v2215 = vmax.f32 %v2181, 0.0
  %v2216 = vmax.f32 %v2186, 0.0
  %v2217 = vmax.f32 %v2191, 0.0
  %v2218 = vmax.f32 %v2196, 0.0
  %v2219 = vmax.f32 %v2201, 0.0
  %v2220 = vld [vmem:[%s5] sm:$0xff]
  %v2221 = vld [vmem:[%s5 + $0x8] sm:$0xff]
  %v2222 = vld [vmem:[%s5 + $0x10] sm:$0xff]
  %v2223 = vld [vmem:[%s5 + $0x18] sm:$0xff]
  %v2224 = vld [vmem:[%s5 + $0x20] sm:$0xff]
  %v2225 = vld [vmem:[%s5 + $0x28] sm:$0xff]
  %v2226 = vld [vmem:[%s5 + $0x30] sm:$0xff]
  %v2227 = vld [vmem:[%s5 + $0x38] sm:$0xff]
  %v2228 = vld [vmem:[%s5 + $0x40] sm:$0xff]
  %v2229 = vld [vmem:[%s5 + $0x48] sm:$0xff]
  %v2230 = vld [vmem:[%s5 + $0x50] sm:$0xff]
  %v2231 = vld [vmem:[%s5 + $0x58] sm:$0xff]
  %v2232 = vld [vmem:[%s5 + $0x60] sm:$0xff]
  %v2233 = vld [vmem:[%s5 + $0x68] sm:$0xff]
  %v2234 = vld [vmem:[%s5 + $0x70] sm:$0xff]
  %v2235 = vld [vmem:[%s5 + $0x78] sm:$0xff]
  %v2236 = vld [vmem:[%s6] sm:$0x1]
  %v2238 = vlaneseq
  %v2239 = vshrl.u32 %v2238, 7
  %v2240 = vsub.s32 0, %v2239
  %v2241 = vrot.slane %v2236, %v2240
  %2243 = vmatprep.subr.mxu0 0.0
  %2244 = vmatpush1.msra.mxu0 %v2220
  %2245 = vmatprep.subr.mxu0 0.0
  %2246 = vmatpush1.msra.mxu0 %v2221
  %2247 = vmatprep.subr.mxu0 0.0
  %2248 = vmatpush1.msra.mxu0 %v2222
  %2249 = vmatprep.subr.mxu0 0.0
  %2250 = vmatpush1.msra.mxu0 %v2223
  %2251 = vmatprep.subr.mxu0 0.0
  %2252 = vmatpush1.msra.mxu0 %v2224
  %2253 = vmatprep.subr.mxu0 0.0
  %2254 = vmatpush1.msra.mxu0 %v2225
  %2255 = vmatprep.subr.mxu0 0.0
  %2256 = vmatpush1.msra.mxu0 %v2226
  %2257 = vmatprep.subr.mxu0 0.0
  %2258 = vmatpush1.msra.mxu0 %v2227
  %2259 = vmatprep.subr.mxu0 0.0
  %2260 = vmatpush1.msra.mxu0 %v2228
  %2261 = vmatprep.subr.mxu0 0.0
  %2262 = vmatpush1.msra.mxu0 %v2229
  %2263 = vmatprep.subr.mxu0 0.0
  %2264 = vmatpush1.msra.mxu0 %v2230
  %2265 = vmatprep.subr.mxu0 0.0
  %2266 = vmatpush1.msra.mxu0 %v2231
  %2267 = vmatprep.subr.mxu0 0.0
  %2268 = vmatpush1.msra.mxu0 %v2232
  %2269 = vmatprep.subr.mxu0 0.0
  %2270 = vmatpush1.msra.mxu0 %v2233
  %2271 = vmatprep.subr.mxu0 0.0
  %2272 = vmatpush1.msra.mxu0 %v2234
  %2273 = vmatprep.subr.mxu0 0.0
  %2274 = vmatpush1.msra.mxu0 %v2235
  %2275 = vmatprep.subr.mxu0 0.0
  %2276 = vmatpush1.msra.mxu0 0.0
  %2277 = vmatprep.subr.mxu0 0.0
  %2278 = vmatpush1.msra.mxu0 0.0
  %2279 = vmatprep.subr.mxu0 0.0
  %2280 = vmatpush1.msra.mxu0 0.0
  %2281 = vmatprep.subr.mxu0 0.0
  %2282 = vmatpush1.msra.mxu0 0.0
  %2283 = vmatprep.subr.mxu0 0.0
  %2284 = vmatpush1.msra.mxu0 0.0
  %2285 = vmatprep.subr.mxu0 0.0
  %2286 = vmatpush1.msra.mxu0 0.0
  %2287 = vmatprep.subr.mxu0 0.0
  %2288 = vmatpush1.msra.mxu0 0.0
  %2289 = vmatprep.subr.mxu0 0.0
  %2290 = vmatpush1.msra.mxu0 0.0
  %2291 = vmatprep.subr.mxu0 0.0
  %2292 = vmatpush1.msra.mxu0 0.0
  %2293 = vmatprep.subr.mxu0 0.0
  %2294 = vmatpush1.msra.mxu0 0.0
  %2295 = vmatprep.subr.mxu0 0.0
  %2296 = vmatpush1.msra.mxu0 0.0
  %2297 = vmatprep.subr.mxu0 0.0
  %2298 = vmatpush1.msra.mxu0 0.0
  %2299 = vmatprep.subr.mxu0 0.0
  %2300 = vmatpush1.msra.mxu0 0.0
  %2301 = vmatprep.subr.mxu0 0.0
  %2302 = vmatpush1.msra.mxu0 0.0
  %2303 = vmatprep.subr.mxu0 0.0
  %2304 = vmatpush1.msra.mxu0 0.0
  %2305 = vmatprep.subr.mxu0 0.0
  %2306 = vmatpush1.msra.mxu0 0.0
  %2307 = vmatprep.mubr.f32.mxu0 0.0
  %2308 = vmatmul.mubr.f32.gmra.mrb[0].mxu0 %v2204
  %v2309 = vpop.f32.mrb[0].mxu0
  %v2310 = vadd.f32 %v2241, %v2309
  %v2311 = vpop.f32.mrb[0].mxu0
  %2312 = vmatprep.mubr.f32.mxu0 0.0
  %2313 = vmatmul.mubr.f32.gmra.mrb[0].mxu0 %v2205
  %v2314 = vpop.f32.mrb[0].mxu0
  %v2315 = vadd.f32 %v2241, %v2314
  %v2316 = vpop.f32.mrb[0].mxu0
  %2317 = vmatprep.mubr.f32.mxu0 0.0
  %2318 = vmatmul.mubr.f32.gmra.mrb[0].mxu0 %v2206
  %v2319 = vpop.f32.mrb[0].mxu0
  %v2320 = vadd.f32 %v2241, %v2319
  %v2321 = vpop.f32.mrb[0].mxu0
  %2322 = vmatprep.mubr.f32.mxu0 0.0
  %2323 = vmatmul.mubr.f32.gmra.mrb[0].mxu0 %v2207
  %v2324 = vpop.f32.mrb[0].mxu0
  %v2325 = vadd.f32 %v2241, %v2324
  %v2326 = vpop.f32.mrb[0].mxu0
  %2327 = vmatprep.mubr.f32.mxu0 0.0
  %2328 = vmatmul.mubr.f32.gmra.mrb[0].mxu0 %v2208
  %v2329 = vpop.f32.mrb[0].mxu0
  %v2330 = vadd.f32 %v2241, %v2329
  %v2331 = vpop.f32.mrb[0].mxu0
  %2332 = vmatprep.mubr.f32.mxu0 0.0
  %2333 = vmatmul.mubr.f32.gmra.mrb[0].mxu0 %v2209
  %v2334 = vpop.f32.mrb[0].mxu0
  %v2335 = vadd.f32 %v2241, %v2334
  %v2336 = vpop.f32.mrb[0].mxu0
  %2337 = vmatprep.mubr.f32.mxu0 0.0
  %2338 = vmatmul.mubr.f32.gmra.mrb[0].mxu0 %v2210
  %v2339 = vpop.f32.mrb[0].mxu0
  %v2340 = vadd.f32 %v2241, %v2339
  %v2341 = vpop.f32.mrb[0].mxu0
  %2342 = vmatprep.mubr.f32.mxu0 0.0
  %2343 = vmatmul.mubr.f32.gmra.mrb[0].mxu0 %v2211
  %v2344 = vpop.f32.mrb[0].mxu0
  %v2345 = vadd.f32 %v2241, %v2344
  %v2346 = vpop.f32.mrb[0].mxu0
  %2347 = vmatprep.mubr.f32.mxu0 0.0
  %2348 = vmatmul.mubr.f32.gmra.mrb[0].mxu0 %v2212
  %v2349 = vpop.f32.mrb[0].mxu0
  %v2350 = vadd.f32 %v2241, %v2349
  %v2351 = vpop.f32.mrb[0].mxu0
  %2352 = vmatprep.mubr.f32.mxu0 0.0
  %2353 = vmatmul.mubr.f32.gmra.mrb[0].mxu0 %v2213
  %v2354 = vpop.f32.mrb[0].mxu0
  %v2355 = vadd.f32 %v2241, %v2354
  %v2356 = vpop.f32.mrb[0].mxu0
  %2357 = vmatprep.mubr.f32.mxu0 0.0
  %2358 = vmatmul.mubr.f32.gmra.mrb[0].mxu0 %v2214
  %v2359 = vpop.f32.mrb[0].mxu0
  %v2360 = vadd.f32 %v2241, %v2359
  %v2361 = vpop.f32.mrb[0].mxu0
  %2362 = vmatprep.mubr.f32.mxu0 0.0
  %2363 = vmatmul.mubr.f32.gmra.mrb[0].mxu0 %v2215
  %v2364 = vpop.f32.mrb[0].mxu0
  %v2365 = vadd.f32 %v2241, %v2364
  %v2366 = vpop.f32.mrb[0].mxu0
  %2367 = vmatprep.mubr.f32.mxu0 0.0
  %2368 = vmatmul.mubr.f32.gmra.mrb[0].mxu0 %v2216
  %v2369 = vpop.f32.mrb[0].mxu0
  %v2370 = vadd.f32 %v2241, %v2369
  %v2371 = vpop.f32.mrb[0].mxu0
  %2372 = vmatprep.mubr.f32.mxu0 0.0
  %2373 = vmatmul.mubr.f32.gmra.mrb[0].mxu0 %v2217
  %v2374 = vpop.f32.mrb[0].mxu0
  %v2375 = vadd.f32 %v2241, %v2374
  %v2376 = vpop.f32.mrb[0].mxu0
  %2377 = vmatprep.mubr.f32.mxu0 0.0
  %2378 = vmatmul.mubr.f32.gmra.mrb[0].mxu0 %v2218
  %v2379 = vpop.f32.mrb[0].mxu0
  %v2380 = vadd.f32 %v2241, %v2379
  %v2381 = vpop.f32.mrb[0].mxu0
  %2382 = vmatprep.mubr.f32.mxu0 0.0
  %2383 = vmatmul.mubr.f32.gmra.mrb[0].mxu0 %v2219
  %v2384 = vpop.f32.mrb[0].mxu0
  %v2385 = vadd.f32 %v2241, %v2384
  %v2386 = vpop.f32.mrb[0].mxu0
  %2387 = vdwg.mxu0
  %v2388 = vmax.f32 %v2310, 0.0
  %v2389 = vmax.f32 %v2315, 0.0
  %v2390 = vmax.f32 %v2320, 0.0
  %v2391 = vmax.f32 %v2325, 0.0
  %v2392 = vmax.f32 %v2330, 0.0
  %v2393 = vmax.f32 %v2335, 0.0
  %v2394 = vmax.f32 %v2340, 0.0
  %v2395 = vmax.f32 %v2345, 0.0
  %v2396 = vmax.f32 %v2350, 0.0
  %v2397 = vmax.f32 %v2355, 0.0
  %v2398 = vmax.f32 %v2360, 0.0
  %v2399 = vmax.f32 %v2365, 0.0
  %v2400 = vmax.f32 %v2370, 0.0
  %v2401 = vmax.f32 %v2375, 0.0
  %v2402 = vmax.f32 %v2380, 0.0
  %v2403 = vmax.f32 %v2385, 0.0
  %s2404 = scalar_lea.vmem %s4, 200
  %v2405 = vld [vmem:[%s2404] sm:$0xff]
  %v2406 = vld [vmem:[%s2404 + $0x8] sm:$0xff]
  %v2407 = vld [vmem:[%s2404 + $0x10] sm:$0xff]
  %v2408 = vld [vmem:[%s2404 + $0x18] sm:$0xff]
  %v2409 = vld [vmem:[%s2404 + $0x20] sm:$0xff]
  %v2410 = vld [vmem:[%s2404 + $0x28] sm:$0xff]
  %v2411 = vld [vmem:[%s2404 + $0x30] sm:$0xff]
  %v2412 = vld [vmem:[%s2404 + $0x38] sm:$0xff]
  %v2413 = vld [vmem:[%s2404 + $0x40] sm:$0xff]
  %v2414 = vld [vmem:[%s2404 + $0x48] sm:$0xff]
  %v2415 = vld [vmem:[%s2404 + $0x50] sm:$0xff]
  %v2416 = vld [vmem:[%s2404 + $0x58] sm:$0xff]
  %v2417 = vld [vmem:[%s2404 + $0x60] sm:$0xff]
  %v2418 = vld [vmem:[%s2404 + $0x68] sm:$0xff]
  %v2419 = vld [vmem:[%s2404 + $0x70] sm:$0xff]
  %v2420 = vld [vmem:[%s2404 + $0x78] sm:$0xff]
  %v2421 = vld [vmem:[%s2404 + $0x80] sm:$0xff]
  %v2422 = vld [vmem:[%s2404 + $0x88] sm:$0xff]
  %v2423 = vld [vmem:[%s2404 + $0x90] sm:$0xff]
  %v2424 = vld [vmem:[%s2404 + $0x98] sm:$0xff]
  %v2425 = vld [vmem:[%s2404 + $0xa0] sm:$0x1]
  %v2426 = vld [vmem:[%s2404 + $0xa8] sm:$0x1]
  %v2427 = vld [vmem:[%s2404 + $0xb0] sm:$0x1]
  %v2428 = vld [vmem:[%s2404 + $0xb8] sm:$0x1]
  %v2429 = vld [vmem:[%s2404 + $0xc0] sm:$0x1]
  %v2431 = vsel %vm83, %v2388, 0
  %v2434 = vsel %vm83, %v2389, 0
  %v2437 = vsel %vm83, %v2390, 0
  %v2440 = vsel %vm83, %v2391, 0
  %v2443 = vsel %vm83, %v2392, 0
  %v2446 = vsel %vm83, %v2393, 0
  %v2449 = vsel %vm83, %v2394, 0
  %v2452 = vsel %vm83, %v2395, 0
  %v2455 = vsel %vm83, %v2396, 0
  %v2458 = vsel %vm83, %v2397, 0
  %v2461 = vsel %vm83, %v2398, 0
  %v2464 = vsel %vm83, %v2399, 0
  %v2467 = vsel %vm83, %v2400, 0
  %v2470 = vsel %vm83, %v2401, 0
  %v2473 = vsel %vm83, %v2402, 0
  %v2476 = vsel %vm83, %v2403, 0
  %v2479 = vsel %vm132, %v2425, 0
  %v2482 = vsel %vm132, %v2426, 0
  %v2485 = vsel %vm132, %v2427, 0
  %v2488 = vsel %vm132, %v2428, 0
  %v2491 = vsel %vm132, %v2429, 0
  %2493 = vmatprep.subr.mxu0 %v2406
  %2494 = vmatpush1.msra.mxu0 %v2405
  %2495 = vmatprep.subr.mxu0 %v2411
  %2496 = vmatpush1.msra.mxu0 %v2410
  %2497 = vmatprep.subr.mxu0 %v2416
  %2498 = vmatpush1.msra.mxu0 %v2415
  %2499 = vmatprep.subr.mxu0 %v2421
  %2500 = vmatpush1.msra.mxu0 %v2420
  %2501 = vmatprep.subr.mxu0 %v2482
  %2502 = vmatpush1.msra.mxu0 %v2479
  %2503 = vmatprep.subr.mxu0 0.0
  %2504 = vmatpush1.msra.mxu0 0.0
  %2505 = vmatprep.subr.mxu0 0.0
  %2506 = vmatpush1.msra.mxu0 0.0
  %2507 = vmatprep.subr.mxu0 0.0
  %2508 = vmatpush1.msra.mxu0 0.0
  %2509 = vmatprep.subr.mxu0 0.0
  %2510 = vmatpush1.msra.mxu0 0.0
  %2511 = vmatprep.subr.mxu0 0.0
  %2512 = vmatpush1.msra.mxu0 0.0
  %2513 = vmatprep.subr.mxu0 0.0
  %2514 = vmatpush1.msra.mxu0 0.0
  %2515 = vmatprep.subr.mxu0 0.0
  %2516 = vmatpush1.msra.mxu0 0.0
  %2517 = vmatprep.subr.mxu0 0.0
  %2518 = vmatpush1.msra.mxu0 0.0
  %2519 = vmatprep.subr.mxu0 0.0
  %2520 = vmatpush1.msra.mxu0 0.0
  %2521 = vmatprep.subr.mxu0 0.0
  %2522 = vmatpush1.msra.mxu0 0.0
  %2523 = vmatprep.subr.mxu0 0.0
  %2524 = vmatpush1.msra.mxu0 0.0
  %2525 = vmatprep.subr.mxu0 0.0
  %2526 = vmatpush1.msra.mxu0 0.0
  %2527 = vmatprep.subr.mxu0 0.0
  %2528 = vmatpush1.msra.mxu0 0.0
  %2529 = vmatprep.subr.mxu0 0.0
  %2530 = vmatpush1.msra.mxu0 0.0
  %2531 = vmatprep.subr.mxu0 0.0
  %2532 = vmatpush1.msra.mxu0 0.0
  %2533 = vmatprep.subr.mxu0 0.0
  %2534 = vmatpush1.msra.mxu0 0.0
  %2535 = vmatprep.subr.mxu0 0.0
  %2536 = vmatpush1.msra.mxu0 0.0
  %2537 = vmatprep.subr.mxu0 0.0
  %2538 = vmatpush1.msra.mxu0 0.0
  %2539 = vmatprep.subr.mxu0 0.0
  %2540 = vmatpush1.msra.mxu0 0.0
  %2541 = vmatprep.subr.mxu0 0.0
  %2542 = vmatpush1.msra.mxu0 0.0
  %2543 = vmatprep.subr.mxu0 0.0
  %2544 = vmatpush1.msra.mxu0 0.0
  %2545 = vmatprep.subr.mxu0 0.0
  %2546 = vmatpush1.msra.mxu0 0.0
  %2547 = vmatprep.subr.mxu0 0.0
  %2548 = vmatpush1.msra.mxu0 0.0
  %2549 = vmatprep.subr.mxu0 0.0
  %2550 = vmatpush1.msra.mxu0 0.0
  %2551 = vmatprep.subr.mxu0 0.0
  %2552 = vmatpush1.msra.mxu0 0.0
  %2553 = vmatprep.subr.mxu0 0.0
  %2554 = vmatpush1.msra.mxu0 0.0
  %2555 = vmatprep.subr.mxu0 0.0
  %2556 = vmatpush1.msra.mxu0 0.0
  %2557 = vmatprep.mubr.f32.mxu0 0.0
  %2558 = vmatmul.mubr.f32.gmra.mrb[0].mxu0 %v2431
  %v2559 = vpop.f32.mrb[0].mxu0
  %v2560 = vadd.f32 0.0, %v2559
  %v2561 = vpop.f32.mrb[0].mxu0
  %v2562 = vadd.f32 0.0, %v2561
  %2563 = vmatprep.mubr.f32.mxu0 0.0
  %2564 = vmatmul.mubr.f32.gmra.mrb[0].mxu0 %v2434
  %v2565 = vpop.f32.mrb[0].mxu0
  %v2566 = vadd.f32 0.0, %v2565
  %v2567 = vpop.f32.mrb[0].mxu0
  %v2568 = vadd.f32 0.0, %v2567
  %2569 = vmatprep.mubr.f32.mxu0 0.0
  %2570 = vmatmul.mubr.f32.gmra.mrb[0].mxu0 %v2437
  %v2571 = vpop.f32.mrb[0].mxu0
  %v2572 = vadd.f32 0.0, %v2571
  %v2573 = vpop.f32.mrb[0].mxu0
  %v2574 = vadd.f32 0.0, %v2573
  %2575 = vmatprep.mubr.f32.mxu0 0.0
  %2576 = vmatmul.mubr.f32.gmra.mrb[0].mxu0 %v2440
  %v2577 = vpop.f32.mrb[0].mxu0
  %v2578 = vadd.f32 0.0, %v2577
  %v2579 = vpop.f32.mrb[0].mxu0
  %v2580 = vadd.f32 0.0, %v2579
  %2581 = vmatprep.mubr.f32.mxu0 0.0
  %2582 = vmatmul.mubr.f32.gmra.mrb[0].mxu0 %v2443
  %v2583 = vpop.f32.mrb[0].mxu0
  %v2584 = vadd.f32 0.0, %v2583
  %v2585 = vpop.f32.mrb[0].mxu0
  %v2586 = vadd.f32 0.0, %v2585
  %2587 = vmatprep.mubr.f32.mxu0 0.0
  %2588 = vmatmul.mubr.f32.gmra.mrb[0].mxu0 %v2446
  %v2589 = vpop.f32.mrb[0].mxu0
  %v2590 = vadd.f32 0.0, %v2589
  %v2591 = vpop.f32.mrb[0].mxu0
  %v2592 = vadd.f32 0.0, %v2591
  %2593 = vmatprep.mubr.f32.mxu0 0.0
  %2594 = vmatmul.mubr.f32.gmra.mrb[0].mxu0 %v2449
  %v2595 = vpop.f32.mrb[0].mxu0
  %v2596 = vadd.f32 0.0, %v2595
  %v2597 = vpop.f32.mrb[0].mxu0
  %v2598 = vadd.f32 0.0, %v2597
  %2599 = vmatprep.mubr.f32.mxu0 0.0
  %2600 = vmatmul.mubr.f32.gmra.mrb[0].mxu0 %v2452
  %v2601 = vpop.f32.mrb[0].mxu0
  %v2602 = vadd.f32 0.0, %v2601
  %v2603 = vpop.f32.mrb[0].mxu0
  %v2604 = vadd.f32 0.0, %v2603
  %2605 = vmatprep.mubr.f32.mxu0 0.0
  %2606 = vmatmul.mubr.f32.gmra.mrb[0].mxu0 %v2455
  %v2607 = vpop.f32.mrb[0].mxu0
  %v2608 = vadd.f32 0.0, %v2607
  %v2609 = vpop.f32.mrb[0].mxu0
  %v2610 = vadd.f32 0.0, %v2609
  %2611 = vmatprep.mubr.f32.mxu0 0.0
  %2612 = vmatmul.mubr.f32.gmra.mrb[0].mxu0 %v2458
  %v2613 = vpop.f32.mrb[0].mxu0
  %v2614 = vadd.f32 0.0, %v2613
  %v2615 = vpop.f32.mrb[0].mxu0
  %v2616 = vadd.f32 0.0, %v2615
  %2617 = vmatprep.mubr.f32.mxu0 0.0
  %2618 = vmatmul.mubr.f32.gmra.mrb[0].mxu0 %v2461
  %v2619 = vpop.f32.mrb[0].mxu0
  %v2620 = vadd.f32 0.0, %v2619
  %v2621 = vpop.f32.mrb[0].mxu0
  %v2622 = vadd.f32 0.0, %v2621
  %2623 = vmatprep.mubr.f32.mxu0 0.0
  %2624 = vmatmul.mubr.f32.gmra.mrb[0].mxu0 %v2464
  %v2625 = vpop.f32.mrb[0].mxu0
  %v2626 = vadd.f32 0.0, %v2625
  %v2627 = vpop.f32.mrb[0].mxu0
  %v2628 = vadd.f32 0.0, %v2627
  %2629 = vmatprep.mubr.f32.mxu0 0.0
  %2630 = vmatmul.mubr.f32.gmra.mrb[0].mxu0 %v2467
  %v2631 = vpop.f32.mrb[0].mxu0
  %v2632 = vadd.f32 0.0, %v2631
  %v2633 = vpop.f32.mrb[0].mxu0
  %v2634 = vadd.f32 0.0, %v2633
  %2635 = vmatprep.mubr.f32.mxu0 0.0
  %2636 = vmatmul.mubr.f32.gmra.mrb[0].mxu0 %v2470
  %v2637 = vpop.f32.mrb[0].mxu0
  %v2638 = vadd.f32 0.0, %v2637
  %v2639 = vpop.f32.mrb[0].mxu0
  %v2640 = vadd.f32 0.0, %v2639
  %2641 = vmatprep.mubr.f32.mxu0 0.0
  %2642 = vmatmul.mubr.f32.gmra.mrb[0].mxu0 %v2473
  %v2643 = vpop.f32.mrb[0].mxu0
  %v2644 = vadd.f32 0.0, %v2643
  %v2645 = vpop.f32.mrb[0].mxu0
  %v2646 = vadd.f32 0.0, %v2645
  %2647 = vmatprep.mubr.f32.mxu0 0.0
  %2648 = vmatmul.mubr.f32.gmra.mrb[0].mxu0 %v2476
  %v2649 = vpop.f32.mrb[0].mxu0
  %v2650 = vadd.f32 0.0, %v2649
  %v2651 = vpop.f32.mrb[0].mxu0
  %v2652 = vadd.f32 0.0, %v2651
  %2653 = vdwg.mxu0
  %2654 = vmatprep.subr.mxu0 %v2408
  %2655 = vmatpush1.msra.mxu0 %v2407
  %2656 = vmatprep.subr.mxu0 %v2413
  %2657 = vmatpush1.msra.mxu0 %v2412
  %2658 = vmatprep.subr.mxu0 %v2418
  %2659 = vmatpush1.msra.mxu0 %v2417
  %2660 = vmatprep.subr.mxu0 %v2423
  %2661 = vmatpush1.msra.mxu0 %v2422
  %2662 = vmatprep.subr.mxu0 %v2488
  %2663 = vmatpush1.msra.mxu0 %v2485
  %2664 = vmatprep.subr.mxu0 0.0
  %2665 = vmatpush1.msra.mxu0 0.0
  %2666 = vmatprep.subr.mxu0 0.0
  %2667 = vmatpush1.msra.mxu0 0.0
  %2668 = vmatprep.subr.mxu0 0.0
  %2669 = vmatpush1.msra.mxu0 0.0
  %2670 = vmatprep.subr.mxu0 0.0
  %2671 = vmatpush1.msra.mxu0 0.0
  %2672 = vmatprep.subr.mxu0 0.0
  %2673 = vmatpush1.msra.mxu0 0.0
  %2674 = vmatprep.subr.mxu0 0.0
  %2675 = vmatpush1.msra.mxu0 0.0
  %2676 = vmatprep.subr.mxu0 0.0
  %2677 = vmatpush1.msra.mxu0 0.0
  %2678 = vmatprep.subr.mxu0 0.0
  %2679 = vmatpush1.msra.mxu0 0.0
  %2680 = vmatprep.subr.mxu0 0.0
  %2681 = vmatpush1.msra.mxu0 0.0
  %2682 = vmatprep.subr.mxu0 0.0
  %2683 = vmatpush1.msra.mxu0 0.0
  %2684 = vmatprep.subr.mxu0 0.0
  %2685 = vmatpush1.msra.mxu0 0.0
  %2686 = vmatprep.subr.mxu0 0.0
  %2687 = vmatpush1.msra.mxu0 0.0
  %2688 = vmatprep.subr.mxu0 0.0
  %2689 = vmatpush1.msra.mxu0 0.0
  %2690 = vmatprep.subr.mxu0 0.0
  %2691 = vmatpush1.msra.mxu0 0.0
  %2692 = vmatprep.subr.mxu0 0.0
  %2693 = vmatpush1.msra.mxu0 0.0
  %2694 = vmatprep.subr.mxu0 0.0
  %2695 = vmatpush1.msra.mxu0 0.0
  %2696 = vmatprep.subr.mxu0 0.0
  %2697 = vmatpush1.msra.mxu0 0.0
  %2698 = vmatprep.subr.mxu0 0.0
  %2699 = vmatpush1.msra.mxu0 0.0
  %2700 = vmatprep.subr.mxu0 0.0
  %2701 = vmatpush1.msra.mxu0 0.0
  %2702 = vmatprep.subr.mxu0 0.0
  %2703 = vmatpush1.msra.mxu0 0.0
  %2704 = vmatprep.subr.mxu0 0.0
  %2705 = vmatpush1.msra.mxu0 0.0
  %2706 = vmatprep.subr.mxu0 0.0
  %2707 = vmatpush1.msra.mxu0 0.0
  %2708 = vmatprep.subr.mxu0 0.0
  %2709 = vmatpush1.msra.mxu0 0.0
  %2710 = vmatprep.subr.mxu0 0.0
  %2711 = vmatpush1.msra.mxu0 0.0
  %2712 = vmatprep.subr.mxu0 0.0
  %2713 = vmatpush1.msra.mxu0 0.0
  %2714 = vmatprep.subr.mxu0 0.0
  %2715 = vmatpush1.msra.mxu0 0.0
  %2716 = vmatprep.subr.mxu0 0.0
  %2717 = vmatpush1.msra.mxu0 0.0
  %2718 = vmatprep.mubr.f32.mxu0 0.0
  %2719 = vmatmul.mubr.f32.gmra.mrb[0].mxu0 %v2431
  %v2720 = vpop.f32.mrb[0].mxu0
  %v2721 = vadd.f32 0.0, %v2720
  %v2722 = vpop.f32.mrb[0].mxu0
  %v2723 = vadd.f32 0.0, %v2722
  %2724 = vmatprep.mubr.f32.mxu0 0.0
  %2725 = vmatmul.mubr.f32.gmra.mrb[0].mxu0 %v2434
  %v2726 = vpop.f32.mrb[0].mxu0
  %v2727 = vadd.f32 0.0, %v2726
  %v2728 = vpop.f32.mrb[0].mxu0
  %v2729 = vadd.f32 0.0, %v2728
  %2730 = vmatprep.mubr.f32.mxu0 0.0
  %2731 = vmatmul.mubr.f32.gmra.mrb[0].mxu0 %v2437
  %v2732 = vpop.f32.mrb[0].mxu0
  %v2733 = vadd.f32 0.0, %v2732
  %v2734 = vpop.f32.mrb[0].mxu0
  %v2735 = vadd.f32 0.0, %v2734
  %2736 = vmatprep.mubr.f32.mxu0 0.0
  %2737 = vmatmul.mubr.f32.gmra.mrb[0].mxu0 %v2440
  %v2738 = vpop.f32.mrb[0].mxu0
  %v2739 = vadd.f32 0.0, %v2738
  %v2740 = vpop.f32.mrb[0].mxu0
  %v2741 = vadd.f32 0.0, %v2740
  %2742 = vmatprep.mubr.f32.mxu0 0.0
  %2743 = vmatmul.mubr.f32.gmra.mrb[0].mxu0 %v2443
  %v2744 = vpop.f32.mrb[0].mxu0
  %v2745 = vadd.f32 0.0, %v2744
  %v2746 = vpop.f32.mrb[0].mxu0
  %v2747 = vadd.f32 0.0, %v2746
  %2748 = vmatprep.mubr.f32.mxu0 0.0
  %2749 = vmatmul.mubr.f32.gmra.mrb[0].mxu0 %v2446
  %v2750 = vpop.f32.mrb[0].mxu0
  %v2751 = vadd.f32 0.0, %v2750
  %v2752 = vpop.f32.mrb[0].mxu0
  %v2753 = vadd.f32 0.0, %v2752
  %2754 = vmatprep.mubr.f32.mxu0 0.0
  %2755 = vmatmul.mubr.f32.gmra.mrb[0].mxu0 %v2449
  %v2756 = vpop.f32.mrb[0].mxu0
  %v2757 = vadd.f32 0.0, %v2756
  %v2758 = vpop.f32.mrb[0].mxu0
  %v2759 = vadd.f32 0.0, %v2758
  %2760 = vmatprep.mubr.f32.mxu0 0.0
  %2761 = vmatmul.mubr.f32.gmra.mrb[0].mxu0 %v2452
  %v2762 = vpop.f32.mrb[0].mxu0
  %v2763 = vadd.f32 0.0, %v2762
  %v2764 = vpop.f32.mrb[0].mxu0
  %v2765 = vadd.f32 0.0, %v2764
  %2766 = vmatprep.mubr.f32.mxu0 0.0
  %2767 = vmatmul.mubr.f32.gmra.mrb[0].mxu0 %v2455
  %v2768 = vpop.f32.mrb[0].mxu0
  %v2769 = vadd.f32 0.0, %v2768
  %v2770 = vpop.f32.mrb[0].mxu0
  %v2771 = vadd.f32 0.0, %v2770
  %2772 = vmatprep.mubr.f32.mxu0 0.0
  %2773 = vmatmul.mubr.f32.gmra.mrb[0].mxu0 %v2458
  %v2774 = vpop.f32.mrb[0].mxu0
  %v2775 = vadd.f32 0.0, %v2774
  %v2776 = vpop.f32.mrb[0].mxu0
  %v2777 = vadd.f32 0.0, %v2776
  %2778 = vmatprep.mubr.f32.mxu0 0.0
  %2779 = vmatmul.mubr.f32.gmra.mrb[0].mxu0 %v2461
  %v2780 = vpop.f32.mrb[0].mxu0
  %v2781 = vadd.f32 0.0, %v2780
  %v2782 = vpop.f32.mrb[0].mxu0
  %v2783 = vadd.f32 0.0, %v2782
  %2784 = vmatprep.mubr.f32.mxu0 0.0
  %2785 = vmatmul.mubr.f32.gmra.mrb[0].mxu0 %v2464
  %v2786 = vpop.f32.mrb[0].mxu0
  %v2787 = vadd.f32 0.0, %v2786
  %v2788 = vpop.f32.mrb[0].mxu0
  %v2789 = vadd.f32 0.0, %v2788
  %2790 = vmatprep.mubr.f32.mxu0 0.0
  %2791 = vmatmul.mubr.f32.gmra.mrb[0].mxu0 %v2467
  %v2792 = vpop.f32.mrb[0].mxu0
  %v2793 = vadd.f32 0.0, %v2792
  %v2794 = vpop.f32.mrb[0].mxu0
  %v2795 = vadd.f32 0.0, %v2794
  %2796 = vmatprep.mubr.f32.mxu0 0.0
  %2797 = vmatmul.mubr.f32.gmra.mrb[0].mxu0 %v2470
  %v2798 = vpop.f32.mrb[0].mxu0
  %v2799 = vadd.f32 0.0, %v2798
  %v2800 = vpop.f32.mrb[0].mxu0
  %v2801 = vadd.f32 0.0, %v2800
  %2802 = vmatprep.mubr.f32.mxu0 0.0
  %2803 = vmatmul.mubr.f32.gmra.mrb[0].mxu0 %v2473
  %v2804 = vpop.f32.mrb[0].mxu0
  %v2805 = vadd.f32 0.0, %v2804
  %v2806 = vpop.f32.mrb[0].mxu0
  %v2807 = vadd.f32 0.0, %v2806
  %2808 = vmatprep.mubr.f32.mxu0 0.0
  %2809 = vmatmul.mubr.f32.gmra.mrb[0].mxu0 %v2476
  %v2810 = vpop.f32.mrb[0].mxu0
  %v2811 = vadd.f32 0.0, %v2810
  %v2812 = vpop.f32.mrb[0].mxu0
  %v2813 = vadd.f32 0.0, %v2812
  %2814 = vdwg.mxu0
  %2815 = vmatprep.subr.mxu0 0.0
  %2816 = vmatpush1.msra.mxu0 %v2409
  %2817 = vmatprep.subr.mxu0 0.0
  %2818 = vmatpush1.msra.mxu0 %v2414
  %2819 = vmatprep.subr.mxu0 0.0
  %2820 = vmatpush1.msra.mxu0 %v2419
  %2821 = vmatprep.subr.mxu0 0.0
  %2822 = vmatpush1.msra.mxu0 %v2424
  %2823 = vmatprep.subr.mxu0 0.0
  %2824 = vmatpush1.msra.mxu0 %v2491
  %2825 = vmatprep.subr.mxu0 0.0
  %2826 = vmatpush1.msra.mxu0 0.0
  %2827 = vmatprep.subr.mxu0 0.0
  %2828 = vmatpush1.msra.mxu0 0.0
  %2829 = vmatprep.subr.mxu0 0.0
  %2830 = vmatpush1.msra.mxu0 0.0
  %2831 = vmatprep.subr.mxu0 0.0
  %2832 = vmatpush1.msra.mxu0 0.0
  %2833 = vmatprep.subr.mxu0 0.0
  %2834 = vmatpush1.msra.mxu0 0.0
  %2835 = vmatprep.subr.mxu0 0.0
  %2836 = vmatpush1.msra.mxu0 0.0
  %2837 = vmatprep.subr.mxu0 0.0
  %2838 = vmatpush1.msra.mxu0 0.0
  %2839 = vmatprep.subr.mxu0 0.0
  %2840 = vmatpush1.msra.mxu0 0.0
  %2841 = vmatprep.subr.mxu0 0.0
  %2842 = vmatpush1.msra.mxu0 0.0
  %2843 = vmatprep.subr.mxu0 0.0
  %2844 = vmatpush1.msra.mxu0 0.0
  %2845 = vmatprep.subr.mxu0 0.0
  %2846 = vmatpush1.msra.mxu0 0.0
  %2847 = vmatprep.subr.mxu0 0.0
  %2848 = vmatpush1.msra.mxu0 0.0
  %2849 = vmatprep.subr.mxu0 0.0
  %2850 = vmatpush1.msra.mxu0 0.0
  %2851 = vmatprep.subr.mxu0 0.0
  %2852 = vmatpush1.msra.mxu0 0.0
  %2853 = vmatprep.subr.mxu0 0.0
  %2854 = vmatpush1.msra.mxu0 0.0
  %2855 = vmatprep.subr.mxu0 0.0
  %2856 = vmatpush1.msra.mxu0 0.0
  %2857 = vmatprep.subr.mxu0 0.0
  %2858 = vmatpush1.msra.mxu0 0.0
  %2859 = vmatprep.subr.mxu0 0.0
  %2860 = vmatpush1.msra.mxu0 0.0
  %2861 = vmatprep.subr.mxu0 0.0
  %2862 = vmatpush1.msra.mxu0 0.0
  %2863 = vmatprep.subr.mxu0 0.0
  %2864 = vmatpush1.msra.mxu0 0.0
  %2865 = vmatprep.subr.mxu0 0.0
  %2866 = vmatpush1.msra.mxu0 0.0
  %2867 = vmatprep.subr.mxu0 0.0
  %2868 = vmatpush1.msra.mxu0 0.0
  %2869 = vmatprep.subr.mxu0 0.0
  %2870 = vmatpush1.msra.mxu0 0.0
  %2871 = vmatprep.subr.mxu0 0.0
  %2872 = vmatpush1.msra.mxu0 0.0
  %2873 = vmatprep.subr.mxu0 0.0
  %2874 = vmatpush1.msra.mxu0 0.0
  %2875 = vmatprep.subr.mxu0 0.0
  %2876 = vmatpush1.msra.mxu0 0.0
  %2877 = vmatprep.subr.mxu0 0.0
  %2878 = vmatpush1.msra.mxu0 0.0
  %2879 = vmatprep.mubr.f32.mxu0 0.0
  %2880 = vmatmul.mubr.f32.gmra.mrb[0].mxu0 %v2431
  %v2881 = vpop.f32.mrb[0].mxu0
  %v2882 = vadd.f32 0.0, %v2881
  %v2883 = vpop.f32.mrb[0].mxu0
  %2884 = vmatprep.mubr.f32.mxu0 0.0
  %2885 = vmatmul.mubr.f32.gmra.mrb[0].mxu0 %v2434
  %v2886 = vpop.f32.mrb[0].mxu0
  %v2887 = vadd.f32 0.0, %v2886
  %v2888 = vpop.f32.mrb[0].mxu0
  %2889 = vmatprep.mubr.f32.mxu0 0.0
  %2890 = vmatmul.mubr.f32.gmra.mrb[0].mxu0 %v2437
  %v2891 = vpop.f32.mrb[0].mxu0
  %v2892 = vadd.f32 0.0, %v2891
  %v2893 = vpop.f32.mrb[0].mxu0
  %2894 = vmatprep.mubr.f32.mxu0 0.0
  %2895 = vmatmul.mubr.f32.gmra.mrb[0].mxu0 %v2440
  %v2896 = vpop.f32.mrb[0].mxu0
  %v2897 = vadd.f32 0.0, %v2896
  %v2898 = vpop.f32.mrb[0].mxu0
  %2899 = vmatprep.mubr.f32.mxu0 0.0
  %2900 = vmatmul.mubr.f32.gmra.mrb[0].mxu0 %v2443
  %v2901 = vpop.f32.mrb[0].mxu0
  %v2902 = vadd.f32 0.0, %v2901
  %v2903 = vpop.f32.mrb[0].mxu0
  %2904 = vmatprep.mubr.f32.mxu0 0.0
  %2905 = vmatmul.mubr.f32.gmra.mrb[0].mxu0 %v2446
  %v2906 = vpop.f32.mrb[0].mxu0
  %v2907 = vadd.f32 0.0, %v2906
  %v2908 = vpop.f32.mrb[0].mxu0
  %2909 = vmatprep.mubr.f32.mxu0 0.0
  %2910 = vmatmul.mubr.f32.gmra.mrb[0].mxu0 %v2449
  %v2911 = vpop.f32.mrb[0].mxu0
  %v2912 = vadd.f32 0.0, %v2911
  %v2913 = vpop.f32.mrb[0].mxu0
  %2914 = vmatprep.mubr.f32.mxu0 0.0
  %2915 = vmatmul.mubr.f32.gmra.mrb[0].mxu0 %v2452
  %v2916 = vpop.f32.mrb[0].mxu0
  %v2917 = vadd.f32 0.0, %v2916
  %v2918 = vpop.f32.mrb[0].mxu0
  %2919 = vmatprep.mubr.f32.mxu0 0.0
  %2920 = vmatmul.mubr.f32.gmra.mrb[0].mxu0 %v2455
  %v2921 = vpop.f32.mrb[0].mxu0
  %v2922 = vadd.f32 0.0, %v2921
  %v2923 = vpop.f32.mrb[0].mxu0
  %2924 = vmatprep.mubr.f32.mxu0 0.0
  %2925 = vmatmul.mubr.f32.gmra.mrb[0].mxu0 %v2458
  %v2926 = vpop.f32.mrb[0].mxu0
  %v2927 = vadd.f32 0.0, %v2926
  %v2928 = vpop.f32.mrb[0].mxu0
  %2929 = vmatprep.mubr.f32.mxu0 0.0
  %2930 = vmatmul.mubr.f32.gmra.mrb[0].mxu0 %v2461
  %v2931 = vpop.f32.mrb[0].mxu0
  %v2932 = vadd.f32 0.0, %v2931
  %v2933 = vpop.f32.mrb[0].mxu0
  %2934 = vmatprep.mubr.f32.mxu0 0.0
  %2935 = vmatmul.mubr.f32.gmra.mrb[0].mxu0 %v2464
  %v2936 = vpop.f32.mrb[0].mxu0
  %v2937 = vadd.f32 0.0, %v2936
  %v2938 = vpop.f32.mrb[0].mxu0
  %2939 = vmatprep.mubr.f32.mxu0 0.0
  %2940 = vmatmul.mubr.f32.gmra.mrb[0].mxu0 %v2467
  %v2941 = vpop.f32.mrb[0].mxu0
  %v2942 = vadd.f32 0.0, %v2941
  %v2943 = vpop.f32.mrb[0].mxu0
  %2944 = vmatprep.mubr.f32.mxu0 0.0
  %2945 = vmatmul.mubr.f32.gmra.mrb[0].mxu0 %v2470
  %v2946 = vpop.f32.mrb[0].mxu0
  %v2947 = vadd.f32 0.0, %v2946
  %v2948 = vpop.f32.mrb[0].mxu0
  %2949 = vmatprep.mubr.f32.mxu0 0.0
  %2950 = vmatmul.mubr.f32.gmra.mrb[0].mxu0 %v2473
  %v2951 = vpop.f32.mrb[0].mxu0
  %v2952 = vadd.f32 0.0, %v2951
  %v2953 = vpop.f32.mrb[0].mxu0
  %2954 = vmatprep.mubr.f32.mxu0 0.0
  %2955 = vmatmul.mubr.f32.gmra.mrb[0].mxu0 %v2476
  %v2956 = vpop.f32.mrb[0].mxu0
  %v2957 = vadd.f32 0.0, %v2956
  %v2958 = vpop.f32.mrb[0].mxu0
  %2959 = vdwg.mxu0
  %s2960 = scalar_lea.vmem %s2, 40
  %v2961 = vld [vmem:[%s2960] sm:$0xff]
  %v2962 = vld [vmem:[%s2960 + $0x8] sm:$0xff]
  %v2963 = vld [vmem:[%s2960 + $0x10] sm:$0xff]
  %v2964 = vld [vmem:[%s2960 + $0x18] sm:$0xff]
  %v2965 = vld [vmem:[%s2960 + $0x20] sm:$0x1]
  %v2967 = vsel %vm132, %v2965, 0
  %2969 = vmatprep.subr.mxu0 0.0
  %2970 = vmatpush1.msra.mxu0 %v2961
  %2971 = vmatprep.subr.mxu0 0.0
  %2972 = vmatpush1.msra.mxu0 %v2962
  %2973 = vmatprep.subr.mxu0 0.0
  %2974 = vmatpush1.msra.mxu0 %v2963
  %2975 = vmatprep.subr.mxu0 0.0
  %2976 = vmatpush1.msra.mxu0 %v2964
  %2977 = vmatprep.subr.mxu0 0.0
  %2978 = vmatpush1.msra.mxu0 %v2967
  %2979 = vmatprep.subr.mxu0 0.0
  %2980 = vmatpush1.msra.mxu0 0.0
  %2981 = vmatprep.subr.mxu0 0.0
  %2982 = vmatpush1.msra.mxu0 0.0
  %2983 = vmatprep.subr.mxu0 0.0
  %2984 = vmatpush1.msra.mxu0 0.0
  %2985 = vmatprep.subr.mxu0 0.0
  %2986 = vmatpush1.msra.mxu0 0.0
  %2987 = vmatprep.subr.mxu0 0.0
  %2988 = vmatpush1.msra.mxu0 0.0
  %2989 = vmatprep.subr.mxu0 0.0
  %2990 = vmatpush1.msra.mxu0 0.0
  %2991 = vmatprep.subr.mxu0 0.0
  %2992 = vmatpush1.msra.mxu0 0.0
  %2993 = vmatprep.subr.mxu0 0.0
  %2994 = vmatpush1.msra.mxu0 0.0
  %2995 = vmatprep.subr.mxu0 0.0
  %2996 = vmatpush1.msra.mxu0 0.0
  %2997 = vmatprep.subr.mxu0 0.0
  %2998 = vmatpush1.msra.mxu0 0.0
  %2999 = vmatprep.subr.mxu0 0.0
  %3000 = vmatpush1.msra.mxu0 0.0
  %3001 = vmatprep.subr.mxu0 0.0
  %3002 = vmatpush1.msra.mxu0 0.0
  %3003 = vmatprep.subr.mxu0 0.0
  %3004 = vmatpush1.msra.mxu0 0.0
  %3005 = vmatprep.subr.mxu0 0.0
  %3006 = vmatpush1.msra.mxu0 0.0
  %3007 = vmatprep.subr.mxu0 0.0
  %3008 = vmatpush1.msra.mxu0 0.0
  %3009 = vmatprep.subr.mxu0 0.0
  %3010 = vmatpush1.msra.mxu0 0.0
  %3011 = vmatprep.subr.mxu0 0.0
  %3012 = vmatpush1.msra.mxu0 0.0
  %3013 = vmatprep.subr.mxu0 0.0
  %3014 = vmatpush1.msra.mxu0 0.0
  %3015 = vmatprep.subr.mxu0 0.0
  %3016 = vmatpush1.msra.mxu0 0.0
  %3017 = vmatprep.subr.mxu0 0.0
  %3018 = vmatpush1.msra.mxu0 0.0
  %3019 = vmatprep.subr.mxu0 0.0
  %3020 = vmatpush1.msra.mxu0 0.0
  %3021 = vmatprep.subr.mxu0 0.0
  %3022 = vmatpush1.msra.mxu0 0.0
  %3023 = vmatprep.subr.mxu0 0.0
  %3024 = vmatpush1.msra.mxu0 0.0
  %3025 = vmatprep.subr.mxu0 0.0
  %3026 = vmatpush1.msra.mxu0 0.0
  %3027 = vmatprep.subr.mxu0 0.0
  %3028 = vmatpush1.msra.mxu0 0.0
  %3029 = vmatprep.subr.mxu0 0.0
  %3030 = vmatpush1.msra.mxu0 0.0
  %3031 = vmatprep.subr.mxu0 0.0
  %3032 = vmatpush1.msra.mxu0 0.0
  %3033 = vmatprep.mubr.f32.mxu0 0.0
  %3034 = vmatmul.mubr.f32.gmra.mrb[0].mxu0 %v2431
  %v3035 = vpop.f32.mrb[0].mxu0
  %v3036 = vadd.f32 0.0, %v3035
  %v3037 = vpop.f32.mrb[0].mxu0
  %3038 = vmatprep.mubr.f32.mxu0 0.0
  %3039 = vmatmul.mubr.f32.gmra.mrb[0].mxu0 %v2434
  %v3040 = vpop.f32.mrb[0].mxu0
  %v3041 = vadd.f32 0.0, %v3040
  %v3042 = vpop.f32.mrb[0].mxu0
  %3043 = vmatprep.mubr.f32.mxu0 0.0
  %3044 = vmatmul.mubr.f32.gmra.mrb[0].mxu0 %v2437
  %v3045 = vpop.f32.mrb[0].mxu0
  %v3046 = vadd.f32 0.0, %v3045
  %v3047 = vpop.f32.mrb[0].mxu0
  %3048 = vmatprep.mubr.f32.mxu0 0.0
  %3049 = vmatmul.mubr.f32.gmra.mrb[0].mxu0 %v2440
  %v3050 = vpop.f32.mrb[0].mxu0
  %v3051 = vadd.f32 0.0, %v3050
  %v3052 = vpop.f32.mrb[0].mxu0
  %3053 = vmatprep.mubr.f32.mxu0 0.0
  %3054 = vmatmul.mubr.f32.gmra.mrb[0].mxu0 %v2443
  %v3055 = vpop.f32.mrb[0].mxu0
  %v3056 = vadd.f32 0.0, %v3055
  %v3057 = vpop.f32.mrb[0].mxu0
  %3058 = vmatprep.mubr.f32.mxu0 0.0
  %3059 = vmatmul.mubr.f32.gmra.mrb[0].mxu0 %v2446
  %v3060 = vpop.f32.mrb[0].mxu0
  %v3061 = vadd.f32 0.0, %v3060
  %v3062 = vpop.f32.mrb[0].mxu0
  %3063 = vmatprep.mubr.f32.mxu0 0.0
  %3064 = vmatmul.mubr.f32.gmra.mrb[0].mxu0 %v2449
  %v3065 = vpop.f32.mrb[0].mxu0
  %v3066 = vadd.f32 0.0, %v3065
  %v3067 = vpop.f32.mrb[0].mxu0
  %3068 = vmatprep.mubr.f32.mxu0 0.0
  %3069 = vmatmul.mubr.f32.gmra.mrb[0].mxu0 %v2452
  %v3070 = vpop.f32.mrb[0].mxu0
  %v3071 = vadd.f32 0.0, %v3070
  %v3072 = vpop.f32.mrb[0].mxu0
  %3073 = vmatprep.mubr.f32.mxu0 0.0
  %3074 = vmatmul.mubr.f32.gmra.mrb[0].mxu0 %v2455
  %v3075 = vpop.f32.mrb[0].mxu0
  %v3076 = vadd.f32 0.0, %v3075
  %v3077 = vpop.f32.mrb[0].mxu0
  %3078 = vmatprep.mubr.f32.mxu0 0.0
  %3079 = vmatmul.mubr.f32.gmra.mrb[0].mxu0 %v2458
  %v3080 = vpop.f32.mrb[0].mxu0
  %v3081 = vadd.f32 0.0, %v3080
  %v3082 = vpop.f32.mrb[0].mxu0
  %3083 = vmatprep.mubr.f32.mxu0 0.0
  %3084 = vmatmul.mubr.f32.gmra.mrb[0].mxu0 %v2461
  %v3085 = vpop.f32.mrb[0].mxu0
  %v3086 = vadd.f32 0.0, %v3085
  %v3087 = vpop.f32.mrb[0].mxu0
  %3088 = vmatprep.mubr.f32.mxu0 0.0
  %3089 = vmatmul.mubr.f32.gmra.mrb[0].mxu0 %v2464
  %v3090 = vpop.f32.mrb[0].mxu0
  %v3091 = vadd.f32 0.0, %v3090
  %v3092 = vpop.f32.mrb[0].mxu0
  %3093 = vmatprep.mubr.f32.mxu0 0.0
  %3094 = vmatmul.mubr.f32.gmra.mrb[0].mxu0 %v2467
  %v3095 = vpop.f32.mrb[0].mxu0
  %v3096 = vadd.f32 0.0, %v3095
  %v3097 = vpop.f32.mrb[0].mxu0
  %3098 = vmatprep.mubr.f32.mxu0 0.0
  %3099 = vmatmul.mubr.f32.gmra.mrb[0].mxu0 %v2470
  %v3100 = vpop.f32.mrb[0].mxu0
  %v3101 = vadd.f32 0.0, %v3100
  %v3102 = vpop.f32.mrb[0].mxu0
  %3103 = vmatprep.mubr.f32.mxu0 0.0
  %3104 = vmatmul.mubr.f32.gmra.mrb[0].mxu0 %v2473
  %v3105 = vpop.f32.mrb[0].mxu0
  %v3106 = vadd.f32 0.0, %v3105
  %v3107 = vpop.f32.mrb[0].mxu0
  %3108 = vmatprep.mubr.f32.mxu0 0.0
  %3109 = vmatmul.mubr.f32.gmra.mrb[0].mxu0 %v2476
  %v3110 = vpop.f32.mrb[0].mxu0
  %v3111 = vadd.f32 0.0, %v3110
  %v3112 = vpop.f32.mrb[0].mxu0
  %3113 = vdwg.mxu0
  %3114 = vmatprep.subr.mxu0 0.0
  %3115 = vmatpush1.msra.mxu0 %v3036
  %3116 = vmatprep.subr.mxu0 0.0
  %3117 = vmatpush1.msra.mxu0 %v3041
  %3118 = vmatprep.subr.mxu0 0.0
  %3119 = vmatpush1.msra.mxu0 %v3046
  %3120 = vmatprep.subr.mxu0 0.0
  %3121 = vmatpush1.msra.mxu0 %v3051
  %3122 = vmatprep.subr.mxu0 0.0
  %3123 = vmatpush1.msra.mxu0 %v3056
  %3124 = vmatprep.subr.mxu0 0.0
  %3125 = vmatpush1.msra.mxu0 %v3061
  %3126 = vmatprep.subr.mxu0 0.0
  %3127 = vmatpush1.msra.mxu0 %v3066
  %3128 = vmatprep.subr.mxu0 0.0
  %3129 = vmatpush1.msra.mxu0 %v3071
  %3130 = vmatprep.subr.mxu0 0.0
  %3131 = vmatpush1.msra.mxu0 %v3076
  %3132 = vmatprep.subr.mxu0 0.0
  %3133 = vmatpush1.msra.mxu0 %v3081
  %3134 = vmatprep.subr.mxu0 0.0
  %3135 = vmatpush1.msra.mxu0 %v3086
  %3136 = vmatprep.subr.mxu0 0.0
  %3137 = vmatpush1.msra.mxu0 %v3091
  %3138 = vmatprep.subr.mxu0 0.0
  %3139 = vmatpush1.msra.mxu0 %v3096
  %3140 = vmatprep.subr.mxu0 0.0
  %3141 = vmatpush1.msra.mxu0 %v3101
  %3142 = vmatprep.subr.mxu0 0.0
  %3143 = vmatpush1.msra.mxu0 %v3106
  %3144 = vmatprep.subr.mxu0 0.0
  %3145 = vmatpush1.msra.mxu0 %v3111
  %3146 = vmatprep.subr.mxu0 0.0
  %3147 = vmatpush1.msra.mxu0 0.0
  %3148 = vmatprep.subr.mxu0 0.0
  %3149 = vmatpush1.msra.mxu0 0.0
  %3150 = vmatprep.subr.mxu0 0.0
  %3151 = vmatpush1.msra.mxu0 0.0
  %3152 = vmatprep.subr.mxu0 0.0
  %3153 = vmatpush1.msra.mxu0 0.0
  %3154 = vmatprep.subr.mxu0 0.0
  %3155 = vmatpush1.msra.mxu0 0.0
  %3156 = vmatprep.subr.mxu0 0.0
  %3157 = vmatpush1.msra.mxu0 0.0
  %3158 = vmatprep.subr.mxu0 0.0
  %3159 = vmatpush1.msra.mxu0 0.0
  %3160 = vmatprep.subr.mxu0 0.0
  %3161 = vmatpush1.msra.mxu0 0.0
  %3162 = vmatprep.subr.mxu0 0.0
  %3163 = vmatpush1.msra.mxu0 0.0
  %3164 = vmatprep.subr.mxu0 0.0
  %3165 = vmatpush1.msra.mxu0 0.0
  %3166 = vmatprep.subr.mxu0 0.0
  %3167 = vmatpush1.msra.mxu0 0.0
  %3168 = vmatprep.subr.mxu0 0.0
  %3169 = vmatpush1.msra.mxu0 0.0
  %3170 = vmatprep.subr.mxu0 0.0
  %3171 = vmatpush1.msra.mxu0 0.0
  %3172 = vmatprep.subr.mxu0 0.0
  %3173 = vmatpush1.msra.mxu0 0.0
  %3174 = vmatprep.subr.mxu0 0.0
  %3175 = vmatpush1.msra.mxu0 0.0
  %3176 = vmatprep.subr.mxu0 0.0
  %3177 = vmatpush1.msra.mxu0 0.0
  %3178 = vmatprep.mubr.f32.mxu0 0.0
  %3179 = vmatmul.mubr.f32.gmra.mrb[0].mxu0 %v26
  %v3180 = vpop.f32.mrb[0].mxu0
  %v3181 = vadd.f32 %v2560, %v3180
  %v3182 = vpop.f32.mrb[0].mxu0
  %3183 = vmatprep.mubr.f32.mxu0 0.0
  %3184 = vmatmul.mubr.f32.gmra.mrb[0].mxu0 %v27
  %v3185 = vpop.f32.mrb[0].mxu0
  %v3186 = vadd.f32 %v2566, %v3185
  %v3187 = vpop.f32.mrb[0].mxu0
  %3188 = vmatprep.mubr.f32.mxu0 0.0
  %3189 = vmatmul.mubr.f32.gmra.mrb[0].mxu0 %v28
  %v3190 = vpop.f32.mrb[0].mxu0
  %v3191 = vadd.f32 %v2572, %v3190
  %v3192 = vpop.f32.mrb[0].mxu0
  %3193 = vmatprep.mubr.f32.mxu0 0.0
  %3194 = vmatmul.mubr.f32.gmra.mrb[0].mxu0 %v29
  %v3195 = vpop.f32.mrb[0].mxu0
  %v3196 = vadd.f32 %v2578, %v3195
  %v3197 = vpop.f32.mrb[0].mxu0
  %3198 = vmatprep.mubr.f32.mxu0 0.0
  %3199 = vmatmul.mubr.f32.gmra.mrb[0].mxu0 %v30
  %v3200 = vpop.f32.mrb[0].mxu0
  %v3201 = vadd.f32 %v2584, %v3200
  %v3202 = vpop.f32.mrb[0].mxu0
  %3203 = vmatprep.mubr.f32.mxu0 0.0
  %3204 = vmatmul.mubr.f32.gmra.mrb[0].mxu0 %v31
  %v3205 = vpop.f32.mrb[0].mxu0
  %v3206 = vadd.f32 %v2590, %v3205
  %v3207 = vpop.f32.mrb[0].mxu0
  %3208 = vmatprep.mubr.f32.mxu0 0.0
  %3209 = vmatmul.mubr.f32.gmra.mrb[0].mxu0 %v32
  %v3210 = vpop.f32.mrb[0].mxu0
  %v3211 = vadd.f32 %v2596, %v3210
  %v3212 = vpop.f32.mrb[0].mxu0
  %3213 = vmatprep.mubr.f32.mxu0 0.0
  %3214 = vmatmul.mubr.f32.gmra.mrb[0].mxu0 %v33
  %v3215 = vpop.f32.mrb[0].mxu0
  %v3216 = vadd.f32 %v2602, %v3215
  %v3217 = vpop.f32.mrb[0].mxu0
  %3218 = vmatprep.mubr.f32.mxu0 0.0
  %3219 = vmatmul.mubr.f32.gmra.mrb[0].mxu0 %v34
  %v3220 = vpop.f32.mrb[0].mxu0
  %v3221 = vadd.f32 %v2608, %v3220
  %v3222 = vpop.f32.mrb[0].mxu0
  %3223 = vmatprep.mubr.f32.mxu0 0.0
  %3224 = vmatmul.mubr.f32.gmra.mrb[0].mxu0 %v35
  %v3225 = vpop.f32.mrb[0].mxu0
  %v3226 = vadd.f32 %v2614, %v3225
  %v3227 = vpop.f32.mrb[0].mxu0
  %3228 = vmatprep.mubr.f32.mxu0 0.0
  %3229 = vmatmul.mubr.f32.gmra.mrb[0].mxu0 %v36
  %v3230 = vpop.f32.mrb[0].mxu0
  %v3231 = vadd.f32 %v2620, %v3230
  %v3232 = vpop.f32.mrb[0].mxu0
  %3233 = vmatprep.mubr.f32.mxu0 0.0
  %3234 = vmatmul.mubr.f32.gmra.mrb[0].mxu0 %v37
  %v3235 = vpop.f32.mrb[0].mxu0
  %v3236 = vadd.f32 %v2626, %v3235
  %v3237 = vpop.f32.mrb[0].mxu0
  %3238 = vmatprep.mubr.f32.mxu0 0.0
  %3239 = vmatmul.mubr.f32.gmra.mrb[0].mxu0 %v38
  %v3240 = vpop.f32.mrb[0].mxu0
  %v3241 = vadd.f32 %v2632, %v3240
  %v3242 = vpop.f32.mrb[0].mxu0
  %3243 = vmatprep.mubr.f32.mxu0 0.0
  %3244 = vmatmul.mubr.f32.gmra.mrb[0].mxu0 %v39
  %v3245 = vpop.f32.mrb[0].mxu0
  %v3246 = vadd.f32 %v2638, %v3245
  %v3247 = vpop.f32.mrb[0].mxu0
  %3248 = vmatprep.mubr.f32.mxu0 0.0
  %3249 = vmatmul.mubr.f32.gmra.mrb[0].mxu0 %v40
  %v3250 = vpop.f32.mrb[0].mxu0
  %v3251 = vadd.f32 %v2644, %v3250
  %v3252 = vpop.f32.mrb[0].mxu0
  %3253 = vmatprep.mubr.f32.mxu0 0.0
  %3254 = vmatmul.mubr.f32.gmra.mrb[0].mxu0 %v41
  %v3255 = vpop.f32.mrb[0].mxu0
  %v3256 = vadd.f32 %v2650, %v3255
  %v3257 = vpop.f32.mrb[0].mxu0
  %3258 = vdwg.mxu0
  %v3259 = vmax.f32 %v3181, 0.0
  %v3260 = vmax.f32 %v3186, 0.0
  %v3261 = vmax.f32 %v3191, 0.0
  %v3262 = vmax.f32 %v3196, 0.0
  %v3263 = vmax.f32 %v3201, 0.0
  %v3264 = vmax.f32 %v3206, 0.0
  %v3265 = vmax.f32 %v3211, 0.0
  %v3266 = vmax.f32 %v3216, 0.0
  %v3267 = vmax.f32 %v3221, 0.0
  %v3268 = vmax.f32 %v3226, 0.0
  %v3269 = vmax.f32 %v3231, 0.0
  %v3270 = vmax.f32 %v3236, 0.0
  %v3271 = vmax.f32 %v3241, 0.0
  %v3272 = vmax.f32 %v3246, 0.0
  %v3273 = vmax.f32 %v3251, 0.0
  %v3274 = vmax.f32 %v3256, 0.0
  %s3275 = scalar_lea.vmem %s3, 512
  %v3276 = vld [vmem:[%s3275] sm:$0xff]
  %v3277 = vld [vmem:[%s3275 + $0x8] sm:$0xff]
  %v3278 = vld [vmem:[%s3275 + $0x10] sm:$0xff]
  %v3279 = vld [vmem:[%s3275 + $0x18] sm:$0xff]
  %v3280 = vld [vmem:[%s3275 + $0x20] sm:$0xff]
  %v3281 = vld [vmem:[%s3275 + $0x28] sm:$0xff]
  %v3282 = vld [vmem:[%s3275 + $0x30] sm:$0xff]
  %v3283 = vld [vmem:[%s3275 + $0x38] sm:$0xff]
  %v3284 = vld [vmem:[%s3275 + $0x40] sm:$0xff]
  %v3285 = vld [vmem:[%s3275 + $0x48] sm:$0xff]
  %v3286 = vld [vmem:[%s3275 + $0x50] sm:$0xff]
  %v3287 = vld [vmem:[%s3275 + $0x58] sm:$0xff]
  %v3288 = vld [vmem:[%s3275 + $0x60] sm:$0xff]
  %v3289 = vld [vmem:[%s3275 + $0x68] sm:$0xff]
  %v3290 = vld [vmem:[%s3275 + $0x70] sm:$0xff]
  %v3291 = vld [vmem:[%s3275 + $0x78] sm:$0xff]
  %3292 = vmatprep.subr.mxu0 0.0
  %3293 = vmatpush1.msra.mxu0 %v3276
  %3294 = vmatprep.subr.mxu0 0.0
  %3295 = vmatpush1.msra.mxu0 %v3277
  %3296 = vmatprep.subr.mxu0 0.0
  %3297 = vmatpush1.msra.mxu0 %v3278
  %3298 = vmatprep.subr.mxu0 0.0
  %3299 = vmatpush1.msra.mxu0 %v3279
  %3300 = vmatprep.subr.mxu0 0.0
  %3301 = vmatpush1.msra.mxu0 %v3280
  %3302 = vmatprep.subr.mxu0 0.0
  %3303 = vmatpush1.msra.mxu0 %v3281
  %3304 = vmatprep.subr.mxu0 0.0
  %3305 = vmatpush1.msra.mxu0 %v3282
  %3306 = vmatprep.subr.mxu0 0.0
  %3307 = vmatpush1.msra.mxu0 %v3283
  %3308 = vmatprep.subr.mxu0 0.0
  %3309 = vmatpush1.msra.mxu0 %v3284
  %3310 = vmatprep.subr.mxu0 0.0
  %3311 = vmatpush1.msra.mxu0 %v3285
  %3312 = vmatprep.subr.mxu0 0.0
  %3313 = vmatpush1.msra.mxu0 %v3286
  %3314 = vmatprep.subr.mxu0 0.0
  %3315 = vmatpush1.msra.mxu0 %v3287
  %3316 = vmatprep.subr.mxu0 0.0
  %3317 = vmatpush1.msra.mxu0 %v3288
  %3318 = vmatprep.subr.mxu0 0.0
  %3319 = vmatpush1.msra.mxu0 %v3289
  %3320 = vmatprep.subr.mxu0 0.0
  %3321 = vmatpush1.msra.mxu0 %v3290
  %3322 = vmatprep.subr.mxu0 0.0
  %3323 = vmatpush1.msra.mxu0 %v3291
  %3324 = vmatprep.subr.mxu0 0.0
  %3325 = vmatpush1.msra.mxu0 0.0
  %3326 = vmatprep.subr.mxu0 0.0
  %3327 = vmatpush1.msra.mxu0 0.0
  %3328 = vmatprep.subr.mxu0 0.0
  %3329 = vmatpush1.msra.mxu0 0.0
  %3330 = vmatprep.subr.mxu0 0.0
  %3331 = vmatpush1.msra.mxu0 0.0
  %3332 = vmatprep.subr.mxu0 0.0
  %3333 = vmatpush1.msra.mxu0 0.0
  %3334 = vmatprep.subr.mxu0 0.0
  %3335 = vmatpush1.msra.mxu0 0.0
  %3336 = vmatprep.subr.mxu0 0.0
  %3337 = vmatpush1.msra.mxu0 0.0
  %3338 = vmatprep.subr.mxu0 0.0
  %3339 = vmatpush1.msra.mxu0 0.0
  %3340 = vmatprep.subr.mxu0 0.0
  %3341 = vmatpush1.msra.mxu0 0.0
  %3342 = vmatprep.subr.mxu0 0.0
  %3343 = vmatpush1.msra.mxu0 0.0
  %3344 = vmatprep.subr.mxu0 0.0
  %3345 = vmatpush1.msra.mxu0 0.0
  %3346 = vmatprep.subr.mxu0 0.0
  %3347 = vmatpush1.msra.mxu0 0.0
  %3348 = vmatprep.subr.mxu0 0.0
  %3349 = vmatpush1.msra.mxu0 0.0
  %3350 = vmatprep.subr.mxu0 0.0
  %3351 = vmatpush1.msra.mxu0 0.0
  %3352 = vmatprep.subr.mxu0 0.0
  %3353 = vmatpush1.msra.mxu0 0.0
  %3354 = vmatprep.subr.mxu0 0.0
  %3355 = vmatpush1.msra.mxu0 0.0
  %3356 = vmatprep.mubr.f32.mxu0 0.0
  %3357 = vmatmul.mubr.f32.gmra.mrb[0].mxu0 %v3259
  %v3358 = vpop.f32.mrb[0].mxu0
  %v3359 = vadd.f32 0.0, %v3358
  %v3360 = vpop.f32.mrb[0].mxu0
  %3361 = vmatprep.mubr.f32.mxu0 0.0
  %3362 = vmatmul.mubr.f32.gmra.mrb[0].mxu0 %v3260
  %v3363 = vpop.f32.mrb[0].mxu0
  %v3364 = vadd.f32 0.0, %v3363
  %v3365 = vpop.f32.mrb[0].mxu0
  %3366 = vmatprep.mubr.f32.mxu0 0.0
  %3367 = vmatmul.mubr.f32.gmra.mrb[0].mxu0 %v3261
  %v3368 = vpop.f32.mrb[0].mxu0
  %v3369 = vadd.f32 0.0, %v3368
  %v3370 = vpop.f32.mrb[0].mxu0
  %3371 = vmatprep.mubr.f32.mxu0 0.0
  %3372 = vmatmul.mubr.f32.gmra.mrb[0].mxu0 %v3262
  %v3373 = vpop.f32.mrb[0].mxu0
  %v3374 = vadd.f32 0.0, %v3373
  %v3375 = vpop.f32.mrb[0].mxu0
  %3376 = vmatprep.mubr.f32.mxu0 0.0
  %3377 = vmatmul.mubr.f32.gmra.mrb[0].mxu0 %v3263
  %v3378 = vpop.f32.mrb[0].mxu0
  %v3379 = vadd.f32 0.0, %v3378
  %v3380 = vpop.f32.mrb[0].mxu0
  %3381 = vmatprep.mubr.f32.mxu0 0.0
  %3382 = vmatmul.mubr.f32.gmra.mrb[0].mxu0 %v3264
  %v3383 = vpop.f32.mrb[0].mxu0
  %v3384 = vadd.f32 0.0, %v3383
  %v3385 = vpop.f32.mrb[0].mxu0
  %3386 = vmatprep.mubr.f32.mxu0 0.0
  %3387 = vmatmul.mubr.f32.gmra.mrb[0].mxu0 %v3265
  %v3388 = vpop.f32.mrb[0].mxu0
  %v3389 = vadd.f32 0.0, %v3388
  %v3390 = vpop.f32.mrb[0].mxu0
  %3391 = vmatprep.mubr.f32.mxu0 0.0
  %3392 = vmatmul.mubr.f32.gmra.mrb[0].mxu0 %v3266
  %v3393 = vpop.f32.mrb[0].mxu0
  %v3394 = vadd.f32 0.0, %v3393
  %v3395 = vpop.f32.mrb[0].mxu0
  %3396 = vmatprep.mubr.f32.mxu0 0.0
  %3397 = vmatmul.mubr.f32.gmra.mrb[0].mxu0 %v3267
  %v3398 = vpop.f32.mrb[0].mxu0
  %v3399 = vadd.f32 0.0, %v3398
  %v3400 = vpop.f32.mrb[0].mxu0
  %3401 = vmatprep.mubr.f32.mxu0 0.0
  %3402 = vmatmul.mubr.f32.gmra.mrb[0].mxu0 %v3268
  %v3403 = vpop.f32.mrb[0].mxu0
  %v3404 = vadd.f32 0.0, %v3403
  %v3405 = vpop.f32.mrb[0].mxu0
  %3406 = vmatprep.mubr.f32.mxu0 0.0
  %3407 = vmatmul.mubr.f32.gmra.mrb[0].mxu0 %v3269
  %v3408 = vpop.f32.mrb[0].mxu0
  %v3409 = vadd.f32 0.0, %v3408
  %v3410 = vpop.f32.mrb[0].mxu0
  %3411 = vmatprep.mubr.f32.mxu0 0.0
  %3412 = vmatmul.mubr.f32.gmra.mrb[0].mxu0 %v3270
  %v3413 = vpop.f32.mrb[0].mxu0
  %v3414 = vadd.f32 0.0, %v3413
  %v3415 = vpop.f32.mrb[0].mxu0
  %3416 = vmatprep.mubr.f32.mxu0 0.0
  %3417 = vmatmul.mubr.f32.gmra.mrb[0].mxu0 %v3271
  %v3418 = vpop.f32.mrb[0].mxu0
  %v3419 = vadd.f32 0.0, %v3418
  %v3420 = vpop.f32.mrb[0].mxu0
  %3421 = vmatprep.mubr.f32.mxu0 0.0
  %3422 = vmatmul.mubr.f32.gmra.mrb[0].mxu0 %v3272
  %v3423 = vpop.f32.mrb[0].mxu0
  %v3424 = vadd.f32 0.0, %v3423
  %v3425 = vpop.f32.mrb[0].mxu0
  %3426 = vmatprep.mubr.f32.mxu0 0.0
  %3427 = vmatmul.mubr.f32.gmra.mrb[0].mxu0 %v3273
  %v3428 = vpop.f32.mrb[0].mxu0
  %v3429 = vadd.f32 0.0, %v3428
  %v3430 = vpop.f32.mrb[0].mxu0
  %3431 = vmatprep.mubr.f32.mxu0 0.0
  %3432 = vmatmul.mubr.f32.gmra.mrb[0].mxu0 %v3274
  %v3433 = vpop.f32.mrb[0].mxu0
  %v3434 = vadd.f32 0.0, %v3433
  %v3435 = vpop.f32.mrb[0].mxu0
  %3436 = vdwg.mxu0
  %3437 = vmatprep.subr.mxu0 0.0
  %3438 = vmatpush1.msra.mxu0 %v3359
  %3439 = vmatprep.subr.mxu0 0.0
  %3440 = vmatpush1.msra.mxu0 %v3364
  %3441 = vmatprep.subr.mxu0 0.0
  %3442 = vmatpush1.msra.mxu0 %v3369
  %3443 = vmatprep.subr.mxu0 0.0
  %3444 = vmatpush1.msra.mxu0 %v3374
  %3445 = vmatprep.subr.mxu0 0.0
  %3446 = vmatpush1.msra.mxu0 %v3379
  %3447 = vmatprep.subr.mxu0 0.0
  %3448 = vmatpush1.msra.mxu0 %v3384
  %3449 = vmatprep.subr.mxu0 0.0
  %3450 = vmatpush1.msra.mxu0 %v3389
  %3451 = vmatprep.subr.mxu0 0.0
  %3452 = vmatpush1.msra.mxu0 %v3394
  %3453 = vmatprep.subr.mxu0 0.0
  %3454 = vmatpush1.msra.mxu0 %v3399
  %3455 = vmatprep.subr.mxu0 0.0
  %3456 = vmatpush1.msra.mxu0 %v3404
  %3457 = vmatprep.subr.mxu0 0.0
  %3458 = vmatpush1.msra.mxu0 %v3409
  %3459 = vmatprep.subr.mxu0 0.0
  %3460 = vmatpush1.msra.mxu0 %v3414
  %3461 = vmatprep.subr.mxu0 0.0
  %3462 = vmatpush1.msra.mxu0 %v3419
  %3463 = vmatprep.subr.mxu0 0.0
  %3464 = vmatpush1.msra.mxu0 %v3424
  %3465 = vmatprep.subr.mxu0 0.0
  %3466 = vmatpush1.msra.mxu0 %v3429
  %3467 = vmatprep.subr.mxu0 0.0
  %3468 = vmatpush1.msra.mxu0 %v3434
  %3469 = vmatprep.subr.mxu0 0.0
  %3470 = vmatpush1.msra.mxu0 0.0
  %3471 = vmatprep.subr.mxu0 0.0
  %3472 = vmatpush1.msra.mxu0 0.0
  %3473 = vmatprep.subr.mxu0 0.0
  %3474 = vmatpush1.msra.mxu0 0.0
  %3475 = vmatprep.subr.mxu0 0.0
  %3476 = vmatpush1.msra.mxu0 0.0
  %3477 = vmatprep.subr.mxu0 0.0
  %3478 = vmatpush1.msra.mxu0 0.0
  %3479 = vmatprep.subr.mxu0 0.0
  %3480 = vmatpush1.msra.mxu0 0.0
  %3481 = vmatprep.subr.mxu0 0.0
  %3482 = vmatpush1.msra.mxu0 0.0
  %3483 = vmatprep.subr.mxu0 0.0
  %3484 = vmatpush1.msra.mxu0 0.0
  %3485 = vmatprep.subr.mxu0 0.0
  %3486 = vmatpush1.msra.mxu0 0.0
  %3487 = vmatprep.subr.mxu0 0.0
  %3488 = vmatpush1.msra.mxu0 0.0
  %3489 = vmatprep.subr.mxu0 0.0
  %3490 = vmatpush1.msra.mxu0 0.0
  %3491 = vmatprep.subr.mxu0 0.0
  %3492 = vmatpush1.msra.mxu0 0.0
  %3493 = vmatprep.subr.mxu0 0.0
  %3494 = vmatpush1.msra.mxu0 0.0
  %3495 = vmatprep.subr.mxu0 0.0
  %3496 = vmatpush1.msra.mxu0 0.0
  %3497 = vmatprep.subr.mxu0 0.0
  %3498 = vmatpush1.msra.mxu0 0.0
  %3499 = vmatprep.subr.mxu0 0.0
  %3500 = vmatpush1.msra.mxu0 0.0
  %3501 = vmatprep.mubr.f32.mxu0 0.0
  %3502 = vmatmul.mubr.f32.gmra.mrb[0].mxu0 %v26
  %v3503 = vpop.f32.mrb[0].mxu0
  %v3504 = vadd.f32 %v2562, %v3503
  %v3505 = vpop.f32.mrb[0].mxu0
  %3506 = vmatprep.mubr.f32.mxu0 0.0
  %3507 = vmatmul.mubr.f32.gmra.mrb[0].mxu0 %v27
  %v3508 = vpop.f32.mrb[0].mxu0
  %v3509 = vadd.f32 %v2568, %v3508
  %v3510 = vpop.f32.mrb[0].mxu0
  %3511 = vmatprep.mubr.f32.mxu0 0.0
  %3512 = vmatmul.mubr.f32.gmra.mrb[0].mxu0 %v28
  %v3513 = vpop.f32.mrb[0].mxu0
  %v3514 = vadd.f32 %v2574, %v3513
  %v3515 = vpop.f32.mrb[0].mxu0
  %3516 = vmatprep.mubr.f32.mxu0 0.0
  %3517 = vmatmul.mubr.f32.gmra.mrb[0].mxu0 %v29
  %v3518 = vpop.f32.mrb[0].mxu0
  %v3519 = vadd.f32 %v2580, %v3518
  %v3520 = vpop.f32.mrb[0].mxu0
  %3521 = vmatprep.mubr.f32.mxu0 0.0
  %3522 = vmatmul.mubr.f32.gmra.mrb[0].mxu0 %v30
  %v3523 = vpop.f32.mrb[0].mxu0
  %v3524 = vadd.f32 %v2586, %v3523
  %v3525 = vpop.f32.mrb[0].mxu0
  %3526 = vmatprep.mubr.f32.mxu0 0.0
  %3527 = vmatmul.mubr.f32.gmra.mrb[0].mxu0 %v31
  %v3528 = vpop.f32.mrb[0].mxu0
  %v3529 = vadd.f32 %v2592, %v3528
  %v3530 = vpop.f32.mrb[0].mxu0
  %3531 = vmatprep.mubr.f32.mxu0 0.0
  %3532 = vmatmul.mubr.f32.gmra.mrb[0].mxu0 %v32
  %v3533 = vpop.f32.mrb[0].mxu0
  %v3534 = vadd.f32 %v2598, %v3533
  %v3535 = vpop.f32.mrb[0].mxu0
  %3536 = vmatprep.mubr.f32.mxu0 0.0
  %3537 = vmatmul.mubr.f32.gmra.mrb[0].mxu0 %v33
  %v3538 = vpop.f32.mrb[0].mxu0
  %v3539 = vadd.f32 %v2604, %v3538
  %v3540 = vpop.f32.mrb[0].mxu0
  %3541 = vmatprep.mubr.f32.mxu0 0.0
  %3542 = vmatmul.mubr.f32.gmra.mrb[0].mxu0 %v34
  %v3543 = vpop.f32.mrb[0].mxu0
  %v3544 = vadd.f32 %v2610, %v3543
  %v3545 = vpop.f32.mrb[0].mxu0
  %3546 = vmatprep.mubr.f32.mxu0 0.0
  %3547 = vmatmul.mubr.f32.gmra.mrb[0].mxu0 %v35
  %v3548 = vpop.f32.mrb[0].mxu0
  %v3549 = vadd.f32 %v2616, %v3548
  %v3550 = vpop.f32.mrb[0].mxu0
  %3551 = vmatprep.mubr.f32.mxu0 0.0
  %3552 = vmatmul.mubr.f32.gmra.mrb[0].mxu0 %v36
  %v3553 = vpop.f32.mrb[0].mxu0
  %v3554 = vadd.f32 %v2622, %v3553
  %v3555 = vpop.f32.mrb[0].mxu0
  %3556 = vmatprep.mubr.f32.mxu0 0.0
  %3557 = vmatmul.mubr.f32.gmra.mrb[0].mxu0 %v37
  %v3558 = vpop.f32.mrb[0].mxu0
  %v3559 = vadd.f32 %v2628, %v3558
  %v3560 = vpop.f32.mrb[0].mxu0
  %3561 = vmatprep.mubr.f32.mxu0 0.0
  %3562 = vmatmul.mubr.f32.gmra.mrb[0].mxu0 %v38
  %v3563 = vpop.f32.mrb[0].mxu0
  %v3564 = vadd.f32 %v2634, %v3563
  %v3565 = vpop.f32.mrb[0].mxu0
  %3566 = vmatprep.mubr.f32.mxu0 0.0
  %3567 = vmatmul.mubr.f32.gmra.mrb[0].mxu0 %v39
  %v3568 = vpop.f32.mrb[0].mxu0
  %v3569 = vadd.f32 %v2640, %v3568
  %v3570 = vpop.f32.mrb[0].mxu0
  %3571 = vmatprep.mubr.f32.mxu0 0.0
  %3572 = vmatmul.mubr.f32.gmra.mrb[0].mxu0 %v40
  %v3573 = vpop.f32.mrb[0].mxu0
  %v3574 = vadd.f32 %v2646, %v3573
  %v3575 = vpop.f32.mrb[0].mxu0
  %3576 = vmatprep.mubr.f32.mxu0 0.0
  %3577 = vmatmul.mubr.f32.gmra.mrb[0].mxu0 %v41
  %v3578 = vpop.f32.mrb[0].mxu0
  %v3579 = vadd.f32 %v2652, %v3578
  %v3580 = vpop.f32.mrb[0].mxu0
  %3581 = vdwg.mxu0
  %v3582 = vmax.f32 %v3504, 0.0
  %v3583 = vmax.f32 %v3509, 0.0
  %v3584 = vmax.f32 %v3514, 0.0
  %v3585 = vmax.f32 %v3519, 0.0
  %v3586 = vmax.f32 %v3524, 0.0
  %v3587 = vmax.f32 %v3529, 0.0
  %v3588 = vmax.f32 %v3534, 0.0
  %v3589 = vmax.f32 %v3539, 0.0
  %v3590 = vmax.f32 %v3544, 0.0
  %v3591 = vmax.f32 %v3549, 0.0
  %v3592 = vmax.f32 %v3554, 0.0
  %v3593 = vmax.f32 %v3559, 0.0
  %v3594 = vmax.f32 %v3564, 0.0
  %v3595 = vmax.f32 %v3569, 0.0
  %v3596 = vmax.f32 %v3574, 0.0
  %v3597 = vmax.f32 %v3579, 0.0
  %s3598 = scalar_lea.vmem %s3, 640
  %v3599 = vld [vmem:[%s3598] sm:$0xff]
  %v3600 = vld [vmem:[%s3598 + $0x8] sm:$0xff]
  %v3601 = vld [vmem:[%s3598 + $0x10] sm:$0xff]
  %v3602 = vld [vmem:[%s3598 + $0x18] sm:$0xff]
  %v3603 = vld [vmem:[%s3598 + $0x20] sm:$0xff]
  %v3604 = vld [vmem:[%s3598 + $0x28] sm:$0xff]
  %v3605 = vld [vmem:[%s3598 + $0x30] sm:$0xff]
  %v3606 = vld [vmem:[%s3598 + $0x38] sm:$0xff]
  %v3607 = vld [vmem:[%s3598 + $0x40] sm:$0xff]
  %v3608 = vld [vmem:[%s3598 + $0x48] sm:$0xff]
  %v3609 = vld [vmem:[%s3598 + $0x50] sm:$0xff]
  %v3610 = vld [vmem:[%s3598 + $0x58] sm:$0xff]
  %v3611 = vld [vmem:[%s3598 + $0x60] sm:$0xff]
  %v3612 = vld [vmem:[%s3598 + $0x68] sm:$0xff]
  %v3613 = vld [vmem:[%s3598 + $0x70] sm:$0xff]
  %v3614 = vld [vmem:[%s3598 + $0x78] sm:$0xff]
  %3615 = vmatprep.subr.mxu0 0.0
  %3616 = vmatpush1.msra.mxu0 %v3599
  %3617 = vmatprep.subr.mxu0 0.0
  %3618 = vmatpush1.msra.mxu0 %v3600
  %3619 = vmatprep.subr.mxu0 0.0
  %3620 = vmatpush1.msra.mxu0 %v3601
  %3621 = vmatprep.subr.mxu0 0.0
  %3622 = vmatpush1.msra.mxu0 %v3602
  %3623 = vmatprep.subr.mxu0 0.0
  %3624 = vmatpush1.msra.mxu0 %v3603
  %3625 = vmatprep.subr.mxu0 0.0
  %3626 = vmatpush1.msra.mxu0 %v3604
  %3627 = vmatprep.subr.mxu0 0.0
  %3628 = vmatpush1.msra.mxu0 %v3605
  %3629 = vmatprep.subr.mxu0 0.0
  %3630 = vmatpush1.msra.mxu0 %v3606
  %3631 = vmatprep.subr.mxu0 0.0
  %3632 = vmatpush1.msra.mxu0 %v3607
  %3633 = vmatprep.subr.mxu0 0.0
  %3634 = vmatpush1.msra.mxu0 %v3608
  %3635 = vmatprep.subr.mxu0 0.0
  %3636 = vmatpush1.msra.mxu0 %v3609
  %3637 = vmatprep.subr.mxu0 0.0
  %3638 = vmatpush1.msra.mxu0 %v3610
  %3639 = vmatprep.subr.mxu0 0.0
  %3640 = vmatpush1.msra.mxu0 %v3611
  %3641 = vmatprep.subr.mxu0 0.0
  %3642 = vmatpush1.msra.mxu0 %v3612
  %3643 = vmatprep.subr.mxu0 0.0
  %3644 = vmatpush1.msra.mxu0 %v3613
  %3645 = vmatprep.subr.mxu0 0.0
  %3646 = vmatpush1.msra.mxu0 %v3614
  %3647 = vmatprep.subr.mxu0 0.0
  %3648 = vmatpush1.msra.mxu0 0.0
  %3649 = vmatprep.subr.mxu0 0.0
  %3650 = vmatpush1.msra.mxu0 0.0
  %3651 = vmatprep.subr.mxu0 0.0
  %3652 = vmatpush1.msra.mxu0 0.0
  %3653 = vmatprep.subr.mxu0 0.0
  %3654 = vmatpush1.msra.mxu0 0.0
  %3655 = vmatprep.subr.mxu0 0.0
  %3656 = vmatpush1.msra.mxu0 0.0
  %3657 = vmatprep.subr.mxu0 0.0
  %3658 = vmatpush1.msra.mxu0 0.0
  %3659 = vmatprep.subr.mxu0 0.0
  %3660 = vmatpush1.msra.mxu0 0.0
  %3661 = vmatprep.subr.mxu0 0.0
  %3662 = vmatpush1.msra.mxu0 0.0
  %3663 = vmatprep.subr.mxu0 0.0
  %3664 = vmatpush1.msra.mxu0 0.0
  %3665 = vmatprep.subr.mxu0 0.0
  %3666 = vmatpush1.msra.mxu0 0.0
  %3667 = vmatprep.subr.mxu0 0.0
  %3668 = vmatpush1.msra.mxu0 0.0
  %3669 = vmatprep.subr.mxu0 0.0
  %3670 = vmatpush1.msra.mxu0 0.0
  %3671 = vmatprep.subr.mxu0 0.0
  %3672 = vmatpush1.msra.mxu0 0.0
  %3673 = vmatprep.subr.mxu0 0.0
  %3674 = vmatpush1.msra.mxu0 0.0
  %3675 = vmatprep.subr.mxu0 0.0
  %3676 = vmatpush1.msra.mxu0 0.0
  %3677 = vmatprep.subr.mxu0 0.0
  %3678 = vmatpush1.msra.mxu0 0.0
  %3679 = vmatprep.mubr.f32.mxu0 0.0
  %3680 = vmatmul.mubr.f32.gmra.mrb[0].mxu0 %v3582
  %v3681 = vpop.f32.mrb[0].mxu0
  %v3682 = vadd.f32 0.0, %v3681
  %v3683 = vpop.f32.mrb[0].mxu0
  %3684 = vmatprep.mubr.f32.mxu0 0.0
  %3685 = vmatmul.mubr.f32.gmra.mrb[0].mxu0 %v3583
  %v3686 = vpop.f32.mrb[0].mxu0
  %v3687 = vadd.f32 0.0, %v3686
  %v3688 = vpop.f32.mrb[0].mxu0
  %3689 = vmatprep.mubr.f32.mxu0 0.0
  %3690 = vmatmul.mubr.f32.gmra.mrb[0].mxu0 %v3584
  %v3691 = vpop.f32.mrb[0].mxu0
  %v3692 = vadd.f32 0.0, %v3691
  %v3693 = vpop.f32.mrb[0].mxu0
  %3694 = vmatprep.mubr.f32.mxu0 0.0
  %3695 = vmatmul.mubr.f32.gmra.mrb[0].mxu0 %v3585
  %v3696 = vpop.f32.mrb[0].mxu0
  %v3697 = vadd.f32 0.0, %v3696
  %v3698 = vpop.f32.mrb[0].mxu0
  %3699 = vmatprep.mubr.f32.mxu0 0.0
  %3700 = vmatmul.mubr.f32.gmra.mrb[0].mxu0 %v3586
  %v3701 = vpop.f32.mrb[0].mxu0
  %v3702 = vadd.f32 0.0, %v3701
  %v3703 = vpop.f32.mrb[0].mxu0
  %3704 = vmatprep.mubr.f32.mxu0 0.0
  %3705 = vmatmul.mubr.f32.gmra.mrb[0].mxu0 %v3587
  %v3706 = vpop.f32.mrb[0].mxu0
  %v3707 = vadd.f32 0.0, %v3706
  %v3708 = vpop.f32.mrb[0].mxu0
  %3709 = vmatprep.mubr.f32.mxu0 0.0
  %3710 = vmatmul.mubr.f32.gmra.mrb[0].mxu0 %v3588
  %v3711 = vpop.f32.mrb[0].mxu0
  %v3712 = vadd.f32 0.0, %v3711
  %v3713 = vpop.f32.mrb[0].mxu0
  %3714 = vmatprep.mubr.f32.mxu0 0.0
  %3715 = vmatmul.mubr.f32.gmra.mrb[0].mxu0 %v3589
  %v3716 = vpop.f32.mrb[0].mxu0
  %v3717 = vadd.f32 0.0, %v3716
  %v3718 = vpop.f32.mrb[0].mxu0
  %3719 = vmatprep.mubr.f32.mxu0 0.0
  %3720 = vmatmul.mubr.f32.gmra.mrb[0].mxu0 %v3590
  %v3721 = vpop.f32.mrb[0].mxu0
  %v3722 = vadd.f32 0.0, %v3721
  %v3723 = vpop.f32.mrb[0].mxu0
  %3724 = vmatprep.mubr.f32.mxu0 0.0
  %3725 = vmatmul.mubr.f32.gmra.mrb[0].mxu0 %v3591
  %v3726 = vpop.f32.mrb[0].mxu0
  %v3727 = vadd.f32 0.0, %v3726
  %v3728 = vpop.f32.mrb[0].mxu0
  %3729 = vmatprep.mubr.f32.mxu0 0.0
  %3730 = vmatmul.mubr.f32.gmra.mrb[0].mxu0 %v3592
  %v3731 = vpop.f32.mrb[0].mxu0
  %v3732 = vadd.f32 0.0, %v3731
  %v3733 = vpop.f32.mrb[0].mxu0
  %3734 = vmatprep.mubr.f32.mxu0 0.0
  %3735 = vmatmul.mubr.f32.gmra.mrb[0].mxu0 %v3593
  %v3736 = vpop.f32.mrb[0].mxu0
  %v3737 = vadd.f32 0.0, %v3736
  %v3738 = vpop.f32.mrb[0].mxu0
  %3739 = vmatprep.mubr.f32.mxu0 0.0
  %3740 = vmatmul.mubr.f32.gmra.mrb[0].mxu0 %v3594
  %v3741 = vpop.f32.mrb[0].mxu0
  %v3742 = vadd.f32 0.0, %v3741
  %v3743 = vpop.f32.mrb[0].mxu0
  %3744 = vmatprep.mubr.f32.mxu0 0.0
  %3745 = vmatmul.mubr.f32.gmra.mrb[0].mxu0 %v3595
  %v3746 = vpop.f32.mrb[0].mxu0
  %v3747 = vadd.f32 0.0, %v3746
  %v3748 = vpop.f32.mrb[0].mxu0
  %3749 = vmatprep.mubr.f32.mxu0 0.0
  %3750 = vmatmul.mubr.f32.gmra.mrb[0].mxu0 %v3596
  %v3751 = vpop.f32.mrb[0].mxu0
  %v3752 = vadd.f32 0.0, %v3751
  %v3753 = vpop.f32.mrb[0].mxu0
  %3754 = vmatprep.mubr.f32.mxu0 0.0
  %3755 = vmatmul.mubr.f32.gmra.mrb[0].mxu0 %v3597
  %v3756 = vpop.f32.mrb[0].mxu0
  %v3757 = vadd.f32 0.0, %v3756
  %v3758 = vpop.f32.mrb[0].mxu0
  %3759 = vdwg.mxu0
  %3760 = vmatprep.subr.mxu0 0.0
  %3761 = vmatpush1.msra.mxu0 %v3682
  %3762 = vmatprep.subr.mxu0 0.0
  %3763 = vmatpush1.msra.mxu0 %v3687
  %3764 = vmatprep.subr.mxu0 0.0
  %3765 = vmatpush1.msra.mxu0 %v3692
  %3766 = vmatprep.subr.mxu0 0.0
  %3767 = vmatpush1.msra.mxu0 %v3697
  %3768 = vmatprep.subr.mxu0 0.0
  %3769 = vmatpush1.msra.mxu0 %v3702
  %3770 = vmatprep.subr.mxu0 0.0
  %3771 = vmatpush1.msra.mxu0 %v3707
  %3772 = vmatprep.subr.mxu0 0.0
  %3773 = vmatpush1.msra.mxu0 %v3712
  %3774 = vmatprep.subr.mxu0 0.0
  %3775 = vmatpush1.msra.mxu0 %v3717
  %3776 = vmatprep.subr.mxu0 0.0
  %3777 = vmatpush1.msra.mxu0 %v3722
  %3778 = vmatprep.subr.mxu0 0.0
  %3779 = vmatpush1.msra.mxu0 %v3727
  %3780 = vmatprep.subr.mxu0 0.0
  %3781 = vmatpush1.msra.mxu0 %v3732
  %3782 = vmatprep.subr.mxu0 0.0
  %3783 = vmatpush1.msra.mxu0 %v3737
  %3784 = vmatprep.subr.mxu0 0.0
  %3785 = vmatpush1.msra.mxu0 %v3742
  %3786 = vmatprep.subr.mxu0 0.0
  %3787 = vmatpush1.msra.mxu0 %v3747
  %3788 = vmatprep.subr.mxu0 0.0
  %3789 = vmatpush1.msra.mxu0 %v3752
  %3790 = vmatprep.subr.mxu0 0.0
  %3791 = vmatpush1.msra.mxu0 %v3757
  %3792 = vmatprep.subr.mxu0 0.0
  %3793 = vmatpush1.msra.mxu0 0.0
  %3794 = vmatprep.subr.mxu0 0.0
  %3795 = vmatpush1.msra.mxu0 0.0
  %3796 = vmatprep.subr.mxu0 0.0
  %3797 = vmatpush1.msra.mxu0 0.0
  %3798 = vmatprep.subr.mxu0 0.0
  %3799 = vmatpush1.msra.mxu0 0.0
  %3800 = vmatprep.subr.mxu0 0.0
  %3801 = vmatpush1.msra.mxu0 0.0
  %3802 = vmatprep.subr.mxu0 0.0
  %3803 = vmatpush1.msra.mxu0 0.0
  %3804 = vmatprep.subr.mxu0 0.0
  %3805 = vmatpush1.msra.mxu0 0.0
  %3806 = vmatprep.subr.mxu0 0.0
  %3807 = vmatpush1.msra.mxu0 0.0
  %3808 = vmatprep.subr.mxu0 0.0
  %3809 = vmatpush1.msra.mxu0 0.0
  %3810 = vmatprep.subr.mxu0 0.0
  %3811 = vmatpush1.msra.mxu0 0.0
  %3812 = vmatprep.subr.mxu0 0.0
  %3813 = vmatpush1.msra.mxu0 0.0
  %3814 = vmatprep.subr.mxu0 0.0
  %3815 = vmatpush1.msra.mxu0 0.0
  %3816 = vmatprep.subr.mxu0 0.0
  %3817 = vmatpush1.msra.mxu0 0.0
  %3818 = vmatprep.subr.mxu0 0.0
  %3819 = vmatpush1.msra.mxu0 0.0
  %3820 = vmatprep.subr.mxu0 0.0
  %3821 = vmatpush1.msra.mxu0 0.0
  %3822 = vmatprep.subr.mxu0 0.0
  %3823 = vmatpush1.msra.mxu0 0.0
  %3824 = vmatprep.mubr.f32.mxu0 0.0
  %3825 = vmatmul.mubr.f32.gmra.mrb[0].mxu0 %v26
  %v3826 = vpop.f32.mrb[0].mxu0
  %v3827 = vadd.f32 %v2721, %v3826
  %v3828 = vpop.f32.mrb[0].mxu0
  %3829 = vmatprep.mubr.f32.mxu0 0.0
  %3830 = vmatmul.mubr.f32.gmra.mrb[0].mxu0 %v27
  %v3831 = vpop.f32.mrb[0].mxu0
  %v3832 = vadd.f32 %v2727, %v3831
  %v3833 = vpop.f32.mrb[0].mxu0
  %3834 = vmatprep.mubr.f32.mxu0 0.0
  %3835 = vmatmul.mubr.f32.gmra.mrb[0].mxu0 %v28
  %v3836 = vpop.f32.mrb[0].mxu0
  %v3837 = vadd.f32 %v2733, %v3836
  %v3838 = vpop.f32.mrb[0].mxu0
  %3839 = vmatprep.mubr.f32.mxu0 0.0
  %3840 = vmatmul.mubr.f32.gmra.mrb[0].mxu0 %v29
  %v3841 = vpop.f32.mrb[0].mxu0
  %v3842 = vadd.f32 %v2739, %v3841
  %v3843 = vpop.f32.mrb[0].mxu0
  %3844 = vmatprep.mubr.f32.mxu0 0.0
  %3845 = vmatmul.mubr.f32.gmra.mrb[0].mxu0 %v30
  %v3846 = vpop.f32.mrb[0].mxu0
  %v3847 = vadd.f32 %v2745, %v3846
  %v3848 = vpop.f32.mrb[0].mxu0
  %3849 = vmatprep.mubr.f32.mxu0 0.0
  %3850 = vmatmul.mubr.f32.gmra.mrb[0].mxu0 %v31
  %v3851 = vpop.f32.mrb[0].mxu0
  %v3852 = vadd.f32 %v2751, %v3851
  %v3853 = vpop.f32.mrb[0].mxu0
  %3854 = vmatprep.mubr.f32.mxu0 0.0
  %3855 = vmatmul.mubr.f32.gmra.mrb[0].mxu0 %v32
  %v3856 = vpop.f32.mrb[0].mxu0
  %v3857 = vadd.f32 %v2757, %v3856
  %v3858 = vpop.f32.mrb[0].mxu0
  %3859 = vmatprep.mubr.f32.mxu0 0.0
  %3860 = vmatmul.mubr.f32.gmra.mrb[0].mxu0 %v33
  %v3861 = vpop.f32.mrb[0].mxu0
  %v3862 = vadd.f32 %v2763, %v3861
  %v3863 = vpop.f32.mrb[0].mxu0
  %3864 = vmatprep.mubr.f32.mxu0 0.0
  %3865 = vmatmul.mubr.f32.gmra.mrb[0].mxu0 %v34
  %v3866 = vpop.f32.mrb[0].mxu0
  %v3867 = vadd.f32 %v2769, %v3866
  %v3868 = vpop.f32.mrb[0].mxu0
  %3869 = vmatprep.mubr.f32.mxu0 0.0
  %3870 = vmatmul.mubr.f32.gmra.mrb[0].mxu0 %v35
  %v3871 = vpop.f32.mrb[0].mxu0
  %v3872 = vadd.f32 %v2775, %v3871
  %v3873 = vpop.f32.mrb[0].mxu0
  %3874 = vmatprep.mubr.f32.mxu0 0.0
  %3875 = vmatmul.mubr.f32.gmra.mrb[0].mxu0 %v36
  %v3876 = vpop.f32.mrb[0].mxu0
  %v3877 = vadd.f32 %v2781, %v3876
  %v3878 = vpop.f32.mrb[0].mxu0
  %3879 = vmatprep.mubr.f32.mxu0 0.0
  %3880 = vmatmul.mubr.f32.gmra.mrb[0].mxu0 %v37
  %v3881 = vpop.f32.mrb[0].mxu0
  %v3882 = vadd.f32 %v2787, %v3881
  %v3883 = vpop.f32.mrb[0].mxu0
  %3884 = vmatprep.mubr.f32.mxu0 0.0
  %3885 = vmatmul.mubr.f32.gmra.mrb[0].mxu0 %v38
  %v3886 = vpop.f32.mrb[0].mxu0
  %v3887 = vadd.f32 %v2793, %v3886
  %v3888 = vpop.f32.mrb[0].mxu0
  %3889 = vmatprep.mubr.f32.mxu0 0.0
  %3890 = vmatmul.mubr.f32.gmra.mrb[0].mxu0 %v39
  %v3891 = vpop.f32.mrb[0].mxu0
  %v3892 = vadd.f32 %v2799, %v3891
  %v3893 = vpop.f32.mrb[0].mxu0
  %3894 = vmatprep.mubr.f32.mxu0 0.0
  %3895 = vmatmul.mubr.f32.gmra.mrb[0].mxu0 %v40
  %v3896 = vpop.f32.mrb[0].mxu0
  %v3897 = vadd.f32 %v2805, %v3896
  %v3898 = vpop.f32.mrb[0].mxu0
  %3899 = vmatprep.mubr.f32.mxu0 0.0
  %3900 = vmatmul.mubr.f32.gmra.mrb[0].mxu0 %v41
  %v3901 = vpop.f32.mrb[0].mxu0
  %v3902 = vadd.f32 %v2811, %v3901
  %v3903 = vpop.f32.mrb[0].mxu0
  %3904 = vdwg.mxu0
  %v3905 = vmax.f32 %v3827, 0.0
  %v3906 = vmax.f32 %v3832, 0.0
  %v3907 = vmax.f32 %v3837, 0.0
  %v3908 = vmax.f32 %v3842, 0.0
  %v3909 = vmax.f32 %v3847, 0.0
  %v3910 = vmax.f32 %v3852, 0.0
  %v3911 = vmax.f32 %v3857, 0.0
  %v3912 = vmax.f32 %v3862, 0.0
  %v3913 = vmax.f32 %v3867, 0.0
  %v3914 = vmax.f32 %v3872, 0.0
  %v3915 = vmax.f32 %v3877, 0.0
  %v3916 = vmax.f32 %v3882, 0.0
  %v3917 = vmax.f32 %v3887, 0.0
  %v3918 = vmax.f32 %v3892, 0.0
  %v3919 = vmax.f32 %v3897, 0.0
  %v3920 = vmax.f32 %v3902, 0.0
  %s3921 = scalar_lea.vmem %s3, 768
  %v3922 = vld [vmem:[%s3921] sm:$0xff]
  %v3923 = vld [vmem:[%s3921 + $0x8] sm:$0xff]
  %v3924 = vld [vmem:[%s3921 + $0x10] sm:$0xff]
  %v3925 = vld [vmem:[%s3921 + $0x18] sm:$0xff]
  %v3926 = vld [vmem:[%s3921 + $0x20] sm:$0xff]
  %v3927 = vld [vmem:[%s3921 + $0x28] sm:$0xff]
  %v3928 = vld [vmem:[%s3921 + $0x30] sm:$0xff]
  %v3929 = vld [vmem:[%s3921 + $0x38] sm:$0xff]
  %v3930 = vld [vmem:[%s3921 + $0x40] sm:$0xff]
  %v3931 = vld [vmem:[%s3921 + $0x48] sm:$0xff]
  %v3932 = vld [vmem:[%s3921 + $0x50] sm:$0xff]
  %v3933 = vld [vmem:[%s3921 + $0x58] sm:$0xff]
  %v3934 = vld [vmem:[%s3921 + $0x60] sm:$0xff]
  %v3935 = vld [vmem:[%s3921 + $0x68] sm:$0xff]
  %v3936 = vld [vmem:[%s3921 + $0x70] sm:$0xff]
  %v3937 = vld [vmem:[%s3921 + $0x78] sm:$0xff]
  %3938 = vmatprep.subr.mxu0 0.0
  %3939 = vmatpush1.msra.mxu0 %v3922
  %3940 = vmatprep.subr.mxu0 0.0
  %3941 = vmatpush1.msra.mxu0 %v3923
  %3942 = vmatprep.subr.mxu0 0.0
  %3943 = vmatpush1.msra.mxu0 %v3924
  %3944 = vmatprep.subr.mxu0 0.0
  %3945 = vmatpush1.msra.mxu0 %v3925
  %3946 = vmatprep.subr.mxu0 0.0
  %3947 = vmatpush1.msra.mxu0 %v3926
  %3948 = vmatprep.subr.mxu0 0.0
  %3949 = vmatpush1.msra.mxu0 %v3927
  %3950 = vmatprep.subr.mxu0 0.0
  %3951 = vmatpush1.msra.mxu0 %v3928
  %3952 = vmatprep.subr.mxu0 0.0
  %3953 = vmatpush1.msra.mxu0 %v3929
  %3954 = vmatprep.subr.mxu0 0.0
  %3955 = vmatpush1.msra.mxu0 %v3930
  %3956 = vmatprep.subr.mxu0 0.0
  %3957 = vmatpush1.msra.mxu0 %v3931
  %3958 = vmatprep.subr.mxu0 0.0
  %3959 = vmatpush1.msra.mxu0 %v3932
  %3960 = vmatprep.subr.mxu0 0.0
  %3961 = vmatpush1.msra.mxu0 %v3933
  %3962 = vmatprep.subr.mxu0 0.0
  %3963 = vmatpush1.msra.mxu0 %v3934
  %3964 = vmatprep.subr.mxu0 0.0
  %3965 = vmatpush1.msra.mxu0 %v3935
  %3966 = vmatprep.subr.mxu0 0.0
  %3967 = vmatpush1.msra.mxu0 %v3936
  %3968 = vmatprep.subr.mxu0 0.0
  %3969 = vmatpush1.msra.mxu0 %v3937
  %3970 = vmatprep.subr.mxu0 0.0
  %3971 = vmatpush1.msra.mxu0 0.0
  %3972 = vmatprep.subr.mxu0 0.0
  %3973 = vmatpush1.msra.mxu0 0.0
  %3974 = vmatprep.subr.mxu0 0.0
  %3975 = vmatpush1.msra.mxu0 0.0
  %3976 = vmatprep.subr.mxu0 0.0
  %3977 = vmatpush1.msra.mxu0 0.0
  %3978 = vmatprep.subr.mxu0 0.0
  %3979 = vmatpush1.msra.mxu0 0.0
  %3980 = vmatprep.subr.mxu0 0.0
  %3981 = vmatpush1.msra.mxu0 0.0
  %3982 = vmatprep.subr.mxu0 0.0
  %3983 = vmatpush1.msra.mxu0 0.0
  %3984 = vmatprep.subr.mxu0 0.0
  %3985 = vmatpush1.msra.mxu0 0.0
  %3986 = vmatprep.subr.mxu0 0.0
  %3987 = vmatpush1.msra.mxu0 0.0
  %3988 = vmatprep.subr.mxu0 0.0
  %3989 = vmatpush1.msra.mxu0 0.0
  %3990 = vmatprep.subr.mxu0 0.0
  %3991 = vmatpush1.msra.mxu0 0.0
  %3992 = vmatprep.subr.mxu0 0.0
  %3993 = vmatpush1.msra.mxu0 0.0
  %3994 = vmatprep.subr.mxu0 0.0
  %3995 = vmatpush1.msra.mxu0 0.0
  %3996 = vmatprep.subr.mxu0 0.0
  %3997 = vmatpush1.msra.mxu0 0.0
  %3998 = vmatprep.subr.mxu0 0.0
  %3999 = vmatpush1.msra.mxu0 0.0
  %4000 = vmatprep.subr.mxu0 0.0
  %4001 = vmatpush1.msra.mxu0 0.0
  %4002 = vmatprep.mubr.f32.mxu0 0.0
  %4003 = vmatmul.mubr.f32.gmra.mrb[0].mxu0 %v3905
  %v4004 = vpop.f32.mrb[0].mxu0
  %v4005 = vadd.f32 0.0, %v4004
  %v4006 = vpop.f32.mrb[0].mxu0
  %4007 = vmatprep.mubr.f32.mxu0 0.0
  %4008 = vmatmul.mubr.f32.gmra.mrb[0].mxu0 %v3906
  %v4009 = vpop.f32.mrb[0].mxu0
  %v4010 = vadd.f32 0.0, %v4009
  %v4011 = vpop.f32.mrb[0].mxu0
  %4012 = vmatprep.mubr.f32.mxu0 0.0
  %4013 = vmatmul.mubr.f32.gmra.mrb[0].mxu0 %v3907
  %v4014 = vpop.f32.mrb[0].mxu0
  %v4015 = vadd.f32 0.0, %v4014
  %v4016 = vpop.f32.mrb[0].mxu0
  %4017 = vmatprep.mubr.f32.mxu0 0.0
  %4018 = vmatmul.mubr.f32.gmra.mrb[0].mxu0 %v3908
  %v4019 = vpop.f32.mrb[0].mxu0
  %v4020 = vadd.f32 0.0, %v4019
  %v4021 = vpop.f32.mrb[0].mxu0
  %4022 = vmatprep.mubr.f32.mxu0 0.0
  %4023 = vmatmul.mubr.f32.gmra.mrb[0].mxu0 %v3909
  %v4024 = vpop.f32.mrb[0].mxu0
  %v4025 = vadd.f32 0.0, %v4024
  %v4026 = vpop.f32.mrb[0].mxu0
  %4027 = vmatprep.mubr.f32.mxu0 0.0
  %4028 = vmatmul.mubr.f32.gmra.mrb[0].mxu0 %v3910
  %v4029 = vpop.f32.mrb[0].mxu0
  %v4030 = vadd.f32 0.0, %v4029
  %v4031 = vpop.f32.mrb[0].mxu0
  %4032 = vmatprep.mubr.f32.mxu0 0.0
  %4033 = vmatmul.mubr.f32.gmra.mrb[0].mxu0 %v3911
  %v4034 = vpop.f32.mrb[0].mxu0
  %v4035 = vadd.f32 0.0, %v4034
  %v4036 = vpop.f32.mrb[0].mxu0
  %4037 = vmatprep.mubr.f32.mxu0 0.0
  %4038 = vmatmul.mubr.f32.gmra.mrb[0].mxu0 %v3912
  %v4039 = vpop.f32.mrb[0].mxu0
  %v4040 = vadd.f32 0.0, %v4039
  %v4041 = vpop.f32.mrb[0].mxu0
  %4042 = vmatprep.mubr.f32.mxu0 0.0
  %4043 = vmatmul.mubr.f32.gmra.mrb[0].mxu0 %v3913
  %v4044 = vpop.f32.mrb[0].mxu0
  %v4045 = vadd.f32 0.0, %v4044
  %v4046 = vpop.f32.mrb[0].mxu0
  %4047 = vmatprep.mubr.f32.mxu0 0.0
  %4048 = vmatmul.mubr.f32.gmra.mrb[0].mxu0 %v3914
  %v4049 = vpop.f32.mrb[0].mxu0
  %v4050 = vadd.f32 0.0, %v4049
  %v4051 = vpop.f32.mrb[0].mxu0
  %4052 = vmatprep.mubr.f32.mxu0 0.0
  %4053 = vmatmul.mubr.f32.gmra.mrb[0].mxu0 %v3915
  %v4054 = vpop.f32.mrb[0].mxu0
  %v4055 = vadd.f32 0.0, %v4054
  %v4056 = vpop.f32.mrb[0].mxu0
  %4057 = vmatprep.mubr.f32.mxu0 0.0
  %4058 = vmatmul.mubr.f32.gmra.mrb[0].mxu0 %v3916
  %v4059 = vpop.f32.mrb[0].mxu0
  %v4060 = vadd.f32 0.0, %v4059
  %v4061 = vpop.f32.mrb[0].mxu0
  %4062 = vmatprep.mubr.f32.mxu0 0.0
  %4063 = vmatmul.mubr.f32.gmra.mrb[0].mxu0 %v3917
  %v4064 = vpop.f32.mrb[0].mxu0
  %v4065 = vadd.f32 0.0, %v4064
  %v4066 = vpop.f32.mrb[0].mxu0
  %4067 = vmatprep.mubr.f32.mxu0 0.0
  %4068 = vmatmul.mubr.f32.gmra.mrb[0].mxu0 %v3918
  %v4069 = vpop.f32.mrb[0].mxu0
  %v4070 = vadd.f32 0.0, %v4069
  %v4071 = vpop.f32.mrb[0].mxu0
  %4072 = vmatprep.mubr.f32.mxu0 0.0
  %4073 = vmatmul.mubr.f32.gmra.mrb[0].mxu0 %v3919
  %v4074 = vpop.f32.mrb[0].mxu0
  %v4075 = vadd.f32 0.0, %v4074
  %v4076 = vpop.f32.mrb[0].mxu0
  %4077 = vmatprep.mubr.f32.mxu0 0.0
  %4078 = vmatmul.mubr.f32.gmra.mrb[0].mxu0 %v3920
  %v4079 = vpop.f32.mrb[0].mxu0
  %v4080 = vadd.f32 0.0, %v4079
  %v4081 = vpop.f32.mrb[0].mxu0
  %4082 = vdwg.mxu0
  %4083 = vmatprep.subr.mxu0 0.0
  %4084 = vmatpush1.msra.mxu0 %v4005
  %4085 = vmatprep.subr.mxu0 0.0
  %4086 = vmatpush1.msra.mxu0 %v4010
  %4087 = vmatprep.subr.mxu0 0.0
  %4088 = vmatpush1.msra.mxu0 %v4015
  %4089 = vmatprep.subr.mxu0 0.0
  %4090 = vmatpush1.msra.mxu0 %v4020
  %4091 = vmatprep.subr.mxu0 0.0
  %4092 = vmatpush1.msra.mxu0 %v4025
  %4093 = vmatprep.subr.mxu0 0.0
  %4094 = vmatpush1.msra.mxu0 %v4030
  %4095 = vmatprep.subr.mxu0 0.0
  %4096 = vmatpush1.msra.mxu0 %v4035
  %4097 = vmatprep.subr.mxu0 0.0
  %4098 = vmatpush1.msra.mxu0 %v4040
  %4099 = vmatprep.subr.mxu0 0.0
  %4100 = vmatpush1.msra.mxu0 %v4045
  %4101 = vmatprep.subr.mxu0 0.0
  %4102 = vmatpush1.msra.mxu0 %v4050
  %4103 = vmatprep.subr.mxu0 0.0
  %4104 = vmatpush1.msra.mxu0 %v4055
  %4105 = vmatprep.subr.mxu0 0.0
  %4106 = vmatpush1.msra.mxu0 %v4060
  %4107 = vmatprep.subr.mxu0 0.0
  %4108 = vmatpush1.msra.mxu0 %v4065
  %4109 = vmatprep.subr.mxu0 0.0
  %4110 = vmatpush1.msra.mxu0 %v4070
  %4111 = vmatprep.subr.mxu0 0.0
  %4112 = vmatpush1.msra.mxu0 %v4075
  %4113 = vmatprep.subr.mxu0 0.0
  %4114 = vmatpush1.msra.mxu0 %v4080
  %4115 = vmatprep.subr.mxu0 0.0
  %4116 = vmatpush1.msra.mxu0 0.0
  %4117 = vmatprep.subr.mxu0 0.0
  %4118 = vmatpush1.msra.mxu0 0.0
  %4119 = vmatprep.subr.mxu0 0.0
  %4120 = vmatpush1.msra.mxu0 0.0
  %4121 = vmatprep.subr.mxu0 0.0
  %4122 = vmatpush1.msra.mxu0 0.0
  %4123 = vmatprep.subr.mxu0 0.0
  %4124 = vmatpush1.msra.mxu0 0.0
  %4125 = vmatprep.subr.mxu0 0.0
  %4126 = vmatpush1.msra.mxu0 0.0
  %4127 = vmatprep.subr.mxu0 0.0
  %4128 = vmatpush1.msra.mxu0 0.0
  %4129 = vmatprep.subr.mxu0 0.0
  %4130 = vmatpush1.msra.mxu0 0.0
  %4131 = vmatprep.subr.mxu0 0.0
  %4132 = vmatpush1.msra.mxu0 0.0
  %4133 = vmatprep.subr.mxu0 0.0
  %4134 = vmatpush1.msra.mxu0 0.0
  %4135 = vmatprep.subr.mxu0 0.0
  %4136 = vmatpush1.msra.mxu0 0.0
  %4137 = vmatprep.subr.mxu0 0.0
  %4138 = vmatpush1.msra.mxu0 0.0
  %4139 = vmatprep.subr.mxu0 0.0
  %4140 = vmatpush1.msra.mxu0 0.0
  %4141 = vmatprep.subr.mxu0 0.0
  %4142 = vmatpush1.msra.mxu0 0.0
  %4143 = vmatprep.subr.mxu0 0.0
  %4144 = vmatpush1.msra.mxu0 0.0
  %4145 = vmatprep.subr.mxu0 0.0
  %4146 = vmatpush1.msra.mxu0 0.0
  %4147 = vmatprep.mubr.f32.mxu0 0.0
  %4148 = vmatmul.mubr.f32.gmra.mrb[0].mxu0 %v26
  %v4149 = vpop.f32.mrb[0].mxu0
  %v4150 = vadd.f32 %v2723, %v4149
  %v4151 = vpop.f32.mrb[0].mxu0
  %4152 = vmatprep.mubr.f32.mxu0 0.0
  %4153 = vmatmul.mubr.f32.gmra.mrb[0].mxu0 %v27
  %v4154 = vpop.f32.mrb[0].mxu0
  %v4155 = vadd.f32 %v2729, %v4154
  %v4156 = vpop.f32.mrb[0].mxu0
  %4157 = vmatprep.mubr.f32.mxu0 0.0
  %4158 = vmatmul.mubr.f32.gmra.mrb[0].mxu0 %v28
  %v4159 = vpop.f32.mrb[0].mxu0
  %v4160 = vadd.f32 %v2735, %v4159
  %v4161 = vpop.f32.mrb[0].mxu0
  %4162 = vmatprep.mubr.f32.mxu0 0.0
  %4163 = vmatmul.mubr.f32.gmra.mrb[0].mxu0 %v29
  %v4164 = vpop.f32.mrb[0].mxu0
  %v4165 = vadd.f32 %v2741, %v4164
  %v4166 = vpop.f32.mrb[0].mxu0
  %4167 = vmatprep.mubr.f32.mxu0 0.0
  %4168 = vmatmul.mubr.f32.gmra.mrb[0].mxu0 %v30
  %v4169 = vpop.f32.mrb[0].mxu0
  %v4170 = vadd.f32 %v2747, %v4169
  %v4171 = vpop.f32.mrb[0].mxu0
  %4172 = vmatprep.mubr.f32.mxu0 0.0
  %4173 = vmatmul.mubr.f32.gmra.mrb[0].mxu0 %v31
  %v4174 = vpop.f32.mrb[0].mxu0
  %v4175 = vadd.f32 %v2753, %v4174
  %v4176 = vpop.f32.mrb[0].mxu0
  %4177 = vmatprep.mubr.f32.mxu0 0.0
  %4178 = vmatmul.mubr.f32.gmra.mrb[0].mxu0 %v32
  %v4179 = vpop.f32.mrb[0].mxu0
  %v4180 = vadd.f32 %v2759, %v4179
  %v4181 = vpop.f32.mrb[0].mxu0
  %4182 = vmatprep.mubr.f32.mxu0 0.0
  %4183 = vmatmul.mubr.f32.gmra.mrb[0].mxu0 %v33
  %v4184 = vpop.f32.mrb[0].mxu0
  %v4185 = vadd.f32 %v2765, %v4184
  %v4186 = vpop.f32.mrb[0].mxu0
  %4187 = vmatprep.mubr.f32.mxu0 0.0
  %4188 = vmatmul.mubr.f32.gmra.mrb[0].mxu0 %v34
  %v4189 = vpop.f32.mrb[0].mxu0
  %v4190 = vadd.f32 %v2771, %v4189
  %v4191 = vpop.f32.mrb[0].mxu0
  %4192 = vmatprep.mubr.f32.mxu0 0.0
  %4193 = vmatmul.mubr.f32.gmra.mrb[0].mxu0 %v35
  %v4194 = vpop.f32.mrb[0].mxu0
  %v4195 = vadd.f32 %v2777, %v4194
  %v4196 = vpop.f32.mrb[0].mxu0
  %4197 = vmatprep.mubr.f32.mxu0 0.0
  %4198 = vmatmul.mubr.f32.gmra.mrb[0].mxu0 %v36
  %v4199 = vpop.f32.mrb[0].mxu0
  %v4200 = vadd.f32 %v2783, %v4199
  %v4201 = vpop.f32.mrb[0].mxu0
  %4202 = vmatprep.mubr.f32.mxu0 0.0
  %4203 = vmatmul.mubr.f32.gmra.mrb[0].mxu0 %v37
  %v4204 = vpop.f32.mrb[0].mxu0
  %v4205 = vadd.f32 %v2789, %v4204
  %v4206 = vpop.f32.mrb[0].mxu0
  %4207 = vmatprep.mubr.f32.mxu0 0.0
  %4208 = vmatmul.mubr.f32.gmra.mrb[0].mxu0 %v38
  %v4209 = vpop.f32.mrb[0].mxu0
  %v4210 = vadd.f32 %v2795, %v4209
  %v4211 = vpop.f32.mrb[0].mxu0
  %4212 = vmatprep.mubr.f32.mxu0 0.0
  %4213 = vmatmul.mubr.f32.gmra.mrb[0].mxu0 %v39
  %v4214 = vpop.f32.mrb[0].mxu0
  %v4215 = vadd.f32 %v2801, %v4214
  %v4216 = vpop.f32.mrb[0].mxu0
  %4217 = vmatprep.mubr.f32.mxu0 0.0
  %4218 = vmatmul.mubr.f32.gmra.mrb[0].mxu0 %v40
  %v4219 = vpop.f32.mrb[0].mxu0
  %v4220 = vadd.f32 %v2807, %v4219
  %v4221 = vpop.f32.mrb[0].mxu0
  %4222 = vmatprep.mubr.f32.mxu0 0.0
  %4223 = vmatmul.mubr.f32.gmra.mrb[0].mxu0 %v41
  %v4224 = vpop.f32.mrb[0].mxu0
  %v4225 = vadd.f32 %v2813, %v4224
  %v4226 = vpop.f32.mrb[0].mxu0
  %4227 = vdwg.mxu0
  %v4228 = vmax.f32 %v4150, 0.0
  %v4229 = vmax.f32 %v4155, 0.0
  %v4230 = vmax.f32 %v4160, 0.0
  %v4231 = vmax.f32 %v4165, 0.0
  %v4232 = vmax.f32 %v4170, 0.0
  %v4233 = vmax.f32 %v4175, 0.0
  %v4234 = vmax.f32 %v4180, 0.0
  %v4235 = vmax.f32 %v4185, 0.0
  %v4236 = vmax.f32 %v4190, 0.0
  %v4237 = vmax.f32 %v4195, 0.0
  %v4238 = vmax.f32 %v4200, 0.0
  %v4239 = vmax.f32 %v4205, 0.0
  %v4240 = vmax.f32 %v4210, 0.0
  %v4241 = vmax.f32 %v4215, 0.0
  %v4242 = vmax.f32 %v4220, 0.0
  %v4243 = vmax.f32 %v4225, 0.0
  %s4244 = scalar_lea.vmem %s3, 896
  %v4245 = vld [vmem:[%s4244] sm:$0xff]
  %v4246 = vld [vmem:[%s4244 + $0x8] sm:$0xff]
  %v4247 = vld [vmem:[%s4244 + $0x10] sm:$0xff]
  %v4248 = vld [vmem:[%s4244 + $0x18] sm:$0xff]
  %v4249 = vld [vmem:[%s4244 + $0x20] sm:$0xff]
  %v4250 = vld [vmem:[%s4244 + $0x28] sm:$0xff]
  %v4251 = vld [vmem:[%s4244 + $0x30] sm:$0xff]
  %v4252 = vld [vmem:[%s4244 + $0x38] sm:$0xff]
  %v4253 = vld [vmem:[%s4244 + $0x40] sm:$0xff]
  %v4254 = vld [vmem:[%s4244 + $0x48] sm:$0xff]
  %v4255 = vld [vmem:[%s4244 + $0x50] sm:$0xff]
  %v4256 = vld [vmem:[%s4244 + $0x58] sm:$0xff]
  %v4257 = vld [vmem:[%s4244 + $0x60] sm:$0xff]
  %v4258 = vld [vmem:[%s4244 + $0x68] sm:$0xff]
  %v4259 = vld [vmem:[%s4244 + $0x70] sm:$0xff]
  %v4260 = vld [vmem:[%s4244 + $0x78] sm:$0xff]
  %4261 = vmatprep.subr.mxu0 0.0
  %4262 = vmatpush1.msra.mxu0 %v4245
  %4263 = vmatprep.subr.mxu0 0.0
  %4264 = vmatpush1.msra.mxu0 %v4246
  %4265 = vmatprep.subr.mxu0 0.0
  %4266 = vmatpush1.msra.mxu0 %v4247
  %4267 = vmatprep.subr.mxu0 0.0
  %4268 = vmatpush1.msra.mxu0 %v4248
  %4269 = vmatprep.subr.mxu0 0.0
  %4270 = vmatpush1.msra.mxu0 %v4249
  %4271 = vmatprep.subr.mxu0 0.0
  %4272 = vmatpush1.msra.mxu0 %v4250
  %4273 = vmatprep.subr.mxu0 0.0
  %4274 = vmatpush1.msra.mxu0 %v4251
  %4275 = vmatprep.subr.mxu0 0.0
  %4276 = vmatpush1.msra.mxu0 %v4252
  %4277 = vmatprep.subr.mxu0 0.0
  %4278 = vmatpush1.msra.mxu0 %v4253
  %4279 = vmatprep.subr.mxu0 0.0
  %4280 = vmatpush1.msra.mxu0 %v4254
  %4281 = vmatprep.subr.mxu0 0.0
  %4282 = vmatpush1.msra.mxu0 %v4255
  %4283 = vmatprep.subr.mxu0 0.0
  %4284 = vmatpush1.msra.mxu0 %v4256
  %4285 = vmatprep.subr.mxu0 0.0
  %4286 = vmatpush1.msra.mxu0 %v4257
  %4287 = vmatprep.subr.mxu0 0.0
  %4288 = vmatpush1.msra.mxu0 %v4258
  %4289 = vmatprep.subr.mxu0 0.0
  %4290 = vmatpush1.msra.mxu0 %v4259
  %4291 = vmatprep.subr.mxu0 0.0
  %4292 = vmatpush1.msra.mxu0 %v4260
  %4293 = vmatprep.subr.mxu0 0.0
  %4294 = vmatpush1.msra.mxu0 0.0
  %4295 = vmatprep.subr.mxu0 0.0
  %4296 = vmatpush1.msra.mxu0 0.0
  %4297 = vmatprep.subr.mxu0 0.0
  %4298 = vmatpush1.msra.mxu0 0.0
  %4299 = vmatprep.subr.mxu0 0.0
  %4300 = vmatpush1.msra.mxu0 0.0
  %4301 = vmatprep.subr.mxu0 0.0
  %4302 = vmatpush1.msra.mxu0 0.0
  %4303 = vmatprep.subr.mxu0 0.0
  %4304 = vmatpush1.msra.mxu0 0.0
  %4305 = vmatprep.subr.mxu0 0.0
  %4306 = vmatpush1.msra.mxu0 0.0
  %4307 = vmatprep.subr.mxu0 0.0
  %4308 = vmatpush1.msra.mxu0 0.0
  %4309 = vmatprep.subr.mxu0 0.0
  %4310 = vmatpush1.msra.mxu0 0.0
  %4311 = vmatprep.subr.mxu0 0.0
  %4312 = vmatpush1.msra.mxu0 0.0
  %4313 = vmatprep.subr.mxu0 0.0
  %4314 = vmatpush1.msra.mxu0 0.0
  %4315 = vmatprep.subr.mxu0 0.0
  %4316 = vmatpush1.msra.mxu0 0.0
  %4317 = vmatprep.subr.mxu0 0.0
  %4318 = vmatpush1.msra.mxu0 0.0
  %4319 = vmatprep.subr.mxu0 0.0
  %4320 = vmatpush1.msra.mxu0 0.0
  %4321 = vmatprep.subr.mxu0 0.0
  %4322 = vmatpush1.msra.mxu0 0.0
  %4323 = vmatprep.subr.mxu0 0.0
  %4324 = vmatpush1.msra.mxu0 0.0
  %4325 = vmatprep.mubr.f32.mxu0 0.0
  %4326 = vmatmul.mubr.f32.gmra.mrb[0].mxu0 %v4228
  %v4327 = vpop.f32.mrb[0].mxu0
  %v4328 = vadd.f32 0.0, %v4327
  %v4329 = vpop.f32.mrb[0].mxu0
  %4330 = vmatprep.mubr.f32.mxu0 0.0
  %4331 = vmatmul.mubr.f32.gmra.mrb[0].mxu0 %v4229
  %v4332 = vpop.f32.mrb[0].mxu0
  %v4333 = vadd.f32 0.0, %v4332
  %v4334 = vpop.f32.mrb[0].mxu0
  %4335 = vmatprep.mubr.f32.mxu0 0.0
  %4336 = vmatmul.mubr.f32.gmra.mrb[0].mxu0 %v4230
  %v4337 = vpop.f32.mrb[0].mxu0
  %v4338 = vadd.f32 0.0, %v4337
  %v4339 = vpop.f32.mrb[0].mxu0
  %4340 = vmatprep.mubr.f32.mxu0 0.0
  %4341 = vmatmul.mubr.f32.gmra.mrb[0].mxu0 %v4231
  %v4342 = vpop.f32.mrb[0].mxu0
  %v4343 = vadd.f32 0.0, %v4342
  %v4344 = vpop.f32.mrb[0].mxu0
  %4345 = vmatprep.mubr.f32.mxu0 0.0
  %4346 = vmatmul.mubr.f32.gmra.mrb[0].mxu0 %v4232
  %v4347 = vpop.f32.mrb[0].mxu0
  %v4348 = vadd.f32 0.0, %v4347
  %v4349 = vpop.f32.mrb[0].mxu0
  %4350 = vmatprep.mubr.f32.mxu0 0.0
  %4351 = vmatmul.mubr.f32.gmra.mrb[0].mxu0 %v4233
  %v4352 = vpop.f32.mrb[0].mxu0
  %v4353 = vadd.f32 0.0, %v4352
  %v4354 = vpop.f32.mrb[0].mxu0
  %4355 = vmatprep.mubr.f32.mxu0 0.0
  %4356 = vmatmul.mubr.f32.gmra.mrb[0].mxu0 %v4234
  %v4357 = vpop.f32.mrb[0].mxu0
  %v4358 = vadd.f32 0.0, %v4357
  %v4359 = vpop.f32.mrb[0].mxu0
  %4360 = vmatprep.mubr.f32.mxu0 0.0
  %4361 = vmatmul.mubr.f32.gmra.mrb[0].mxu0 %v4235
  %v4362 = vpop.f32.mrb[0].mxu0
  %v4363 = vadd.f32 0.0, %v4362
  %v4364 = vpop.f32.mrb[0].mxu0
  %4365 = vmatprep.mubr.f32.mxu0 0.0
  %4366 = vmatmul.mubr.f32.gmra.mrb[0].mxu0 %v4236
  %v4367 = vpop.f32.mrb[0].mxu0
  %v4368 = vadd.f32 0.0, %v4367
  %v4369 = vpop.f32.mrb[0].mxu0
  %4370 = vmatprep.mubr.f32.mxu0 0.0
  %4371 = vmatmul.mubr.f32.gmra.mrb[0].mxu0 %v4237
  %v4372 = vpop.f32.mrb[0].mxu0
  %v4373 = vadd.f32 0.0, %v4372
  %v4374 = vpop.f32.mrb[0].mxu0
  %4375 = vmatprep.mubr.f32.mxu0 0.0
  %4376 = vmatmul.mubr.f32.gmra.mrb[0].mxu0 %v4238
  %v4377 = vpop.f32.mrb[0].mxu0
  %v4378 = vadd.f32 0.0, %v4377
  %v4379 = vpop.f32.mrb[0].mxu0
  %4380 = vmatprep.mubr.f32.mxu0 0.0
  %4381 = vmatmul.mubr.f32.gmra.mrb[0].mxu0 %v4239
  %v4382 = vpop.f32.mrb[0].mxu0
  %v4383 = vadd.f32 0.0, %v4382
  %v4384 = vpop.f32.mrb[0].mxu0
  %4385 = vmatprep.mubr.f32.mxu0 0.0
  %4386 = vmatmul.mubr.f32.gmra.mrb[0].mxu0 %v4240
  %v4387 = vpop.f32.mrb[0].mxu0
  %v4388 = vadd.f32 0.0, %v4387
  %v4389 = vpop.f32.mrb[0].mxu0
  %4390 = vmatprep.mubr.f32.mxu0 0.0
  %4391 = vmatmul.mubr.f32.gmra.mrb[0].mxu0 %v4241
  %v4392 = vpop.f32.mrb[0].mxu0
  %v4393 = vadd.f32 0.0, %v4392
  %v4394 = vpop.f32.mrb[0].mxu0
  %4395 = vmatprep.mubr.f32.mxu0 0.0
  %4396 = vmatmul.mubr.f32.gmra.mrb[0].mxu0 %v4242
  %v4397 = vpop.f32.mrb[0].mxu0
  %v4398 = vadd.f32 0.0, %v4397
  %v4399 = vpop.f32.mrb[0].mxu0
  %4400 = vmatprep.mubr.f32.mxu0 0.0
  %4401 = vmatmul.mubr.f32.gmra.mrb[0].mxu0 %v4243
  %v4402 = vpop.f32.mrb[0].mxu0
  %v4403 = vadd.f32 0.0, %v4402
  %v4404 = vpop.f32.mrb[0].mxu0
  %4405 = vdwg.mxu0
  %4406 = vmatprep.subr.mxu0 0.0
  %4407 = vmatpush1.msra.mxu0 %v4328
  %4408 = vmatprep.subr.mxu0 0.0
  %4409 = vmatpush1.msra.mxu0 %v4333
  %4410 = vmatprep.subr.mxu0 0.0
  %4411 = vmatpush1.msra.mxu0 %v4338
  %4412 = vmatprep.subr.mxu0 0.0
  %4413 = vmatpush1.msra.mxu0 %v4343
  %4414 = vmatprep.subr.mxu0 0.0
  %4415 = vmatpush1.msra.mxu0 %v4348
  %4416 = vmatprep.subr.mxu0 0.0
  %4417 = vmatpush1.msra.mxu0 %v4353
  %4418 = vmatprep.subr.mxu0 0.0
  %4419 = vmatpush1.msra.mxu0 %v4358
  %4420 = vmatprep.subr.mxu0 0.0
  %4421 = vmatpush1.msra.mxu0 %v4363
  %4422 = vmatprep.subr.mxu0 0.0
  %4423 = vmatpush1.msra.mxu0 %v4368
  %4424 = vmatprep.subr.mxu0 0.0
  %4425 = vmatpush1.msra.mxu0 %v4373
  %4426 = vmatprep.subr.mxu0 0.0
  %4427 = vmatpush1.msra.mxu0 %v4378
  %4428 = vmatprep.subr.mxu0 0.0
  %4429 = vmatpush1.msra.mxu0 %v4383
  %4430 = vmatprep.subr.mxu0 0.0
  %4431 = vmatpush1.msra.mxu0 %v4388
  %4432 = vmatprep.subr.mxu0 0.0
  %4433 = vmatpush1.msra.mxu0 %v4393
  %4434 = vmatprep.subr.mxu0 0.0
  %4435 = vmatpush1.msra.mxu0 %v4398
  %4436 = vmatprep.subr.mxu0 0.0
  %4437 = vmatpush1.msra.mxu0 %v4403
  %4438 = vmatprep.subr.mxu0 0.0
  %4439 = vmatpush1.msra.mxu0 0.0
  %4440 = vmatprep.subr.mxu0 0.0
  %4441 = vmatpush1.msra.mxu0 0.0
  %4442 = vmatprep.subr.mxu0 0.0
  %4443 = vmatpush1.msra.mxu0 0.0
  %4444 = vmatprep.subr.mxu0 0.0
  %4445 = vmatpush1.msra.mxu0 0.0
  %4446 = vmatprep.subr.mxu0 0.0
  %4447 = vmatpush1.msra.mxu0 0.0
  %4448 = vmatprep.subr.mxu0 0.0
  %4449 = vmatpush1.msra.mxu0 0.0
  %4450 = vmatprep.subr.mxu0 0.0
  %4451 = vmatpush1.msra.mxu0 0.0
  %4452 = vmatprep.subr.mxu0 0.0
  %4453 = vmatpush1.msra.mxu0 0.0
  %4454 = vmatprep.subr.mxu0 0.0
  %4455 = vmatpush1.msra.mxu0 0.0
  %4456 = vmatprep.subr.mxu0 0.0
  %4457 = vmatpush1.msra.mxu0 0.0
  %4458 = vmatprep.subr.mxu0 0.0
  %4459 = vmatpush1.msra.mxu0 0.0
  %4460 = vmatprep.subr.mxu0 0.0
  %4461 = vmatpush1.msra.mxu0 0.0
  %4462 = vmatprep.subr.mxu0 0.0
  %4463 = vmatpush1.msra.mxu0 0.0
  %4464 = vmatprep.subr.mxu0 0.0
  %4465 = vmatpush1.msra.mxu0 0.0
  %4466 = vmatprep.subr.mxu0 0.0
  %4467 = vmatpush1.msra.mxu0 0.0
  %4468 = vmatprep.subr.mxu0 0.0
  %4469 = vmatpush1.msra.mxu0 0.0
  %4470 = vmatprep.mubr.f32.mxu0 0.0
  %4471 = vmatmul.mubr.f32.gmra.mrb[0].mxu0 %v26
  %v4472 = vpop.f32.mrb[0].mxu0
  %v4473 = vadd.f32 %v2882, %v4472
  %v4474 = vpop.f32.mrb[0].mxu0
  %4475 = vmatprep.mubr.f32.mxu0 0.0
  %4476 = vmatmul.mubr.f32.gmra.mrb[0].mxu0 %v27
  %v4477 = vpop.f32.mrb[0].mxu0
  %v4478 = vadd.f32 %v2887, %v4477
  %v4479 = vpop.f32.mrb[0].mxu0
  %4480 = vmatprep.mubr.f32.mxu0 0.0
  %4481 = vmatmul.mubr.f32.gmra.mrb[0].mxu0 %v28
  %v4482 = vpop.f32.mrb[0].mxu0
  %v4483 = vadd.f32 %v2892, %v4482
  %v4484 = vpop.f32.mrb[0].mxu0
  %4485 = vmatprep.mubr.f32.mxu0 0.0
  %4486 = vmatmul.mubr.f32.gmra.mrb[0].mxu0 %v29
  %v4487 = vpop.f32.mrb[0].mxu0
  %v4488 = vadd.f32 %v2897, %v4487
  %v4489 = vpop.f32.mrb[0].mxu0
  %4490 = vmatprep.mubr.f32.mxu0 0.0
  %4491 = vmatmul.mubr.f32.gmra.mrb[0].mxu0 %v30
  %v4492 = vpop.f32.mrb[0].mxu0
  %v4493 = vadd.f32 %v2902, %v4492
  %v4494 = vpop.f32.mrb[0].mxu0
  %4495 = vmatprep.mubr.f32.mxu0 0.0
  %4496 = vmatmul.mubr.f32.gmra.mrb[0].mxu0 %v31
  %v4497 = vpop.f32.mrb[0].mxu0
  %v4498 = vadd.f32 %v2907, %v4497
  %v4499 = vpop.f32.mrb[0].mxu0
  %4500 = vmatprep.mubr.f32.mxu0 0.0
  %4501 = vmatmul.mubr.f32.gmra.mrb[0].mxu0 %v32
  %v4502 = vpop.f32.mrb[0].mxu0
  %v4503 = vadd.f32 %v2912, %v4502
  %v4504 = vpop.f32.mrb[0].mxu0
  %4505 = vmatprep.mubr.f32.mxu0 0.0
  %4506 = vmatmul.mubr.f32.gmra.mrb[0].mxu0 %v33
  %v4507 = vpop.f32.mrb[0].mxu0
  %v4508 = vadd.f32 %v2917, %v4507
  %v4509 = vpop.f32.mrb[0].mxu0
  %4510 = vmatprep.mubr.f32.mxu0 0.0
  %4511 = vmatmul.mubr.f32.gmra.mrb[0].mxu0 %v34
  %v4512 = vpop.f32.mrb[0].mxu0
  %v4513 = vadd.f32 %v2922, %v4512
  %v4514 = vpop.f32.mrb[0].mxu0
  %4515 = vmatprep.mubr.f32.mxu0 0.0
  %4516 = vmatmul.mubr.f32.gmra.mrb[0].mxu0 %v35
  %v4517 = vpop.f32.mrb[0].mxu0
  %v4518 = vadd.f32 %v2927, %v4517
  %v4519 = vpop.f32.mrb[0].mxu0
  %4520 = vmatprep.mubr.f32.mxu0 0.0
  %4521 = vmatmul.mubr.f32.gmra.mrb[0].mxu0 %v36
  %v4522 = vpop.f32.mrb[0].mxu0
  %v4523 = vadd.f32 %v2932, %v4522
  %v4524 = vpop.f32.mrb[0].mxu0
  %4525 = vmatprep.mubr.f32.mxu0 0.0
  %4526 = vmatmul.mubr.f32.gmra.mrb[0].mxu0 %v37
  %v4527 = vpop.f32.mrb[0].mxu0
  %v4528 = vadd.f32 %v2937, %v4527
  %v4529 = vpop.f32.mrb[0].mxu0
  %4530 = vmatprep.mubr.f32.mxu0 0.0
  %4531 = vmatmul.mubr.f32.gmra.mrb[0].mxu0 %v38
  %v4532 = vpop.f32.mrb[0].mxu0
  %v4533 = vadd.f32 %v2942, %v4532
  %v4534 = vpop.f32.mrb[0].mxu0
  %4535 = vmatprep.mubr.f32.mxu0 0.0
  %4536 = vmatmul.mubr.f32.gmra.mrb[0].mxu0 %v39
  %v4537 = vpop.f32.mrb[0].mxu0
  %v4538 = vadd.f32 %v2947, %v4537
  %v4539 = vpop.f32.mrb[0].mxu0
  %4540 = vmatprep.mubr.f32.mxu0 0.0
  %4541 = vmatmul.mubr.f32.gmra.mrb[0].mxu0 %v40
  %v4542 = vpop.f32.mrb[0].mxu0
  %v4543 = vadd.f32 %v2952, %v4542
  %v4544 = vpop.f32.mrb[0].mxu0
  %4545 = vmatprep.mubr.f32.mxu0 0.0
  %4546 = vmatmul.mubr.f32.gmra.mrb[0].mxu0 %v41
  %v4547 = vpop.f32.mrb[0].mxu0
  %v4548 = vadd.f32 %v2957, %v4547
  %v4549 = vpop.f32.mrb[0].mxu0
  %4550 = vdwg.mxu0
  %v4551 = vmax.f32 %v4473, 0.0
  %v4552 = vmax.f32 %v4478, 0.0
  %v4553 = vmax.f32 %v4483, 0.0
  %v4554 = vmax.f32 %v4488, 0.0
  %v4555 = vmax.f32 %v4493, 0.0
  %v4556 = vmax.f32 %v4498, 0.0
  %v4557 = vmax.f32 %v4503, 0.0
  %v4558 = vmax.f32 %v4508, 0.0
  %v4559 = vmax.f32 %v4513, 0.0
  %v4560 = vmax.f32 %v4518, 0.0
  %v4561 = vmax.f32 %v4523, 0.0
  %v4562 = vmax.f32 %v4528, 0.0
  %v4563 = vmax.f32 %v4533, 0.0
  %v4564 = vmax.f32 %v4538, 0.0
  %v4565 = vmax.f32 %v4543, 0.0
  %v4566 = vmax.f32 %v4548, 0.0
  %s4567 = scalar_lea.vmem %s5, 128
  %v4568 = vld [vmem:[%s4567] sm:$0xff]
  %v4569 = vld [vmem:[%s4567 + $0x8] sm:$0xff]
  %v4570 = vld [vmem:[%s4567 + $0x10] sm:$0xff]
  %v4571 = vld [vmem:[%s4567 + $0x18] sm:$0xff]
  %v4572 = vld [vmem:[%s4567 + $0x20] sm:$0xff]
  %v4573 = vld [vmem:[%s4567 + $0x28] sm:$0xff]
  %v4574 = vld [vmem:[%s4567 + $0x30] sm:$0xff]
  %v4575 = vld [vmem:[%s4567 + $0x38] sm:$0xff]
  %v4576 = vld [vmem:[%s4567 + $0x40] sm:$0xff]
  %v4577 = vld [vmem:[%s4567 + $0x48] sm:$0xff]
  %v4578 = vld [vmem:[%s4567 + $0x50] sm:$0xff]
  %v4579 = vld [vmem:[%s4567 + $0x58] sm:$0xff]
  %v4580 = vld [vmem:[%s4567 + $0x60] sm:$0xff]
  %v4581 = vld [vmem:[%s4567 + $0x68] sm:$0xff]
  %v4582 = vld [vmem:[%s4567 + $0x70] sm:$0xff]
  %v4583 = vld [vmem:[%s4567 + $0x78] sm:$0xff]
  %s4584 = scalar_lea.vmem %s6, 1
  %v4585 = vld [vmem:[%s4584] sm:$0x1]
  %v4587 = vlaneseq
  %v4588 = vshrl.u32 %v4587, 7
  %v4589 = vsub.s32 0, %v4588
  %v4590 = vrot.slane %v4585, %v4589
  %4592 = vmatprep.subr.mxu0 0.0
  %4593 = vmatpush1.msra.mxu0 %v4568
  %4594 = vmatprep.subr.mxu0 0.0
  %4595 = vmatpush1.msra.mxu0 %v4569
  %4596 = vmatprep.subr.mxu0 0.0
  %4597 = vmatpush1.msra.mxu0 %v4570
  %4598 = vmatprep.subr.mxu0 0.0
  %4599 = vmatpush1.msra.mxu0 %v4571
  %4600 = vmatprep.subr.mxu0 0.0
  %4601 = vmatpush1.msra.mxu0 %v4572
  %4602 = vmatprep.subr.mxu0 0.0
  %4603 = vmatpush1.msra.mxu0 %v4573
  %4604 = vmatprep.subr.mxu0 0.0
  %4605 = vmatpush1.msra.mxu0 %v4574
  %4606 = vmatprep.subr.mxu0 0.0
  %4607 = vmatpush1.msra.mxu0 %v4575
  %4608 = vmatprep.subr.mxu0 0.0
  %4609 = vmatpush1.msra.mxu0 %v4576
  %4610 = vmatprep.subr.mxu0 0.0
  %4611 = vmatpush1.msra.mxu0 %v4577
  %4612 = vmatprep.subr.mxu0 0.0
  %4613 = vmatpush1.msra.mxu0 %v4578
  %4614 = vmatprep.subr.mxu0 0.0
  %4615 = vmatpush1.msra.mxu0 %v4579
  %4616 = vmatprep.subr.mxu0 0.0
  %4617 = vmatpush1.msra.mxu0 %v4580
  %4618 = vmatprep.subr.mxu0 0.0
  %4619 = vmatpush1.msra.mxu0 %v4581
  %4620 = vmatprep.subr.mxu0 0.0
  %4621 = vmatpush1.msra.mxu0 %v4582
  %4622 = vmatprep.subr.mxu0 0.0
  %4623 = vmatpush1.msra.mxu0 %v4583
  %4624 = vmatprep.subr.mxu0 0.0
  %4625 = vmatpush1.msra.mxu0 0.0
  %4626 = vmatprep.subr.mxu0 0.0
  %4627 = vmatpush1.msra.mxu0 0.0
  %4628 = vmatprep.subr.mxu0 0.0
  %4629 = vmatpush1.msra.mxu0 0.0
  %4630 = vmatprep.subr.mxu0 0.0
  %4631 = vmatpush1.msra.mxu0 0.0
  %4632 = vmatprep.subr.mxu0 0.0
  %4633 = vmatpush1.msra.mxu0 0.0
  %4634 = vmatprep.subr.mxu0 0.0
  %4635 = vmatpush1.msra.mxu0 0.0
  %4636 = vmatprep.subr.mxu0 0.0
  %4637 = vmatpush1.msra.mxu0 0.0
  %4638 = vmatprep.subr.mxu0 0.0
  %4639 = vmatpush1.msra.mxu0 0.0
  %4640 = vmatprep.subr.mxu0 0.0
  %4641 = vmatpush1.msra.mxu0 0.0
  %4642 = vmatprep.subr.mxu0 0.0
  %4643 = vmatpush1.msra.mxu0 0.0
  %4644 = vmatprep.subr.mxu0 0.0
  %4645 = vmatpush1.msra.mxu0 0.0
  %4646 = vmatprep.subr.mxu0 0.0
  %4647 = vmatpush1.msra.mxu0 0.0
  %4648 = vmatprep.subr.mxu0 0.0
  %4649 = vmatpush1.msra.mxu0 0.0
  %4650 = vmatprep.subr.mxu0 0.0
  %4651 = vmatpush1.msra.mxu0 0.0
  %4652 = vmatprep.subr.mxu0 0.0
  %4653 = vmatpush1.msra.mxu0 0.0
  %4654 = vmatprep.subr.mxu0 0.0
  %4655 = vmatpush1.msra.mxu0 0.0
  %4656 = vmatprep.mubr.f32.mxu0 0.0
  %4657 = vmatmul.mubr.f32.gmra.mrb[0].mxu0 %v4551
  %v4658 = vpop.f32.mrb[0].mxu0
  %v4659 = vadd.f32 %v4590, %v4658
  %v4660 = vpop.f32.mrb[0].mxu0
  %4661 = vmatprep.mubr.f32.mxu0 0.0
  %4662 = vmatmul.mubr.f32.gmra.mrb[0].mxu0 %v4552
  %v4663 = vpop.f32.mrb[0].mxu0
  %v4664 = vadd.f32 %v4590, %v4663
  %v4665 = vpop.f32.mrb[0].mxu0
  %4666 = vmatprep.mubr.f32.mxu0 0.0
  %4667 = vmatmul.mubr.f32.gmra.mrb[0].mxu0 %v4553
  %v4668 = vpop.f32.mrb[0].mxu0
  %v4669 = vadd.f32 %v4590, %v4668
  %v4670 = vpop.f32.mrb[0].mxu0
  %4671 = vmatprep.mubr.f32.mxu0 0.0
  %4672 = vmatmul.mubr.f32.gmra.mrb[0].mxu0 %v4554
  %v4673 = vpop.f32.mrb[0].mxu0
  %v4674 = vadd.f32 %v4590, %v4673
  %v4675 = vpop.f32.mrb[0].mxu0
  %4676 = vmatprep.mubr.f32.mxu0 0.0
  %4677 = vmatmul.mubr.f32.gmra.mrb[0].mxu0 %v4555
  %v4678 = vpop.f32.mrb[0].mxu0
  %v4679 = vadd.f32 %v4590, %v4678
  %v4680 = vpop.f32.mrb[0].mxu0
  %4681 = vmatprep.mubr.f32.mxu0 0.0
  %4682 = vmatmul.mubr.f32.gmra.mrb[0].mxu0 %v4556
  %v4683 = vpop.f32.mrb[0].mxu0
  %v4684 = vadd.f32 %v4590, %v4683
  %v4685 = vpop.f32.mrb[0].mxu0
  %4686 = vmatprep.mubr.f32.mxu0 0.0
  %4687 = vmatmul.mubr.f32.gmra.mrb[0].mxu0 %v4557
  %v4688 = vpop.f32.mrb[0].mxu0
  %v4689 = vadd.f32 %v4590, %v4688
  %v4690 = vpop.f32.mrb[0].mxu0
  %4691 = vmatprep.mubr.f32.mxu0 0.0
  %4692 = vmatmul.mubr.f32.gmra.mrb[0].mxu0 %v4558
  %v4693 = vpop.f32.mrb[0].mxu0
  %v4694 = vadd.f32 %v4590, %v4693
  %v4695 = vpop.f32.mrb[0].mxu0
  %4696 = vmatprep.mubr.f32.mxu0 0.0
  %4697 = vmatmul.mubr.f32.gmra.mrb[0].mxu0 %v4559
  %v4698 = vpop.f32.mrb[0].mxu0
  %v4699 = vadd.f32 %v4590, %v4698
  %v4700 = vpop.f32.mrb[0].mxu0
  %4701 = vmatprep.mubr.f32.mxu0 0.0
  %4702 = vmatmul.mubr.f32.gmra.mrb[0].mxu0 %v4560
  %v4703 = vpop.f32.mrb[0].mxu0
  %v4704 = vadd.f32 %v4590, %v4703
  %v4705 = vpop.f32.mrb[0].mxu0
  %4706 = vmatprep.mubr.f32.mxu0 0.0
  %4707 = vmatmul.mubr.f32.gmra.mrb[0].mxu0 %v4561
  %v4708 = vpop.f32.mrb[0].mxu0
  %v4709 = vadd.f32 %v4590, %v4708
  %v4710 = vpop.f32.mrb[0].mxu0
  %4711 = vmatprep.mubr.f32.mxu0 0.0
  %4712 = vmatmul.mubr.f32.gmra.mrb[0].mxu0 %v4562
  %v4713 = vpop.f32.mrb[0].mxu0
  %v4714 = vadd.f32 %v4590, %v4713
  %v4715 = vpop.f32.mrb[0].mxu0
  %4716 = vmatprep.mubr.f32.mxu0 0.0
  %4717 = vmatmul.mubr.f32.gmra.mrb[0].mxu0 %v4563
  %v4718 = vpop.f32.mrb[0].mxu0
  %v4719 = vadd.f32 %v4590, %v4718
  %v4720 = vpop.f32.mrb[0].mxu0
  %4721 = vmatprep.mubr.f32.mxu0 0.0
  %4722 = vmatmul.mubr.f32.gmra.mrb[0].mxu0 %v4564
  %v4723 = vpop.f32.mrb[0].mxu0
  %v4724 = vadd.f32 %v4590, %v4723
  %v4725 = vpop.f32.mrb[0].mxu0
  %4726 = vmatprep.mubr.f32.mxu0 0.0
  %4727 = vmatmul.mubr.f32.gmra.mrb[0].mxu0 %v4565
  %v4728 = vpop.f32.mrb[0].mxu0
  %v4729 = vadd.f32 %v4590, %v4728
  %v4730 = vpop.f32.mrb[0].mxu0
  %4731 = vmatprep.mubr.f32.mxu0 0.0
  %4732 = vmatmul.mubr.f32.gmra.mrb[0].mxu0 %v4566
  %v4733 = vpop.f32.mrb[0].mxu0
  %v4734 = vadd.f32 %v4590, %v4733
  %v4735 = vpop.f32.mrb[0].mxu0
  %4736 = vdwg.mxu0
  %v4737 = vmax.f32 %v4659, 0.0
  %v4738 = vmax.f32 %v4664, 0.0
  %v4739 = vmax.f32 %v4669, 0.0
  %v4740 = vmax.f32 %v4674, 0.0
  %v4741 = vmax.f32 %v4679, 0.0
  %v4742 = vmax.f32 %v4684, 0.0
  %v4743 = vmax.f32 %v4689, 0.0
  %v4744 = vmax.f32 %v4694, 0.0
  %v4745 = vmax.f32 %v4699, 0.0
  %v4746 = vmax.f32 %v4704, 0.0
  %v4747 = vmax.f32 %v4709, 0.0
  %v4748 = vmax.f32 %v4714, 0.0
  %v4749 = vmax.f32 %v4719, 0.0
  %v4750 = vmax.f32 %v4724, 0.0
  %v4751 = vmax.f32 %v4729, 0.0
  %v4752 = vmax.f32 %v4734, 0.0
  %s4753 = scalar_lea.vmem %s4, 400
  %v4754 = vld [vmem:[%s4753] sm:$0xff]
  %v4755 = vld [vmem:[%s4753 + $0x8] sm:$0xff]
  %v4756 = vld [vmem:[%s4753 + $0x10] sm:$0xff]
  %v4757 = vld [vmem:[%s4753 + $0x18] sm:$0xff]
  %v4758 = vld [vmem:[%s4753 + $0x20] sm:$0xff]
  %v4759 = vld [vmem:[%s4753 + $0x28] sm:$0xff]
  %v4760 = vld [vmem:[%s4753 + $0x30] sm:$0xff]
  %v4761 = vld [vmem:[%s4753 + $0x38] sm:$0xff]
  %v4762 = vld [vmem:[%s4753 + $0x40] sm:$0xff]
  %v4763 = vld [vmem:[%s4753 + $0x48] sm:$0xff]
  %v4764 = vld [vmem:[%s4753 + $0x50] sm:$0xff]
  %v4765 = vld [vmem:[%s4753 + $0x58] sm:$0xff]
  %v4766 = vld [vmem:[%s4753 + $0x60] sm:$0xff]
  %v4767 = vld [vmem:[%s4753 + $0x68] sm:$0xff]
  %v4768 = vld [vmem:[%s4753 + $0x70] sm:$0xff]
  %v4769 = vld [vmem:[%s4753 + $0x78] sm:$0xff]
  %v4770 = vld [vmem:[%s4753 + $0x80] sm:$0xff]
  %v4771 = vld [vmem:[%s4753 + $0x88] sm:$0xff]
  %v4772 = vld [vmem:[%s4753 + $0x90] sm:$0xff]
  %v4773 = vld [vmem:[%s4753 + $0x98] sm:$0xff]
  %v4774 = vld [vmem:[%s4753 + $0xa0] sm:$0x1]
  %v4775 = vld [vmem:[%s4753 + $0xa8] sm:$0x1]
  %v4776 = vld [vmem:[%s4753 + $0xb0] sm:$0x1]
  %v4777 = vld [vmem:[%s4753 + $0xb8] sm:$0x1]
  %v4778 = vld [vmem:[%s4753 + $0xc0] sm:$0x1]
  %v4780 = vsel %vm83, %v4737, 0
  %v4783 = vsel %vm83, %v4738, 0
  %v4786 = vsel %vm83, %v4739, 0
  %v4789 = vsel %vm83, %v4740, 0
  %v4792 = vsel %vm83, %v4741, 0
  %v4795 = vsel %vm83, %v4742, 0
  %v4798 = vsel %vm83, %v4743, 0
  %v4801 = vsel %vm83, %v4744, 0
  %v4804 = vsel %vm83, %v4745, 0
  %v4807 = vsel %vm83, %v4746, 0
  %v4810 = vsel %vm83, %v4747, 0
  %v4813 = vsel %vm83, %v4748, 0
  %v4816 = vsel %vm83, %v4749, 0
  %v4819 = vsel %vm83, %v4750, 0
  %v4822 = vsel %vm83, %v4751, 0
  %v4825 = vsel %vm83, %v4752, 0
  %v4828 = vsel %vm132, %v4774, 0
  %v4831 = vsel %vm132, %v4775, 0
  %v4834 = vsel %vm132, %v4776, 0
  %v4837 = vsel %vm132, %v4777, 0
  %v4840 = vsel %vm132, %v4778, 0
  %4842 = vmatprep.subr.mxu0 %v4755
  %4843 = vmatpush1.msra.mxu0 %v4754
  %4844 = vmatprep.subr.mxu0 %v4760
  %4845 = vmatpush1.msra.mxu0 %v4759
  %4846 = vmatprep.subr.mxu0 %v4765
  %4847 = vmatpush1.msra.mxu0 %v4764
  %4848 = vmatprep.subr.mxu0 %v4770
  %4849 = vmatpush1.msra.mxu0 %v4769
  %4850 = vmatprep.subr.mxu0 %v4831
  %4851 = vmatpush1.msra.mxu0 %v4828
  %4852 = vmatprep.subr.mxu0 0.0
  %4853 = vmatpush1.msra.mxu0 0.0
  %4854 = vmatprep.subr.mxu0 0.0
  %4855 = vmatpush1.msra.mxu0 0.0
  %4856 = vmatprep.subr.mxu0 0.0
  %4857 = vmatpush1.msra.mxu0 0.0
  %4858 = vmatprep.subr.mxu0 0.0
  %4859 = vmatpush1.msra.mxu0 0.0
  %4860 = vmatprep.subr.mxu0 0.0
  %4861 = vmatpush1.msra.mxu0 0.0
  %4862 = vmatprep.subr.mxu0 0.0
  %4863 = vmatpush1.msra.mxu0 0.0
  %4864 = vmatprep.subr.mxu0 0.0
  %4865 = vmatpush1.msra.mxu0 0.0
  %4866 = vmatprep.subr.mxu0 0.0
  %4867 = vmatpush1.msra.mxu0 0.0
  %4868 = vmatprep.subr.mxu0 0.0
  %4869 = vmatpush1.msra.mxu0 0.0
  %4870 = vmatprep.subr.mxu0 0.0
  %4871 = vmatpush1.msra.mxu0 0.0
  %4872 = vmatprep.subr.mxu0 0.0
  %4873 = vmatpush1.msra.mxu0 0.0
  %4874 = vmatprep.subr.mxu0 0.0
  %4875 = vmatpush1.msra.mxu0 0.0
  %4876 = vmatprep.subr.mxu0 0.0
  %4877 = vmatpush1.msra.mxu0 0.0
  %4878 = vmatprep.subr.mxu0 0.0
  %4879 = vmatpush1.msra.mxu0 0.0
  %4880 = vmatprep.subr.mxu0 0.0
  %4881 = vmatpush1.msra.mxu0 0.0
  %4882 = vmatprep.subr.mxu0 0.0
  %4883 = vmatpush1.msra.mxu0 0.0
  %4884 = vmatprep.subr.mxu0 0.0
  %4885 = vmatpush1.msra.mxu0 0.0
  %4886 = vmatprep.subr.mxu0 0.0
  %4887 = vmatpush1.msra.mxu0 0.0
  %4888 = vmatprep.subr.mxu0 0.0
  %4889 = vmatpush1.msra.mxu0 0.0
  %4890 = vmatprep.subr.mxu0 0.0
  %4891 = vmatpush1.msra.mxu0 0.0
  %4892 = vmatprep.subr.mxu0 0.0
  %4893 = vmatpush1.msra.mxu0 0.0
  %4894 = vmatprep.subr.mxu0 0.0
  %4895 = vmatpush1.msra.mxu0 0.0
  %4896 = vmatprep.subr.mxu0 0.0
  %4897 = vmatpush1.msra.mxu0 0.0
  %4898 = vmatprep.subr.mxu0 0.0
  %4899 = vmatpush1.msra.mxu0 0.0
  %4900 = vmatprep.subr.mxu0 0.0
  %4901 = vmatpush1.msra.mxu0 0.0
  %4902 = vmatprep.subr.mxu0 0.0
  %4903 = vmatpush1.msra.mxu0 0.0
  %4904 = vmatprep.subr.mxu0 0.0
  %4905 = vmatpush1.msra.mxu0 0.0
  %4906 = vmatprep.mubr.f32.mxu0 0.0
  %4907 = vmatmul.mubr.f32.gmra.mrb[0].mxu0 %v4780
  %v4908 = vpop.f32.mrb[0].mxu0
  %v4909 = vadd.f32 0.0, %v4908
  %v4910 = vpop.f32.mrb[0].mxu0
  %v4911 = vadd.f32 0.0, %v4910
  %4912 = vmatprep.mubr.f32.mxu0 0.0
  %4913 = vmatmul.mubr.f32.gmra.mrb[0].mxu0 %v4783
  %v4914 = vpop.f32.mrb[0].mxu0
  %v4915 = vadd.f32 0.0, %v4914
  %v4916 = vpop.f32.mrb[0].mxu0
  %v4917 = vadd.f32 0.0, %v4916
  %4918 = vmatprep.mubr.f32.mxu0 0.0
  %4919 = vmatmul.mubr.f32.gmra.mrb[0].mxu0 %v4786
  %v4920 = vpop.f32.mrb[0].mxu0
  %v4921 = vadd.f32 0.0, %v4920
  %v4922 = vpop.f32.mrb[0].mxu0
  %v4923 = vadd.f32 0.0, %v4922
  %4924 = vmatprep.mubr.f32.mxu0 0.0
  %4925 = vmatmul.mubr.f32.gmra.mrb[0].mxu0 %v4789
  %v4926 = vpop.f32.mrb[0].mxu0
  %v4927 = vadd.f32 0.0, %v4926
  %v4928 = vpop.f32.mrb[0].mxu0
  %v4929 = vadd.f32 0.0, %v4928
  %4930 = vmatprep.mubr.f32.mxu0 0.0
  %4931 = vmatmul.mubr.f32.gmra.mrb[0].mxu0 %v4792
  %v4932 = vpop.f32.mrb[0].mxu0
  %v4933 = vadd.f32 0.0, %v4932
  %v4934 = vpop.f32.mrb[0].mxu0
  %v4935 = vadd.f32 0.0, %v4934
  %4936 = vmatprep.mubr.f32.mxu0 0.0
  %4937 = vmatmul.mubr.f32.gmra.mrb[0].mxu0 %v4795
  %v4938 = vpop.f32.mrb[0].mxu0
  %v4939 = vadd.f32 0.0, %v4938
  %v4940 = vpop.f32.mrb[0].mxu0
  %v4941 = vadd.f32 0.0, %v4940
  %4942 = vmatprep.mubr.f32.mxu0 0.0
  %4943 = vmatmul.mubr.f32.gmra.mrb[0].mxu0 %v4798
  %v4944 = vpop.f32.mrb[0].mxu0
  %v4945 = vadd.f32 0.0, %v4944
  %v4946 = vpop.f32.mrb[0].mxu0
  %v4947 = vadd.f32 0.0, %v4946
  %4948 = vmatprep.mubr.f32.mxu0 0.0
  %4949 = vmatmul.mubr.f32.gmra.mrb[0].mxu0 %v4801
  %v4950 = vpop.f32.mrb[0].mxu0
  %v4951 = vadd.f32 0.0, %v4950
  %v4952 = vpop.f32.mrb[0].mxu0
  %v4953 = vadd.f32 0.0, %v4952
  %4954 = vmatprep.mubr.f32.mxu0 0.0
  %4955 = vmatmul.mubr.f32.gmra.mrb[0].mxu0 %v4804
  %v4956 = vpop.f32.mrb[0].mxu0
  %v4957 = vadd.f32 0.0, %v4956
  %v4958 = vpop.f32.mrb[0].mxu0
  %v4959 = vadd.f32 0.0, %v4958
  %4960 = vmatprep.mubr.f32.mxu0 0.0
  %4961 = vmatmul.mubr.f32.gmra.mrb[0].mxu0 %v4807
  %v4962 = vpop.f32.mrb[0].mxu0
  %v4963 = vadd.f32 0.0, %v4962
  %v4964 = vpop.f32.mrb[0].mxu0
  %v4965 = vadd.f32 0.0, %v4964
  %4966 = vmatprep.mubr.f32.mxu0 0.0
  %4967 = vmatmul.mubr.f32.gmra.mrb[0].mxu0 %v4810
  %v4968 = vpop.f32.mrb[0].mxu0
  %v4969 = vadd.f32 0.0, %v4968
  %v4970 = vpop.f32.mrb[0].mxu0
  %v4971 = vadd.f32 0.0, %v4970
  %4972 = vmatprep.mubr.f32.mxu0 0.0
  %4973 = vmatmul.mubr.f32.gmra.mrb[0].mxu0 %v4813
  %v4974 = vpop.f32.mrb[0].mxu0
  %v4975 = vadd.f32 0.0, %v4974
  %v4976 = vpop.f32.mrb[0].mxu0
  %v4977 = vadd.f32 0.0, %v4976
  %4978 = vmatprep.mubr.f32.mxu0 0.0
  %4979 = vmatmul.mubr.f32.gmra.mrb[0].mxu0 %v4816
  %v4980 = vpop.f32.mrb[0].mxu0
  %v4981 = vadd.f32 0.0, %v4980
  %v4982 = vpop.f32.mrb[0].mxu0
  %v4983 = vadd.f32 0.0, %v4982
  %4984 = vmatprep.mubr.f32.mxu0 0.0
  %4985 = vmatmul.mubr.f32.gmra.mrb[0].mxu0 %v4819
  %v4986 = vpop.f32.mrb[0].mxu0
  %v4987 = vadd.f32 0.0, %v4986
  %v4988 = vpop.f32.mrb[0].mxu0
  %v4989 = vadd.f32 0.0, %v4988
  %4990 = vmatprep.mubr.f32.mxu0 0.0
  %4991 = vmatmul.mubr.f32.gmra.mrb[0].mxu0 %v4822
  %v4992 = vpop.f32.mrb[0].mxu0
  %v4993 = vadd.f32 0.0, %v4992
  %v4994 = vpop.f32.mrb[0].mxu0
  %v4995 = vadd.f32 0.0, %v4994
  %4996 = vmatprep.mubr.f32.mxu0 0.0
  %4997 = vmatmul.mubr.f32.gmra.mrb[0].mxu0 %v4825
  %v4998 = vpop.f32.mrb[0].mxu0
  %v4999 = vadd.f32 0.0, %v4998
  %v5000 = vpop.f32.mrb[0].mxu0
  %v5001 = vadd.f32 0.0, %v5000
  %5002 = vdwg.mxu0
  %5003 = vmatprep.subr.mxu0 %v4757
  %5004 = vmatpush1.msra.mxu0 %v4756
  %5005 = vmatprep.subr.mxu0 %v4762
  %5006 = vmatpush1.msra.mxu0 %v4761
  %5007 = vmatprep.subr.mxu0 %v4767
  %5008 = vmatpush1.msra.mxu0 %v4766
  %5009 = vmatprep.subr.mxu0 %v4772
  %5010 = vmatpush1.msra.mxu0 %v4771
  %5011 = vmatprep.subr.mxu0 %v4837
  %5012 = vmatpush1.msra.mxu0 %v4834
  %5013 = vmatprep.subr.mxu0 0.0
  %5014 = vmatpush1.msra.mxu0 0.0
  %5015 = vmatprep.subr.mxu0 0.0
  %5016 = vmatpush1.msra.mxu0 0.0
  %5017 = vmatprep.subr.mxu0 0.0
  %5018 = vmatpush1.msra.mxu0 0.0
  %5019 = vmatprep.subr.mxu0 0.0
  %5020 = vmatpush1.msra.mxu0 0.0
  %5021 = vmatprep.subr.mxu0 0.0
  %5022 = vmatpush1.msra.mxu0 0.0
  %5023 = vmatprep.subr.mxu0 0.0
  %5024 = vmatpush1.msra.mxu0 0.0
  %5025 = vmatprep.subr.mxu0 0.0
  %5026 = vmatpush1.msra.mxu0 0.0
  %5027 = vmatprep.subr.mxu0 0.0
  %5028 = vmatpush1.msra.mxu0 0.0
  %5029 = vmatprep.subr.mxu0 0.0
  %5030 = vmatpush1.msra.mxu0 0.0
  %5031 = vmatprep.subr.mxu0 0.0
  %5032 = vmatpush1.msra.mxu0 0.0
  %5033 = vmatprep.subr.mxu0 0.0
  %5034 = vmatpush1.msra.mxu0 0.0
  %5035 = vmatprep.subr.mxu0 0.0
  %5036 = vmatpush1.msra.mxu0 0.0
  %5037 = vmatprep.subr.mxu0 0.0
  %5038 = vmatpush1.msra.mxu0 0.0
  %5039 = vmatprep.subr.mxu0 0.0
  %5040 = vmatpush1.msra.mxu0 0.0
  %5041 = vmatprep.subr.mxu0 0.0
  %5042 = vmatpush1.msra.mxu0 0.0
  %5043 = vmatprep.subr.mxu0 0.0
  %5044 = vmatpush1.msra.mxu0 0.0
  %5045 = vmatprep.subr.mxu0 0.0
  %5046 = vmatpush1.msra.mxu0 0.0
  %5047 = vmatprep.subr.mxu0 0.0
  %5048 = vmatpush1.msra.mxu0 0.0
  %5049 = vmatprep.subr.mxu0 0.0
  %5050 = vmatpush1.msra.mxu0 0.0
  %5051 = vmatprep.subr.mxu0 0.0
  %5052 = vmatpush1.msra.mxu0 0.0
  %5053 = vmatprep.subr.mxu0 0.0
  %5054 = vmatpush1.msra.mxu0 0.0
  %5055 = vmatprep.subr.mxu0 0.0
  %5056 = vmatpush1.msra.mxu0 0.0
  %5057 = vmatprep.subr.mxu0 0.0
  %5058 = vmatpush1.msra.mxu0 0.0
  %5059 = vmatprep.subr.mxu0 0.0
  %5060 = vmatpush1.msra.mxu0 0.0
  %5061 = vmatprep.subr.mxu0 0.0
  %5062 = vmatpush1.msra.mxu0 0.0
  %5063 = vmatprep.subr.mxu0 0.0
  %5064 = vmatpush1.msra.mxu0 0.0
  %5065 = vmatprep.subr.mxu0 0.0
  %5066 = vmatpush1.msra.mxu0 0.0
  %5067 = vmatprep.mubr.f32.mxu0 0.0
  %5068 = vmatmul.mubr.f32.gmra.mrb[0].mxu0 %v4780
  %v5069 = vpop.f32.mrb[0].mxu0
  %v5070 = vadd.f32 0.0, %v5069
  %v5071 = vpop.f32.mrb[0].mxu0
  %v5072 = vadd.f32 0.0, %v5071
  %5073 = vmatprep.mubr.f32.mxu0 0.0
  %5074 = vmatmul.mubr.f32.gmra.mrb[0].mxu0 %v4783
  %v5075 = vpop.f32.mrb[0].mxu0
  %v5076 = vadd.f32 0.0, %v5075
  %v5077 = vpop.f32.mrb[0].mxu0
  %v5078 = vadd.f32 0.0, %v5077
  %5079 = vmatprep.mubr.f32.mxu0 0.0
  %5080 = vmatmul.mubr.f32.gmra.mrb[0].mxu0 %v4786
  %v5081 = vpop.f32.mrb[0].mxu0
  %v5082 = vadd.f32 0.0, %v5081
  %v5083 = vpop.f32.mrb[0].mxu0
  %v5084 = vadd.f32 0.0, %v5083
  %5085 = vmatprep.mubr.f32.mxu0 0.0
  %5086 = vmatmul.mubr.f32.gmra.mrb[0].mxu0 %v4789
  %v5087 = vpop.f32.mrb[0].mxu0
  %v5088 = vadd.f32 0.0, %v5087
  %v5089 = vpop.f32.mrb[0].mxu0
  %v5090 = vadd.f32 0.0, %v5089
  %5091 = vmatprep.mubr.f32.mxu0 0.0
  %5092 = vmatmul.mubr.f32.gmra.mrb[0].mxu0 %v4792
  %v5093 = vpop.f32.mrb[0].mxu0
  %v5094 = vadd.f32 0.0, %v5093
  %v5095 = vpop.f32.mrb[0].mxu0
  %v5096 = vadd.f32 0.0, %v5095
  %5097 = vmatprep.mubr.f32.mxu0 0.0
  %5098 = vmatmul.mubr.f32.gmra.mrb[0].mxu0 %v4795
  %v5099 = vpop.f32.mrb[0].mxu0
  %v5100 = vadd.f32 0.0, %v5099
  %v5101 = vpop.f32.mrb[0].mxu0
  %v5102 = vadd.f32 0.0, %v5101
  %5103 = vmatprep.mubr.f32.mxu0 0.0
  %5104 = vmatmul.mubr.f32.gmra.mrb[0].mxu0 %v4798
  %v5105 = vpop.f32.mrb[0].mxu0
  %v5106 = vadd.f32 0.0, %v5105
  %v5107 = vpop.f32.mrb[0].mxu0
  %v5108 = vadd.f32 0.0, %v5107
  %5109 = vmatprep.mubr.f32.mxu0 0.0
  %5110 = vmatmul.mubr.f32.gmra.mrb[0].mxu0 %v4801
  %v5111 = vpop.f32.mrb[0].mxu0
  %v5112 = vadd.f32 0.0, %v5111
  %v5113 = vpop.f32.mrb[0].mxu0
  %v5114 = vadd.f32 0.0, %v5113
  %5115 = vmatprep.mubr.f32.mxu0 0.0
  %5116 = vmatmul.mubr.f32.gmra.mrb[0].mxu0 %v4804
  %v5117 = vpop.f32.mrb[0].mxu0
  %v5118 = vadd.f32 0.0, %v5117
  %v5119 = vpop.f32.mrb[0].mxu0
  %v5120 = vadd.f32 0.0, %v5119
  %5121 = vmatprep.mubr.f32.mxu0 0.0
  %5122 = vmatmul.mubr.f32.gmra.mrb[0].mxu0 %v4807
  %v5123 = vpop.f32.mrb[0].mxu0
  %v5124 = vadd.f32 0.0, %v5123
  %v5125 = vpop.f32.mrb[0].mxu0
  %v5126 = vadd.f32 0.0, %v5125
  %5127 = vmatprep.mubr.f32.mxu0 0.0
  %5128 = vmatmul.mubr.f32.gmra.mrb[0].mxu0 %v4810
  %v5129 = vpop.f32.mrb[0].mxu0
  %v5130 = vadd.f32 0.0, %v5129
  %v5131 = vpop.f32.mrb[0].mxu0
  %v5132 = vadd.f32 0.0, %v5131
  %5133 = vmatprep.mubr.f32.mxu0 0.0
  %5134 = vmatmul.mubr.f32.gmra.mrb[0].mxu0 %v4813
  %v5135 = vpop.f32.mrb[0].mxu0
  %v5136 = vadd.f32 0.0, %v5135
  %v5137 = vpop.f32.mrb[0].mxu0
  %v5138 = vadd.f32 0.0, %v5137
  %5139 = vmatprep.mubr.f32.mxu0 0.0
  %5140 = vmatmul.mubr.f32.gmra.mrb[0].mxu0 %v4816
  %v5141 = vpop.f32.mrb[0].mxu0
  %v5142 = vadd.f32 0.0, %v5141
  %v5143 = vpop.f32.mrb[0].mxu0
  %v5144 = vadd.f32 0.0, %v5143
  %5145 = vmatprep.mubr.f32.mxu0 0.0
  %5146 = vmatmul.mubr.f32.gmra.mrb[0].mxu0 %v4819
  %v5147 = vpop.f32.mrb[0].mxu0
  %v5148 = vadd.f32 0.0, %v5147
  %v5149 = vpop.f32.mrb[0].mxu0
  %v5150 = vadd.f32 0.0, %v5149
  %5151 = vmatprep.mubr.f32.mxu0 0.0
  %5152 = vmatmul.mubr.f32.gmra.mrb[0].mxu0 %v4822
  %v5153 = vpop.f32.mrb[0].mxu0
  %v5154 = vadd.f32 0.0, %v5153
  %v5155 = vpop.f32.mrb[0].mxu0
  %v5156 = vadd.f32 0.0, %v5155
  %5157 = vmatprep.mubr.f32.mxu0 0.0
  %5158 = vmatmul.mubr.f32.gmra.mrb[0].mxu0 %v4825
  %v5159 = vpop.f32.mrb[0].mxu0
  %v5160 = vadd.f32 0.0, %v5159
  %v5161 = vpop.f32.mrb[0].mxu0
  %v5162 = vadd.f32 0.0, %v5161
  %5163 = vdwg.mxu0
  %5164 = vmatprep.subr.mxu0 0.0
  %5165 = vmatpush1.msra.mxu0 %v4758
  %5166 = vmatprep.subr.mxu0 0.0
  %5167 = vmatpush1.msra.mxu0 %v4763
  %5168 = vmatprep.subr.mxu0 0.0
  %5169 = vmatpush1.msra.mxu0 %v4768
  %5170 = vmatprep.subr.mxu0 0.0
  %5171 = vmatpush1.msra.mxu0 %v4773
  %5172 = vmatprep.subr.mxu0 0.0
  %5173 = vmatpush1.msra.mxu0 %v4840
  %5174 = vmatprep.subr.mxu0 0.0
  %5175 = vmatpush1.msra.mxu0 0.0
  %5176 = vmatprep.subr.mxu0 0.0
  %5177 = vmatpush1.msra.mxu0 0.0
  %5178 = vmatprep.subr.mxu0 0.0
  %5179 = vmatpush1.msra.mxu0 0.0
  %5180 = vmatprep.subr.mxu0 0.0
  %5181 = vmatpush1.msra.mxu0 0.0
  %5182 = vmatprep.subr.mxu0 0.0
  %5183 = vmatpush1.msra.mxu0 0.0
  %5184 = vmatprep.subr.mxu0 0.0
  %5185 = vmatpush1.msra.mxu0 0.0
  %5186 = vmatprep.subr.mxu0 0.0
  %5187 = vmatpush1.msra.mxu0 0.0
  %5188 = vmatprep.subr.mxu0 0.0
  %5189 = vmatpush1.msra.mxu0 0.0
  %5190 = vmatprep.subr.mxu0 0.0
  %5191 = vmatpush1.msra.mxu0 0.0
  %5192 = vmatprep.subr.mxu0 0.0
  %5193 = vmatpush1.msra.mxu0 0.0
  %5194 = vmatprep.subr.mxu0 0.0
  %5195 = vmatpush1.msra.mxu0 0.0
  %5196 = vmatprep.subr.mxu0 0.0
  %5197 = vmatpush1.msra.mxu0 0.0
  %5198 = vmatprep.subr.mxu0 0.0
  %5199 = vmatpush1.msra.mxu0 0.0
  %5200 = vmatprep.subr.mxu0 0.0
  %5201 = vmatpush1.msra.mxu0 0.0
  %5202 = vmatprep.subr.mxu0 0.0
  %5203 = vmatpush1.msra.mxu0 0.0
  %5204 = vmatprep.subr.mxu0 0.0
  %5205 = vmatpush1.msra.mxu0 0.0
  %5206 = vmatprep.subr.mxu0 0.0
  %5207 = vmatpush1.msra.mxu0 0.0
  %5208 = vmatprep.subr.mxu0 0.0
  %5209 = vmatpush1.msra.mxu0 0.0
  %5210 = vmatprep.subr.mxu0 0.0
  %5211 = vmatpush1.msra.mxu0 0.0
  %5212 = vmatprep.subr.mxu0 0.0
  %5213 = vmatpush1.msra.mxu0 0.0
  %5214 = vmatprep.subr.mxu0 0.0
  %5215 = vmatpush1.msra.mxu0 0.0
  %5216 = vmatprep.subr.mxu0 0.0
  %5217 = vmatpush1.msra.mxu0 0.0
  %5218 = vmatprep.subr.mxu0 0.0
  %5219 = vmatpush1.msra.mxu0 0.0
  %5220 = vmatprep.subr.mxu0 0.0
  %5221 = vmatpush1.msra.mxu0 0.0
  %5222 = vmatprep.subr.mxu0 0.0
  %5223 = vmatpush1.msra.mxu0 0.0
  %5224 = vmatprep.subr.mxu0 0.0
  %5225 = vmatpush1.msra.mxu0 0.0
  %5226 = vmatprep.subr.mxu0 0.0
  %5227 = vmatpush1.msra.mxu0 0.0
  %5228 = vmatprep.mubr.f32.mxu0 0.0
  %5229 = vmatmul.mubr.f32.gmra.mrb[0].mxu0 %v4780
  %v5230 = vpop.f32.mrb[0].mxu0
  %v5231 = vadd.f32 0.0, %v5230
  %v5232 = vpop.f32.mrb[0].mxu0
  %5233 = vmatprep.mubr.f32.mxu0 0.0
  %5234 = vmatmul.mubr.f32.gmra.mrb[0].mxu0 %v4783
  %v5235 = vpop.f32.mrb[0].mxu0
  %v5236 = vadd.f32 0.0, %v5235
  %v5237 = vpop.f32.mrb[0].mxu0
  %5238 = vmatprep.mubr.f32.mxu0 0.0
  %5239 = vmatmul.mubr.f32.gmra.mrb[0].mxu0 %v4786
  %v5240 = vpop.f32.mrb[0].mxu0
  %v5241 = vadd.f32 0.0, %v5240
  %v5242 = vpop.f32.mrb[0].mxu0
  %5243 = vmatprep.mubr.f32.mxu0 0.0
  %5244 = vmatmul.mubr.f32.gmra.mrb[0].mxu0 %v4789
  %v5245 = vpop.f32.mrb[0].mxu0
  %v5246 = vadd.f32 0.0, %v5245
  %v5247 = vpop.f32.mrb[0].mxu0
  %5248 = vmatprep.mubr.f32.mxu0 0.0
  %5249 = vmatmul.mubr.f32.gmra.mrb[0].mxu0 %v4792
  %v5250 = vpop.f32.mrb[0].mxu0
  %v5251 = vadd.f32 0.0, %v5250
  %v5252 = vpop.f32.mrb[0].mxu0
  %5253 = vmatprep.mubr.f32.mxu0 0.0
  %5254 = vmatmul.mubr.f32.gmra.mrb[0].mxu0 %v4795
  %v5255 = vpop.f32.mrb[0].mxu0
  %v5256 = vadd.f32 0.0, %v5255
  %v5257 = vpop.f32.mrb[0].mxu0
  %5258 = vmatprep.mubr.f32.mxu0 0.0
  %5259 = vmatmul.mubr.f32.gmra.mrb[0].mxu0 %v4798
  %v5260 = vpop.f32.mrb[0].mxu0
  %v5261 = vadd.f32 0.0, %v5260
  %v5262 = vpop.f32.mrb[0].mxu0
  %5263 = vmatprep.mubr.f32.mxu0 0.0
  %5264 = vmatmul.mubr.f32.gmra.mrb[0].mxu0 %v4801
  %v5265 = vpop.f32.mrb[0].mxu0
  %v5266 = vadd.f32 0.0, %v5265
  %v5267 = vpop.f32.mrb[0].mxu0
  %5268 = vmatprep.mubr.f32.mxu0 0.0
  %5269 = vmatmul.mubr.f32.gmra.mrb[0].mxu0 %v4804
  %v5270 = vpop.f32.mrb[0].mxu0
  %v5271 = vadd.f32 0.0, %v5270
  %v5272 = vpop.f32.mrb[0].mxu0
  %5273 = vmatprep.mubr.f32.mxu0 0.0
  %5274 = vmatmul.mubr.f32.gmra.mrb[0].mxu0 %v4807
  %v5275 = vpop.f32.mrb[0].mxu0
  %v5276 = vadd.f32 0.0, %v5275
  %v5277 = vpop.f32.mrb[0].mxu0
  %5278 = vmatprep.mubr.f32.mxu0 0.0
  %5279 = vmatmul.mubr.f32.gmra.mrb[0].mxu0 %v4810
  %v5280 = vpop.f32.mrb[0].mxu0
  %v5281 = vadd.f32 0.0, %v5280
  %v5282 = vpop.f32.mrb[0].mxu0
  %5283 = vmatprep.mubr.f32.mxu0 0.0
  %5284 = vmatmul.mubr.f32.gmra.mrb[0].mxu0 %v4813
  %v5285 = vpop.f32.mrb[0].mxu0
  %v5286 = vadd.f32 0.0, %v5285
  %v5287 = vpop.f32.mrb[0].mxu0
  %5288 = vmatprep.mubr.f32.mxu0 0.0
  %5289 = vmatmul.mubr.f32.gmra.mrb[0].mxu0 %v4816
  %v5290 = vpop.f32.mrb[0].mxu0
  %v5291 = vadd.f32 0.0, %v5290
  %v5292 = vpop.f32.mrb[0].mxu0
  %5293 = vmatprep.mubr.f32.mxu0 0.0
  %5294 = vmatmul.mubr.f32.gmra.mrb[0].mxu0 %v4819
  %v5295 = vpop.f32.mrb[0].mxu0
  %v5296 = vadd.f32 0.0, %v5295
  %v5297 = vpop.f32.mrb[0].mxu0
  %5298 = vmatprep.mubr.f32.mxu0 0.0
  %5299 = vmatmul.mubr.f32.gmra.mrb[0].mxu0 %v4822
  %v5300 = vpop.f32.mrb[0].mxu0
  %v5301 = vadd.f32 0.0, %v5300
  %v5302 = vpop.f32.mrb[0].mxu0
  %5303 = vmatprep.mubr.f32.mxu0 0.0
  %5304 = vmatmul.mubr.f32.gmra.mrb[0].mxu0 %v4825
  %v5305 = vpop.f32.mrb[0].mxu0
  %v5306 = vadd.f32 0.0, %v5305
  %v5307 = vpop.f32.mrb[0].mxu0
  %5308 = vdwg.mxu0
  %s5309 = scalar_lea.vmem %s2, 80
  %v5310 = vld [vmem:[%s5309] sm:$0xff]
  %v5311 = vld [vmem:[%s5309 + $0x8] sm:$0xff]
  %v5312 = vld [vmem:[%s5309 + $0x10] sm:$0xff]
  %v5313 = vld [vmem:[%s5309 + $0x18] sm:$0xff]
  %v5314 = vld [vmem:[%s5309 + $0x20] sm:$0x1]
  %v5316 = vsel %vm132, %v5314, 0
  %5318 = vmatprep.subr.mxu0 0.0
  %5319 = vmatpush1.msra.mxu0 %v5310
  %5320 = vmatprep.subr.mxu0 0.0
  %5321 = vmatpush1.msra.mxu0 %v5311
  %5322 = vmatprep.subr.mxu0 0.0
  %5323 = vmatpush1.msra.mxu0 %v5312
  %5324 = vmatprep.subr.mxu0 0.0
  %5325 = vmatpush1.msra.mxu0 %v5313
  %5326 = vmatprep.subr.mxu0 0.0
  %5327 = vmatpush1.msra.mxu0 %v5316
  %5328 = vmatprep.subr.mxu0 0.0
  %5329 = vmatpush1.msra.mxu0 0.0
  %5330 = vmatprep.subr.mxu0 0.0
  %5331 = vmatpush1.msra.mxu0 0.0
  %5332 = vmatprep.subr.mxu0 0.0
  %5333 = vmatpush1.msra.mxu0 0.0
  %5334 = vmatprep.subr.mxu0 0.0
  %5335 = vmatpush1.msra.mxu0 0.0
  %5336 = vmatprep.subr.mxu0 0.0
  %5337 = vmatpush1.msra.mxu0 0.0
  %5338 = vmatprep.subr.mxu0 0.0
  %5339 = vmatpush1.msra.mxu0 0.0
  %5340 = vmatprep.subr.mxu0 0.0
  %5341 = vmatpush1.msra.mxu0 0.0
  %5342 = vmatprep.subr.mxu0 0.0
  %5343 = vmatpush1.msra.mxu0 0.0
  %5344 = vmatprep.subr.mxu0 0.0
  %5345 = vmatpush1.msra.mxu0 0.0
  %5346 = vmatprep.subr.mxu0 0.0
  %5347 = vmatpush1.msra.mxu0 0.0
  %5348 = vmatprep.subr.mxu0 0.0
  %5349 = vmatpush1.msra.mxu0 0.0
  %5350 = vmatprep.subr.mxu0 0.0
  %5351 = vmatpush1.msra.mxu0 0.0
  %5352 = vmatprep.subr.mxu0 0.0
  %5353 = vmatpush1.msra.mxu0 0.0
  %5354 = vmatprep.subr.mxu0 0.0
  %5355 = vmatpush1.msra.mxu0 0.0
  %5356 = vmatprep.subr.mxu0 0.0
  %5357 = vmatpush1.msra.mxu0 0.0
  %5358 = vmatprep.subr.mxu0 0.0
  %5359 = vmatpush1.msra.mxu0 0.0
  %5360 = vmatprep.subr.mxu0 0.0
  %5361 = vmatpush1.msra.mxu0 0.0
  %5362 = vmatprep.subr.mxu0 0.0
  %5363 = vmatpush1.msra.mxu0 0.0
  %5364 = vmatprep.subr.mxu0 0.0
  %5365 = vmatpush1.msra.mxu0 0.0
  %5366 = vmatprep.subr.mxu0 0.0
  %5367 = vmatpush1.msra.mxu0 0.0
  %5368 = vmatprep.subr.mxu0 0.0
  %5369 = vmatpush1.msra.mxu0 0.0
  %5370 = vmatprep.subr.mxu0 0.0
  %5371 = vmatpush1.msra.mxu0 0.0
  %5372 = vmatprep.subr.mxu0 0.0
  %5373 = vmatpush1.msra.mxu0 0.0
  %5374 = vmatprep.subr.mxu0 0.0
  %5375 = vmatpush1.msra.mxu0 0.0
  %5376 = vmatprep.subr.mxu0 0.0
  %5377 = vmatpush1.msra.mxu0 0.0
  %5378 = vmatprep.subr.mxu0 0.0
  %5379 = vmatpush1.msra.mxu0 0.0
  %5380 = vmatprep.subr.mxu0 0.0
  %5381 = vmatpush1.msra.mxu0 0.0
  %5382 = vmatprep.mubr.f32.mxu0 0.0
  %5383 = vmatmul.mubr.f32.gmra.mrb[0].mxu0 %v4780
  %v5384 = vpop.f32.mrb[0].mxu0
  %v5385 = vadd.f32 0.0, %v5384
  %v5386 = vpop.f32.mrb[0].mxu0
  %5387 = vmatprep.mubr.f32.mxu0 0.0
  %5388 = vmatmul.mubr.f32.gmra.mrb[0].mxu0 %v4783
  %v5389 = vpop.f32.mrb[0].mxu0
  %v5390 = vadd.f32 0.0, %v5389
  %v5391 = vpop.f32.mrb[0].mxu0
  %5392 = vmatprep.mubr.f32.mxu0 0.0
  %5393 = vmatmul.mubr.f32.gmra.mrb[0].mxu0 %v4786
  %v5394 = vpop.f32.mrb[0].mxu0
  %v5395 = vadd.f32 0.0, %v5394
  %v5396 = vpop.f32.mrb[0].mxu0
  %5397 = vmatprep.mubr.f32.mxu0 0.0
  %5398 = vmatmul.mubr.f32.gmra.mrb[0].mxu0 %v4789
  %v5399 = vpop.f32.mrb[0].mxu0
  %v5400 = vadd.f32 0.0, %v5399
  %v5401 = vpop.f32.mrb[0].mxu0
  %5402 = vmatprep.mubr.f32.mxu0 0.0
  %5403 = vmatmul.mubr.f32.gmra.mrb[0].mxu0 %v4792
  %v5404 = vpop.f32.mrb[0].mxu0
  %v5405 = vadd.f32 0.0, %v5404
  %v5406 = vpop.f32.mrb[0].mxu0
  %5407 = vmatprep.mubr.f32.mxu0 0.0
  %5408 = vmatmul.mubr.f32.gmra.mrb[0].mxu0 %v4795
  %v5409 = vpop.f32.mrb[0].mxu0
  %v5410 = vadd.f32 0.0, %v5409
  %v5411 = vpop.f32.mrb[0].mxu0
  %5412 = vmatprep.mubr.f32.mxu0 0.0
  %5413 = vmatmul.mubr.f32.gmra.mrb[0].mxu0 %v4798
  %v5414 = vpop.f32.mrb[0].mxu0
  %v5415 = vadd.f32 0.0, %v5414
  %v5416 = vpop.f32.mrb[0].mxu0
  %5417 = vmatprep.mubr.f32.mxu0 0.0
  %5418 = vmatmul.mubr.f32.gmra.mrb[0].mxu0 %v4801
  %v5419 = vpop.f32.mrb[0].mxu0
  %v5420 = vadd.f32 0.0, %v5419
  %v5421 = vpop.f32.mrb[0].mxu0
  %5422 = vmatprep.mubr.f32.mxu0 0.0
  %5423 = vmatmul.mubr.f32.gmra.mrb[0].mxu0 %v4804
  %v5424 = vpop.f32.mrb[0].mxu0
  %v5425 = vadd.f32 0.0, %v5424
  %v5426 = vpop.f32.mrb[0].mxu0
  %5427 = vmatprep.mubr.f32.mxu0 0.0
  %5428 = vmatmul.mubr.f32.gmra.mrb[0].mxu0 %v4807
  %v5429 = vpop.f32.mrb[0].mxu0
  %v5430 = vadd.f32 0.0, %v5429
  %v5431 = vpop.f32.mrb[0].mxu0
  %5432 = vmatprep.mubr.f32.mxu0 0.0
  %5433 = vmatmul.mubr.f32.gmra.mrb[0].mxu0 %v4810
  %v5434 = vpop.f32.mrb[0].mxu0
  %v5435 = vadd.f32 0.0, %v5434
  %v5436 = vpop.f32.mrb[0].mxu0
  %5437 = vmatprep.mubr.f32.mxu0 0.0
  %5438 = vmatmul.mubr.f32.gmra.mrb[0].mxu0 %v4813
  %v5439 = vpop.f32.mrb[0].mxu0
  %v5440 = vadd.f32 0.0, %v5439
  %v5441 = vpop.f32.mrb[0].mxu0
  %5442 = vmatprep.mubr.f32.mxu0 0.0
  %5443 = vmatmul.mubr.f32.gmra.mrb[0].mxu0 %v4816
  %v5444 = vpop.f32.mrb[0].mxu0
  %v5445 = vadd.f32 0.0, %v5444
  %v5446 = vpop.f32.mrb[0].mxu0
  %5447 = vmatprep.mubr.f32.mxu0 0.0
  %5448 = vmatmul.mubr.f32.gmra.mrb[0].mxu0 %v4819
  %v5449 = vpop.f32.mrb[0].mxu0
  %v5450 = vadd.f32 0.0, %v5449
  %v5451 = vpop.f32.mrb[0].mxu0
  %5452 = vmatprep.mubr.f32.mxu0 0.0
  %5453 = vmatmul.mubr.f32.gmra.mrb[0].mxu0 %v4822
  %v5454 = vpop.f32.mrb[0].mxu0
  %v5455 = vadd.f32 0.0, %v5454
  %v5456 = vpop.f32.mrb[0].mxu0
  %5457 = vmatprep.mubr.f32.mxu0 0.0
  %5458 = vmatmul.mubr.f32.gmra.mrb[0].mxu0 %v4825
  %v5459 = vpop.f32.mrb[0].mxu0
  %v5460 = vadd.f32 0.0, %v5459
  %v5461 = vpop.f32.mrb[0].mxu0
  %5462 = vdwg.mxu0
  %5463 = vmatprep.subr.mxu0 0.0
  %5464 = vmatpush1.msra.mxu0 %v5385
  %5465 = vmatprep.subr.mxu0 0.0
  %5466 = vmatpush1.msra.mxu0 %v5390
  %5467 = vmatprep.subr.mxu0 0.0
  %5468 = vmatpush1.msra.mxu0 %v5395
  %5469 = vmatprep.subr.mxu0 0.0
  %5470 = vmatpush1.msra.mxu0 %v5400
  %5471 = vmatprep.subr.mxu0 0.0
  %5472 = vmatpush1.msra.mxu0 %v5405
  %5473 = vmatprep.subr.mxu0 0.0
  %5474 = vmatpush1.msra.mxu0 %v5410
  %5475 = vmatprep.subr.mxu0 0.0
  %5476 = vmatpush1.msra.mxu0 %v5415
  %5477 = vmatprep.subr.mxu0 0.0
  %5478 = vmatpush1.msra.mxu0 %v5420
  %5479 = vmatprep.subr.mxu0 0.0
  %5480 = vmatpush1.msra.mxu0 %v5425
  %5481 = vmatprep.subr.mxu0 0.0
  %5482 = vmatpush1.msra.mxu0 %v5430
  %5483 = vmatprep.subr.mxu0 0.0
  %5484 = vmatpush1.msra.mxu0 %v5435
  %5485 = vmatprep.subr.mxu0 0.0
  %5486 = vmatpush1.msra.mxu0 %v5440
  %5487 = vmatprep.subr.mxu0 0.0
  %5488 = vmatpush1.msra.mxu0 %v5445
  %5489 = vmatprep.subr.mxu0 0.0
  %5490 = vmatpush1.msra.mxu0 %v5450
  %5491 = vmatprep.subr.mxu0 0.0
  %5492 = vmatpush1.msra.mxu0 %v5455
  %5493 = vmatprep.subr.mxu0 0.0
  %5494 = vmatpush1.msra.mxu0 %v5460
  %5495 = vmatprep.subr.mxu0 0.0
  %5496 = vmatpush1.msra.mxu0 0.0
  %5497 = vmatprep.subr.mxu0 0.0
  %5498 = vmatpush1.msra.mxu0 0.0
  %5499 = vmatprep.subr.mxu0 0.0
  %5500 = vmatpush1.msra.mxu0 0.0
  %5501 = vmatprep.subr.mxu0 0.0
  %5502 = vmatpush1.msra.mxu0 0.0
  %5503 = vmatprep.subr.mxu0 0.0
  %5504 = vmatpush1.msra.mxu0 0.0
  %5505 = vmatprep.subr.mxu0 0.0
  %5506 = vmatpush1.msra.mxu0 0.0
  %5507 = vmatprep.subr.mxu0 0.0
  %5508 = vmatpush1.msra.mxu0 0.0
  %5509 = vmatprep.subr.mxu0 0.0
  %5510 = vmatpush1.msra.mxu0 0.0
  %5511 = vmatprep.subr.mxu0 0.0
  %5512 = vmatpush1.msra.mxu0 0.0
  %5513 = vmatprep.subr.mxu0 0.0
  %5514 = vmatpush1.msra.mxu0 0.0
  %5515 = vmatprep.subr.mxu0 0.0
  %5516 = vmatpush1.msra.mxu0 0.0
  %5517 = vmatprep.subr.mxu0 0.0
  %5518 = vmatpush1.msra.mxu0 0.0
  %5519 = vmatprep.subr.mxu0 0.0
  %5520 = vmatpush1.msra.mxu0 0.0
  %5521 = vmatprep.subr.mxu0 0.0
  %5522 = vmatpush1.msra.mxu0 0.0
  %5523 = vmatprep.subr.mxu0 0.0
  %5524 = vmatpush1.msra.mxu0 0.0
  %5525 = vmatprep.subr.mxu0 0.0
  %5526 = vmatpush1.msra.mxu0 0.0
  %5527 = vmatprep.mubr.f32.mxu0 0.0
  %5528 = vmatmul.mubr.f32.gmra.mrb[0].mxu0 %v26
  %v5529 = vpop.f32.mrb[0].mxu0
  %v5530 = vadd.f32 %v4909, %v5529
  %v5531 = vpop.f32.mrb[0].mxu0
  %5532 = vmatprep.mubr.f32.mxu0 0.0
  %5533 = vmatmul.mubr.f32.gmra.mrb[0].mxu0 %v27
  %v5534 = vpop.f32.mrb[0].mxu0
  %v5535 = vadd.f32 %v4915, %v5534
  %v5536 = vpop.f32.mrb[0].mxu0
  %5537 = vmatprep.mubr.f32.mxu0 0.0
  %5538 = vmatmul.mubr.f32.gmra.mrb[0].mxu0 %v28
  %v5539 = vpop.f32.mrb[0].mxu0
  %v5540 = vadd.f32 %v4921, %v5539
  %v5541 = vpop.f32.mrb[0].mxu0
  %5542 = vmatprep.mubr.f32.mxu0 0.0
  %5543 = vmatmul.mubr.f32.gmra.mrb[0].mxu0 %v29
  %v5544 = vpop.f32.mrb[0].mxu0
  %v5545 = vadd.f32 %v4927, %v5544
  %v5546 = vpop.f32.mrb[0].mxu0
  %5547 = vmatprep.mubr.f32.mxu0 0.0
  %5548 = vmatmul.mubr.f32.gmra.mrb[0].mxu0 %v30
  %v5549 = vpop.f32.mrb[0].mxu0
  %v5550 = vadd.f32 %v4933, %v5549
  %v5551 = vpop.f32.mrb[0].mxu0
  %5552 = vmatprep.mubr.f32.mxu0 0.0
  %5553 = vmatmul.mubr.f32.gmra.mrb[0].mxu0 %v31
  %v5554 = vpop.f32.mrb[0].mxu0
  %v5555 = vadd.f32 %v4939, %v5554
  %v5556 = vpop.f32.mrb[0].mxu0
  %5557 = vmatprep.mubr.f32.mxu0 0.0
  %5558 = vmatmul.mubr.f32.gmra.mrb[0].mxu0 %v32
  %v5559 = vpop.f32.mrb[0].mxu0
  %v5560 = vadd.f32 %v4945, %v5559
  %v5561 = vpop.f32.mrb[0].mxu0
  %5562 = vmatprep.mubr.f32.mxu0 0.0
  %5563 = vmatmul.mubr.f32.gmra.mrb[0].mxu0 %v33
  %v5564 = vpop.f32.mrb[0].mxu0
  %v5565 = vadd.f32 %v4951, %v5564
  %v5566 = vpop.f32.mrb[0].mxu0
  %5567 = vmatprep.mubr.f32.mxu0 0.0
  %5568 = vmatmul.mubr.f32.gmra.mrb[0].mxu0 %v34
  %v5569 = vpop.f32.mrb[0].mxu0
  %v5570 = vadd.f32 %v4957, %v5569
  %v5571 = vpop.f32.mrb[0].mxu0
  %5572 = vmatprep.mubr.f32.mxu0 0.0
  %5573 = vmatmul.mubr.f32.gmra.mrb[0].mxu0 %v35
  %v5574 = vpop.f32.mrb[0].mxu0
  %v5575 = vadd.f32 %v4963, %v5574
  %v5576 = vpop.f32.mrb[0].mxu0
  %5577 = vmatprep.mubr.f32.mxu0 0.0
  %5578 = vmatmul.mubr.f32.gmra.mrb[0].mxu0 %v36
  %v5579 = vpop.f32.mrb[0].mxu0
  %v5580 = vadd.f32 %v4969, %v5579
  %v5581 = vpop.f32.mrb[0].mxu0
  %5582 = vmatprep.mubr.f32.mxu0 0.0
  %5583 = vmatmul.mubr.f32.gmra.mrb[0].mxu0 %v37
  %v5584 = vpop.f32.mrb[0].mxu0
  %v5585 = vadd.f32 %v4975, %v5584
  %v5586 = vpop.f32.mrb[0].mxu0
  %5587 = vmatprep.mubr.f32.mxu0 0.0
  %5588 = vmatmul.mubr.f32.gmra.mrb[0].mxu0 %v38
  %v5589 = vpop.f32.mrb[0].mxu0
  %v5590 = vadd.f32 %v4981, %v5589
  %v5591 = vpop.f32.mrb[0].mxu0
  %5592 = vmatprep.mubr.f32.mxu0 0.0
  %5593 = vmatmul.mubr.f32.gmra.mrb[0].mxu0 %v39
  %v5594 = vpop.f32.mrb[0].mxu0
  %v5595 = vadd.f32 %v4987, %v5594
  %v5596 = vpop.f32.mrb[0].mxu0
  %5597 = vmatprep.mubr.f32.mxu0 0.0
  %5598 = vmatmul.mubr.f32.gmra.mrb[0].mxu0 %v40
  %v5599 = vpop.f32.mrb[0].mxu0
  %v5600 = vadd.f32 %v4993, %v5599
  %v5601 = vpop.f32.mrb[0].mxu0
  %5602 = vmatprep.mubr.f32.mxu0 0.0
  %5603 = vmatmul.mubr.f32.gmra.mrb[0].mxu0 %v41
  %v5604 = vpop.f32.mrb[0].mxu0
  %v5605 = vadd.f32 %v4999, %v5604
  %v5606 = vpop.f32.mrb[0].mxu0
  %5607 = vdwg.mxu0
  %v5608 = vmax.f32 %v5530, 0.0
  %v5609 = vmax.f32 %v5535, 0.0
  %v5610 = vmax.f32 %v5540, 0.0
  %v5611 = vmax.f32 %v5545, 0.0
  %v5612 = vmax.f32 %v5550, 0.0
  %v5613 = vmax.f32 %v5555, 0.0
  %v5614 = vmax.f32 %v5560, 0.0
  %v5615 = vmax.f32 %v5565, 0.0
  %v5616 = vmax.f32 %v5570, 0.0
  %v5617 = vmax.f32 %v5575, 0.0
  %v5618 = vmax.f32 %v5580, 0.0
  %v5619 = vmax.f32 %v5585, 0.0
  %v5620 = vmax.f32 %v5590, 0.0
  %v5621 = vmax.f32 %v5595, 0.0
  %v5622 = vmax.f32 %v5600, 0.0
  %v5623 = vmax.f32 %v5605, 0.0
  %s5624 = scalar_lea.vmem %s3, 1024
  %v5625 = vld [vmem:[%s5624] sm:$0xff]
  %v5626 = vld [vmem:[%s5624 + $0x8] sm:$0xff]
  %v5627 = vld [vmem:[%s5624 + $0x10] sm:$0xff]
  %v5628 = vld [vmem:[%s5624 + $0x18] sm:$0xff]
  %v5629 = vld [vmem:[%s5624 + $0x20] sm:$0xff]
  %v5630 = vld [vmem:[%s5624 + $0x28] sm:$0xff]
  %v5631 = vld [vmem:[%s5624 + $0x30] sm:$0xff]
  %v5632 = vld [vmem:[%s5624 + $0x38] sm:$0xff]
  %v5633 = vld [vmem:[%s5624 + $0x40] sm:$0xff]
  %v5634 = vld [vmem:[%s5624 + $0x48] sm:$0xff]
  %v5635 = vld [vmem:[%s5624 + $0x50] sm:$0xff]
  %v5636 = vld [vmem:[%s5624 + $0x58] sm:$0xff]
  %v5637 = vld [vmem:[%s5624 + $0x60] sm:$0xff]
  %v5638 = vld [vmem:[%s5624 + $0x68] sm:$0xff]
  %v5639 = vld [vmem:[%s5624 + $0x70] sm:$0xff]
  %v5640 = vld [vmem:[%s5624 + $0x78] sm:$0xff]
  %5641 = vmatprep.subr.mxu0 0.0
  %5642 = vmatpush1.msra.mxu0 %v5625
  %5643 = vmatprep.subr.mxu0 0.0
  %5644 = vmatpush1.msra.mxu0 %v5626
  %5645 = vmatprep.subr.mxu0 0.0
  %5646 = vmatpush1.msra.mxu0 %v5627
  %5647 = vmatprep.subr.mxu0 0.0
  %5648 = vmatpush1.msra.mxu0 %v5628
  %5649 = vmatprep.subr.mxu0 0.0
  %5650 = vmatpush1.msra.mxu0 %v5629
  %5651 = vmatprep.subr.mxu0 0.0
  %5652 = vmatpush1.msra.mxu0 %v5630
  %5653 = vmatprep.subr.mxu0 0.0
  %5654 = vmatpush1.msra.mxu0 %v5631
  %5655 = vmatprep.subr.mxu0 0.0
  %5656 = vmatpush1.msra.mxu0 %v5632
  %5657 = vmatprep.subr.mxu0 0.0
  %5658 = vmatpush1.msra.mxu0 %v5633
  %5659 = vmatprep.subr.mxu0 0.0
  %5660 = vmatpush1.msra.mxu0 %v5634
  %5661 = vmatprep.subr.mxu0 0.0
  %5662 = vmatpush1.msra.mxu0 %v5635
  %5663 = vmatprep.subr.mxu0 0.0
  %5664 = vmatpush1.msra.mxu0 %v5636
  %5665 = vmatprep.subr.mxu0 0.0
  %5666 = vmatpush1.msra.mxu0 %v5637
  %5667 = vmatprep.subr.mxu0 0.0
  %5668 = vmatpush1.msra.mxu0 %v5638
  %5669 = vmatprep.subr.mxu0 0.0
  %5670 = vmatpush1.msra.mxu0 %v5639
  %5671 = vmatprep.subr.mxu0 0.0
  %5672 = vmatpush1.msra.mxu0 %v5640
  %5673 = vmatprep.subr.mxu0 0.0
  %5674 = vmatpush1.msra.mxu0 0.0
  %5675 = vmatprep.subr.mxu0 0.0
  %5676 = vmatpush1.msra.mxu0 0.0
  %5677 = vmatprep.subr.mxu0 0.0
  %5678 = vmatpush1.msra.mxu0 0.0
  %5679 = vmatprep.subr.mxu0 0.0
  %5680 = vmatpush1.msra.mxu0 0.0
  %5681 = vmatprep.subr.mxu0 0.0
  %5682 = vmatpush1.msra.mxu0 0.0
  %5683 = vmatprep.subr.mxu0 0.0
  %5684 = vmatpush1.msra.mxu0 0.0
  %5685 = vmatprep.subr.mxu0 0.0
  %5686 = vmatpush1.msra.mxu0 0.0
  %5687 = vmatprep.subr.mxu0 0.0
  %5688 = vmatpush1.msra.mxu0 0.0
  %5689 = vmatprep.subr.mxu0 0.0
  %5690 = vmatpush1.msra.mxu0 0.0
  %5691 = vmatprep.subr.mxu0 0.0
  %5692 = vmatpush1.msra.mxu0 0.0
  %5693 = vmatprep.subr.mxu0 0.0
  %5694 = vmatpush1.msra.mxu0 0.0
  %5695 = vmatprep.subr.mxu0 0.0
  %5696 = vmatpush1.msra.mxu0 0.0
  %5697 = vmatprep.subr.mxu0 0.0
  %5698 = vmatpush1.msra.mxu0 0.0
  %5699 = vmatprep.subr.mxu0 0.0
  %5700 = vmatpush1.msra.mxu0 0.0
  %5701 = vmatprep.subr.mxu0 0.0
  %5702 = vmatpush1.msra.mxu0 0.0
  %5703 = vmatprep.subr.mxu0 0.0
  %5704 = vmatpush1.msra.mxu0 0.0
  %5705 = vmatprep.mubr.f32.mxu0 0.0
  %5706 = vmatmul.mubr.f32.gmra.mrb[0].mxu0 %v5608
  %v5707 = vpop.f32.mrb[0].mxu0
  %v5708 = vadd.f32 0.0, %v5707
  %v5709 = vpop.f32.mrb[0].mxu0
  %5710 = vmatprep.mubr.f32.mxu0 0.0
  %5711 = vmatmul.mubr.f32.gmra.mrb[0].mxu0 %v5609
  %v5712 = vpop.f32.mrb[0].mxu0
  %v5713 = vadd.f32 0.0, %v5712
  %v5714 = vpop.f32.mrb[0].mxu0
  %5715 = vmatprep.mubr.f32.mxu0 0.0
  %5716 = vmatmul.mubr.f32.gmra.mrb[0].mxu0 %v5610
  %v5717 = vpop.f32.mrb[0].mxu0
  %v5718 = vadd.f32 0.0, %v5717
  %v5719 = vpop.f32.mrb[0].mxu0
  %5720 = vmatprep.mubr.f32.mxu0 0.0
  %5721 = vmatmul.mubr.f32.gmra.mrb[0].mxu0 %v5611
  %v5722 = vpop.f32.mrb[0].mxu0
  %v5723 = vadd.f32 0.0, %v5722
  %v5724 = vpop.f32.mrb[0].mxu0
  %5725 = vmatprep.mubr.f32.mxu0 0.0
  %5726 = vmatmul.mubr.f32.gmra.mrb[0].mxu0 %v5612
  %v5727 = vpop.f32.mrb[0].mxu0
  %v5728 = vadd.f32 0.0, %v5727
  %v5729 = vpop.f32.mrb[0].mxu0
  %5730 = vmatprep.mubr.f32.mxu0 0.0
  %5731 = vmatmul.mubr.f32.gmra.mrb[0].mxu0 %v5613
  %v5732 = vpop.f32.mrb[0].mxu0
  %v5733 = vadd.f32 0.0, %v5732
  %v5734 = vpop.f32.mrb[0].mxu0
  %5735 = vmatprep.mubr.f32.mxu0 0.0
  %5736 = vmatmul.mubr.f32.gmra.mrb[0].mxu0 %v5614
  %v5737 = vpop.f32.mrb[0].mxu0
  %v5738 = vadd.f32 0.0, %v5737
  %v5739 = vpop.f32.mrb[0].mxu0
  %5740 = vmatprep.mubr.f32.mxu0 0.0
  %5741 = vmatmul.mubr.f32.gmra.mrb[0].mxu0 %v5615
  %v5742 = vpop.f32.mrb[0].mxu0
  %v5743 = vadd.f32 0.0, %v5742
  %v5744 = vpop.f32.mrb[0].mxu0
  %5745 = vmatprep.mubr.f32.mxu0 0.0
  %5746 = vmatmul.mubr.f32.gmra.mrb[0].mxu0 %v5616
  %v5747 = vpop.f32.mrb[0].mxu0
  %v5748 = vadd.f32 0.0, %v5747
  %v5749 = vpop.f32.mrb[0].mxu0
  %5750 = vmatprep.mubr.f32.mxu0 0.0
  %5751 = vmatmul.mubr.f32.gmra.mrb[0].mxu0 %v5617
  %v5752 = vpop.f32.mrb[0].mxu0
  %v5753 = vadd.f32 0.0, %v5752
  %v5754 = vpop.f32.mrb[0].mxu0
  %5755 = vmatprep.mubr.f32.mxu0 0.0
  %5756 = vmatmul.mubr.f32.gmra.mrb[0].mxu0 %v5618
  %v5757 = vpop.f32.mrb[0].mxu0
  %v5758 = vadd.f32 0.0, %v5757
  %v5759 = vpop.f32.mrb[0].mxu0
  %5760 = vmatprep.mubr.f32.mxu0 0.0
  %5761 = vmatmul.mubr.f32.gmra.mrb[0].mxu0 %v5619
  %v5762 = vpop.f32.mrb[0].mxu0
  %v5763 = vadd.f32 0.0, %v5762
  %v5764 = vpop.f32.mrb[0].mxu0
  %5765 = vmatprep.mubr.f32.mxu0 0.0
  %5766 = vmatmul.mubr.f32.gmra.mrb[0].mxu0 %v5620
  %v5767 = vpop.f32.mrb[0].mxu0
  %v5768 = vadd.f32 0.0, %v5767
  %v5769 = vpop.f32.mrb[0].mxu0
  %5770 = vmatprep.mubr.f32.mxu0 0.0
  %5771 = vmatmul.mubr.f32.gmra.mrb[0].mxu0 %v5621
  %v5772 = vpop.f32.mrb[0].mxu0
  %v5773 = vadd.f32 0.0, %v5772
  %v5774 = vpop.f32.mrb[0].mxu0
  %5775 = vmatprep.mubr.f32.mxu0 0.0
  %5776 = vmatmul.mubr.f32.gmra.mrb[0].mxu0 %v5622
  %v5777 = vpop.f32.mrb[0].mxu0
  %v5778 = vadd.f32 0.0, %v5777
  %v5779 = vpop.f32.mrb[0].mxu0
  %5780 = vmatprep.mubr.f32.mxu0 0.0
  %5781 = vmatmul.mubr.f32.gmra.mrb[0].mxu0 %v5623
  %v5782 = vpop.f32.mrb[0].mxu0
  %v5783 = vadd.f32 0.0, %v5782
  %v5784 = vpop.f32.mrb[0].mxu0
  %5785 = vdwg.mxu0
  %5786 = vmatprep.subr.mxu0 0.0
  %5787 = vmatpush1.msra.mxu0 %v5708
  %5788 = vmatprep.subr.mxu0 0.0
  %5789 = vmatpush1.msra.mxu0 %v5713
  %5790 = vmatprep.subr.mxu0 0.0
  %5791 = vmatpush1.msra.mxu0 %v5718
  %5792 = vmatprep.subr.mxu0 0.0
  %5793 = vmatpush1.msra.mxu0 %v5723
  %5794 = vmatprep.subr.mxu0 0.0
  %5795 = vmatpush1.msra.mxu0 %v5728
  %5796 = vmatprep.subr.mxu0 0.0
  %5797 = vmatpush1.msra.mxu0 %v5733
  %5798 = vmatprep.subr.mxu0 0.0
  %5799 = vmatpush1.msra.mxu0 %v5738
  %5800 = vmatprep.subr.mxu0 0.0
  %5801 = vmatpush1.msra.mxu0 %v5743
  %5802 = vmatprep.subr.mxu0 0.0
  %5803 = vmatpush1.msra.mxu0 %v5748
  %5804 = vmatprep.subr.mxu0 0.0
  %5805 = vmatpush1.msra.mxu0 %v5753
  %5806 = vmatprep.subr.mxu0 0.0
  %5807 = vmatpush1.msra.mxu0 %v5758
  %5808 = vmatprep.subr.mxu0 0.0
  %5809 = vmatpush1.msra.mxu0 %v5763
  %5810 = vmatprep.subr.mxu0 0.0
  %5811 = vmatpush1.msra.mxu0 %v5768
  %5812 = vmatprep.subr.mxu0 0.0
  %5813 = vmatpush1.msra.mxu0 %v5773
  %5814 = vmatprep.subr.mxu0 0.0
  %5815 = vmatpush1.msra.mxu0 %v5778
  %5816 = vmatprep.subr.mxu0 0.0
  %5817 = vmatpush1.msra.mxu0 %v5783
  %5818 = vmatprep.subr.mxu0 0.0
  %5819 = vmatpush1.msra.mxu0 0.0
  %5820 = vmatprep.subr.mxu0 0.0
  %5821 = vmatpush1.msra.mxu0 0.0
  %5822 = vmatprep.subr.mxu0 0.0
  %5823 = vmatpush1.msra.mxu0 0.0
  %5824 = vmatprep.subr.mxu0 0.0
  %5825 = vmatpush1.msra.mxu0 0.0
  %5826 = vmatprep.subr.mxu0 0.0
  %5827 = vmatpush1.msra.mxu0 0.0
  %5828 = vmatprep.subr.mxu0 0.0
  %5829 = vmatpush1.msra.mxu0 0.0
  %5830 = vmatprep.subr.mxu0 0.0
  %5831 = vmatpush1.msra.mxu0 0.0
  %5832 = vmatprep.subr.mxu0 0.0
  %5833 = vmatpush1.msra.mxu0 0.0
  %5834 = vmatprep.subr.mxu0 0.0
  %5835 = vmatpush1.msra.mxu0 0.0
  %5836 = vmatprep.subr.mxu0 0.0
  %5837 = vmatpush1.msra.mxu0 0.0
  %5838 = vmatprep.subr.mxu0 0.0
  %5839 = vmatpush1.msra.mxu0 0.0
  %5840 = vmatprep.subr.mxu0 0.0
  %5841 = vmatpush1.msra.mxu0 0.0
  %5842 = vmatprep.subr.mxu0 0.0
  %5843 = vmatpush1.msra.mxu0 0.0
  %5844 = vmatprep.subr.mxu0 0.0
  %5845 = vmatpush1.msra.mxu0 0.0
  %5846 = vmatprep.subr.mxu0 0.0
  %5847 = vmatpush1.msra.mxu0 0.0
  %5848 = vmatprep.subr.mxu0 0.0
  %5849 = vmatpush1.msra.mxu0 0.0
  %5850 = vmatprep.mubr.f32.mxu0 0.0
  %5851 = vmatmul.mubr.f32.gmra.mrb[0].mxu0 %v26
  %v5852 = vpop.f32.mrb[0].mxu0
  %v5853 = vadd.f32 %v4911, %v5852
  %v5854 = vpop.f32.mrb[0].mxu0
  %5855 = vmatprep.mubr.f32.mxu0 0.0
  %5856 = vmatmul.mubr.f32.gmra.mrb[0].mxu0 %v27
  %v5857 = vpop.f32.mrb[0].mxu0
  %v5858 = vadd.f32 %v4917, %v5857
  %v5859 = vpop.f32.mrb[0].mxu0
  %5860 = vmatprep.mubr.f32.mxu0 0.0
  %5861 = vmatmul.mubr.f32.gmra.mrb[0].mxu0 %v28
  %v5862 = vpop.f32.mrb[0].mxu0
  %v5863 = vadd.f32 %v4923, %v5862
  %v5864 = vpop.f32.mrb[0].mxu0
  %5865 = vmatprep.mubr.f32.mxu0 0.0
  %5866 = vmatmul.mubr.f32.gmra.mrb[0].mxu0 %v29
  %v5867 = vpop.f32.mrb[0].mxu0
  %v5868 = vadd.f32 %v4929, %v5867
  %v5869 = vpop.f32.mrb[0].mxu0
  %5870 = vmatprep.mubr.f32.mxu0 0.0
  %5871 = vmatmul.mubr.f32.gmra.mrb[0].mxu0 %v30
  %v5872 = vpop.f32.mrb[0].mxu0
  %v5873 = vadd.f32 %v4935, %v5872
  %v5874 = vpop.f32.mrb[0].mxu0
  %5875 = vmatprep.mubr.f32.mxu0 0.0
  %5876 = vmatmul.mubr.f32.gmra.mrb[0].mxu0 %v31
  %v5877 = vpop.f32.mrb[0].mxu0
  %v5878 = vadd.f32 %v4941, %v5877
  %v5879 = vpop.f32.mrb[0].mxu0
  %5880 = vmatprep.mubr.f32.mxu0 0.0
  %5881 = vmatmul.mubr.f32.gmra.mrb[0].mxu0 %v32
  %v5882 = vpop.f32.mrb[0].mxu0
  %v5883 = vadd.f32 %v4947, %v5882
  %v5884 = vpop.f32.mrb[0].mxu0
  %5885 = vmatprep.mubr.f32.mxu0 0.0
  %5886 = vmatmul.mubr.f32.gmra.mrb[0].mxu0 %v33
  %v5887 = vpop.f32.mrb[0].mxu0
  %v5888 = vadd.f32 %v4953, %v5887
  %v5889 = vpop.f32.mrb[0].mxu0
  %5890 = vmatprep.mubr.f32.mxu0 0.0
  %5891 = vmatmul.mubr.f32.gmra.mrb[0].mxu0 %v34
  %v5892 = vpop.f32.mrb[0].mxu0
  %v5893 = vadd.f32 %v4959, %v5892
  %v5894 = vpop.f32.mrb[0].mxu0
  %5895 = vmatprep.mubr.f32.mxu0 0.0
  %5896 = vmatmul.mubr.f32.gmra.mrb[0].mxu0 %v35
  %v5897 = vpop.f32.mrb[0].mxu0
  %v5898 = vadd.f32 %v4965, %v5897
  %v5899 = vpop.f32.mrb[0].mxu0
  %5900 = vmatprep.mubr.f32.mxu0 0.0
  %5901 = vmatmul.mubr.f32.gmra.mrb[0].mxu0 %v36
  %v5902 = vpop.f32.mrb[0].mxu0
  %v5903 = vadd.f32 %v4971, %v5902
  %v5904 = vpop.f32.mrb[0].mxu0
  %5905 = vmatprep.mubr.f32.mxu0 0.0
  %5906 = vmatmul.mubr.f32.gmra.mrb[0].mxu0 %v37
  %v5907 = vpop.f32.mrb[0].mxu0
  %v5908 = vadd.f32 %v4977, %v5907
  %v5909 = vpop.f32.mrb[0].mxu0
  %5910 = vmatprep.mubr.f32.mxu0 0.0
  %5911 = vmatmul.mubr.f32.gmra.mrb[0].mxu0 %v38
  %v5912 = vpop.f32.mrb[0].mxu0
  %v5913 = vadd.f32 %v4983, %v5912
  %v5914 = vpop.f32.mrb[0].mxu0
  %5915 = vmatprep.mubr.f32.mxu0 0.0
  %5916 = vmatmul.mubr.f32.gmra.mrb[0].mxu0 %v39
  %v5917 = vpop.f32.mrb[0].mxu0
  %v5918 = vadd.f32 %v4989, %v5917
  %v5919 = vpop.f32.mrb[0].mxu0
  %5920 = vmatprep.mubr.f32.mxu0 0.0
  %5921 = vmatmul.mubr.f32.gmra.mrb[0].mxu0 %v40
  %v5922 = vpop.f32.mrb[0].mxu0
  %v5923 = vadd.f32 %v4995, %v5922
  %v5924 = vpop.f32.mrb[0].mxu0
  %5925 = vmatprep.mubr.f32.mxu0 0.0
  %5926 = vmatmul.mubr.f32.gmra.mrb[0].mxu0 %v41
  %v5927 = vpop.f32.mrb[0].mxu0
  %v5928 = vadd.f32 %v5001, %v5927
  %v5929 = vpop.f32.mrb[0].mxu0
  %5930 = vdwg.mxu0
  %v5931 = vmax.f32 %v5853, 0.0
  %v5932 = vmax.f32 %v5858, 0.0
  %v5933 = vmax.f32 %v5863, 0.0
  %v5934 = vmax.f32 %v5868, 0.0
  %v5935 = vmax.f32 %v5873, 0.0
  %v5936 = vmax.f32 %v5878, 0.0
  %v5937 = vmax.f32 %v5883, 0.0
  %v5938 = vmax.f32 %v5888, 0.0
  %v5939 = vmax.f32 %v5893, 0.0
  %v5940 = vmax.f32 %v5898, 0.0
  %v5941 = vmax.f32 %v5903, 0.0
  %v5942 = vmax.f32 %v5908, 0.0
  %v5943 = vmax.f32 %v5913, 0.0
  %v5944 = vmax.f32 %v5918, 0.0
  %v5945 = vmax.f32 %v5923, 0.0
  %v5946 = vmax.f32 %v5928, 0.0
  %s5947 = scalar_lea.vmem %s3, 1152
  %v5948 = vld [vmem:[%s5947] sm:$0xff]
  %v5949 = vld [vmem:[%s5947 + $0x8] sm:$0xff]
  %v5950 = vld [vmem:[%s5947 + $0x10] sm:$0xff]
  %v5951 = vld [vmem:[%s5947 + $0x18] sm:$0xff]
  %v5952 = vld [vmem:[%s5947 + $0x20] sm:$0xff]
  %v5953 = vld [vmem:[%s5947 + $0x28] sm:$0xff]
  %v5954 = vld [vmem:[%s5947 + $0x30] sm:$0xff]
  %v5955 = vld [vmem:[%s5947 + $0x38] sm:$0xff]
  %v5956 = vld [vmem:[%s5947 + $0x40] sm:$0xff]
  %v5957 = vld [vmem:[%s5947 + $0x48] sm:$0xff]
  %v5958 = vld [vmem:[%s5947 + $0x50] sm:$0xff]
  %v5959 = vld [vmem:[%s5947 + $0x58] sm:$0xff]
  %v5960 = vld [vmem:[%s5947 + $0x60] sm:$0xff]
  %v5961 = vld [vmem:[%s5947 + $0x68] sm:$0xff]
  %v5962 = vld [vmem:[%s5947 + $0x70] sm:$0xff]
  %v5963 = vld [vmem:[%s5947 + $0x78] sm:$0xff]
  %5964 = vmatprep.subr.mxu0 0.0
  %5965 = vmatpush1.msra.mxu0 %v5948
  %5966 = vmatprep.subr.mxu0 0.0
  %5967 = vmatpush1.msra.mxu0 %v5949
  %5968 = vmatprep.subr.mxu0 0.0
  %5969 = vmatpush1.msra.mxu0 %v5950
  %5970 = vmatprep.subr.mxu0 0.0
  %5971 = vmatpush1.msra.mxu0 %v5951
  %5972 = vmatprep.subr.mxu0 0.0
  %5973 = vmatpush1.msra.mxu0 %v5952
  %5974 = vmatprep.subr.mxu0 0.0
  %5975 = vmatpush1.msra.mxu0 %v5953
  %5976 = vmatprep.subr.mxu0 0.0
  %5977 = vmatpush1.msra.mxu0 %v5954
  %5978 = vmatprep.subr.mxu0 0.0
  %5979 = vmatpush1.msra.mxu0 %v5955
  %5980 = vmatprep.subr.mxu0 0.0
  %5981 = vmatpush1.msra.mxu0 %v5956
  %5982 = vmatprep.subr.mxu0 0.0
  %5983 = vmatpush1.msra.mxu0 %v5957
  %5984 = vmatprep.subr.mxu0 0.0
  %5985 = vmatpush1.msra.mxu0 %v5958
  %5986 = vmatprep.subr.mxu0 0.0
  %5987 = vmatpush1.msra.mxu0 %v5959
  %5988 = vmatprep.subr.mxu0 0.0
  %5989 = vmatpush1.msra.mxu0 %v5960
  %5990 = vmatprep.subr.mxu0 0.0
  %5991 = vmatpush1.msra.mxu0 %v5961
  %5992 = vmatprep.subr.mxu0 0.0
  %5993 = vmatpush1.msra.mxu0 %v5962
  %5994 = vmatprep.subr.mxu0 0.0
  %5995 = vmatpush1.msra.mxu0 %v5963
  %5996 = vmatprep.subr.mxu0 0.0
  %5997 = vmatpush1.msra.mxu0 0.0
  %5998 = vmatprep.subr.mxu0 0.0
  %5999 = vmatpush1.msra.mxu0 0.0
  %6000 = vmatprep.subr.mxu0 0.0
  %6001 = vmatpush1.msra.mxu0 0.0
  %6002 = vmatprep.subr.mxu0 0.0
  %6003 = vmatpush1.msra.mxu0 0.0
  %6004 = vmatprep.subr.mxu0 0.0
  %6005 = vmatpush1.msra.mxu0 0.0
  %6006 = vmatprep.subr.mxu0 0.0
  %6007 = vmatpush1.msra.mxu0 0.0
  %6008 = vmatprep.subr.mxu0 0.0
  %6009 = vmatpush1.msra.mxu0 0.0
  %6010 = vmatprep.subr.mxu0 0.0
  %6011 = vmatpush1.msra.mxu0 0.0
  %6012 = vmatprep.subr.mxu0 0.0
  %6013 = vmatpush1.msra.mxu0 0.0
  %6014 = vmatprep.subr.mxu0 0.0
  %6015 = vmatpush1.msra.mxu0 0.0
  %6016 = vmatprep.subr.mxu0 0.0
  %6017 = vmatpush1.msra.mxu0 0.0
  %6018 = vmatprep.subr.mxu0 0.0
  %6019 = vmatpush1.msra.mxu0 0.0
  %6020 = vmatprep.subr.mxu0 0.0
  %6021 = vmatpush1.msra.mxu0 0.0
  %6022 = vmatprep.subr.mxu0 0.0
  %6023 = vmatpush1.msra.mxu0 0.0
  %6024 = vmatprep.subr.mxu0 0.0
  %6025 = vmatpush1.msra.mxu0 0.0
  %6026 = vmatprep.subr.mxu0 0.0
  %6027 = vmatpush1.msra.mxu0 0.0
  %6028 = vmatprep.mubr.f32.mxu0 0.0
  %6029 = vmatmul.mubr.f32.gmra.mrb[0].mxu0 %v5931
  %v6030 = vpop.f32.mrb[0].mxu0
  %v6031 = vadd.f32 0.0, %v6030
  %v6032 = vpop.f32.mrb[0].mxu0
  %6033 = vmatprep.mubr.f32.mxu0 0.0
  %6034 = vmatmul.mubr.f32.gmra.mrb[0].mxu0 %v5932
  %v6035 = vpop.f32.mrb[0].mxu0
  %v6036 = vadd.f32 0.0, %v6035
  %v6037 = vpop.f32.mrb[0].mxu0
  %6038 = vmatprep.mubr.f32.mxu0 0.0
  %6039 = vmatmul.mubr.f32.gmra.mrb[0].mxu0 %v5933
  %v6040 = vpop.f32.mrb[0].mxu0
  %v6041 = vadd.f32 0.0, %v6040
  %v6042 = vpop.f32.mrb[0].mxu0
  %6043 = vmatprep.mubr.f32.mxu0 0.0
  %6044 = vmatmul.mubr.f32.gmra.mrb[0].mxu0 %v5934
  %v6045 = vpop.f32.mrb[0].mxu0
  %v6046 = vadd.f32 0.0, %v6045
  %v6047 = vpop.f32.mrb[0].mxu0
  %6048 = vmatprep.mubr.f32.mxu0 0.0
  %6049 = vmatmul.mubr.f32.gmra.mrb[0].mxu0 %v5935
  %v6050 = vpop.f32.mrb[0].mxu0
  %v6051 = vadd.f32 0.0, %v6050
  %v6052 = vpop.f32.mrb[0].mxu0
  %6053 = vmatprep.mubr.f32.mxu0 0.0
  %6054 = vmatmul.mubr.f32.gmra.mrb[0].mxu0 %v5936
  %v6055 = vpop.f32.mrb[0].mxu0
  %v6056 = vadd.f32 0.0, %v6055
  %v6057 = vpop.f32.mrb[0].mxu0
  %6058 = vmatprep.mubr.f32.mxu0 0.0
  %6059 = vmatmul.mubr.f32.gmra.mrb[0].mxu0 %v5937
  %v6060 = vpop.f32.mrb[0].mxu0
  %v6061 = vadd.f32 0.0, %v6060
  %v6062 = vpop.f32.mrb[0].mxu0
  %6063 = vmatprep.mubr.f32.mxu0 0.0
  %6064 = vmatmul.mubr.f32.gmra.mrb[0].mxu0 %v5938
  %v6065 = vpop.f32.mrb[0].mxu0
  %v6066 = vadd.f32 0.0, %v6065
  %v6067 = vpop.f32.mrb[0].mxu0
  %6068 = vmatprep.mubr.f32.mxu0 0.0
  %6069 = vmatmul.mubr.f32.gmra.mrb[0].mxu0 %v5939
  %v6070 = vpop.f32.mrb[0].mxu0
  %v6071 = vadd.f32 0.0, %v6070
  %v6072 = vpop.f32.mrb[0].mxu0
  %6073 = vmatprep.mubr.f32.mxu0 0.0
  %6074 = vmatmul.mubr.f32.gmra.mrb[0].mxu0 %v5940
  %v6075 = vpop.f32.mrb[0].mxu0
  %v6076 = vadd.f32 0.0, %v6075
  %v6077 = vpop.f32.mrb[0].mxu0
  %6078 = vmatprep.mubr.f32.mxu0 0.0
  %6079 = vmatmul.mubr.f32.gmra.mrb[0].mxu0 %v5941
  %v6080 = vpop.f32.mrb[0].mxu0
  %v6081 = vadd.f32 0.0, %v6080
  %v6082 = vpop.f32.mrb[0].mxu0
  %6083 = vmatprep.mubr.f32.mxu0 0.0
  %6084 = vmatmul.mubr.f32.gmra.mrb[0].mxu0 %v5942
  %v6085 = vpop.f32.mrb[0].mxu0
  %v6086 = vadd.f32 0.0, %v6085
  %v6087 = vpop.f32.mrb[0].mxu0
  %6088 = vmatprep.mubr.f32.mxu0 0.0
  %6089 = vmatmul.mubr.f32.gmra.mrb[0].mxu0 %v5943
  %v6090 = vpop.f32.mrb[0].mxu0
  %v6091 = vadd.f32 0.0, %v6090
  %v6092 = vpop.f32.mrb[0].mxu0
  %6093 = vmatprep.mubr.f32.mxu0 0.0
  %6094 = vmatmul.mubr.f32.gmra.mrb[0].mxu0 %v5944
  %v6095 = vpop.f32.mrb[0].mxu0
  %v6096 = vadd.f32 0.0, %v6095
  %v6097 = vpop.f32.mrb[0].mxu0
  %6098 = vmatprep.mubr.f32.mxu0 0.0
  %6099 = vmatmul.mubr.f32.gmra.mrb[0].mxu0 %v5945
  %v6100 = vpop.f32.mrb[0].mxu0
  %v6101 = vadd.f32 0.0, %v6100
  %v6102 = vpop.f32.mrb[0].mxu0
  %6103 = vmatprep.mubr.f32.mxu0 0.0
  %6104 = vmatmul.mubr.f32.gmra.mrb[0].mxu0 %v5946
  %v6105 = vpop.f32.mrb[0].mxu0
  %v6106 = vadd.f32 0.0, %v6105
  %v6107 = vpop.f32.mrb[0].mxu0
  %6108 = vdwg.mxu0
  %6109 = vmatprep.subr.mxu0 0.0
  %6110 = vmatpush1.msra.mxu0 %v6031
  %6111 = vmatprep.subr.mxu0 0.0
  %6112 = vmatpush1.msra.mxu0 %v6036
  %6113 = vmatprep.subr.mxu0 0.0
  %6114 = vmatpush1.msra.mxu0 %v6041
  %6115 = vmatprep.subr.mxu0 0.0
  %6116 = vmatpush1.msra.mxu0 %v6046
  %6117 = vmatprep.subr.mxu0 0.0
  %6118 = vmatpush1.msra.mxu0 %v6051
  %6119 = vmatprep.subr.mxu0 0.0
  %6120 = vmatpush1.msra.mxu0 %v6056
  %6121 = vmatprep.subr.mxu0 0.0
  %6122 = vmatpush1.msra.mxu0 %v6061
  %6123 = vmatprep.subr.mxu0 0.0
  %6124 = vmatpush1.msra.mxu0 %v6066
  %6125 = vmatprep.subr.mxu0 0.0
  %6126 = vmatpush1.msra.mxu0 %v6071
  %6127 = vmatprep.subr.mxu0 0.0
  %6128 = vmatpush1.msra.mxu0 %v6076
  %6129 = vmatprep.subr.mxu0 0.0
  %6130 = vmatpush1.msra.mxu0 %v6081
  %6131 = vmatprep.subr.mxu0 0.0
  %6132 = vmatpush1.msra.mxu0 %v6086
  %6133 = vmatprep.subr.mxu0 0.0
  %6134 = vmatpush1.msra.mxu0 %v6091
  %6135 = vmatprep.subr.mxu0 0.0
  %6136 = vmatpush1.msra.mxu0 %v6096
  %6137 = vmatprep.subr.mxu0 0.0
  %6138 = vmatpush1.msra.mxu0 %v6101
  %6139 = vmatprep.subr.mxu0 0.0
  %6140 = vmatpush1.msra.mxu0 %v6106
  %6141 = vmatprep.subr.mxu0 0.0
  %6142 = vmatpush1.msra.mxu0 0.0
  %6143 = vmatprep.subr.mxu0 0.0
  %6144 = vmatpush1.msra.mxu0 0.0
  %6145 = vmatprep.subr.mxu0 0.0
  %6146 = vmatpush1.msra.mxu0 0.0
  %6147 = vmatprep.subr.mxu0 0.0
  %6148 = vmatpush1.msra.mxu0 0.0
  %6149 = vmatprep.subr.mxu0 0.0
  %6150 = vmatpush1.msra.mxu0 0.0
  %6151 = vmatprep.subr.mxu0 0.0
  %6152 = vmatpush1.msra.mxu0 0.0
  %6153 = vmatprep.subr.mxu0 0.0
  %6154 = vmatpush1.msra.mxu0 0.0
  %6155 = vmatprep.subr.mxu0 0.0
  %6156 = vmatpush1.msra.mxu0 0.0
  %6157 = vmatprep.subr.mxu0 0.0
  %6158 = vmatpush1.msra.mxu0 0.0
  %6159 = vmatprep.subr.mxu0 0.0
  %6160 = vmatpush1.msra.mxu0 0.0
  %6161 = vmatprep.subr.mxu0 0.0
  %6162 = vmatpush1.msra.mxu0 0.0
  %6163 = vmatprep.subr.mxu0 0.0
  %6164 = vmatpush1.msra.mxu0 0.0
  %6165 = vmatprep.subr.mxu0 0.0
  %6166 = vmatpush1.msra.mxu0 0.0
  %6167 = vmatprep.subr.mxu0 0.0
  %6168 = vmatpush1.msra.mxu0 0.0
  %6169 = vmatprep.subr.mxu0 0.0
  %6170 = vmatpush1.msra.mxu0 0.0
  %6171 = vmatprep.subr.mxu0 0.0
  %6172 = vmatpush1.msra.mxu0 0.0
  %6173 = vmatprep.mubr.f32.mxu0 0.0
  %6174 = vmatmul.mubr.f32.gmra.mrb[0].mxu0 %v26
  %v6175 = vpop.f32.mrb[0].mxu0
  %v6176 = vadd.f32 %v5070, %v6175
  %v6177 = vpop.f32.mrb[0].mxu0
  %6178 = vmatprep.mubr.f32.mxu0 0.0
  %6179 = vmatmul.mubr.f32.gmra.mrb[0].mxu0 %v27
  %v6180 = vpop.f32.mrb[0].mxu0
  %v6181 = vadd.f32 %v5076, %v6180
  %v6182 = vpop.f32.mrb[0].mxu0
  %6183 = vmatprep.mubr.f32.mxu0 0.0
  %6184 = vmatmul.mubr.f32.gmra.mrb[0].mxu0 %v28
  %v6185 = vpop.f32.mrb[0].mxu0
  %v6186 = vadd.f32 %v5082, %v6185
  %v6187 = vpop.f32.mrb[0].mxu0
  %6188 = vmatprep.mubr.f32.mxu0 0.0
  %6189 = vmatmul.mubr.f32.gmra.mrb[0].mxu0 %v29
  %v6190 = vpop.f32.mrb[0].mxu0
  %v6191 = vadd.f32 %v5088, %v6190
  %v6192 = vpop.f32.mrb[0].mxu0
  %6193 = vmatprep.mubr.f32.mxu0 0.0
  %6194 = vmatmul.mubr.f32.gmra.mrb[0].mxu0 %v30
  %v6195 = vpop.f32.mrb[0].mxu0
  %v6196 = vadd.f32 %v5094, %v6195
  %v6197 = vpop.f32.mrb[0].mxu0
  %6198 = vmatprep.mubr.f32.mxu0 0.0
  %6199 = vmatmul.mubr.f32.gmra.mrb[0].mxu0 %v31
  %v6200 = vpop.f32.mrb[0].mxu0
  %v6201 = vadd.f32 %v5100, %v6200
  %v6202 = vpop.f32.mrb[0].mxu0
  %6203 = vmatprep.mubr.f32.mxu0 0.0
  %6204 = vmatmul.mubr.f32.gmra.mrb[0].mxu0 %v32
  %v6205 = vpop.f32.mrb[0].mxu0
  %v6206 = vadd.f32 %v5106, %v6205
  %v6207 = vpop.f32.mrb[0].mxu0
  %6208 = vmatprep.mubr.f32.mxu0 0.0
  %6209 = vmatmul.mubr.f32.gmra.mrb[0].mxu0 %v33
  %v6210 = vpop.f32.mrb[0].mxu0
  %v6211 = vadd.f32 %v5112, %v6210
  %v6212 = vpop.f32.mrb[0].mxu0
  %6213 = vmatprep.mubr.f32.mxu0 0.0
  %6214 = vmatmul.mubr.f32.gmra.mrb[0].mxu0 %v34
  %v6215 = vpop.f32.mrb[0].mxu0
  %v6216 = vadd.f32 %v5118, %v6215
  %v6217 = vpop.f32.mrb[0].mxu0
  %6218 = vmatprep.mubr.f32.mxu0 0.0
  %6219 = vmatmul.mubr.f32.gmra.mrb[0].mxu0 %v35
  %v6220 = vpop.f32.mrb[0].mxu0
  %v6221 = vadd.f32 %v5124, %v6220
  %v6222 = vpop.f32.mrb[0].mxu0
  %6223 = vmatprep.mubr.f32.mxu0 0.0
  %6224 = vmatmul.mubr.f32.gmra.mrb[0].mxu0 %v36
  %v6225 = vpop.f32.mrb[0].mxu0
  %v6226 = vadd.f32 %v5130, %v6225
  %v6227 = vpop.f32.mrb[0].mxu0
  %6228 = vmatprep.mubr.f32.mxu0 0.0
  %6229 = vmatmul.mubr.f32.gmra.mrb[0].mxu0 %v37
  %v6230 = vpop.f32.mrb[0].mxu0
  %v6231 = vadd.f32 %v5136, %v6230
  %v6232 = vpop.f32.mrb[0].mxu0
  %6233 = vmatprep.mubr.f32.mxu0 0.0
  %6234 = vmatmul.mubr.f32.gmra.mrb[0].mxu0 %v38
  %v6235 = vpop.f32.mrb[0].mxu0
  %v6236 = vadd.f32 %v5142, %v6235
  %v6237 = vpop.f32.mrb[0].mxu0
  %6238 = vmatprep.mubr.f32.mxu0 0.0
  %6239 = vmatmul.mubr.f32.gmra.mrb[0].mxu0 %v39
  %v6240 = vpop.f32.mrb[0].mxu0
  %v6241 = vadd.f32 %v5148, %v6240
  %v6242 = vpop.f32.mrb[0].mxu0
  %6243 = vmatprep.mubr.f32.mxu0 0.0
  %6244 = vmatmul.mubr.f32.gmra.mrb[0].mxu0 %v40
  %v6245 = vpop.f32.mrb[0].mxu0
  %v6246 = vadd.f32 %v5154, %v6245
  %v6247 = vpop.f32.mrb[0].mxu0
  %6248 = vmatprep.mubr.f32.mxu0 0.0
  %6249 = vmatmul.mubr.f32.gmra.mrb[0].mxu0 %v41
  %v6250 = vpop.f32.mrb[0].mxu0
  %v6251 = vadd.f32 %v5160, %v6250
  %v6252 = vpop.f32.mrb[0].mxu0
  %6253 = vdwg.mxu0
  %v6254 = vmax.f32 %v6176, 0.0
  %v6255 = vmax.f32 %v6181, 0.0
  %v6256 = vmax.f32 %v6186, 0.0
  %v6257 = vmax.f32 %v6191, 0.0
  %v6258 = vmax.f32 %v6196, 0.0
  %v6259 = vmax.f32 %v6201, 0.0
  %v6260 = vmax.f32 %v6206, 0.0
  %v6261 = vmax.f32 %v6211, 0.0
  %v6262 = vmax.f32 %v6216, 0.0
  %v6263 = vmax.f32 %v6221, 0.0
  %v6264 = vmax.f32 %v6226, 0.0
  %v6265 = vmax.f32 %v6231, 0.0
  %v6266 = vmax.f32 %v6236, 0.0
  %v6267 = vmax.f32 %v6241, 0.0
  %v6268 = vmax.f32 %v6246, 0.0
  %v6269 = vmax.f32 %v6251, 0.0
  %s6270 = scalar_lea.vmem %s3, 1280
  %v6271 = vld [vmem:[%s6270] sm:$0xff]
  %v6272 = vld [vmem:[%s6270 + $0x8] sm:$0xff]
  %v6273 = vld [vmem:[%s6270 + $0x10] sm:$0xff]
  %v6274 = vld [vmem:[%s6270 + $0x18] sm:$0xff]
  %v6275 = vld [vmem:[%s6270 + $0x20] sm:$0xff]
  %v6276 = vld [vmem:[%s6270 + $0x28] sm:$0xff]
  %v6277 = vld [vmem:[%s6270 + $0x30] sm:$0xff]
  %v6278 = vld [vmem:[%s6270 + $0x38] sm:$0xff]
  %v6279 = vld [vmem:[%s6270 + $0x40] sm:$0xff]
  %v6280 = vld [vmem:[%s6270 + $0x48] sm:$0xff]
  %v6281 = vld [vmem:[%s6270 + $0x50] sm:$0xff]
  %v6282 = vld [vmem:[%s6270 + $0x58] sm:$0xff]
  %v6283 = vld [vmem:[%s6270 + $0x60] sm:$0xff]
  %v6284 = vld [vmem:[%s6270 + $0x68] sm:$0xff]
  %v6285 = vld [vmem:[%s6270 + $0x70] sm:$0xff]
  %v6286 = vld [vmem:[%s6270 + $0x78] sm:$0xff]
  %6287 = vmatprep.subr.mxu0 0.0
  %6288 = vmatpush1.msra.mxu0 %v6271
  %6289 = vmatprep.subr.mxu0 0.0
  %6290 = vmatpush1.msra.mxu0 %v6272
  %6291 = vmatprep.subr.mxu0 0.0
  %6292 = vmatpush1.msra.mxu0 %v6273
  %6293 = vmatprep.subr.mxu0 0.0
  %6294 = vmatpush1.msra.mxu0 %v6274
  %6295 = vmatprep.subr.mxu0 0.0
  %6296 = vmatpush1.msra.mxu0 %v6275
  %6297 = vmatprep.subr.mxu0 0.0
  %6298 = vmatpush1.msra.mxu0 %v6276
  %6299 = vmatprep.subr.mxu0 0.0
  %6300 = vmatpush1.msra.mxu0 %v6277
  %6301 = vmatprep.subr.mxu0 0.0
  %6302 = vmatpush1.msra.mxu0 %v6278
  %6303 = vmatprep.subr.mxu0 0.0
  %6304 = vmatpush1.msra.mxu0 %v6279
  %6305 = vmatprep.subr.mxu0 0.0
  %6306 = vmatpush1.msra.mxu0 %v6280
  %6307 = vmatprep.subr.mxu0 0.0
  %6308 = vmatpush1.msra.mxu0 %v6281
  %6309 = vmatprep.subr.mxu0 0.0
  %6310 = vmatpush1.msra.mxu0 %v6282
  %6311 = vmatprep.subr.mxu0 0.0
  %6312 = vmatpush1.msra.mxu0 %v6283
  %6313 = vmatprep.subr.mxu0 0.0
  %6314 = vmatpush1.msra.mxu0 %v6284
  %6315 = vmatprep.subr.mxu0 0.0
  %6316 = vmatpush1.msra.mxu0 %v6285
  %6317 = vmatprep.subr.mxu0 0.0
  %6318 = vmatpush1.msra.mxu0 %v6286
  %6319 = vmatprep.subr.mxu0 0.0
  %6320 = vmatpush1.msra.mxu0 0.0
  %6321 = vmatprep.subr.mxu0 0.0
  %6322 = vmatpush1.msra.mxu0 0.0
  %6323 = vmatprep.subr.mxu0 0.0
  %6324 = vmatpush1.msra.mxu0 0.0
  %6325 = vmatprep.subr.mxu0 0.0
  %6326 = vmatpush1.msra.mxu0 0.0
  %6327 = vmatprep.subr.mxu0 0.0
  %6328 = vmatpush1.msra.mxu0 0.0
  %6329 = vmatprep.subr.mxu0 0.0
  %6330 = vmatpush1.msra.mxu0 0.0
  %6331 = vmatprep.subr.mxu0 0.0
  %6332 = vmatpush1.msra.mxu0 0.0
  %6333 = vmatprep.subr.mxu0 0.0
  %6334 = vmatpush1.msra.mxu0 0.0
  %6335 = vmatprep.subr.mxu0 0.0
  %6336 = vmatpush1.msra.mxu0 0.0
  %6337 = vmatprep.subr.mxu0 0.0
  %6338 = vmatpush1.msra.mxu0 0.0
  %6339 = vmatprep.subr.mxu0 0.0
  %6340 = vmatpush1.msra.mxu0 0.0
  %6341 = vmatprep.subr.mxu0 0.0
  %6342 = vmatpush1.msra.mxu0 0.0
  %6343 = vmatprep.subr.mxu0 0.0
  %6344 = vmatpush1.msra.mxu0 0.0
  %6345 = vmatprep.subr.mxu0 0.0
  %6346 = vmatpush1.msra.mxu0 0.0
  %6347 = vmatprep.subr.mxu0 0.0
  %6348 = vmatpush1.msra.mxu0 0.0
  %6349 = vmatprep.subr.mxu0 0.0
  %6350 = vmatpush1.msra.mxu0 0.0
  %6351 = vmatprep.mubr.f32.mxu0 0.0
  %6352 = vmatmul.mubr.f32.gmra.mrb[0].mxu0 %v6254
  %v6353 = vpop.f32.mrb[0].mxu0
  %v6354 = vadd.f32 0.0, %v6353
  %v6355 = vpop.f32.mrb[0].mxu0
  %6356 = vmatprep.mubr.f32.mxu0 0.0
  %6357 = vmatmul.mubr.f32.gmra.mrb[0].mxu0 %v6255
  %v6358 = vpop.f32.mrb[0].mxu0
  %v6359 = vadd.f32 0.0, %v6358
  %v6360 = vpop.f32.mrb[0].mxu0
  %6361 = vmatprep.mubr.f32.mxu0 0.0
  %6362 = vmatmul.mubr.f32.gmra.mrb[0].mxu0 %v6256
  %v6363 = vpop.f32.mrb[0].mxu0
  %v6364 = vadd.f32 0.0, %v6363
  %v6365 = vpop.f32.mrb[0].mxu0
  %6366 = vmatprep.mubr.f32.mxu0 0.0
  %6367 = vmatmul.mubr.f32.gmra.mrb[0].mxu0 %v6257
  %v6368 = vpop.f32.mrb[0].mxu0
  %v6369 = vadd.f32 0.0, %v6368
  %v6370 = vpop.f32.mrb[0].mxu0
  %6371 = vmatprep.mubr.f32.mxu0 0.0
  %6372 = vmatmul.mubr.f32.gmra.mrb[0].mxu0 %v6258
  %v6373 = vpop.f32.mrb[0].mxu0
  %v6374 = vadd.f32 0.0, %v6373
  %v6375 = vpop.f32.mrb[0].mxu0
  %6376 = vmatprep.mubr.f32.mxu0 0.0
  %6377 = vmatmul.mubr.f32.gmra.mrb[0].mxu0 %v6259
  %v6378 = vpop.f32.mrb[0].mxu0
  %v6379 = vadd.f32 0.0, %v6378
  %v6380 = vpop.f32.mrb[0].mxu0
  %6381 = vmatprep.mubr.f32.mxu0 0.0
  %6382 = vmatmul.mubr.f32.gmra.mrb[0].mxu0 %v6260
  %v6383 = vpop.f32.mrb[0].mxu0
  %v6384 = vadd.f32 0.0, %v6383
  %v6385 = vpop.f32.mrb[0].mxu0
  %6386 = vmatprep.mubr.f32.mxu0 0.0
  %6387 = vmatmul.mubr.f32.gmra.mrb[0].mxu0 %v6261
  %v6388 = vpop.f32.mrb[0].mxu0
  %v6389 = vadd.f32 0.0, %v6388
  %v6390 = vpop.f32.mrb[0].mxu0
  %6391 = vmatprep.mubr.f32.mxu0 0.0
  %6392 = vmatmul.mubr.f32.gmra.mrb[0].mxu0 %v6262
  %v6393 = vpop.f32.mrb[0].mxu0
  %v6394 = vadd.f32 0.0, %v6393
  %v6395 = vpop.f32.mrb[0].mxu0
  %6396 = vmatprep.mubr.f32.mxu0 0.0
  %6397 = vmatmul.mubr.f32.gmra.mrb[0].mxu0 %v6263
  %v6398 = vpop.f32.mrb[0].mxu0
  %v6399 = vadd.f32 0.0, %v6398
  %v6400 = vpop.f32.mrb[0].mxu0
  %6401 = vmatprep.mubr.f32.mxu0 0.0
  %6402 = vmatmul.mubr.f32.gmra.mrb[0].mxu0 %v6264
  %v6403 = vpop.f32.mrb[0].mxu0
  %v6404 = vadd.f32 0.0, %v6403
  %v6405 = vpop.f32.mrb[0].mxu0
  %6406 = vmatprep.mubr.f32.mxu0 0.0
  %6407 = vmatmul.mubr.f32.gmra.mrb[0].mxu0 %v6265
  %v6408 = vpop.f32.mrb[0].mxu0
  %v6409 = vadd.f32 0.0, %v6408
  %v6410 = vpop.f32.mrb[0].mxu0
  %6411 = vmatprep.mubr.f32.mxu0 0.0
  %6412 = vmatmul.mubr.f32.gmra.mrb[0].mxu0 %v6266
  %v6413 = vpop.f32.mrb[0].mxu0
  %v6414 = vadd.f32 0.0, %v6413
  %v6415 = vpop.f32.mrb[0].mxu0
  %6416 = vmatprep.mubr.f32.mxu0 0.0
  %6417 = vmatmul.mubr.f32.gmra.mrb[0].mxu0 %v6267
  %v6418 = vpop.f32.mrb[0].mxu0
  %v6419 = vadd.f32 0.0, %v6418
  %v6420 = vpop.f32.mrb[0].mxu0
  %6421 = vmatprep.mubr.f32.mxu0 0.0
  %6422 = vmatmul.mubr.f32.gmra.mrb[0].mxu0 %v6268
  %v6423 = vpop.f32.mrb[0].mxu0
  %v6424 = vadd.f32 0.0, %v6423
  %v6425 = vpop.f32.mrb[0].mxu0
  %6426 = vmatprep.mubr.f32.mxu0 0.0
  %6427 = vmatmul.mubr.f32.gmra.mrb[0].mxu0 %v6269
  %v6428 = vpop.f32.mrb[0].mxu0
  %v6429 = vadd.f32 0.0, %v6428
  %v6430 = vpop.f32.mrb[0].mxu0
  %6431 = vdwg.mxu0
  %6432 = vmatprep.subr.mxu0 0.0
  %6433 = vmatpush1.msra.mxu0 %v6354
  %6434 = vmatprep.subr.mxu0 0.0
  %6435 = vmatpush1.msra.mxu0 %v6359
  %6436 = vmatprep.subr.mxu0 0.0
  %6437 = vmatpush1.msra.mxu0 %v6364
  %6438 = vmatprep.subr.mxu0 0.0
  %6439 = vmatpush1.msra.mxu0 %v6369
  %6440 = vmatprep.subr.mxu0 0.0
  %6441 = vmatpush1.msra.mxu0 %v6374
  %6442 = vmatprep.subr.mxu0 0.0
  %6443 = vmatpush1.msra.mxu0 %v6379
  %6444 = vmatprep.subr.mxu0 0.0
  %6445 = vmatpush1.msra.mxu0 %v6384
  %6446 = vmatprep.subr.mxu0 0.0
  %6447 = vmatpush1.msra.mxu0 %v6389
  %6448 = vmatprep.subr.mxu0 0.0
  %6449 = vmatpush1.msra.mxu0 %v6394
  %6450 = vmatprep.subr.mxu0 0.0
  %6451 = vmatpush1.msra.mxu0 %v6399
  %6452 = vmatprep.subr.mxu0 0.0
  %6453 = vmatpush1.msra.mxu0 %v6404
  %6454 = vmatprep.subr.mxu0 0.0
  %6455 = vmatpush1.msra.mxu0 %v6409
  %6456 = vmatprep.subr.mxu0 0.0
  %6457 = vmatpush1.msra.mxu0 %v6414
  %6458 = vmatprep.subr.mxu0 0.0
  %6459 = vmatpush1.msra.mxu0 %v6419
  %6460 = vmatprep.subr.mxu0 0.0
  %6461 = vmatpush1.msra.mxu0 %v6424
  %6462 = vmatprep.subr.mxu0 0.0
  %6463 = vmatpush1.msra.mxu0 %v6429
  %6464 = vmatprep.subr.mxu0 0.0
  %6465 = vmatpush1.msra.mxu0 0.0
  %6466 = vmatprep.subr.mxu0 0.0
  %6467 = vmatpush1.msra.mxu0 0.0
  %6468 = vmatprep.subr.mxu0 0.0
  %6469 = vmatpush1.msra.mxu0 0.0
  %6470 = vmatprep.subr.mxu0 0.0
  %6471 = vmatpush1.msra.mxu0 0.0
  %6472 = vmatprep.subr.mxu0 0.0
  %6473 = vmatpush1.msra.mxu0 0.0
  %6474 = vmatprep.subr.mxu0 0.0
  %6475 = vmatpush1.msra.mxu0 0.0
  %6476 = vmatprep.subr.mxu0 0.0
  %6477 = vmatpush1.msra.mxu0 0.0
  %6478 = vmatprep.subr.mxu0 0.0
  %6479 = vmatpush1.msra.mxu0 0.0
  %6480 = vmatprep.subr.mxu0 0.0
  %6481 = vmatpush1.msra.mxu0 0.0
  %6482 = vmatprep.subr.mxu0 0.0
  %6483 = vmatpush1.msra.mxu0 0.0
  %6484 = vmatprep.subr.mxu0 0.0
  %6485 = vmatpush1.msra.mxu0 0.0
  %6486 = vmatprep.subr.mxu0 0.0
  %6487 = vmatpush1.msra.mxu0 0.0
  %6488 = vmatprep.subr.mxu0 0.0
  %6489 = vmatpush1.msra.mxu0 0.0
  %6490 = vmatprep.subr.mxu0 0.0
  %6491 = vmatpush1.msra.mxu0 0.0
  %6492 = vmatprep.subr.mxu0 0.0
  %6493 = vmatpush1.msra.mxu0 0.0
  %6494 = vmatprep.subr.mxu0 0.0
  %6495 = vmatpush1.msra.mxu0 0.0
  %6496 = vmatprep.mubr.f32.mxu0 0.0
  %6497 = vmatmul.mubr.f32.gmra.mrb[0].mxu0 %v26
  %v6498 = vpop.f32.mrb[0].mxu0
  %v6499 = vadd.f32 %v5072, %v6498
  %v6500 = vpop.f32.mrb[0].mxu0
  %6501 = vmatprep.mubr.f32.mxu0 0.0
  %6502 = vmatmul.mubr.f32.gmra.mrb[0].mxu0 %v27
  %v6503 = vpop.f32.mrb[0].mxu0
  %v6504 = vadd.f32 %v5078, %v6503
  %v6505 = vpop.f32.mrb[0].mxu0
  %6506 = vmatprep.mubr.f32.mxu0 0.0
  %6507 = vmatmul.mubr.f32.gmra.mrb[0].mxu0 %v28
  %v6508 = vpop.f32.mrb[0].mxu0
  %v6509 = vadd.f32 %v5084, %v6508
  %v6510 = vpop.f32.mrb[0].mxu0
  %6511 = vmatprep.mubr.f32.mxu0 0.0
  %6512 = vmatmul.mubr.f32.gmra.mrb[0].mxu0 %v29
  %v6513 = vpop.f32.mrb[0].mxu0
  %v6514 = vadd.f32 %v5090, %v6513
  %v6515 = vpop.f32.mrb[0].mxu0
  %6516 = vmatprep.mubr.f32.mxu0 0.0
  %6517 = vmatmul.mubr.f32.gmra.mrb[0].mxu0 %v30
  %v6518 = vpop.f32.mrb[0].mxu0
  %v6519 = vadd.f32 %v5096, %v6518
  %v6520 = vpop.f32.mrb[0].mxu0
  %6521 = vmatprep.mubr.f32.mxu0 0.0
  %6522 = vmatmul.mubr.f32.gmra.mrb[0].mxu0 %v31
  %v6523 = vpop.f32.mrb[0].mxu0
  %v6524 = vadd.f32 %v5102, %v6523
  %v6525 = vpop.f32.mrb[0].mxu0
  %6526 = vmatprep.mubr.f32.mxu0 0.0
  %6527 = vmatmul.mubr.f32.gmra.mrb[0].mxu0 %v32
  %v6528 = vpop.f32.mrb[0].mxu0
  %v6529 = vadd.f32 %v5108, %v6528
  %v6530 = vpop.f32.mrb[0].mxu0
  %6531 = vmatprep.mubr.f32.mxu0 0.0
  %6532 = vmatmul.mubr.f32.gmra.mrb[0].mxu0 %v33
  %v6533 = vpop.f32.mrb[0].mxu0
  %v6534 = vadd.f32 %v5114, %v6533
  %v6535 = vpop.f32.mrb[0].mxu0
  %6536 = vmatprep.mubr.f32.mxu0 0.0
  %6537 = vmatmul.mubr.f32.gmra.mrb[0].mxu0 %v34
  %v6538 = vpop.f32.mrb[0].mxu0
  %v6539 = vadd.f32 %v5120, %v6538
  %v6540 = vpop.f32.mrb[0].mxu0
  %6541 = vmatprep.mubr.f32.mxu0 0.0
  %6542 = vmatmul.mubr.f32.gmra.mrb[0].mxu0 %v35
  %v6543 = vpop.f32.mrb[0].mxu0
  %v6544 = vadd.f32 %v5126, %v6543
  %v6545 = vpop.f32.mrb[0].mxu0
  %6546 = vmatprep.mubr.f32.mxu0 0.0
  %6547 = vmatmul.mubr.f32.gmra.mrb[0].mxu0 %v36
  %v6548 = vpop.f32.mrb[0].mxu0
  %v6549 = vadd.f32 %v5132, %v6548
  %v6550 = vpop.f32.mrb[0].mxu0
  %6551 = vmatprep.mubr.f32.mxu0 0.0
  %6552 = vmatmul.mubr.f32.gmra.mrb[0].mxu0 %v37
  %v6553 = vpop.f32.mrb[0].mxu0
  %v6554 = vadd.f32 %v5138, %v6553
  %v6555 = vpop.f32.mrb[0].mxu0
  %6556 = vmatprep.mubr.f32.mxu0 0.0
  %6557 = vmatmul.mubr.f32.gmra.mrb[0].mxu0 %v38
  %v6558 = vpop.f32.mrb[0].mxu0
  %v6559 = vadd.f32 %v5144, %v6558
  %v6560 = vpop.f32.mrb[0].mxu0
  %6561 = vmatprep.mubr.f32.mxu0 0.0
  %6562 = vmatmul.mubr.f32.gmra.mrb[0].mxu0 %v39
  %v6563 = vpop.f32.mrb[0].mxu0
  %v6564 = vadd.f32 %v5150, %v6563
  %v6565 = vpop.f32.mrb[0].mxu0
  %6566 = vmatprep.mubr.f32.mxu0 0.0
  %6567 = vmatmul.mubr.f32.gmra.mrb[0].mxu0 %v40
  %v6568 = vpop.f32.mrb[0].mxu0
  %v6569 = vadd.f32 %v5156, %v6568
  %v6570 = vpop.f32.mrb[0].mxu0
  %6571 = vmatprep.mubr.f32.mxu0 0.0
  %6572 = vmatmul.mubr.f32.gmra.mrb[0].mxu0 %v41
  %v6573 = vpop.f32.mrb[0].mxu0
  %v6574 = vadd.f32 %v5162, %v6573
  %v6575 = vpop.f32.mrb[0].mxu0
  %6576 = vdwg.mxu0
  %v6577 = vmax.f32 %v6499, 0.0
  %v6578 = vmax.f32 %v6504, 0.0
  %v6579 = vmax.f32 %v6509, 0.0
  %v6580 = vmax.f32 %v6514, 0.0
  %v6581 = vmax.f32 %v6519, 0.0
  %v6582 = vmax.f32 %v6524, 0.0
  %v6583 = vmax.f32 %v6529, 0.0
  %v6584 = vmax.f32 %v6534, 0.0
  %v6585 = vmax.f32 %v6539, 0.0
  %v6586 = vmax.f32 %v6544, 0.0
  %v6587 = vmax.f32 %v6549, 0.0
  %v6588 = vmax.f32 %v6554, 0.0
  %v6589 = vmax.f32 %v6559, 0.0
  %v6590 = vmax.f32 %v6564, 0.0
  %v6591 = vmax.f32 %v6569, 0.0
  %v6592 = vmax.f32 %v6574, 0.0
  %s6593 = scalar_lea.vmem %s3, 1408
  %v6594 = vld [vmem:[%s6593] sm:$0xff]
  %v6595 = vld [vmem:[%s6593 + $0x8] sm:$0xff]
  %v6596 = vld [vmem:[%s6593 + $0x10] sm:$0xff]
  %v6597 = vld [vmem:[%s6593 + $0x18] sm:$0xff]
  %v6598 = vld [vmem:[%s6593 + $0x20] sm:$0xff]
  %v6599 = vld [vmem:[%s6593 + $0x28] sm:$0xff]
  %v6600 = vld [vmem:[%s6593 + $0x30] sm:$0xff]
  %v6601 = vld [vmem:[%s6593 + $0x38] sm:$0xff]
  %v6602 = vld [vmem:[%s6593 + $0x40] sm:$0xff]
  %v6603 = vld [vmem:[%s6593 + $0x48] sm:$0xff]
  %v6604 = vld [vmem:[%s6593 + $0x50] sm:$0xff]
  %v6605 = vld [vmem:[%s6593 + $0x58] sm:$0xff]
  %v6606 = vld [vmem:[%s6593 + $0x60] sm:$0xff]
  %v6607 = vld [vmem:[%s6593 + $0x68] sm:$0xff]
  %v6608 = vld [vmem:[%s6593 + $0x70] sm:$0xff]
  %v6609 = vld [vmem:[%s6593 + $0x78] sm:$0xff]
  %6610 = vmatprep.subr.mxu0 0.0
  %6611 = vmatpush1.msra.mxu0 %v6594
  %6612 = vmatprep.subr.mxu0 0.0
  %6613 = vmatpush1.msra.mxu0 %v6595
  %6614 = vmatprep.subr.mxu0 0.0
  %6615 = vmatpush1.msra.mxu0 %v6596
  %6616 = vmatprep.subr.mxu0 0.0
  %6617 = vmatpush1.msra.mxu0 %v6597
  %6618 = vmatprep.subr.mxu0 0.0
  %6619 = vmatpush1.msra.mxu0 %v6598
  %6620 = vmatprep.subr.mxu0 0.0
  %6621 = vmatpush1.msra.mxu0 %v6599
  %6622 = vmatprep.subr.mxu0 0.0
  %6623 = vmatpush1.msra.mxu0 %v6600
  %6624 = vmatprep.subr.mxu0 0.0
  %6625 = vmatpush1.msra.mxu0 %v6601
  %6626 = vmatprep.subr.mxu0 0.0
  %6627 = vmatpush1.msra.mxu0 %v6602
  %6628 = vmatprep.subr.mxu0 0.0
  %6629 = vmatpush1.msra.mxu0 %v6603
  %6630 = vmatprep.subr.mxu0 0.0
  %6631 = vmatpush1.msra.mxu0 %v6604
  %6632 = vmatprep.subr.mxu0 0.0
  %6633 = vmatpush1.msra.mxu0 %v6605
  %6634 = vmatprep.subr.mxu0 0.0
  %6635 = vmatpush1.msra.mxu0 %v6606
  %6636 = vmatprep.subr.mxu0 0.0
  %6637 = vmatpush1.msra.mxu0 %v6607
  %6638 = vmatprep.subr.mxu0 0.0
  %6639 = vmatpush1.msra.mxu0 %v6608
  %6640 = vmatprep.subr.mxu0 0.0
  %6641 = vmatpush1.msra.mxu0 %v6609
  %6642 = vmatprep.subr.mxu0 0.0
  %6643 = vmatpush1.msra.mxu0 0.0
  %6644 = vmatprep.subr.mxu0 0.0
  %6645 = vmatpush1.msra.mxu0 0.0
  %6646 = vmatprep.subr.mxu0 0.0
  %6647 = vmatpush1.msra.mxu0 0.0
  %6648 = vmatprep.subr.mxu0 0.0
  %6649 = vmatpush1.msra.mxu0 0.0
  %6650 = vmatprep.subr.mxu0 0.0
  %6651 = vmatpush1.msra.mxu0 0.0
  %6652 = vmatprep.subr.mxu0 0.0
  %6653 = vmatpush1.msra.mxu0 0.0
  %6654 = vmatprep.subr.mxu0 0.0
  %6655 = vmatpush1.msra.mxu0 0.0
  %6656 = vmatprep.subr.mxu0 0.0
  %6657 = vmatpush1.msra.mxu0 0.0
  %6658 = vmatprep.subr.mxu0 0.0
  %6659 = vmatpush1.msra.mxu0 0.0
  %6660 = vmatprep.subr.mxu0 0.0
  %6661 = vmatpush1.msra.mxu0 0.0
  %6662 = vmatprep.subr.mxu0 0.0
  %6663 = vmatpush1.msra.mxu0 0.0
  %6664 = vmatprep.subr.mxu0 0.0
  %6665 = vmatpush1.msra.mxu0 0.0
  %6666 = vmatprep.subr.mxu0 0.0
  %6667 = vmatpush1.msra.mxu0 0.0
  %6668 = vmatprep.subr.mxu0 0.0
  %6669 = vmatpush1.msra.mxu0 0.0
  %6670 = vmatprep.subr.mxu0 0.0
  %6671 = vmatpush1.msra.mxu0 0.0
  %6672 = vmatprep.subr.mxu0 0.0
  %6673 = vmatpush1.msra.mxu0 0.0
  %6674 = vmatprep.mubr.f32.mxu0 0.0
  %6675 = vmatmul.mubr.f32.gmra.mrb[0].mxu0 %v6577
  %v6676 = vpop.f32.mrb[0].mxu0
  %v6677 = vadd.f32 0.0, %v6676
  %v6678 = vpop.f32.mrb[0].mxu0
  %6679 = vmatprep.mubr.f32.mxu0 0.0
  %6680 = vmatmul.mubr.f32.gmra.mrb[0].mxu0 %v6578
  %v6681 = vpop.f32.mrb[0].mxu0
  %v6682 = vadd.f32 0.0, %v6681
  %v6683 = vpop.f32.mrb[0].mxu0
  %6684 = vmatprep.mubr.f32.mxu0 0.0
  %6685 = vmatmul.mubr.f32.gmra.mrb[0].mxu0 %v6579
  %v6686 = vpop.f32.mrb[0].mxu0
  %v6687 = vadd.f32 0.0, %v6686
  %v6688 = vpop.f32.mrb[0].mxu0
  %6689 = vmatprep.mubr.f32.mxu0 0.0
  %6690 = vmatmul.mubr.f32.gmra.mrb[0].mxu0 %v6580
  %v6691 = vpop.f32.mrb[0].mxu0
  %v6692 = vadd.f32 0.0, %v6691
  %v6693 = vpop.f32.mrb[0].mxu0
  %6694 = vmatprep.mubr.f32.mxu0 0.0
  %6695 = vmatmul.mubr.f32.gmra.mrb[0].mxu0 %v6581
  %v6696 = vpop.f32.mrb[0].mxu0
  %v6697 = vadd.f32 0.0, %v6696
  %v6698 = vpop.f32.mrb[0].mxu0
  %6699 = vmatprep.mubr.f32.mxu0 0.0
  %6700 = vmatmul.mubr.f32.gmra.mrb[0].mxu0 %v6582
  %v6701 = vpop.f32.mrb[0].mxu0
  %v6702 = vadd.f32 0.0, %v6701
  %v6703 = vpop.f32.mrb[0].mxu0
  %6704 = vmatprep.mubr.f32.mxu0 0.0
  %6705 = vmatmul.mubr.f32.gmra.mrb[0].mxu0 %v6583
  %v6706 = vpop.f32.mrb[0].mxu0
  %v6707 = vadd.f32 0.0, %v6706
  %v6708 = vpop.f32.mrb[0].mxu0
  %6709 = vmatprep.mubr.f32.mxu0 0.0
  %6710 = vmatmul.mubr.f32.gmra.mrb[0].mxu0 %v6584
  %v6711 = vpop.f32.mrb[0].mxu0
  %v6712 = vadd.f32 0.0, %v6711
  %v6713 = vpop.f32.mrb[0].mxu0
  %6714 = vmatprep.mubr.f32.mxu0 0.0
  %6715 = vmatmul.mubr.f32.gmra.mrb[0].mxu0 %v6585
  %v6716 = vpop.f32.mrb[0].mxu0
  %v6717 = vadd.f32 0.0, %v6716
  %v6718 = vpop.f32.mrb[0].mxu0
  %6719 = vmatprep.mubr.f32.mxu0 0.0
  %6720 = vmatmul.mubr.f32.gmra.mrb[0].mxu0 %v6586
  %v6721 = vpop.f32.mrb[0].mxu0
  %v6722 = vadd.f32 0.0, %v6721
  %v6723 = vpop.f32.mrb[0].mxu0
  %6724 = vmatprep.mubr.f32.mxu0 0.0
  %6725 = vmatmul.mubr.f32.gmra.mrb[0].mxu0 %v6587
  %v6726 = vpop.f32.mrb[0].mxu0
  %v6727 = vadd.f32 0.0, %v6726
  %v6728 = vpop.f32.mrb[0].mxu0
  %6729 = vmatprep.mubr.f32.mxu0 0.0
  %6730 = vmatmul.mubr.f32.gmra.mrb[0].mxu0 %v6588
  %v6731 = vpop.f32.mrb[0].mxu0
  %v6732 = vadd.f32 0.0, %v6731
  %v6733 = vpop.f32.mrb[0].mxu0
  %6734 = vmatprep.mubr.f32.mxu0 0.0
  %6735 = vmatmul.mubr.f32.gmra.mrb[0].mxu0 %v6589
  %v6736 = vpop.f32.mrb[0].mxu0
  %v6737 = vadd.f32 0.0, %v6736
  %v6738 = vpop.f32.mrb[0].mxu0
  %6739 = vmatprep.mubr.f32.mxu0 0.0
  %6740 = vmatmul.mubr.f32.gmra.mrb[0].mxu0 %v6590
  %v6741 = vpop.f32.mrb[0].mxu0
  %v6742 = vadd.f32 0.0, %v6741
  %v6743 = vpop.f32.mrb[0].mxu0
  %6744 = vmatprep.mubr.f32.mxu0 0.0
  %6745 = vmatmul.mubr.f32.gmra.mrb[0].mxu0 %v6591
  %v6746 = vpop.f32.mrb[0].mxu0
  %v6747 = vadd.f32 0.0, %v6746
  %v6748 = vpop.f32.mrb[0].mxu0
  %6749 = vmatprep.mubr.f32.mxu0 0.0
  %6750 = vmatmul.mubr.f32.gmra.mrb[0].mxu0 %v6592
  %v6751 = vpop.f32.mrb[0].mxu0
  %v6752 = vadd.f32 0.0, %v6751
  %v6753 = vpop.f32.mrb[0].mxu0
  %6754 = vdwg.mxu0
  %6755 = vmatprep.subr.mxu0 0.0
  %6756 = vmatpush1.msra.mxu0 %v6677
  %6757 = vmatprep.subr.mxu0 0.0
  %6758 = vmatpush1.msra.mxu0 %v6682
  %6759 = vmatprep.subr.mxu0 0.0
  %6760 = vmatpush1.msra.mxu0 %v6687
  %6761 = vmatprep.subr.mxu0 0.0
  %6762 = vmatpush1.msra.mxu0 %v6692
  %6763 = vmatprep.subr.mxu0 0.0
  %6764 = vmatpush1.msra.mxu0 %v6697
  %6765 = vmatprep.subr.mxu0 0.0
  %6766 = vmatpush1.msra.mxu0 %v6702
  %6767 = vmatprep.subr.mxu0 0.0
  %6768 = vmatpush1.msra.mxu0 %v6707
  %6769 = vmatprep.subr.mxu0 0.0
  %6770 = vmatpush1.msra.mxu0 %v6712
  %6771 = vmatprep.subr.mxu0 0.0
  %6772 = vmatpush1.msra.mxu0 %v6717
  %6773 = vmatprep.subr.mxu0 0.0
  %6774 = vmatpush1.msra.mxu0 %v6722
  %6775 = vmatprep.subr.mxu0 0.0
  %6776 = vmatpush1.msra.mxu0 %v6727
  %6777 = vmatprep.subr.mxu0 0.0
  %6778 = vmatpush1.msra.mxu0 %v6732
  %6779 = vmatprep.subr.mxu0 0.0
  %6780 = vmatpush1.msra.mxu0 %v6737
  %6781 = vmatprep.subr.mxu0 0.0
  %6782 = vmatpush1.msra.mxu0 %v6742
  %6783 = vmatprep.subr.mxu0 0.0
  %6784 = vmatpush1.msra.mxu0 %v6747
  %6785 = vmatprep.subr.mxu0 0.0
  %6786 = vmatpush1.msra.mxu0 %v6752
  %6787 = vmatprep.subr.mxu0 0.0
  %6788 = vmatpush1.msra.mxu0 0.0
  %6789 = vmatprep.subr.mxu0 0.0
  %6790 = vmatpush1.msra.mxu0 0.0
  %6791 = vmatprep.subr.mxu0 0.0
  %6792 = vmatpush1.msra.mxu0 0.0
  %6793 = vmatprep.subr.mxu0 0.0
  %6794 = vmatpush1.msra.mxu0 0.0
  %6795 = vmatprep.subr.mxu0 0.0
  %6796 = vmatpush1.msra.mxu0 0.0
  %6797 = vmatprep.subr.mxu0 0.0
  %6798 = vmatpush1.msra.mxu0 0.0
  %6799 = vmatprep.subr.mxu0 0.0
  %6800 = vmatpush1.msra.mxu0 0.0
  %6801 = vmatprep.subr.mxu0 0.0
  %6802 = vmatpush1.msra.mxu0 0.0
  %6803 = vmatprep.subr.mxu0 0.0
  %6804 = vmatpush1.msra.mxu0 0.0
  %6805 = vmatprep.subr.mxu0 0.0
  %6806 = vmatpush1.msra.mxu0 0.0
  %6807 = vmatprep.subr.mxu0 0.0
  %6808 = vmatpush1.msra.mxu0 0.0
  %6809 = vmatprep.subr.mxu0 0.0
  %6810 = vmatpush1.msra.mxu0 0.0
  %6811 = vmatprep.subr.mxu0 0.0
  %6812 = vmatpush1.msra.mxu0 0.0
  %6813 = vmatprep.subr.mxu0 0.0
  %6814 = vmatpush1.msra.mxu0 0.0
  %6815 = vmatprep.subr.mxu0 0.0
  %6816 = vmatpush1.msra.mxu0 0.0
  %6817 = vmatprep.subr.mxu0 0.0
  %6818 = vmatpush1.msra.mxu0 0.0
  %6819 = vmatprep.mubr.f32.mxu0 0.0
  %6820 = vmatmul.mubr.f32.gmra.mrb[0].mxu0 %v26
  %v6821 = vpop.f32.mrb[0].mxu0
  %v6822 = vadd.f32 %v5231, %v6821
  %v6823 = vpop.f32.mrb[0].mxu0
  %6824 = vmatprep.mubr.f32.mxu0 0.0
  %6825 = vmatmul.mubr.f32.gmra.mrb[0].mxu0 %v27
  %v6826 = vpop.f32.mrb[0].mxu0
  %v6827 = vadd.f32 %v5236, %v6826
  %v6828 = vpop.f32.mrb[0].mxu0
  %6829 = vmatprep.mubr.f32.mxu0 0.0
  %6830 = vmatmul.mubr.f32.gmra.mrb[0].mxu0 %v28
  %v6831 = vpop.f32.mrb[0].mxu0
  %v6832 = vadd.f32 %v5241, %v6831
  %v6833 = vpop.f32.mrb[0].mxu0
  %6834 = vmatprep.mubr.f32.mxu0 0.0
  %6835 = vmatmul.mubr.f32.gmra.mrb[0].mxu0 %v29
  %v6836 = vpop.f32.mrb[0].mxu0
  %v6837 = vadd.f32 %v5246, %v6836
  %v6838 = vpop.f32.mrb[0].mxu0
  %6839 = vmatprep.mubr.f32.mxu0 0.0
  %6840 = vmatmul.mubr.f32.gmra.mrb[0].mxu0 %v30
  %v6841 = vpop.f32.mrb[0].mxu0
  %v6842 = vadd.f32 %v5251, %v6841
  %v6843 = vpop.f32.mrb[0].mxu0
  %6844 = vmatprep.mubr.f32.mxu0 0.0
  %6845 = vmatmul.mubr.f32.gmra.mrb[0].mxu0 %v31
  %v6846 = vpop.f32.mrb[0].mxu0
  %v6847 = vadd.f32 %v5256, %v6846
  %v6848 = vpop.f32.mrb[0].mxu0
  %6849 = vmatprep.mubr.f32.mxu0 0.0
  %6850 = vmatmul.mubr.f32.gmra.mrb[0].mxu0 %v32
  %v6851 = vpop.f32.mrb[0].mxu0
  %v6852 = vadd.f32 %v5261, %v6851
  %v6853 = vpop.f32.mrb[0].mxu0
  %6854 = vmatprep.mubr.f32.mxu0 0.0
  %6855 = vmatmul.mubr.f32.gmra.mrb[0].mxu0 %v33
  %v6856 = vpop.f32.mrb[0].mxu0
  %v6857 = vadd.f32 %v5266, %v6856
  %v6858 = vpop.f32.mrb[0].mxu0
  %6859 = vmatprep.mubr.f32.mxu0 0.0
  %6860 = vmatmul.mubr.f32.gmra.mrb[0].mxu0 %v34
  %v6861 = vpop.f32.mrb[0].mxu0
  %v6862 = vadd.f32 %v5271, %v6861
  %v6863 = vpop.f32.mrb[0].mxu0
  %6864 = vmatprep.mubr.f32.mxu0 0.0
  %6865 = vmatmul.mubr.f32.gmra.mrb[0].mxu0 %v35
  %v6866 = vpop.f32.mrb[0].mxu0
  %v6867 = vadd.f32 %v5276, %v6866
  %v6868 = vpop.f32.mrb[0].mxu0
  %6869 = vmatprep.mubr.f32.mxu0 0.0
  %6870 = vmatmul.mubr.f32.gmra.mrb[0].mxu0 %v36
  %v6871 = vpop.f32.mrb[0].mxu0
  %v6872 = vadd.f32 %v5281, %v6871
  %v6873 = vpop.f32.mrb[0].mxu0
  %6874 = vmatprep.mubr.f32.mxu0 0.0
  %6875 = vmatmul.mubr.f32.gmra.mrb[0].mxu0 %v37
  %v6876 = vpop.f32.mrb[0].mxu0
  %v6877 = vadd.f32 %v5286, %v6876
  %v6878 = vpop.f32.mrb[0].mxu0
  %6879 = vmatprep.mubr.f32.mxu0 0.0
  %6880 = vmatmul.mubr.f32.gmra.mrb[0].mxu0 %v38
  %v6881 = vpop.f32.mrb[0].mxu0
  %v6882 = vadd.f32 %v5291, %v6881
  %v6883 = vpop.f32.mrb[0].mxu0
  %6884 = vmatprep.mubr.f32.mxu0 0.0
  %6885 = vmatmul.mubr.f32.gmra.mrb[0].mxu0 %v39
  %v6886 = vpop.f32.mrb[0].mxu0
  %v6887 = vadd.f32 %v5296, %v6886
  %v6888 = vpop.f32.mrb[0].mxu0
  %6889 = vmatprep.mubr.f32.mxu0 0.0
  %6890 = vmatmul.mubr.f32.gmra.mrb[0].mxu0 %v40
  %v6891 = vpop.f32.mrb[0].mxu0
  %v6892 = vadd.f32 %v5301, %v6891
  %v6893 = vpop.f32.mrb[0].mxu0
  %6894 = vmatprep.mubr.f32.mxu0 0.0
  %6895 = vmatmul.mubr.f32.gmra.mrb[0].mxu0 %v41
  %v6896 = vpop.f32.mrb[0].mxu0
  %v6897 = vadd.f32 %v5306, %v6896
  %v6898 = vpop.f32.mrb[0].mxu0
  %6899 = vdwg.mxu0
  %v6900 = vmax.f32 %v6822, 0.0
  %v6901 = vmax.f32 %v6827, 0.0
  %v6902 = vmax.f32 %v6832, 0.0
  %v6903 = vmax.f32 %v6837, 0.0
  %v6904 = vmax.f32 %v6842, 0.0
  %v6905 = vmax.f32 %v6847, 0.0
  %v6906 = vmax.f32 %v6852, 0.0
  %v6907 = vmax.f32 %v6857, 0.0
  %v6908 = vmax.f32 %v6862, 0.0
  %v6909 = vmax.f32 %v6867, 0.0
  %v6910 = vmax.f32 %v6872, 0.0
  %v6911 = vmax.f32 %v6877, 0.0
  %v6912 = vmax.f32 %v6882, 0.0
  %v6913 = vmax.f32 %v6887, 0.0
  %v6914 = vmax.f32 %v6892, 0.0
  %v6915 = vmax.f32 %v6897, 0.0
  %s6916 = scalar_lea.vmem %s5, 256
  %v6917 = vld [vmem:[%s6916] sm:$0xff]
  %v6918 = vld [vmem:[%s6916 + $0x8] sm:$0xff]
  %v6919 = vld [vmem:[%s6916 + $0x10] sm:$0xff]
  %v6920 = vld [vmem:[%s6916 + $0x18] sm:$0xff]
  %v6921 = vld [vmem:[%s6916 + $0x20] sm:$0xff]
  %v6922 = vld [vmem:[%s6916 + $0x28] sm:$0xff]
  %v6923 = vld [vmem:[%s6916 + $0x30] sm:$0xff]
  %v6924 = vld [vmem:[%s6916 + $0x38] sm:$0xff]
  %v6925 = vld [vmem:[%s6916 + $0x40] sm:$0xff]
  %v6926 = vld [vmem:[%s6916 + $0x48] sm:$0xff]
  %v6927 = vld [vmem:[%s6916 + $0x50] sm:$0xff]
  %v6928 = vld [vmem:[%s6916 + $0x58] sm:$0xff]
  %v6929 = vld [vmem:[%s6916 + $0x60] sm:$0xff]
  %v6930 = vld [vmem:[%s6916 + $0x68] sm:$0xff]
  %v6931 = vld [vmem:[%s6916 + $0x70] sm:$0xff]
  %v6932 = vld [vmem:[%s6916 + $0x78] sm:$0xff]
  %s6933 = scalar_lea.vmem %s6, 2
  %v6934 = vld [vmem:[%s6933] sm:$0x1]
  %v6936 = vlaneseq
  %v6937 = vshrl.u32 %v6936, 7
  %v6938 = vsub.s32 0, %v6937
  %v6939 = vrot.slane %v6934, %v6938
  %6941 = vmatprep.subr.mxu0 0.0
  %6942 = vmatpush1.msra.mxu0 %v6917
  %6943 = vmatprep.subr.mxu0 0.0
  %6944 = vmatpush1.msra.mxu0 %v6918
  %6945 = vmatprep.subr.mxu0 0.0
  %6946 = vmatpush1.msra.mxu0 %v6919
  %6947 = vmatprep.subr.mxu0 0.0
  %6948 = vmatpush1.msra.mxu0 %v6920
  %6949 = vmatprep.subr.mxu0 0.0
  %6950 = vmatpush1.msra.mxu0 %v6921
  %6951 = vmatprep.subr.mxu0 0.0
  %6952 = vmatpush1.msra.mxu0 %v6922
  %6953 = vmatprep.subr.mxu0 0.0
  %6954 = vmatpush1.msra.mxu0 %v6923
  %6955 = vmatprep.subr.mxu0 0.0
  %6956 = vmatpush1.msra.mxu0 %v6924
  %6957 = vmatprep.subr.mxu0 0.0
  %6958 = vmatpush1.msra.mxu0 %v6925
  %6959 = vmatprep.subr.mxu0 0.0
  %6960 = vmatpush1.msra.mxu0 %v6926
  %6961 = vmatprep.subr.mxu0 0.0
  %6962 = vmatpush1.msra.mxu0 %v6927
  %6963 = vmatprep.subr.mxu0 0.0
  %6964 = vmatpush1.msra.mxu0 %v6928
  %6965 = vmatprep.subr.mxu0 0.0
  %6966 = vmatpush1.msra.mxu0 %v6929
  %6967 = vmatprep.subr.mxu0 0.0
  %6968 = vmatpush1.msra.mxu0 %v6930
  %6969 = vmatprep.subr.mxu0 0.0
  %6970 = vmatpush1.msra.mxu0 %v6931
  %6971 = vmatprep.subr.mxu0 0.0
  %6972 = vmatpush1.msra.mxu0 %v6932
  %6973 = vmatprep.subr.mxu0 0.0
  %6974 = vmatpush1.msra.mxu0 0.0
  %6975 = vmatprep.subr.mxu0 0.0
  %6976 = vmatpush1.msra.mxu0 0.0
  %6977 = vmatprep.subr.mxu0 0.0
  %6978 = vmatpush1.msra.mxu0 0.0
  %6979 = vmatprep.subr.mxu0 0.0
  %6980 = vmatpush1.msra.mxu0 0.0
  %6981 = vmatprep.subr.mxu0 0.0
  %6982 = vmatpush1.msra.mxu0 0.0
  %6983 = vmatprep.subr.mxu0 0.0
  %6984 = vmatpush1.msra.mxu0 0.0
  %6985 = vmatprep.subr.mxu0 0.0
  %6986 = vmatpush1.msra.mxu0 0.0
  %6987 = vmatprep.subr.mxu0 0.0
  %6988 = vmatpush1.msra.mxu0 0.0
  %6989 = vmatprep.subr.mxu0 0.0
  %6990 = vmatpush1.msra.mxu0 0.0
  %6991 = vmatprep.subr.mxu0 0.0
  %6992 = vmatpush1.msra.mxu0 0.0
  %6993 = vmatprep.subr.mxu0 0.0
  %6994 = vmatpush1.msra.mxu0 0.0
  %6995 = vmatprep.subr.mxu0 0.0
  %6996 = vmatpush1.msra.mxu0 0.0
  %6997 = vmatprep.subr.mxu0 0.0
  %6998 = vmatpush1.msra.mxu0 0.0
  %6999 = vmatprep.subr.mxu0 0.0
  %7000 = vmatpush1.msra.mxu0 0.0
  %7001 = vmatprep.subr.mxu0 0.0
  %7002 = vmatpush1.msra.mxu0 0.0
  %7003 = vmatprep.subr.mxu0 0.0
  %7004 = vmatpush1.msra.mxu0 0.0
  %7005 = vmatprep.mubr.f32.mxu0 0.0
  %7006 = vmatmul.mubr.f32.gmra.mrb[0].mxu0 %v6900
  %v7007 = vpop.f32.mrb[0].mxu0
  %v7008 = vadd.f32 %v6939, %v7007
  %v7009 = vpop.f32.mrb[0].mxu0
  %7010 = vmatprep.mubr.f32.mxu0 0.0
  %7011 = vmatmul.mubr.f32.gmra.mrb[0].mxu0 %v6901
  %v7012 = vpop.f32.mrb[0].mxu0
  %v7013 = vadd.f32 %v6939, %v7012
  %v7014 = vpop.f32.mrb[0].mxu0
  %7015 = vmatprep.mubr.f32.mxu0 0.0
  %7016 = vmatmul.mubr.f32.gmra.mrb[0].mxu0 %v6902
  %v7017 = vpop.f32.mrb[0].mxu0
  %v7018 = vadd.f32 %v6939, %v7017
  %v7019 = vpop.f32.mrb[0].mxu0
  %7020 = vmatprep.mubr.f32.mxu0 0.0
  %7021 = vmatmul.mubr.f32.gmra.mrb[0].mxu0 %v6903
  %v7022 = vpop.f32.mrb[0].mxu0
  %v7023 = vadd.f32 %v6939, %v7022
  %v7024 = vpop.f32.mrb[0].mxu0
  %7025 = vmatprep.mubr.f32.mxu0 0.0
  %7026 = vmatmul.mubr.f32.gmra.mrb[0].mxu0 %v6904
  %v7027 = vpop.f32.mrb[0].mxu0
  %v7028 = vadd.f32 %v6939, %v7027
  %v7029 = vpop.f32.mrb[0].mxu0
  %7030 = vmatprep.mubr.f32.mxu0 0.0
  %7031 = vmatmul.mubr.f32.gmra.mrb[0].mxu0 %v6905
  %v7032 = vpop.f32.mrb[0].mxu0
  %v7033 = vadd.f32 %v6939, %v7032
  %v7034 = vpop.f32.mrb[0].mxu0
  %7035 = vmatprep.mubr.f32.mxu0 0.0
  %7036 = vmatmul.mubr.f32.gmra.mrb[0].mxu0 %v6906
  %v7037 = vpop.f32.mrb[0].mxu0
  %v7038 = vadd.f32 %v6939, %v7037
  %v7039 = vpop.f32.mrb[0].mxu0
  %7040 = vmatprep.mubr.f32.mxu0 0.0
  %7041 = vmatmul.mubr.f32.gmra.mrb[0].mxu0 %v6907
  %v7042 = vpop.f32.mrb[0].mxu0
  %v7043 = vadd.f32 %v6939, %v7042
  %v7044 = vpop.f32.mrb[0].mxu0
  %7045 = vmatprep.mubr.f32.mxu0 0.0
  %7046 = vmatmul.mubr.f32.gmra.mrb[0].mxu0 %v6908
  %v7047 = vpop.f32.mrb[0].mxu0
  %v7048 = vadd.f32 %v6939, %v7047
  %v7049 = vpop.f32.mrb[0].mxu0
  %7050 = vmatprep.mubr.f32.mxu0 0.0
  %7051 = vmatmul.mubr.f32.gmra.mrb[0].mxu0 %v6909
  %v7052 = vpop.f32.mrb[0].mxu0
  %v7053 = vadd.f32 %v6939, %v7052
  %v7054 = vpop.f32.mrb[0].mxu0
  %7055 = vmatprep.mubr.f32.mxu0 0.0
  %7056 = vmatmul.mubr.f32.gmra.mrb[0].mxu0 %v6910
  %v7057 = vpop.f32.mrb[0].mxu0
  %v7058 = vadd.f32 %v6939, %v7057
  %v7059 = vpop.f32.mrb[0].mxu0
  %7060 = vmatprep.mubr.f32.mxu0 0.0
  %7061 = vmatmul.mubr.f32.gmra.mrb[0].mxu0 %v6911
  %v7062 = vpop.f32.mrb[0].mxu0
  %v7063 = vadd.f32 %v6939, %v7062
  %v7064 = vpop.f32.mrb[0].mxu0
  %7065 = vmatprep.mubr.f32.mxu0 0.0
  %7066 = vmatmul.mubr.f32.gmra.mrb[0].mxu0 %v6912
  %v7067 = vpop.f32.mrb[0].mxu0
  %v7068 = vadd.f32 %v6939, %v7067
  %v7069 = vpop.f32.mrb[0].mxu0
  %7070 = vmatprep.mubr.f32.mxu0 0.0
  %7071 = vmatmul.mubr.f32.gmra.mrb[0].mxu0 %v6913
  %v7072 = vpop.f32.mrb[0].mxu0
  %v7073 = vadd.f32 %v6939, %v7072
  %v7074 = vpop.f32.mrb[0].mxu0
  %7075 = vmatprep.mubr.f32.mxu0 0.0
  %7076 = vmatmul.mubr.f32.gmra.mrb[0].mxu0 %v6914
  %v7077 = vpop.f32.mrb[0].mxu0
  %v7078 = vadd.f32 %v6939, %v7077
  %v7079 = vpop.f32.mrb[0].mxu0
  %7080 = vmatprep.mubr.f32.mxu0 0.0
  %7081 = vmatmul.mubr.f32.gmra.mrb[0].mxu0 %v6915
  %v7082 = vpop.f32.mrb[0].mxu0
  %v7083 = vadd.f32 %v6939, %v7082
  %v7084 = vpop.f32.mrb[0].mxu0
  %7085 = vdwg.mxu0
  %v7086 = vmax.f32 %v7008, 0.0
  %v7087 = vmax.f32 %v7013, 0.0
  %v7088 = vmax.f32 %v7018, 0.0
  %v7089 = vmax.f32 %v7023, 0.0
  %v7090 = vmax.f32 %v7028, 0.0
  %v7091 = vmax.f32 %v7033, 0.0
  %v7092 = vmax.f32 %v7038, 0.0
  %v7093 = vmax.f32 %v7043, 0.0
  %v7094 = vmax.f32 %v7048, 0.0
  %v7095 = vmax.f32 %v7053, 0.0
  %v7096 = vmax.f32 %v7058, 0.0
  %v7097 = vmax.f32 %v7063, 0.0
  %v7098 = vmax.f32 %v7068, 0.0
  %v7099 = vmax.f32 %v7073, 0.0
  %v7100 = vmax.f32 %v7078, 0.0
  %v7101 = vmax.f32 %v7083, 0.0
  %s7102 = scalar_lea.vmem %s4, 600
  %v7103 = vld [vmem:[%s7102] sm:$0xff]
  %v7104 = vld [vmem:[%s7102 + $0x8] sm:$0xff]
  %v7105 = vld [vmem:[%s7102 + $0x10] sm:$0xff]
  %v7106 = vld [vmem:[%s7102 + $0x18] sm:$0xff]
  %v7107 = vld [vmem:[%s7102 + $0x20] sm:$0xff]
  %v7108 = vld [vmem:[%s7102 + $0x28] sm:$0xff]
  %v7109 = vld [vmem:[%s7102 + $0x30] sm:$0xff]
  %v7110 = vld [vmem:[%s7102 + $0x38] sm:$0xff]
  %v7111 = vld [vmem:[%s7102 + $0x40] sm:$0xff]
  %v7112 = vld [vmem:[%s7102 + $0x48] sm:$0xff]
  %v7113 = vld [vmem:[%s7102 + $0x50] sm:$0xff]
  %v7114 = vld [vmem:[%s7102 + $0x58] sm:$0xff]
  %v7115 = vld [vmem:[%s7102 + $0x60] sm:$0xff]
  %v7116 = vld [vmem:[%s7102 + $0x68] sm:$0xff]
  %v7117 = vld [vmem:[%s7102 + $0x70] sm:$0xff]
  %v7118 = vld [vmem:[%s7102 + $0x78] sm:$0xff]
  %v7119 = vld [vmem:[%s7102 + $0x80] sm:$0xff]
  %v7120 = vld [vmem:[%s7102 + $0x88] sm:$0xff]
  %v7121 = vld [vmem:[%s7102 + $0x90] sm:$0xff]
  %v7122 = vld [vmem:[%s7102 + $0x98] sm:$0xff]
  %v7123 = vld [vmem:[%s7102 + $0xa0] sm:$0x1]
  %v7124 = vld [vmem:[%s7102 + $0xa8] sm:$0x1]
  %v7125 = vld [vmem:[%s7102 + $0xb0] sm:$0x1]
  %v7126 = vld [vmem:[%s7102 + $0xb8] sm:$0x1]
  %v7127 = vld [vmem:[%s7102 + $0xc0] sm:$0x1]
  %v7129 = vsel %vm83, %v7086, 0
  %v7132 = vsel %vm83, %v7087, 0
  %v7135 = vsel %vm83, %v7088, 0
  %v7138 = vsel %vm83, %v7089, 0
  %v7141 = vsel %vm83, %v7090, 0
  %v7144 = vsel %vm83, %v7091, 0
  %v7147 = vsel %vm83, %v7092, 0
  %v7150 = vsel %vm83, %v7093, 0
  %v7153 = vsel %vm83, %v7094, 0
  %v7156 = vsel %vm83, %v7095, 0
  %v7159 = vsel %vm83, %v7096, 0
  %v7162 = vsel %vm83, %v7097, 0
  %v7165 = vsel %vm83, %v7098, 0
  %v7168 = vsel %vm83, %v7099, 0
  %v7171 = vsel %vm83, %v7100, 0
  %v7174 = vsel %vm83, %v7101, 0
  %v7177 = vsel %vm132, %v7123, 0
  %v7180 = vsel %vm132, %v7124, 0
  %v7183 = vsel %vm132, %v7125, 0
  %v7186 = vsel %vm132, %v7126, 0
  %v7189 = vsel %vm132, %v7127, 0
  %7191 = vmatprep.subr.mxu0 %v7104
  %7192 = vmatpush1.msra.mxu0 %v7103
  %7193 = vmatprep.subr.mxu0 %v7109
  %7194 = vmatpush1.msra.mxu0 %v7108
  %7195 = vmatprep.subr.mxu0 %v7114
  %7196 = vmatpush1.msra.mxu0 %v7113
  %7197 = vmatprep.subr.mxu0 %v7119
  %7198 = vmatpush1.msra.mxu0 %v7118
  %7199 = vmatprep.subr.mxu0 %v7180
  %7200 = vmatpush1.msra.mxu0 %v7177
  %7201 = vmatprep.subr.mxu0 0.0
  %7202 = vmatpush1.msra.mxu0 0.0
  %7203 = vmatprep.subr.mxu0 0.0
  %7204 = vmatpush1.msra.mxu0 0.0
  %7205 = vmatprep.subr.mxu0 0.0
  %7206 = vmatpush1.msra.mxu0 0.0
  %7207 = vmatprep.subr.mxu0 0.0
  %7208 = vmatpush1.msra.mxu0 0.0
  %7209 = vmatprep.subr.mxu0 0.0
  %7210 = vmatpush1.msra.mxu0 0.0
  %7211 = vmatprep.subr.mxu0 0.0
  %7212 = vmatpush1.msra.mxu0 0.0
  %7213 = vmatprep.subr.mxu0 0.0
  %7214 = vmatpush1.msra.mxu0 0.0
  %7215 = vmatprep.subr.mxu0 0.0
  %7216 = vmatpush1.msra.mxu0 0.0
  %7217 = vmatprep.subr.mxu0 0.0
  %7218 = vmatpush1.msra.mxu0 0.0
  %7219 = vmatprep.subr.mxu0 0.0
  %7220 = vmatpush1.msra.mxu0 0.0
  %7221 = vmatprep.subr.mxu0 0.0
  %7222 = vmatpush1.msra.mxu0 0.0
  %7223 = vmatprep.subr.mxu0 0.0
  %7224 = vmatpush1.msra.mxu0 0.0
  %7225 = vmatprep.subr.mxu0 0.0
  %7226 = vmatpush1.msra.mxu0 0.0
  %7227 = vmatprep.subr.mxu0 0.0
  %7228 = vmatpush1.msra.mxu0 0.0
  %7229 = vmatprep.subr.mxu0 0.0
  %7230 = vmatpush1.msra.mxu0 0.0
  %7231 = vmatprep.subr.mxu0 0.0
  %7232 = vmatpush1.msra.mxu0 0.0
  %7233 = vmatprep.subr.mxu0 0.0
  %7234 = vmatpush1.msra.mxu0 0.0
  %7235 = vmatprep.subr.mxu0 0.0
  %7236 = vmatpush1.msra.mxu0 0.0
  %7237 = vmatprep.subr.mxu0 0.0
  %7238 = vmatpush1.msra.mxu0 0.0
  %7239 = vmatprep.subr.mxu0 0.0
  %7240 = vmatpush1.msra.mxu0 0.0
  %7241 = vmatprep.subr.mxu0 0.0
  %7242 = vmatpush1.msra.mxu0 0.0
  %7243 = vmatprep.subr.mxu0 0.0
  %7244 = vmatpush1.msra.mxu0 0.0
  %7245 = vmatprep.subr.mxu0 0.0
  %7246 = vmatpush1.msra.mxu0 0.0
  %7247 = vmatprep.subr.mxu0 0.0
  %7248 = vmatpush1.msra.mxu0 0.0
  %7249 = vmatprep.subr.mxu0 0.0
  %7250 = vmatpush1.msra.mxu0 0.0
  %7251 = vmatprep.subr.mxu0 0.0
  %7252 = vmatpush1.msra.mxu0 0.0
  %7253 = vmatprep.subr.mxu0 0.0
  %7254 = vmatpush1.msra.mxu0 0.0
  %7255 = vmatprep.mubr.f32.mxu0 0.0
  %7256 = vmatmul.mubr.f32.gmra.mrb[0].mxu0 %v7129
  %v7257 = vpop.f32.mrb[0].mxu0
  %v7258 = vadd.f32 0.0, %v7257
  %v7259 = vpop.f32.mrb[0].mxu0
  %v7260 = vadd.f32 0.0, %v7259
  %7261 = vmatprep.mubr.f32.mxu0 0.0
  %7262 = vmatmul.mubr.f32.gmra.mrb[0].mxu0 %v7132
  %v7263 = vpop.f32.mrb[0].mxu0
  %v7264 = vadd.f32 0.0, %v7263
  %v7265 = vpop.f32.mrb[0].mxu0
  %v7266 = vadd.f32 0.0, %v7265
  %7267 = vmatprep.mubr.f32.mxu0 0.0
  %7268 = vmatmul.mubr.f32.gmra.mrb[0].mxu0 %v7135
  %v7269 = vpop.f32.mrb[0].mxu0
  %v7270 = vadd.f32 0.0, %v7269
  %v7271 = vpop.f32.mrb[0].mxu0
  %v7272 = vadd.f32 0.0, %v7271
  %7273 = vmatprep.mubr.f32.mxu0 0.0
  %7274 = vmatmul.mubr.f32.gmra.mrb[0].mxu0 %v7138
  %v7275 = vpop.f32.mrb[0].mxu0
  %v7276 = vadd.f32 0.0, %v7275
  %v7277 = vpop.f32.mrb[0].mxu0
  %v7278 = vadd.f32 0.0, %v7277
  %7279 = vmatprep.mubr.f32.mxu0 0.0
  %7280 = vmatmul.mubr.f32.gmra.mrb[0].mxu0 %v7141
  %v7281 = vpop.f32.mrb[0].mxu0
  %v7282 = vadd.f32 0.0, %v7281
  %v7283 = vpop.f32.mrb[0].mxu0
  %v7284 = vadd.f32 0.0, %v7283
  %7285 = vmatprep.mubr.f32.mxu0 0.0
  %7286 = vmatmul.mubr.f32.gmra.mrb[0].mxu0 %v7144
  %v7287 = vpop.f32.mrb[0].mxu0
  %v7288 = vadd.f32 0.0, %v7287
  %v7289 = vpop.f32.mrb[0].mxu0
  %v7290 = vadd.f32 0.0, %v7289
  %7291 = vmatprep.mubr.f32.mxu0 0.0
  %7292 = vmatmul.mubr.f32.gmra.mrb[0].mxu0 %v7147
  %v7293 = vpop.f32.mrb[0].mxu0
  %v7294 = vadd.f32 0.0, %v7293
  %v7295 = vpop.f32.mrb[0].mxu0
  %v7296 = vadd.f32 0.0, %v7295
  %7297 = vmatprep.mubr.f32.mxu0 0.0
  %7298 = vmatmul.mubr.f32.gmra.mrb[0].mxu0 %v7150
  %v7299 = vpop.f32.mrb[0].mxu0
  %v7300 = vadd.f32 0.0, %v7299
  %v7301 = vpop.f32.mrb[0].mxu0
  %v7302 = vadd.f32 0.0, %v7301
  %7303 = vmatprep.mubr.f32.mxu0 0.0
  %7304 = vmatmul.mubr.f32.gmra.mrb[0].mxu0 %v7153
  %v7305 = vpop.f32.mrb[0].mxu0
  %v7306 = vadd.f32 0.0, %v7305
  %v7307 = vpop.f32.mrb[0].mxu0
  %v7308 = vadd.f32 0.0, %v7307
  %7309 = vmatprep.mubr.f32.mxu0 0.0
  %7310 = vmatmul.mubr.f32.gmra.mrb[0].mxu0 %v7156
  %v7311 = vpop.f32.mrb[0].mxu0
  %v7312 = vadd.f32 0.0, %v7311
  %v7313 = vpop.f32.mrb[0].mxu0
  %v7314 = vadd.f32 0.0, %v7313
  %7315 = vmatprep.mubr.f32.mxu0 0.0
  %7316 = vmatmul.mubr.f32.gmra.mrb[0].mxu0 %v7159
  %v7317 = vpop.f32.mrb[0].mxu0
  %v7318 = vadd.f32 0.0, %v7317
  %v7319 = vpop.f32.mrb[0].mxu0
  %v7320 = vadd.f32 0.0, %v7319
  %7321 = vmatprep.mubr.f32.mxu0 0.0
  %7322 = vmatmul.mubr.f32.gmra.mrb[0].mxu0 %v7162
  %v7323 = vpop.f32.mrb[0].mxu0
  %v7324 = vadd.f32 0.0, %v7323
  %v7325 = vpop.f32.mrb[0].mxu0
  %v7326 = vadd.f32 0.0, %v7325
  %7327 = vmatprep.mubr.f32.mxu0 0.0
  %7328 = vmatmul.mubr.f32.gmra.mrb[0].mxu0 %v7165
  %v7329 = vpop.f32.mrb[0].mxu0
  %v7330 = vadd.f32 0.0, %v7329
  %v7331 = vpop.f32.mrb[0].mxu0
  %v7332 = vadd.f32 0.0, %v7331
  %7333 = vmatprep.mubr.f32.mxu0 0.0
  %7334 = vmatmul.mubr.f32.gmra.mrb[0].mxu0 %v7168
  %v7335 = vpop.f32.mrb[0].mxu0
  %v7336 = vadd.f32 0.0, %v7335
  %v7337 = vpop.f32.mrb[0].mxu0
  %v7338 = vadd.f32 0.0, %v7337
  %7339 = vmatprep.mubr.f32.mxu0 0.0
  %7340 = vmatmul.mubr.f32.gmra.mrb[0].mxu0 %v7171
  %v7341 = vpop.f32.mrb[0].mxu0
  %v7342 = vadd.f32 0.0, %v7341
  %v7343 = vpop.f32.mrb[0].mxu0
  %v7344 = vadd.f32 0.0, %v7343
  %7345 = vmatprep.mubr.f32.mxu0 0.0
  %7346 = vmatmul.mubr.f32.gmra.mrb[0].mxu0 %v7174
  %v7347 = vpop.f32.mrb[0].mxu0
  %v7348 = vadd.f32 0.0, %v7347
  %v7349 = vpop.f32.mrb[0].mxu0
  %v7350 = vadd.f32 0.0, %v7349
  %7351 = vdwg.mxu0
  %7352 = vmatprep.subr.mxu0 %v7106
  %7353 = vmatpush1.msra.mxu0 %v7105
  %7354 = vmatprep.subr.mxu0 %v7111
  %7355 = vmatpush1.msra.mxu0 %v7110
  %7356 = vmatprep.subr.mxu0 %v7116
  %7357 = vmatpush1.msra.mxu0 %v7115
  %7358 = vmatprep.subr.mxu0 %v7121
  %7359 = vmatpush1.msra.mxu0 %v7120
  %7360 = vmatprep.subr.mxu0 %v7186
  %7361 = vmatpush1.msra.mxu0 %v7183
  %7362 = vmatprep.subr.mxu0 0.0
  %7363 = vmatpush1.msra.mxu0 0.0
  %7364 = vmatprep.subr.mxu0 0.0
  %7365 = vmatpush1.msra.mxu0 0.0
  %7366 = vmatprep.subr.mxu0 0.0
  %7367 = vmatpush1.msra.mxu0 0.0
  %7368 = vmatprep.subr.mxu0 0.0
  %7369 = vmatpush1.msra.mxu0 0.0
  %7370 = vmatprep.subr.mxu0 0.0
  %7371 = vmatpush1.msra.mxu0 0.0
  %7372 = vmatprep.subr.mxu0 0.0
  %7373 = vmatpush1.msra.mxu0 0.0
  %7374 = vmatprep.subr.mxu0 0.0
  %7375 = vmatpush1.msra.mxu0 0.0
  %7376 = vmatprep.subr.mxu0 0.0
  %7377 = vmatpush1.msra.mxu0 0.0
  %7378 = vmatprep.subr.mxu0 0.0
  %7379 = vmatpush1.msra.mxu0 0.0
  %7380 = vmatprep.subr.mxu0 0.0
  %7381 = vmatpush1.msra.mxu0 0.0
  %7382 = vmatprep.subr.mxu0 0.0
  %7383 = vmatpush1.msra.mxu0 0.0
  %7384 = vmatprep.subr.mxu0 0.0
  %7385 = vmatpush1.msra.mxu0 0.0
  %7386 = vmatprep.subr.mxu0 0.0
  %7387 = vmatpush1.msra.mxu0 0.0
  %7388 = vmatprep.subr.mxu0 0.0
  %7389 = vmatpush1.msra.mxu0 0.0
  %7390 = vmatprep.subr.mxu0 0.0
  %7391 = vmatpush1.msra.mxu0 0.0
  %7392 = vmatprep.subr.mxu0 0.0
  %7393 = vmatpush1.msra.mxu0 0.0
  %7394 = vmatprep.subr.mxu0 0.0
  %7395 = vmatpush1.msra.mxu0 0.0
  %7396 = vmatprep.subr.mxu0 0.0
  %7397 = vmatpush1.msra.mxu0 0.0
  %7398 = vmatprep.subr.mxu0 0.0
  %7399 = vmatpush1.msra.mxu0 0.0
  %7400 = vmatprep.subr.mxu0 0.0
  %7401 = vmatpush1.msra.mxu0 0.0
  %7402 = vmatprep.subr.mxu0 0.0
  %7403 = vmatpush1.msra.mxu0 0.0
  %7404 = vmatprep.subr.mxu0 0.0
  %7405 = vmatpush1.msra.mxu0 0.0
  %7406 = vmatprep.subr.mxu0 0.0
  %7407 = vmatpush1.msra.mxu0 0.0
  %7408 = vmatprep.subr.mxu0 0.0
  %7409 = vmatpush1.msra.mxu0 0.0
  %7410 = vmatprep.subr.mxu0 0.0
  %7411 = vmatpush1.msra.mxu0 0.0
  %7412 = vmatprep.subr.mxu0 0.0
  %7413 = vmatpush1.msra.mxu0 0.0
  %7414 = vmatprep.subr.mxu0 0.0
  %7415 = vmatpush1.msra.mxu0 0.0
  %7416 = vmatprep.mubr.f32.mxu0 0.0
  %7417 = vmatmul.mubr.f32.gmra.mrb[0].mxu0 %v7129
  %v7418 = vpop.f32.mrb[0].mxu0
  %v7419 = vadd.f32 0.0, %v7418
  %v7420 = vpop.f32.mrb[0].mxu0
  %v7421 = vadd.f32 0.0, %v7420
  %7422 = vmatprep.mubr.f32.mxu0 0.0
  %7423 = vmatmul.mubr.f32.gmra.mrb[0].mxu0 %v7132
  %v7424 = vpop.f32.mrb[0].mxu0
  %v7425 = vadd.f32 0.0, %v7424
  %v7426 = vpop.f32.mrb[0].mxu0
  %v7427 = vadd.f32 0.0, %v7426
  %7428 = vmatprep.mubr.f32.mxu0 0.0
  %7429 = vmatmul.mubr.f32.gmra.mrb[0].mxu0 %v7135
  %v7430 = vpop.f32.mrb[0].mxu0
  %v7431 = vadd.f32 0.0, %v7430
  %v7432 = vpop.f32.mrb[0].mxu0
  %v7433 = vadd.f32 0.0, %v7432
  %7434 = vmatprep.mubr.f32.mxu0 0.0
  %7435 = vmatmul.mubr.f32.gmra.mrb[0].mxu0 %v7138
  %v7436 = vpop.f32.mrb[0].mxu0
  %v7437 = vadd.f32 0.0, %v7436
  %v7438 = vpop.f32.mrb[0].mxu0
  %v7439 = vadd.f32 0.0, %v7438
  %7440 = vmatprep.mubr.f32.mxu0 0.0
  %7441 = vmatmul.mubr.f32.gmra.mrb[0].mxu0 %v7141
  %v7442 = vpop.f32.mrb[0].mxu0
  %v7443 = vadd.f32 0.0, %v7442
  %v7444 = vpop.f32.mrb[0].mxu0
  %v7445 = vadd.f32 0.0, %v7444
  %7446 = vmatprep.mubr.f32.mxu0 0.0
  %7447 = vmatmul.mubr.f32.gmra.mrb[0].mxu0 %v7144
  %v7448 = vpop.f32.mrb[0].mxu0
  %v7449 = vadd.f32 0.0, %v7448
  %v7450 = vpop.f32.mrb[0].mxu0
  %v7451 = vadd.f32 0.0, %v7450
  %7452 = vmatprep.mubr.f32.mxu0 0.0
  %7453 = vmatmul.mubr.f32.gmra.mrb[0].mxu0 %v7147
  %v7454 = vpop.f32.mrb[0].mxu0
  %v7455 = vadd.f32 0.0, %v7454
  %v7456 = vpop.f32.mrb[0].mxu0
  %v7457 = vadd.f32 0.0, %v7456
  %7458 = vmatprep.mubr.f32.mxu0 0.0
  %7459 = vmatmul.mubr.f32.gmra.mrb[0].mxu0 %v7150
  %v7460 = vpop.f32.mrb[0].mxu0
  %v7461 = vadd.f32 0.0, %v7460
  %v7462 = vpop.f32.mrb[0].mxu0
  %v7463 = vadd.f32 0.0, %v7462
  %7464 = vmatprep.mubr.f32.mxu0 0.0
  %7465 = vmatmul.mubr.f32.gmra.mrb[0].mxu0 %v7153
  %v7466 = vpop.f32.mrb[0].mxu0
  %v7467 = vadd.f32 0.0, %v7466
  %v7468 = vpop.f32.mrb[0].mxu0
  %v7469 = vadd.f32 0.0, %v7468
  %7470 = vmatprep.mubr.f32.mxu0 0.0
  %7471 = vmatmul.mubr.f32.gmra.mrb[0].mxu0 %v7156
  %v7472 = vpop.f32.mrb[0].mxu0
  %v7473 = vadd.f32 0.0, %v7472
  %v7474 = vpop.f32.mrb[0].mxu0
  %v7475 = vadd.f32 0.0, %v7474
  %7476 = vmatprep.mubr.f32.mxu0 0.0
  %7477 = vmatmul.mubr.f32.gmra.mrb[0].mxu0 %v7159
  %v7478 = vpop.f32.mrb[0].mxu0
  %v7479 = vadd.f32 0.0, %v7478
  %v7480 = vpop.f32.mrb[0].mxu0
  %v7481 = vadd.f32 0.0, %v7480
  %7482 = vmatprep.mubr.f32.mxu0 0.0
  %7483 = vmatmul.mubr.f32.gmra.mrb[0].mxu0 %v7162
  %v7484 = vpop.f32.mrb[0].mxu0
  %v7485 = vadd.f32 0.0, %v7484
  %v7486 = vpop.f32.mrb[0].mxu0
  %v7487 = vadd.f32 0.0, %v7486
  %7488 = vmatprep.mubr.f32.mxu0 0.0
  %7489 = vmatmul.mubr.f32.gmra.mrb[0].mxu0 %v7165
  %v7490 = vpop.f32.mrb[0].mxu0
  %v7491 = vadd.f32 0.0, %v7490
  %v7492 = vpop.f32.mrb[0].mxu0
  %v7493 = vadd.f32 0.0, %v7492
  %7494 = vmatprep.mubr.f32.mxu0 0.0
  %7495 = vmatmul.mubr.f32.gmra.mrb[0].mxu0 %v7168
  %v7496 = vpop.f32.mrb[0].mxu0
  %v7497 = vadd.f32 0.0, %v7496
  %v7498 = vpop.f32.mrb[0].mxu0
  %v7499 = vadd.f32 0.0, %v7498
  %7500 = vmatprep.mubr.f32.mxu0 0.0
  %7501 = vmatmul.mubr.f32.gmra.mrb[0].mxu0 %v7171
  %v7502 = vpop.f32.mrb[0].mxu0
  %v7503 = vadd.f32 0.0, %v7502
  %v7504 = vpop.f32.mrb[0].mxu0
  %v7505 = vadd.f32 0.0, %v7504
  %7506 = vmatprep.mubr.f32.mxu0 0.0
  %7507 = vmatmul.mubr.f32.gmra.mrb[0].mxu0 %v7174
  %v7508 = vpop.f32.mrb[0].mxu0
  %v7509 = vadd.f32 0.0, %v7508
  %v7510 = vpop.f32.mrb[0].mxu0
  %v7511 = vadd.f32 0.0, %v7510
  %7512 = vdwg.mxu0
  %7513 = vmatprep.subr.mxu0 0.0
  %7514 = vmatpush1.msra.mxu0 %v7107
  %7515 = vmatprep.subr.mxu0 0.0
  %7516 = vmatpush1.msra.mxu0 %v7112
  %7517 = vmatprep.subr.mxu0 0.0
  %7518 = vmatpush1.msra.mxu0 %v7117
  %7519 = vmatprep.subr.mxu0 0.0
  %7520 = vmatpush1.msra.mxu0 %v7122
  %7521 = vmatprep.subr.mxu0 0.0
  %7522 = vmatpush1.msra.mxu0 %v7189
  %7523 = vmatprep.subr.mxu0 0.0
  %7524 = vmatpush1.msra.mxu0 0.0
  %7525 = vmatprep.subr.mxu0 0.0
  %7526 = vmatpush1.msra.mxu0 0.0
  %7527 = vmatprep.subr.mxu0 0.0
  %7528 = vmatpush1.msra.mxu0 0.0
  %7529 = vmatprep.subr.mxu0 0.0
  %7530 = vmatpush1.msra.mxu0 0.0
  %7531 = vmatprep.subr.mxu0 0.0
  %7532 = vmatpush1.msra.mxu0 0.0
  %7533 = vmatprep.subr.mxu0 0.0
  %7534 = vmatpush1.msra.mxu0 0.0
  %7535 = vmatprep.subr.mxu0 0.0
  %7536 = vmatpush1.msra.mxu0 0.0
  %7537 = vmatprep.subr.mxu0 0.0
  %7538 = vmatpush1.msra.mxu0 0.0
  %7539 = vmatprep.subr.mxu0 0.0
  %7540 = vmatpush1.msra.mxu0 0.0
  %7541 = vmatprep.subr.mxu0 0.0
  %7542 = vmatpush1.msra.mxu0 0.0
  %7543 = vmatprep.subr.mxu0 0.0
  %7544 = vmatpush1.msra.mxu0 0.0
  %7545 = vmatprep.subr.mxu0 0.0
  %7546 = vmatpush1.msra.mxu0 0.0
  %7547 = vmatprep.subr.mxu0 0.0
  %7548 = vmatpush1.msra.mxu0 0.0
  %7549 = vmatprep.subr.mxu0 0.0
  %7550 = vmatpush1.msra.mxu0 0.0
  %7551 = vmatprep.subr.mxu0 0.0
  %7552 = vmatpush1.msra.mxu0 0.0
  %7553 = vmatprep.subr.mxu0 0.0
  %7554 = vmatpush1.msra.mxu0 0.0
  %7555 = vmatprep.subr.mxu0 0.0
  %7556 = vmatpush1.msra.mxu0 0.0
  %7557 = vmatprep.subr.mxu0 0.0
  %7558 = vmatpush1.msra.mxu0 0.0
  %7559 = vmatprep.subr.mxu0 0.0
  %7560 = vmatpush1.msra.mxu0 0.0
  %7561 = vmatprep.subr.mxu0 0.0
  %7562 = vmatpush1.msra.mxu0 0.0
  %7563 = vmatprep.subr.mxu0 0.0
  %7564 = vmatpush1.msra.mxu0 0.0
  %7565 = vmatprep.subr.mxu0 0.0
  %7566 = vmatpush1.msra.mxu0 0.0
  %7567 = vmatprep.subr.mxu0 0.0
  %7568 = vmatpush1.msra.mxu0 0.0
  %7569 = vmatprep.subr.mxu0 0.0
  %7570 = vmatpush1.msra.mxu0 0.0
  %7571 = vmatprep.subr.mxu0 0.0
  %7572 = vmatpush1.msra.mxu0 0.0
  %7573 = vmatprep.subr.mxu0 0.0
  %7574 = vmatpush1.msra.mxu0 0.0
  %7575 = vmatprep.subr.mxu0 0.0
  %7576 = vmatpush1.msra.mxu0 0.0
  %7577 = vmatprep.mubr.f32.mxu0 0.0
  %7578 = vmatmul.mubr.f32.gmra.mrb[0].mxu0 %v7129
  %v7579 = vpop.f32.mrb[0].mxu0
  %v7580 = vadd.f32 0.0, %v7579
  %v7581 = vpop.f32.mrb[0].mxu0
  %7582 = vmatprep.mubr.f32.mxu0 0.0
  %7583 = vmatmul.mubr.f32.gmra.mrb[0].mxu0 %v7132
  %v7584 = vpop.f32.mrb[0].mxu0
  %v7585 = vadd.f32 0.0, %v7584
  %v7586 = vpop.f32.mrb[0].mxu0
  %7587 = vmatprep.mubr.f32.mxu0 0.0
  %7588 = vmatmul.mubr.f32.gmra.mrb[0].mxu0 %v7135
  %v7589 = vpop.f32.mrb[0].mxu0
  %v7590 = vadd.f32 0.0, %v7589
  %v7591 = vpop.f32.mrb[0].mxu0
  %7592 = vmatprep.mubr.f32.mxu0 0.0
  %7593 = vmatmul.mubr.f32.gmra.mrb[0].mxu0 %v7138
  %v7594 = vpop.f32.mrb[0].mxu0
  %v7595 = vadd.f32 0.0, %v7594
  %v7596 = vpop.f32.mrb[0].mxu0
  %7597 = vmatprep.mubr.f32.mxu0 0.0
  %7598 = vmatmul.mubr.f32.gmra.mrb[0].mxu0 %v7141
  %v7599 = vpop.f32.mrb[0].mxu0
  %v7600 = vadd.f32 0.0, %v7599
  %v7601 = vpop.f32.mrb[0].mxu0
  %7602 = vmatprep.mubr.f32.mxu0 0.0
  %7603 = vmatmul.mubr.f32.gmra.mrb[0].mxu0 %v7144
  %v7604 = vpop.f32.mrb[0].mxu0
  %v7605 = vadd.f32 0.0, %v7604
  %v7606 = vpop.f32.mrb[0].mxu0
  %7607 = vmatprep.mubr.f32.mxu0 0.0
  %7608 = vmatmul.mubr.f32.gmra.mrb[0].mxu0 %v7147
  %v7609 = vpop.f32.mrb[0].mxu0
  %v7610 = vadd.f32 0.0, %v7609
  %v7611 = vpop.f32.mrb[0].mxu0
  %7612 = vmatprep.mubr.f32.mxu0 0.0
  %7613 = vmatmul.mubr.f32.gmra.mrb[0].mxu0 %v7150
  %v7614 = vpop.f32.mrb[0].mxu0
  %v7615 = vadd.f32 0.0, %v7614
  %v7616 = vpop.f32.mrb[0].mxu0
  %7617 = vmatprep.mubr.f32.mxu0 0.0
  %7618 = vmatmul.mubr.f32.gmra.mrb[0].mxu0 %v7153
  %v7619 = vpop.f32.mrb[0].mxu0
  %v7620 = vadd.f32 0.0, %v7619
  %v7621 = vpop.f32.mrb[0].mxu0
  %7622 = vmatprep.mubr.f32.mxu0 0.0
  %7623 = vmatmul.mubr.f32.gmra.mrb[0].mxu0 %v7156
  %v7624 = vpop.f32.mrb[0].mxu0
  %v7625 = vadd.f32 0.0, %v7624
  %v7626 = vpop.f32.mrb[0].mxu0
  %7627 = vmatprep.mubr.f32.mxu0 0.0
  %7628 = vmatmul.mubr.f32.gmra.mrb[0].mxu0 %v7159
  %v7629 = vpop.f32.mrb[0].mxu0
  %v7630 = vadd.f32 0.0, %v7629
  %v7631 = vpop.f32.mrb[0].mxu0
  %7632 = vmatprep.mubr.f32.mxu0 0.0
  %7633 = vmatmul.mubr.f32.gmra.mrb[0].mxu0 %v7162
  %v7634 = vpop.f32.mrb[0].mxu0
  %v7635 = vadd.f32 0.0, %v7634
  %v7636 = vpop.f32.mrb[0].mxu0
  %7637 = vmatprep.mubr.f32.mxu0 0.0
  %7638 = vmatmul.mubr.f32.gmra.mrb[0].mxu0 %v7165
  %v7639 = vpop.f32.mrb[0].mxu0
  %v7640 = vadd.f32 0.0, %v7639
  %v7641 = vpop.f32.mrb[0].mxu0
  %7642 = vmatprep.mubr.f32.mxu0 0.0
  %7643 = vmatmul.mubr.f32.gmra.mrb[0].mxu0 %v7168
  %v7644 = vpop.f32.mrb[0].mxu0
  %v7645 = vadd.f32 0.0, %v7644
  %v7646 = vpop.f32.mrb[0].mxu0
  %7647 = vmatprep.mubr.f32.mxu0 0.0
  %7648 = vmatmul.mubr.f32.gmra.mrb[0].mxu0 %v7171
  %v7649 = vpop.f32.mrb[0].mxu0
  %v7650 = vadd.f32 0.0, %v7649
  %v7651 = vpop.f32.mrb[0].mxu0
  %7652 = vmatprep.mubr.f32.mxu0 0.0
  %7653 = vmatmul.mubr.f32.gmra.mrb[0].mxu0 %v7174
  %v7654 = vpop.f32.mrb[0].mxu0
  %v7655 = vadd.f32 0.0, %v7654
  %v7656 = vpop.f32.mrb[0].mxu0
  %7657 = vdwg.mxu0
  %s7658 = scalar_lea.vmem %s2, 120
  %v7659 = vld [vmem:[%s7658] sm:$0xff]
  %v7660 = vld [vmem:[%s7658 + $0x8] sm:$0xff]
  %v7661 = vld [vmem:[%s7658 + $0x10] sm:$0xff]
  %v7662 = vld [vmem:[%s7658 + $0x18] sm:$0xff]
  %v7663 = vld [vmem:[%s7658 + $0x20] sm:$0x1]
  %v7665 = vsel %vm132, %v7663, 0
  %7667 = vmatprep.subr.mxu0 0.0
  %7668 = vmatpush1.msra.mxu0 %v7659
  %7669 = vmatprep.subr.mxu0 0.0
  %7670 = vmatpush1.msra.mxu0 %v7660
  %7671 = vmatprep.subr.mxu0 0.0
  %7672 = vmatpush1.msra.mxu0 %v7661
  %7673 = vmatprep.subr.mxu0 0.0
  %7674 = vmatpush1.msra.mxu0 %v7662
  %7675 = vmatprep.subr.mxu0 0.0
  %7676 = vmatpush1.msra.mxu0 %v7665
  %7677 = vmatprep.subr.mxu0 0.0
  %7678 = vmatpush1.msra.mxu0 0.0
  %7679 = vmatprep.subr.mxu0 0.0
  %7680 = vmatpush1.msra.mxu0 0.0
  %7681 = vmatprep.subr.mxu0 0.0
  %7682 = vmatpush1.msra.mxu0 0.0
  %7683 = vmatprep.subr.mxu0 0.0
  %7684 = vmatpush1.msra.mxu0 0.0
  %7685 = vmatprep.subr.mxu0 0.0
  %7686 = vmatpush1.msra.mxu0 0.0
  %7687 = vmatprep.subr.mxu0 0.0
  %7688 = vmatpush1.msra.mxu0 0.0
  %7689 = vmatprep.subr.mxu0 0.0
  %7690 = vmatpush1.msra.mxu0 0.0
  %7691 = vmatprep.subr.mxu0 0.0
  %7692 = vmatpush1.msra.mxu0 0.0
  %7693 = vmatprep.subr.mxu0 0.0
  %7694 = vmatpush1.msra.mxu0 0.0
  %7695 = vmatprep.subr.mxu0 0.0
  %7696 = vmatpush1.msra.mxu0 0.0
  %7697 = vmatprep.subr.mxu0 0.0
  %7698 = vmatpush1.msra.mxu0 0.0
  %7699 = vmatprep.subr.mxu0 0.0
  %7700 = vmatpush1.msra.mxu0 0.0
  %7701 = vmatprep.subr.mxu0 0.0
  %7702 = vmatpush1.msra.mxu0 0.0
  %7703 = vmatprep.subr.mxu0 0.0
  %7704 = vmatpush1.msra.mxu0 0.0
  %7705 = vmatprep.subr.mxu0 0.0
  %7706 = vmatpush1.msra.mxu0 0.0
  %7707 = vmatprep.subr.mxu0 0.0
  %7708 = vmatpush1.msra.mxu0 0.0
  %7709 = vmatprep.subr.mxu0 0.0
  %7710 = vmatpush1.msra.mxu0 0.0
  %7711 = vmatprep.subr.mxu0 0.0
  %7712 = vmatpush1.msra.mxu0 0.0
  %7713 = vmatprep.subr.mxu0 0.0
  %7714 = vmatpush1.msra.mxu0 0.0
  %7715 = vmatprep.subr.mxu0 0.0
  %7716 = vmatpush1.msra.mxu0 0.0
  %7717 = vmatprep.subr.mxu0 0.0
  %7718 = vmatpush1.msra.mxu0 0.0
  %7719 = vmatprep.subr.mxu0 0.0
  %7720 = vmatpush1.msra.mxu0 0.0
  %7721 = vmatprep.subr.mxu0 0.0
  %7722 = vmatpush1.msra.mxu0 0.0
  %7723 = vmatprep.subr.mxu0 0.0
  %7724 = vmatpush1.msra.mxu0 0.0
  %7725 = vmatprep.subr.mxu0 0.0
  %7726 = vmatpush1.msra.mxu0 0.0
  %7727 = vmatprep.subr.mxu0 0.0
  %7728 = vmatpush1.msra.mxu0 0.0
  %7729 = vmatprep.subr.mxu0 0.0
  %7730 = vmatpush1.msra.mxu0 0.0
  %7731 = vmatprep.mubr.f32.mxu0 0.0
  %7732 = vmatmul.mubr.f32.gmra.mrb[0].mxu0 %v7129
  %v7733 = vpop.f32.mrb[0].mxu0
  %v7734 = vadd.f32 0.0, %v7733
  %v7735 = vpop.f32.mrb[0].mxu0
  %7736 = vmatprep.mubr.f32.mxu0 0.0
  %7737 = vmatmul.mubr.f32.gmra.mrb[0].mxu0 %v7132
  %v7738 = vpop.f32.mrb[0].mxu0
  %v7739 = vadd.f32 0.0, %v7738
  %v7740 = vpop.f32.mrb[0].mxu0
  %7741 = vmatprep.mubr.f32.mxu0 0.0
  %7742 = vmatmul.mubr.f32.gmra.mrb[0].mxu0 %v7135
  %v7743 = vpop.f32.mrb[0].mxu0
  %v7744 = vadd.f32 0.0, %v7743
  %v7745 = vpop.f32.mrb[0].mxu0
  %7746 = vmatprep.mubr.f32.mxu0 0.0
  %7747 = vmatmul.mubr.f32.gmra.mrb[0].mxu0 %v7138
  %v7748 = vpop.f32.mrb[0].mxu0
  %v7749 = vadd.f32 0.0, %v7748
  %v7750 = vpop.f32.mrb[0].mxu0
  %7751 = vmatprep.mubr.f32.mxu0 0.0
  %7752 = vmatmul.mubr.f32.gmra.mrb[0].mxu0 %v7141
  %v7753 = vpop.f32.mrb[0].mxu0
  %v7754 = vadd.f32 0.0, %v7753
  %v7755 = vpop.f32.mrb[0].mxu0
  %7756 = vmatprep.mubr.f32.mxu0 0.0
  %7757 = vmatmul.mubr.f32.gmra.mrb[0].mxu0 %v7144
  %v7758 = vpop.f32.mrb[0].mxu0
  %v7759 = vadd.f32 0.0, %v7758
  %v7760 = vpop.f32.mrb[0].mxu0
  %7761 = vmatprep.mubr.f32.mxu0 0.0
  %7762 = vmatmul.mubr.f32.gmra.mrb[0].mxu0 %v7147
  %v7763 = vpop.f32.mrb[0].mxu0
  %v7764 = vadd.f32 0.0, %v7763
  %v7765 = vpop.f32.mrb[0].mxu0
  %7766 = vmatprep.mubr.f32.mxu0 0.0
  %7767 = vmatmul.mubr.f32.gmra.mrb[0].mxu0 %v7150
  %v7768 = vpop.f32.mrb[0].mxu0
  %v7769 = vadd.f32 0.0, %v7768
  %v7770 = vpop.f32.mrb[0].mxu0
  %7771 = vmatprep.mubr.f32.mxu0 0.0
  %7772 = vmatmul.mubr.f32.gmra.mrb[0].mxu0 %v7153
  %v7773 = vpop.f32.mrb[0].mxu0
  %v7774 = vadd.f32 0.0, %v7773
  %v7775 = vpop.f32.mrb[0].mxu0
  %7776 = vmatprep.mubr.f32.mxu0 0.0
  %7777 = vmatmul.mubr.f32.gmra.mrb[0].mxu0 %v7156
  %v7778 = vpop.f32.mrb[0].mxu0
  %v7779 = vadd.f32 0.0, %v7778
  %v7780 = vpop.f32.mrb[0].mxu0
  %7781 = vmatprep.mubr.f32.mxu0 0.0
  %7782 = vmatmul.mubr.f32.gmra.mrb[0].mxu0 %v7159
  %v7783 = vpop.f32.mrb[0].mxu0
  %v7784 = vadd.f32 0.0, %v7783
  %v7785 = vpop.f32.mrb[0].mxu0
  %7786 = vmatprep.mubr.f32.mxu0 0.0
  %7787 = vmatmul.mubr.f32.gmra.mrb[0].mxu0 %v7162
  %v7788 = vpop.f32.mrb[0].mxu0
  %v7789 = vadd.f32 0.0, %v7788
  %v7790 = vpop.f32.mrb[0].mxu0
  %7791 = vmatprep.mubr.f32.mxu0 0.0
  %7792 = vmatmul.mubr.f32.gmra.mrb[0].mxu0 %v7165
  %v7793 = vpop.f32.mrb[0].mxu0
  %v7794 = vadd.f32 0.0, %v7793
  %v7795 = vpop.f32.mrb[0].mxu0
  %7796 = vmatprep.mubr.f32.mxu0 0.0
  %7797 = vmatmul.mubr.f32.gmra.mrb[0].mxu0 %v7168
  %v7798 = vpop.f32.mrb[0].mxu0
  %v7799 = vadd.f32 0.0, %v7798
  %v7800 = vpop.f32.mrb[0].mxu0
  %7801 = vmatprep.mubr.f32.mxu0 0.0
  %7802 = vmatmul.mubr.f32.gmra.mrb[0].mxu0 %v7171
  %v7803 = vpop.f32.mrb[0].mxu0
  %v7804 = vadd.f32 0.0, %v7803
  %v7805 = vpop.f32.mrb[0].mxu0
  %7806 = vmatprep.mubr.f32.mxu0 0.0
  %7807 = vmatmul.mubr.f32.gmra.mrb[0].mxu0 %v7174
  %v7808 = vpop.f32.mrb[0].mxu0
  %v7809 = vadd.f32 0.0, %v7808
  %v7810 = vpop.f32.mrb[0].mxu0
  %7811 = vdwg.mxu0
  %7812 = vmatprep.subr.mxu0 0.0
  %7813 = vmatpush1.msra.mxu0 %v7734
  %7814 = vmatprep.subr.mxu0 0.0
  %7815 = vmatpush1.msra.mxu0 %v7739
  %7816 = vmatprep.subr.mxu0 0.0
  %7817 = vmatpush1.msra.mxu0 %v7744
  %7818 = vmatprep.subr.mxu0 0.0
  %7819 = vmatpush1.msra.mxu0 %v7749
  %7820 = vmatprep.subr.mxu0 0.0
  %7821 = vmatpush1.msra.mxu0 %v7754
  %7822 = vmatprep.subr.mxu0 0.0
  %7823 = vmatpush1.msra.mxu0 %v7759
  %7824 = vmatprep.subr.mxu0 0.0
  %7825 = vmatpush1.msra.mxu0 %v7764
  %7826 = vmatprep.subr.mxu0 0.0
  %7827 = vmatpush1.msra.mxu0 %v7769
  %7828 = vmatprep.subr.mxu0 0.0
  %7829 = vmatpush1.msra.mxu0 %v7774
  %7830 = vmatprep.subr.mxu0 0.0
  %7831 = vmatpush1.msra.mxu0 %v7779
  %7832 = vmatprep.subr.mxu0 0.0
  %7833 = vmatpush1.msra.mxu0 %v7784
  %7834 = vmatprep.subr.mxu0 0.0
  %7835 = vmatpush1.msra.mxu0 %v7789
  %7836 = vmatprep.subr.mxu0 0.0
  %7837 = vmatpush1.msra.mxu0 %v7794
  %7838 = vmatprep.subr.mxu0 0.0
  %7839 = vmatpush1.msra.mxu0 %v7799
  %7840 = vmatprep.subr.mxu0 0.0
  %7841 = vmatpush1.msra.mxu0 %v7804
  %7842 = vmatprep.subr.mxu0 0.0
  %7843 = vmatpush1.msra.mxu0 %v7809
  %7844 = vmatprep.subr.mxu0 0.0
  %7845 = vmatpush1.msra.mxu0 0.0
  %7846 = vmatprep.subr.mxu0 0.0
  %7847 = vmatpush1.msra.mxu0 0.0
  %7848 = vmatprep.subr.mxu0 0.0
  %7849 = vmatpush1.msra.mxu0 0.0
  %7850 = vmatprep.subr.mxu0 0.0
  %7851 = vmatpush1.msra.mxu0 0.0
  %7852 = vmatprep.subr.mxu0 0.0
  %7853 = vmatpush1.msra.mxu0 0.0
  %7854 = vmatprep.subr.mxu0 0.0
  %7855 = vmatpush1.msra.mxu0 0.0
  %7856 = vmatprep.subr.mxu0 0.0
  %7857 = vmatpush1.msra.mxu0 0.0
  %7858 = vmatprep.subr.mxu0 0.0
  %7859 = vmatpush1.msra.mxu0 0.0
  %7860 = vmatprep.subr.mxu0 0.0
  %7861 = vmatpush1.msra.mxu0 0.0
  %7862 = vmatprep.subr.mxu0 0.0
  %7863 = vmatpush1.msra.mxu0 0.0
  %7864 = vmatprep.subr.mxu0 0.0
  %7865 = vmatpush1.msra.mxu0 0.0
  %7866 = vmatprep.subr.mxu0 0.0
  %7867 = vmatpush1.msra.mxu0 0.0
  %7868 = vmatprep.subr.mxu0 0.0
  %7869 = vmatpush1.msra.mxu0 0.0
  %7870 = vmatprep.subr.mxu0 0.0
  %7871 = vmatpush1.msra.mxu0 0.0
  %7872 = vmatprep.subr.mxu0 0.0
  %7873 = vmatpush1.msra.mxu0 0.0
  %7874 = vmatprep.subr.mxu0 0.0
  %7875 = vmatpush1.msra.mxu0 0.0
  %7876 = vmatprep.mubr.f32.mxu0 0.0
  %7877 = vmatmul.mubr.f32.gmra.mrb[0].mxu0 %v26
  %v7878 = vpop.f32.mrb[0].mxu0
  %v7879 = vadd.f32 %v7258, %v7878
  %v7880 = vpop.f32.mrb[0].mxu0
  %7881 = vmatprep.mubr.f32.mxu0 0.0
  %7882 = vmatmul.mubr.f32.gmra.mrb[0].mxu0 %v27
  %v7883 = vpop.f32.mrb[0].mxu0
  %v7884 = vadd.f32 %v7264, %v7883
  %v7885 = vpop.f32.mrb[0].mxu0
  %7886 = vmatprep.mubr.f32.mxu0 0.0
  %7887 = vmatmul.mubr.f32.gmra.mrb[0].mxu0 %v28
  %v7888 = vpop.f32.mrb[0].mxu0
  %v7889 = vadd.f32 %v7270, %v7888
  %v7890 = vpop.f32.mrb[0].mxu0
  %7891 = vmatprep.mubr.f32.mxu0 0.0
  %7892 = vmatmul.mubr.f32.gmra.mrb[0].mxu0 %v29
  %v7893 = vpop.f32.mrb[0].mxu0
  %v7894 = vadd.f32 %v7276, %v7893
  %v7895 = vpop.f32.mrb[0].mxu0
  %7896 = vmatprep.mubr.f32.mxu0 0.0
  %7897 = vmatmul.mubr.f32.gmra.mrb[0].mxu0 %v30
  %v7898 = vpop.f32.mrb[0].mxu0
  %v7899 = vadd.f32 %v7282, %v7898
  %v7900 = vpop.f32.mrb[0].mxu0
  %7901 = vmatprep.mubr.f32.mxu0 0.0
  %7902 = vmatmul.mubr.f32.gmra.mrb[0].mxu0 %v31
  %v7903 = vpop.f32.mrb[0].mxu0
  %v7904 = vadd.f32 %v7288, %v7903
  %v7905 = vpop.f32.mrb[0].mxu0
  %7906 = vmatprep.mubr.f32.mxu0 0.0
  %7907 = vmatmul.mubr.f32.gmra.mrb[0].mxu0 %v32
  %v7908 = vpop.f32.mrb[0].mxu0
  %v7909 = vadd.f32 %v7294, %v7908
  %v7910 = vpop.f32.mrb[0].mxu0
  %7911 = vmatprep.mubr.f32.mxu0 0.0
  %7912 = vmatmul.mubr.f32.gmra.mrb[0].mxu0 %v33
  %v7913 = vpop.f32.mrb[0].mxu0
  %v7914 = vadd.f32 %v7300, %v7913
  %v7915 = vpop.f32.mrb[0].mxu0
  %7916 = vmatprep.mubr.f32.mxu0 0.0
  %7917 = vmatmul.mubr.f32.gmra.mrb[0].mxu0 %v34
  %v7918 = vpop.f32.mrb[0].mxu0
  %v7919 = vadd.f32 %v7306, %v7918
  %v7920 = vpop.f32.mrb[0].mxu0
  %7921 = vmatprep.mubr.f32.mxu0 0.0
  %7922 = vmatmul.mubr.f32.gmra.mrb[0].mxu0 %v35
  %v7923 = vpop.f32.mrb[0].mxu0
  %v7924 = vadd.f32 %v7312, %v7923
  %v7925 = vpop.f32.mrb[0].mxu0
  %7926 = vmatprep.mubr.f32.mxu0 0.0
  %7927 = vmatmul.mubr.f32.gmra.mrb[0].mxu0 %v36
  %v7928 = vpop.f32.mrb[0].mxu0
  %v7929 = vadd.f32 %v7318, %v7928
  %v7930 = vpop.f32.mrb[0].mxu0
  %7931 = vmatprep.mubr.f32.mxu0 0.0
  %7932 = vmatmul.mubr.f32.gmra.mrb[0].mxu0 %v37
  %v7933 = vpop.f32.mrb[0].mxu0
  %v7934 = vadd.f32 %v7324, %v7933
  %v7935 = vpop.f32.mrb[0].mxu0
  %7936 = vmatprep.mubr.f32.mxu0 0.0
  %7937 = vmatmul.mubr.f32.gmra.mrb[0].mxu0 %v38
  %v7938 = vpop.f32.mrb[0].mxu0
  %v7939 = vadd.f32 %v7330, %v7938
  %v7940 = vpop.f32.mrb[0].mxu0
  %7941 = vmatprep.mubr.f32.mxu0 0.0
  %7942 = vmatmul.mubr.f32.gmra.mrb[0].mxu0 %v39
  %v7943 = vpop.f32.mrb[0].mxu0
  %v7944 = vadd.f32 %v7336, %v7943
  %v7945 = vpop.f32.mrb[0].mxu0
  %7946 = vmatprep.mubr.f32.mxu0 0.0
  %7947 = vmatmul.mubr.f32.gmra.mrb[0].mxu0 %v40
  %v7948 = vpop.f32.mrb[0].mxu0
  %v7949 = vadd.f32 %v7342, %v7948
  %v7950 = vpop.f32.mrb[0].mxu0
  %7951 = vmatprep.mubr.f32.mxu0 0.0
  %7952 = vmatmul.mubr.f32.gmra.mrb[0].mxu0 %v41
  %v7953 = vpop.f32.mrb[0].mxu0
  %v7954 = vadd.f32 %v7348, %v7953
  %v7955 = vpop.f32.mrb[0].mxu0
  %7956 = vdwg.mxu0
  %v7957 = vmax.f32 %v7879, 0.0
  %v7958 = vmax.f32 %v7884, 0.0
  %v7959 = vmax.f32 %v7889, 0.0
  %v7960 = vmax.f32 %v7894, 0.0
  %v7961 = vmax.f32 %v7899, 0.0
  %v7962 = vmax.f32 %v7904, 0.0
  %v7963 = vmax.f32 %v7909, 0.0
  %v7964 = vmax.f32 %v7914, 0.0
  %v7965 = vmax.f32 %v7919, 0.0
  %v7966 = vmax.f32 %v7924, 0.0
  %v7967 = vmax.f32 %v7929, 0.0
  %v7968 = vmax.f32 %v7934, 0.0
  %v7969 = vmax.f32 %v7939, 0.0
  %v7970 = vmax.f32 %v7944, 0.0
  %v7971 = vmax.f32 %v7949, 0.0
  %v7972 = vmax.f32 %v7954, 0.0
  %s7973 = scalar_lea.vmem %s3, 1536
  %v7974 = vld [vmem:[%s7973] sm:$0xff]
  %v7975 = vld [vmem:[%s7973 + $0x8] sm:$0xff]
  %v7976 = vld [vmem:[%s7973 + $0x10] sm:$0xff]
  %v7977 = vld [vmem:[%s7973 + $0x18] sm:$0xff]
  %v7978 = vld [vmem:[%s7973 + $0x20] sm:$0xff]
  %v7979 = vld [vmem:[%s7973 + $0x28] sm:$0xff]
  %v7980 = vld [vmem:[%s7973 + $0x30] sm:$0xff]
  %v7981 = vld [vmem:[%s7973 + $0x38] sm:$0xff]
  %v7982 = vld [vmem:[%s7973 + $0x40] sm:$0xff]
  %v7983 = vld [vmem:[%s7973 + $0x48] sm:$0xff]
  %v7984 = vld [vmem:[%s7973 + $0x50] sm:$0xff]
  %v7985 = vld [vmem:[%s7973 + $0x58] sm:$0xff]
  %v7986 = vld [vmem:[%s7973 + $0x60] sm:$0xff]
  %v7987 = vld [vmem:[%s7973 + $0x68] sm:$0xff]
  %v7988 = vld [vmem:[%s7973 + $0x70] sm:$0xff]
  %v7989 = vld [vmem:[%s7973 + $0x78] sm:$0xff]
  %7990 = vmatprep.subr.mxu0 0.0
  %7991 = vmatpush1.msra.mxu0 %v7974
  %7992 = vmatprep.subr.mxu0 0.0
  %7993 = vmatpush1.msra.mxu0 %v7975
  %7994 = vmatprep.subr.mxu0 0.0
  %7995 = vmatpush1.msra.mxu0 %v7976
  %7996 = vmatprep.subr.mxu0 0.0
  %7997 = vmatpush1.msra.mxu0 %v7977
  %7998 = vmatprep.subr.mxu0 0.0
  %7999 = vmatpush1.msra.mxu0 %v7978
  %8000 = vmatprep.subr.mxu0 0.0
  %8001 = vmatpush1.msra.mxu0 %v7979
  %8002 = vmatprep.subr.mxu0 0.0
  %8003 = vmatpush1.msra.mxu0 %v7980
  %8004 = vmatprep.subr.mxu0 0.0
  %8005 = vmatpush1.msra.mxu0 %v7981
  %8006 = vmatprep.subr.mxu0 0.0
  %8007 = vmatpush1.msra.mxu0 %v7982
  %8008 = vmatprep.subr.mxu0 0.0
  %8009 = vmatpush1.msra.mxu0 %v7983
  %8010 = vmatprep.subr.mxu0 0.0
  %8011 = vmatpush1.msra.mxu0 %v7984
  %8012 = vmatprep.subr.mxu0 0.0
  %8013 = vmatpush1.msra.mxu0 %v7985
  %8014 = vmatprep.subr.mxu0 0.0
  %8015 = vmatpush1.msra.mxu0 %v7986
  %8016 = vmatprep.subr.mxu0 0.0
  %8017 = vmatpush1.msra.mxu0 %v7987
  %8018 = vmatprep.subr.mxu0 0.0
  %8019 = vmatpush1.msra.mxu0 %v7988
  %8020 = vmatprep.subr.mxu0 0.0
  %8021 = vmatpush1.msra.mxu0 %v7989
  %8022 = vmatprep.subr.mxu0 0.0
  %8023 = vmatpush1.msra.mxu0 0.0
  %8024 = vmatprep.subr.mxu0 0.0
  %8025 = vmatpush1.msra.mxu0 0.0
  %8026 = vmatprep.subr.mxu0 0.0
  %8027 = vmatpush1.msra.mxu0 0.0
  %8028 = vmatprep.subr.mxu0 0.0
  %8029 = vmatpush1.msra.mxu0 0.0
  %8030 = vmatprep.subr.mxu0 0.0
  %8031 = vmatpush1.msra.mxu0 0.0
  %8032 = vmatprep.subr.mxu0 0.0
  %8033 = vmatpush1.msra.mxu0 0.0
  %8034 = vmatprep.subr.mxu0 0.0
  %8035 = vmatpush1.msra.mxu0 0.0
  %8036 = vmatprep.subr.mxu0 0.0
  %8037 = vmatpush1.msra.mxu0 0.0
  %8038 = vmatprep.subr.mxu0 0.0
  %8039 = vmatpush1.msra.mxu0 0.0
  %8040 = vmatprep.subr.mxu0 0.0
  %8041 = vmatpush1.msra.mxu0 0.0
  %8042 = vmatprep.subr.mxu0 0.0
  %8043 = vmatpush1.msra.mxu0 0.0
  %8044 = vmatprep.subr.mxu0 0.0
  %8045 = vmatpush1.msra.mxu0 0.0
  %8046 = vmatprep.subr.mxu0 0.0
  %8047 = vmatpush1.msra.mxu0 0.0
  %8048 = vmatprep.subr.mxu0 0.0
  %8049 = vmatpush1.msra.mxu0 0.0
  %8050 = vmatprep.subr.mxu0 0.0
  %8051 = vmatpush1.msra.mxu0 0.0
  %8052 = vmatprep.subr.mxu0 0.0
  %8053 = vmatpush1.msra.mxu0 0.0
  %8054 = vmatprep.mubr.f32.mxu0 0.0
  %8055 = vmatmul.mubr.f32.gmra.mrb[0].mxu0 %v7957
  %v8056 = vpop.f32.mrb[0].mxu0
  %v8057 = vadd.f32 0.0, %v8056
  %v8058 = vpop.f32.mrb[0].mxu0
  %8059 = vmatprep.mubr.f32.mxu0 0.0
  %8060 = vmatmul.mubr.f32.gmra.mrb[0].mxu0 %v7958
  %v8061 = vpop.f32.mrb[0].mxu0
  %v8062 = vadd.f32 0.0, %v8061
  %v8063 = vpop.f32.mrb[0].mxu0
  %8064 = vmatprep.mubr.f32.mxu0 0.0
  %8065 = vmatmul.mubr.f32.gmra.mrb[0].mxu0 %v7959
  %v8066 = vpop.f32.mrb[0].mxu0
  %v8067 = vadd.f32 0.0, %v8066
  %v8068 = vpop.f32.mrb[0].mxu0
  %8069 = vmatprep.mubr.f32.mxu0 0.0
  %8070 = vmatmul.mubr.f32.gmra.mrb[0].mxu0 %v7960
  %v8071 = vpop.f32.mrb[0].mxu0
  %v8072 = vadd.f32 0.0, %v8071
  %v8073 = vpop.f32.mrb[0].mxu0
  %8074 = vmatprep.mubr.f32.mxu0 0.0
  %8075 = vmatmul.mubr.f32.gmra.mrb[0].mxu0 %v7961
  %v8076 = vpop.f32.mrb[0].mxu0
  %v8077 = vadd.f32 0.0, %v8076
  %v8078 = vpop.f32.mrb[0].mxu0
  %8079 = vmatprep.mubr.f32.mxu0 0.0
  %8080 = vmatmul.mubr.f32.gmra.mrb[0].mxu0 %v7962
  %v8081 = vpop.f32.mrb[0].mxu0
  %v8082 = vadd.f32 0.0, %v8081
  %v8083 = vpop.f32.mrb[0].mxu0
  %8084 = vmatprep.mubr.f32.mxu0 0.0
  %8085 = vmatmul.mubr.f32.gmra.mrb[0].mxu0 %v7963
  %v8086 = vpop.f32.mrb[0].mxu0
  %v8087 = vadd.f32 0.0, %v8086
  %v8088 = vpop.f32.mrb[0].mxu0
  %8089 = vmatprep.mubr.f32.mxu0 0.0
  %8090 = vmatmul.mubr.f32.gmra.mrb[0].mxu0 %v7964
  %v8091 = vpop.f32.mrb[0].mxu0
  %v8092 = vadd.f32 0.0, %v8091
  %v8093 = vpop.f32.mrb[0].mxu0
  %8094 = vmatprep.mubr.f32.mxu0 0.0
  %8095 = vmatmul.mubr.f32.gmra.mrb[0].mxu0 %v7965
  %v8096 = vpop.f32.mrb[0].mxu0
  %v8097 = vadd.f32 0.0, %v8096
  %v8098 = vpop.f32.mrb[0].mxu0
  %8099 = vmatprep.mubr.f32.mxu0 0.0
  %8100 = vmatmul.mubr.f32.gmra.mrb[0].mxu0 %v7966
  %v8101 = vpop.f32.mrb[0].mxu0
  %v8102 = vadd.f32 0.0, %v8101
  %v8103 = vpop.f32.mrb[0].mxu0
  %8104 = vmatprep.mubr.f32.mxu0 0.0
  %8105 = vmatmul.mubr.f32.gmra.mrb[0].mxu0 %v7967
  %v8106 = vpop.f32.mrb[0].mxu0
  %v8107 = vadd.f32 0.0, %v8106
  %v8108 = vpop.f32.mrb[0].mxu0
  %8109 = vmatprep.mubr.f32.mxu0 0.0
  %8110 = vmatmul.mubr.f32.gmra.mrb[0].mxu0 %v7968
  %v8111 = vpop.f32.mrb[0].mxu0
  %v8112 = vadd.f32 0.0, %v8111
  %v8113 = vpop.f32.mrb[0].mxu0
  %8114 = vmatprep.mubr.f32.mxu0 0.0
  %8115 = vmatmul.mubr.f32.gmra.mrb[0].mxu0 %v7969
  %v8116 = vpop.f32.mrb[0].mxu0
  %v8117 = vadd.f32 0.0, %v8116
  %v8118 = vpop.f32.mrb[0].mxu0
  %8119 = vmatprep.mubr.f32.mxu0 0.0
  %8120 = vmatmul.mubr.f32.gmra.mrb[0].mxu0 %v7970
  %v8121 = vpop.f32.mrb[0].mxu0
  %v8122 = vadd.f32 0.0, %v8121
  %v8123 = vpop.f32.mrb[0].mxu0
  %8124 = vmatprep.mubr.f32.mxu0 0.0
  %8125 = vmatmul.mubr.f32.gmra.mrb[0].mxu0 %v7971
  %v8126 = vpop.f32.mrb[0].mxu0
  %v8127 = vadd.f32 0.0, %v8126
  %v8128 = vpop.f32.mrb[0].mxu0
  %8129 = vmatprep.mubr.f32.mxu0 0.0
  %8130 = vmatmul.mubr.f32.gmra.mrb[0].mxu0 %v7972
  %v8131 = vpop.f32.mrb[0].mxu0
  %v8132 = vadd.f32 0.0, %v8131
  %v8133 = vpop.f32.mrb[0].mxu0
  %8134 = vdwg.mxu0
  %8135 = vmatprep.subr.mxu0 0.0
  %8136 = vmatpush1.msra.mxu0 %v8057
  %8137 = vmatprep.subr.mxu0 0.0
  %8138 = vmatpush1.msra.mxu0 %v8062
  %8139 = vmatprep.subr.mxu0 0.0
  %8140 = vmatpush1.msra.mxu0 %v8067
  %8141 = vmatprep.subr.mxu0 0.0
  %8142 = vmatpush1.msra.mxu0 %v8072
  %8143 = vmatprep.subr.mxu0 0.0
  %8144 = vmatpush1.msra.mxu0 %v8077
  %8145 = vmatprep.subr.mxu0 0.0
  %8146 = vmatpush1.msra.mxu0 %v8082
  %8147 = vmatprep.subr.mxu0 0.0
  %8148 = vmatpush1.msra.mxu0 %v8087
  %8149 = vmatprep.subr.mxu0 0.0
  %8150 = vmatpush1.msra.mxu0 %v8092
  %8151 = vmatprep.subr.mxu0 0.0
  %8152 = vmatpush1.msra.mxu0 %v8097
  %8153 = vmatprep.subr.mxu0 0.0
  %8154 = vmatpush1.msra.mxu0 %v8102
  %8155 = vmatprep.subr.mxu0 0.0
  %8156 = vmatpush1.msra.mxu0 %v8107
  %8157 = vmatprep.subr.mxu0 0.0
  %8158 = vmatpush1.msra.mxu0 %v8112
  %8159 = vmatprep.subr.mxu0 0.0
  %8160 = vmatpush1.msra.mxu0 %v8117
  %8161 = vmatprep.subr.mxu0 0.0
  %8162 = vmatpush1.msra.mxu0 %v8122
  %8163 = vmatprep.subr.mxu0 0.0
  %8164 = vmatpush1.msra.mxu0 %v8127
  %8165 = vmatprep.subr.mxu0 0.0
  %8166 = vmatpush1.msra.mxu0 %v8132
  %8167 = vmatprep.subr.mxu0 0.0
  %8168 = vmatpush1.msra.mxu0 0.0
  %8169 = vmatprep.subr.mxu0 0.0
  %8170 = vmatpush1.msra.mxu0 0.0
  %8171 = vmatprep.subr.mxu0 0.0
  %8172 = vmatpush1.msra.mxu0 0.0
  %8173 = vmatprep.subr.mxu0 0.0
  %8174 = vmatpush1.msra.mxu0 0.0
  %8175 = vmatprep.subr.mxu0 0.0
  %8176 = vmatpush1.msra.mxu0 0.0
  %8177 = vmatprep.subr.mxu0 0.0
  %8178 = vmatpush1.msra.mxu0 0.0
  %8179 = vmatprep.subr.mxu0 0.0
  %8180 = vmatpush1.msra.mxu0 0.0
  %8181 = vmatprep.subr.mxu0 0.0
  %8182 = vmatpush1.msra.mxu0 0.0
  %8183 = vmatprep.subr.mxu0 0.0
  %8184 = vmatpush1.msra.mxu0 0.0
  %8185 = vmatprep.subr.mxu0 0.0
  %8186 = vmatpush1.msra.mxu0 0.0
  %8187 = vmatprep.subr.mxu0 0.0
  %8188 = vmatpush1.msra.mxu0 0.0
  %8189 = vmatprep.subr.mxu0 0.0
  %8190 = vmatpush1.msra.mxu0 0.0
  %8191 = vmatprep.subr.mxu0 0.0
  %8192 = vmatpush1.msra.mxu0 0.0
  %8193 = vmatprep.subr.mxu0 0.0
  %8194 = vmatpush1.msra.mxu0 0.0
  %8195 = vmatprep.subr.mxu0 0.0
  %8196 = vmatpush1.msra.mxu0 0.0
  %8197 = vmatprep.subr.mxu0 0.0
  %8198 = vmatpush1.msra.mxu0 0.0
  %8199 = vmatprep.mubr.f32.mxu0 0.0
  %8200 = vmatmul.mubr.f32.gmra.mrb[0].mxu0 %v26
  %v8201 = vpop.f32.mrb[0].mxu0
  %v8202 = vadd.f32 %v7260, %v8201
  %v8203 = vpop.f32.mrb[0].mxu0
  %8204 = vmatprep.mubr.f32.mxu0 0.0
  %8205 = vmatmul.mubr.f32.gmra.mrb[0].mxu0 %v27
  %v8206 = vpop.f32.mrb[0].mxu0
  %v8207 = vadd.f32 %v7266, %v8206
  %v8208 = vpop.f32.mrb[0].mxu0
  %8209 = vmatprep.mubr.f32.mxu0 0.0
  %8210 = vmatmul.mubr.f32.gmra.mrb[0].mxu0 %v28
  %v8211 = vpop.f32.mrb[0].mxu0
  %v8212 = vadd.f32 %v7272, %v8211
  %v8213 = vpop.f32.mrb[0].mxu0
  %8214 = vmatprep.mubr.f32.mxu0 0.0
  %8215 = vmatmul.mubr.f32.gmra.mrb[0].mxu0 %v29
  %v8216 = vpop.f32.mrb[0].mxu0
  %v8217 = vadd.f32 %v7278, %v8216
  %v8218 = vpop.f32.mrb[0].mxu0
  %8219 = vmatprep.mubr.f32.mxu0 0.0
  %8220 = vmatmul.mubr.f32.gmra.mrb[0].mxu0 %v30
  %v8221 = vpop.f32.mrb[0].mxu0
  %v8222 = vadd.f32 %v7284, %v8221
  %v8223 = vpop.f32.mrb[0].mxu0
  %8224 = vmatprep.mubr.f32.mxu0 0.0
  %8225 = vmatmul.mubr.f32.gmra.mrb[0].mxu0 %v31
  %v8226 = vpop.f32.mrb[0].mxu0
  %v8227 = vadd.f32 %v7290, %v8226
  %v8228 = vpop.f32.mrb[0].mxu0
  %8229 = vmatprep.mubr.f32.mxu0 0.0
  %8230 = vmatmul.mubr.f32.gmra.mrb[0].mxu0 %v32
  %v8231 = vpop.f32.mrb[0].mxu0
  %v8232 = vadd.f32 %v7296, %v8231
  %v8233 = vpop.f32.mrb[0].mxu0
  %8234 = vmatprep.mubr.f32.mxu0 0.0
  %8235 = vmatmul.mubr.f32.gmra.mrb[0].mxu0 %v33
  %v8236 = vpop.f32.mrb[0].mxu0
  %v8237 = vadd.f32 %v7302, %v8236
  %v8238 = vpop.f32.mrb[0].mxu0
  %8239 = vmatprep.mubr.f32.mxu0 0.0
  %8240 = vmatmul.mubr.f32.gmra.mrb[0].mxu0 %v34
  %v8241 = vpop.f32.mrb[0].mxu0
  %v8242 = vadd.f32 %v7308, %v8241
  %v8243 = vpop.f32.mrb[0].mxu0
  %8244 = vmatprep.mubr.f32.mxu0 0.0
  %8245 = vmatmul.mubr.f32.gmra.mrb[0].mxu0 %v35
  %v8246 = vpop.f32.mrb[0].mxu0
  %v8247 = vadd.f32 %v7314, %v8246
  %v8248 = vpop.f32.mrb[0].mxu0
  %8249 = vmatprep.mubr.f32.mxu0 0.0
  %8250 = vmatmul.mubr.f32.gmra.mrb[0].mxu0 %v36
  %v8251 = vpop.f32.mrb[0].mxu0
  %v8252 = vadd.f32 %v7320, %v8251
  %v8253 = vpop.f32.mrb[0].mxu0
  %8254 = vmatprep.mubr.f32.mxu0 0.0
  %8255 = vmatmul.mubr.f32.gmra.mrb[0].mxu0 %v37
  %v8256 = vpop.f32.mrb[0].mxu0
  %v8257 = vadd.f32 %v7326, %v8256
  %v8258 = vpop.f32.mrb[0].mxu0
  %8259 = vmatprep.mubr.f32.mxu0 0.0
  %8260 = vmatmul.mubr.f32.gmra.mrb[0].mxu0 %v38
  %v8261 = vpop.f32.mrb[0].mxu0
  %v8262 = vadd.f32 %v7332, %v8261
  %v8263 = vpop.f32.mrb[0].mxu0
  %8264 = vmatprep.mubr.f32.mxu0 0.0
  %8265 = vmatmul.mubr.f32.gmra.mrb[0].mxu0 %v39
  %v8266 = vpop.f32.mrb[0].mxu0
  %v8267 = vadd.f32 %v7338, %v8266
  %v8268 = vpop.f32.mrb[0].mxu0
  %8269 = vmatprep.mubr.f32.mxu0 0.0
  %8270 = vmatmul.mubr.f32.gmra.mrb[0].mxu0 %v40
  %v8271 = vpop.f32.mrb[0].mxu0
  %v8272 = vadd.f32 %v7344, %v8271
  %v8273 = vpop.f32.mrb[0].mxu0
  %8274 = vmatprep.mubr.f32.mxu0 0.0
  %8275 = vmatmul.mubr.f32.gmra.mrb[0].mxu0 %v41
  %v8276 = vpop.f32.mrb[0].mxu0
  %v8277 = vadd.f32 %v7350, %v8276
  %v8278 = vpop.f32.mrb[0].mxu0
  %8279 = vdwg.mxu0
  %v8280 = vmax.f32 %v8202, 0.0
  %v8281 = vmax.f32 %v8207, 0.0
  %v8282 = vmax.f32 %v8212, 0.0
  %v8283 = vmax.f32 %v8217, 0.0
  %v8284 = vmax.f32 %v8222, 0.0
  %v8285 = vmax.f32 %v8227, 0.0
  %v8286 = vmax.f32 %v8232, 0.0
  %v8287 = vmax.f32 %v8237, 0.0
  %v8288 = vmax.f32 %v8242, 0.0
  %v8289 = vmax.f32 %v8247, 0.0
  %v8290 = vmax.f32 %v8252, 0.0
  %v8291 = vmax.f32 %v8257, 0.0
  %v8292 = vmax.f32 %v8262, 0.0
  %v8293 = vmax.f32 %v8267, 0.0
  %v8294 = vmax.f32 %v8272, 0.0
  %v8295 = vmax.f32 %v8277, 0.0
  %s8296 = scalar_lea.vmem %s3, 1664
  %v8297 = vld [vmem:[%s8296] sm:$0xff]
  %v8298 = vld [vmem:[%s8296 + $0x8] sm:$0xff]
  %v8299 = vld [vmem:[%s8296 + $0x10] sm:$0xff]
  %v8300 = vld [vmem:[%s8296 + $0x18] sm:$0xff]
  %v8301 = vld [vmem:[%s8296 + $0x20] sm:$0xff]
  %v8302 = vld [vmem:[%s8296 + $0x28] sm:$0xff]
  %v8303 = vld [vmem:[%s8296 + $0x30] sm:$0xff]
  %v8304 = vld [vmem:[%s8296 + $0x38] sm:$0xff]
  %v8305 = vld [vmem:[%s8296 + $0x40] sm:$0xff]
  %v8306 = vld [vmem:[%s8296 + $0x48] sm:$0xff]
  %v8307 = vld [vmem:[%s8296 + $0x50] sm:$0xff]
  %v8308 = vld [vmem:[%s8296 + $0x58] sm:$0xff]
  %v8309 = vld [vmem:[%s8296 + $0x60] sm:$0xff]
  %v8310 = vld [vmem:[%s8296 + $0x68] sm:$0xff]
  %v8311 = vld [vmem:[%s8296 + $0x70] sm:$0xff]
  %v8312 = vld [vmem:[%s8296 + $0x78] sm:$0xff]
  %8313 = vmatprep.subr.mxu0 0.0
  %8314 = vmatpush1.msra.mxu0 %v8297
  %8315 = vmatprep.subr.mxu0 0.0
  %8316 = vmatpush1.msra.mxu0 %v8298
  %8317 = vmatprep.subr.mxu0 0.0
  %8318 = vmatpush1.msra.mxu0 %v8299
  %8319 = vmatprep.subr.mxu0 0.0
  %8320 = vmatpush1.msra.mxu0 %v8300
  %8321 = vmatprep.subr.mxu0 0.0
  %8322 = vmatpush1.msra.mxu0 %v8301
  %8323 = vmatprep.subr.mxu0 0.0
  %8324 = vmatpush1.msra.mxu0 %v8302
  %8325 = vmatprep.subr.mxu0 0.0
  %8326 = vmatpush1.msra.mxu0 %v8303
  %8327 = vmatprep.subr.mxu0 0.0
  %8328 = vmatpush1.msra.mxu0 %v8304
  %8329 = vmatprep.subr.mxu0 0.0
  %8330 = vmatpush1.msra.mxu0 %v8305
  %8331 = vmatprep.subr.mxu0 0.0
  %8332 = vmatpush1.msra.mxu0 %v8306
  %8333 = vmatprep.subr.mxu0 0.0
  %8334 = vmatpush1.msra.mxu0 %v8307
  %8335 = vmatprep.subr.mxu0 0.0
  %8336 = vmatpush1.msra.mxu0 %v8308
  %8337 = vmatprep.subr.mxu0 0.0
  %8338 = vmatpush1.msra.mxu0 %v8309
  %8339 = vmatprep.subr.mxu0 0.0
  %8340 = vmatpush1.msra.mxu0 %v8310
  %8341 = vmatprep.subr.mxu0 0.0
  %8342 = vmatpush1.msra.mxu0 %v8311
  %8343 = vmatprep.subr.mxu0 0.0
  %8344 = vmatpush1.msra.mxu0 %v8312
  %8345 = vmatprep.subr.mxu0 0.0
  %8346 = vmatpush1.msra.mxu0 0.0
  %8347 = vmatprep.subr.mxu0 0.0
  %8348 = vmatpush1.msra.mxu0 0.0
  %8349 = vmatprep.subr.mxu0 0.0
  %8350 = vmatpush1.msra.mxu0 0.0
  %8351 = vmatprep.subr.mxu0 0.0
  %8352 = vmatpush1.msra.mxu0 0.0
  %8353 = vmatprep.subr.mxu0 0.0
  %8354 = vmatpush1.msra.mxu0 0.0
  %8355 = vmatprep.subr.mxu0 0.0
  %8356 = vmatpush1.msra.mxu0 0.0
  %8357 = vmatprep.subr.mxu0 0.0
  %8358 = vmatpush1.msra.mxu0 0.0
  %8359 = vmatprep.subr.mxu0 0.0
  %8360 = vmatpush1.msra.mxu0 0.0
  %8361 = vmatprep.subr.mxu0 0.0
  %8362 = vmatpush1.msra.mxu0 0.0
  %8363 = vmatprep.subr.mxu0 0.0
  %8364 = vmatpush1.msra.mxu0 0.0
  %8365 = vmatprep.subr.mxu0 0.0
  %8366 = vmatpush1.msra.mxu0 0.0
  %8367 = vmatprep.subr.mxu0 0.0
  %8368 = vmatpush1.msra.mxu0 0.0
  %8369 = vmatprep.subr.mxu0 0.0
  %8370 = vmatpush1.msra.mxu0 0.0
  %8371 = vmatprep.subr.mxu0 0.0
  %8372 = vmatpush1.msra.mxu0 0.0
  %8373 = vmatprep.subr.mxu0 0.0
  %8374 = vmatpush1.msra.mxu0 0.0
  %8375 = vmatprep.subr.mxu0 0.0
  %8376 = vmatpush1.msra.mxu0 0.0
  %8377 = vmatprep.mubr.f32.mxu0 0.0
  %8378 = vmatmul.mubr.f32.gmra.mrb[0].mxu0 %v8280
  %v8379 = vpop.f32.mrb[0].mxu0
  %v8380 = vadd.f32 0.0, %v8379
  %v8381 = vpop.f32.mrb[0].mxu0
  %8382 = vmatprep.mubr.f32.mxu0 0.0
  %8383 = vmatmul.mubr.f32.gmra.mrb[0].mxu0 %v8281
  %v8384 = vpop.f32.mrb[0].mxu0
  %v8385 = vadd.f32 0.0, %v8384
  %v8386 = vpop.f32.mrb[0].mxu0
  %8387 = vmatprep.mubr.f32.mxu0 0.0
  %8388 = vmatmul.mubr.f32.gmra.mrb[0].mxu0 %v8282
  %v8389 = vpop.f32.mrb[0].mxu0
  %v8390 = vadd.f32 0.0, %v8389
  %v8391 = vpop.f32.mrb[0].mxu0
  %8392 = vmatprep.mubr.f32.mxu0 0.0
  %8393 = vmatmul.mubr.f32.gmra.mrb[0].mxu0 %v8283
  %v8394 = vpop.f32.mrb[0].mxu0
  %v8395 = vadd.f32 0.0, %v8394
  %v8396 = vpop.f32.mrb[0].mxu0
  %8397 = vmatprep.mubr.f32.mxu0 0.0
  %8398 = vmatmul.mubr.f32.gmra.mrb[0].mxu0 %v8284
  %v8399 = vpop.f32.mrb[0].mxu0
  %v8400 = vadd.f32 0.0, %v8399
  %v8401 = vpop.f32.mrb[0].mxu0
  %8402 = vmatprep.mubr.f32.mxu0 0.0
  %8403 = vmatmul.mubr.f32.gmra.mrb[0].mxu0 %v8285
  %v8404 = vpop.f32.mrb[0].mxu0
  %v8405 = vadd.f32 0.0, %v8404
  %v8406 = vpop.f32.mrb[0].mxu0
  %8407 = vmatprep.mubr.f32.mxu0 0.0
  %8408 = vmatmul.mubr.f32.gmra.mrb[0].mxu0 %v8286
  %v8409 = vpop.f32.mrb[0].mxu0
  %v8410 = vadd.f32 0.0, %v8409
  %v8411 = vpop.f32.mrb[0].mxu0
  %8412 = vmatprep.mubr.f32.mxu0 0.0
  %8413 = vmatmul.mubr.f32.gmra.mrb[0].mxu0 %v8287
  %v8414 = vpop.f32.mrb[0].mxu0
  %v8415 = vadd.f32 0.0, %v8414
  %v8416 = vpop.f32.mrb[0].mxu0
  %8417 = vmatprep.mubr.f32.mxu0 0.0
  %8418 = vmatmul.mubr.f32.gmra.mrb[0].mxu0 %v8288
  %v8419 = vpop.f32.mrb[0].mxu0
  %v8420 = vadd.f32 0.0, %v8419
  %v8421 = vpop.f32.mrb[0].mxu0
  %8422 = vmatprep.mubr.f32.mxu0 0.0
  %8423 = vmatmul.mubr.f32.gmra.mrb[0].mxu0 %v8289
  %v8424 = vpop.f32.mrb[0].mxu0
  %v8425 = vadd.f32 0.0, %v8424
  %v8426 = vpop.f32.mrb[0].mxu0
  %8427 = vmatprep.mubr.f32.mxu0 0.0
  %8428 = vmatmul.mubr.f32.gmra.mrb[0].mxu0 %v8290
  %v8429 = vpop.f32.mrb[0].mxu0
  %v8430 = vadd.f32 0.0, %v8429
  %v8431 = vpop.f32.mrb[0].mxu0
  %8432 = vmatprep.mubr.f32.mxu0 0.0
  %8433 = vmatmul.mubr.f32.gmra.mrb[0].mxu0 %v8291
  %v8434 = vpop.f32.mrb[0].mxu0
  %v8435 = vadd.f32 0.0, %v8434
  %v8436 = vpop.f32.mrb[0].mxu0
  %8437 = vmatprep.mubr.f32.mxu0 0.0
  %8438 = vmatmul.mubr.f32.gmra.mrb[0].mxu0 %v8292
  %v8439 = vpop.f32.mrb[0].mxu0
  %v8440 = vadd.f32 0.0, %v8439
  %v8441 = vpop.f32.mrb[0].mxu0
  %8442 = vmatprep.mubr.f32.mxu0 0.0
  %8443 = vmatmul.mubr.f32.gmra.mrb[0].mxu0 %v8293
  %v8444 = vpop.f32.mrb[0].mxu0
  %v8445 = vadd.f32 0.0, %v8444
  %v8446 = vpop.f32.mrb[0].mxu0
  %8447 = vmatprep.mubr.f32.mxu0 0.0
  %8448 = vmatmul.mubr.f32.gmra.mrb[0].mxu0 %v8294
  %v8449 = vpop.f32.mrb[0].mxu0
  %v8450 = vadd.f32 0.0, %v8449
  %v8451 = vpop.f32.mrb[0].mxu0
  %8452 = vmatprep.mubr.f32.mxu0 0.0
  %8453 = vmatmul.mubr.f32.gmra.mrb[0].mxu0 %v8295
  %v8454 = vpop.f32.mrb[0].mxu0
  %v8455 = vadd.f32 0.0, %v8454
  %v8456 = vpop.f32.mrb[0].mxu0
  %8457 = vdwg.mxu0
  %8458 = vmatprep.subr.mxu0 0.0
  %8459 = vmatpush1.msra.mxu0 %v8380
  %8460 = vmatprep.subr.mxu0 0.0
  %8461 = vmatpush1.msra.mxu0 %v8385
  %8462 = vmatprep.subr.mxu0 0.0
  %8463 = vmatpush1.msra.mxu0 %v8390
  %8464 = vmatprep.subr.mxu0 0.0
  %8465 = vmatpush1.msra.mxu0 %v8395
  %8466 = vmatprep.subr.mxu0 0.0
  %8467 = vmatpush1.msra.mxu0 %v8400
  %8468 = vmatprep.subr.mxu0 0.0
  %8469 = vmatpush1.msra.mxu0 %v8405
  %8470 = vmatprep.subr.mxu0 0.0
  %8471 = vmatpush1.msra.mxu0 %v8410
  %8472 = vmatprep.subr.mxu0 0.0
  %8473 = vmatpush1.msra.mxu0 %v8415
  %8474 = vmatprep.subr.mxu0 0.0
  %8475 = vmatpush1.msra.mxu0 %v8420
  %8476 = vmatprep.subr.mxu0 0.0
  %8477 = vmatpush1.msra.mxu0 %v8425
  %8478 = vmatprep.subr.mxu0 0.0
  %8479 = vmatpush1.msra.mxu0 %v8430
  %8480 = vmatprep.subr.mxu0 0.0
  %8481 = vmatpush1.msra.mxu0 %v8435
  %8482 = vmatprep.subr.mxu0 0.0
  %8483 = vmatpush1.msra.mxu0 %v8440
  %8484 = vmatprep.subr.mxu0 0.0
  %8485 = vmatpush1.msra.mxu0 %v8445
  %8486 = vmatprep.subr.mxu0 0.0
  %8487 = vmatpush1.msra.mxu0 %v8450
  %8488 = vmatprep.subr.mxu0 0.0
  %8489 = vmatpush1.msra.mxu0 %v8455
  %8490 = vmatprep.subr.mxu0 0.0
  %8491 = vmatpush1.msra.mxu0 0.0
  %8492 = vmatprep.subr.mxu0 0.0
  %8493 = vmatpush1.msra.mxu0 0.0
  %8494 = vmatprep.subr.mxu0 0.0
  %8495 = vmatpush1.msra.mxu0 0.0
  %8496 = vmatprep.subr.mxu0 0.0
  %8497 = vmatpush1.msra.mxu0 0.0
  %8498 = vmatprep.subr.mxu0 0.0
  %8499 = vmatpush1.msra.mxu0 0.0
  %8500 = vmatprep.subr.mxu0 0.0
  %8501 = vmatpush1.msra.mxu0 0.0
  %8502 = vmatprep.subr.mxu0 0.0
  %8503 = vmatpush1.msra.mxu0 0.0
  %8504 = vmatprep.subr.mxu0 0.0
  %8505 = vmatpush1.msra.mxu0 0.0
  %8506 = vmatprep.subr.mxu0 0.0
  %8507 = vmatpush1.msra.mxu0 0.0
  %8508 = vmatprep.subr.mxu0 0.0
  %8509 = vmatpush1.msra.mxu0 0.0
  %8510 = vmatprep.subr.mxu0 0.0
  %8511 = vmatpush1.msra.mxu0 0.0
  %8512 = vmatprep.subr.mxu0 0.0
  %8513 = vmatpush1.msra.mxu0 0.0
  %8514 = vmatprep.subr.mxu0 0.0
  %8515 = vmatpush1.msra.mxu0 0.0
  %8516 = vmatprep.subr.mxu0 0.0
  %8517 = vmatpush1.msra.mxu0 0.0
  %8518 = vmatprep.subr.mxu0 0.0
  %8519 = vmatpush1.msra.mxu0 0.0
  %8520 = vmatprep.subr.mxu0 0.0
  %8521 = vmatpush1.msra.mxu0 0.0
  %8522 = vmatprep.mubr.f32.mxu0 0.0
  %8523 = vmatmul.mubr.f32.gmra.mrb[0].mxu0 %v26
  %v8524 = vpop.f32.mrb[0].mxu0
  %v8525 = vadd.f32 %v7419, %v8524
  %v8526 = vpop.f32.mrb[0].mxu0
  %8527 = vmatprep.mubr.f32.mxu0 0.0
  %8528 = vmatmul.mubr.f32.gmra.mrb[0].mxu0 %v27
  %v8529 = vpop.f32.mrb[0].mxu0
  %v8530 = vadd.f32 %v7425, %v8529
  %v8531 = vpop.f32.mrb[0].mxu0
  %8532 = vmatprep.mubr.f32.mxu0 0.0
  %8533 = vmatmul.mubr.f32.gmra.mrb[0].mxu0 %v28
  %v8534 = vpop.f32.mrb[0].mxu0
  %v8535 = vadd.f32 %v7431, %v8534
  %v8536 = vpop.f32.mrb[0].mxu0
  %8537 = vmatprep.mubr.f32.mxu0 0.0
  %8538 = vmatmul.mubr.f32.gmra.mrb[0].mxu0 %v29
  %v8539 = vpop.f32.mrb[0].mxu0
  %v8540 = vadd.f32 %v7437, %v8539
  %v8541 = vpop.f32.mrb[0].mxu0
  %8542 = vmatprep.mubr.f32.mxu0 0.0
  %8543 = vmatmul.mubr.f32.gmra.mrb[0].mxu0 %v30
  %v8544 = vpop.f32.mrb[0].mxu0
  %v8545 = vadd.f32 %v7443, %v8544
  %v8546 = vpop.f32.mrb[0].mxu0
  %8547 = vmatprep.mubr.f32.mxu0 0.0
  %8548 = vmatmul.mubr.f32.gmra.mrb[0].mxu0 %v31
  %v8549 = vpop.f32.mrb[0].mxu0
  %v8550 = vadd.f32 %v7449, %v8549
  %v8551 = vpop.f32.mrb[0].mxu0
  %8552 = vmatprep.mubr.f32.mxu0 0.0
  %8553 = vmatmul.mubr.f32.gmra.mrb[0].mxu0 %v32
  %v8554 = vpop.f32.mrb[0].mxu0
  %v8555 = vadd.f32 %v7455, %v8554
  %v8556 = vpop.f32.mrb[0].mxu0
  %8557 = vmatprep.mubr.f32.mxu0 0.0
  %8558 = vmatmul.mubr.f32.gmra.mrb[0].mxu0 %v33
  %v8559 = vpop.f32.mrb[0].mxu0
  %v8560 = vadd.f32 %v7461, %v8559
  %v8561 = vpop.f32.mrb[0].mxu0
  %8562 = vmatprep.mubr.f32.mxu0 0.0
  %8563 = vmatmul.mubr.f32.gmra.mrb[0].mxu0 %v34
  %v8564 = vpop.f32.mrb[0].mxu0
  %v8565 = vadd.f32 %v7467, %v8564
  %v8566 = vpop.f32.mrb[0].mxu0
  %8567 = vmatprep.mubr.f32.mxu0 0.0
  %8568 = vmatmul.mubr.f32.gmra.mrb[0].mxu0 %v35
  %v8569 = vpop.f32.mrb[0].mxu0
  %v8570 = vadd.f32 %v7473, %v8569
  %v8571 = vpop.f32.mrb[0].mxu0
  %8572 = vmatprep.mubr.f32.mxu0 0.0
  %8573 = vmatmul.mubr.f32.gmra.mrb[0].mxu0 %v36
  %v8574 = vpop.f32.mrb[0].mxu0
  %v8575 = vadd.f32 %v7479, %v8574
  %v8576 = vpop.f32.mrb[0].mxu0
  %8577 = vmatprep.mubr.f32.mxu0 0.0
  %8578 = vmatmul.mubr.f32.gmra.mrb[0].mxu0 %v37
  %v8579 = vpop.f32.mrb[0].mxu0
  %v8580 = vadd.f32 %v7485, %v8579
  %v8581 = vpop.f32.mrb[0].mxu0
  %8582 = vmatprep.mubr.f32.mxu0 0.0
  %8583 = vmatmul.mubr.f32.gmra.mrb[0].mxu0 %v38
  %v8584 = vpop.f32.mrb[0].mxu0
  %v8585 = vadd.f32 %v7491, %v8584
  %v8586 = vpop.f32.mrb[0].mxu0
  %8587 = vmatprep.mubr.f32.mxu0 0.0
  %8588 = vmatmul.mubr.f32.gmra.mrb[0].mxu0 %v39
  %v8589 = vpop.f32.mrb[0].mxu0
  %v8590 = vadd.f32 %v7497, %v8589
  %v8591 = vpop.f32.mrb[0].mxu0
  %8592 = vmatprep.mubr.f32.mxu0 0.0
  %8593 = vmatmul.mubr.f32.gmra.mrb[0].mxu0 %v40
  %v8594 = vpop.f32.mrb[0].mxu0
  %v8595 = vadd.f32 %v7503, %v8594
  %v8596 = vpop.f32.mrb[0].mxu0
  %8597 = vmatprep.mubr.f32.mxu0 0.0
  %8598 = vmatmul.mubr.f32.gmra.mrb[0].mxu0 %v41
  %v8599 = vpop.f32.mrb[0].mxu0
  %v8600 = vadd.f32 %v7509, %v8599
  %v8601 = vpop.f32.mrb[0].mxu0
  %8602 = vdwg.mxu0
  %v8603 = vmax.f32 %v8525, 0.0
  %v8604 = vmax.f32 %v8530, 0.0
  %v8605 = vmax.f32 %v8535, 0.0
  %v8606 = vmax.f32 %v8540, 0.0
  %v8607 = vmax.f32 %v8545, 0.0
  %v8608 = vmax.f32 %v8550, 0.0
  %v8609 = vmax.f32 %v8555, 0.0
  %v8610 = vmax.f32 %v8560, 0.0
  %v8611 = vmax.f32 %v8565, 0.0
  %v8612 = vmax.f32 %v8570, 0.0
  %v8613 = vmax.f32 %v8575, 0.0
  %v8614 = vmax.f32 %v8580, 0.0
  %v8615 = vmax.f32 %v8585, 0.0
  %v8616 = vmax.f32 %v8590, 0.0
  %v8617 = vmax.f32 %v8595, 0.0
  %v8618 = vmax.f32 %v8600, 0.0
  %s8619 = scalar_lea.vmem %s3, 1792
  %v8620 = vld [vmem:[%s8619] sm:$0xff]
  %v8621 = vld [vmem:[%s8619 + $0x8] sm:$0xff]
  %v8622 = vld [vmem:[%s8619 + $0x10] sm:$0xff]
  %v8623 = vld [vmem:[%s8619 + $0x18] sm:$0xff]
  %v8624 = vld [vmem:[%s8619 + $0x20] sm:$0xff]
  %v8625 = vld [vmem:[%s8619 + $0x28] sm:$0xff]
  %v8626 = vld [vmem:[%s8619 + $0x30] sm:$0xff]
  %v8627 = vld [vmem:[%s8619 + $0x38] sm:$0xff]
  %v8628 = vld [vmem:[%s8619 + $0x40] sm:$0xff]
  %v8629 = vld [vmem:[%s8619 + $0x48] sm:$0xff]
  %v8630 = vld [vmem:[%s8619 + $0x50] sm:$0xff]
  %v8631 = vld [vmem:[%s8619 + $0x58] sm:$0xff]
  %v8632 = vld [vmem:[%s8619 + $0x60] sm:$0xff]
  %v8633 = vld [vmem:[%s8619 + $0x68] sm:$0xff]
  %v8634 = vld [vmem:[%s8619 + $0x70] sm:$0xff]
  %v8635 = vld [vmem:[%s8619 + $0x78] sm:$0xff]
  %8636 = vmatprep.subr.mxu0 0.0
  %8637 = vmatpush1.msra.mxu0 %v8620
  %8638 = vmatprep.subr.mxu0 0.0
  %8639 = vmatpush1.msra.mxu0 %v8621
  %8640 = vmatprep.subr.mxu0 0.0
  %8641 = vmatpush1.msra.mxu0 %v8622
  %8642 = vmatprep.subr.mxu0 0.0
  %8643 = vmatpush1.msra.mxu0 %v8623
  %8644 = vmatprep.subr.mxu0 0.0
  %8645 = vmatpush1.msra.mxu0 %v8624
  %8646 = vmatprep.subr.mxu0 0.0
  %8647 = vmatpush1.msra.mxu0 %v8625
  %8648 = vmatprep.subr.mxu0 0.0
  %8649 = vmatpush1.msra.mxu0 %v8626
  %8650 = vmatprep.subr.mxu0 0.0
  %8651 = vmatpush1.msra.mxu0 %v8627
  %8652 = vmatprep.subr.mxu0 0.0
  %8653 = vmatpush1.msra.mxu0 %v8628
  %8654 = vmatprep.subr.mxu0 0.0
  %8655 = vmatpush1.msra.mxu0 %v8629
  %8656 = vmatprep.subr.mxu0 0.0
  %8657 = vmatpush1.msra.mxu0 %v8630
  %8658 = vmatprep.subr.mxu0 0.0
  %8659 = vmatpush1.msra.mxu0 %v8631
  %8660 = vmatprep.subr.mxu0 0.0
  %8661 = vmatpush1.msra.mxu0 %v8632
  %8662 = vmatprep.subr.mxu0 0.0
  %8663 = vmatpush1.msra.mxu0 %v8633
  %8664 = vmatprep.subr.mxu0 0.0
  %8665 = vmatpush1.msra.mxu0 %v8634
  %8666 = vmatprep.subr.mxu0 0.0
  %8667 = vmatpush1.msra.mxu0 %v8635
  %8668 = vmatprep.subr.mxu0 0.0
  %8669 = vmatpush1.msra.mxu0 0.0
  %8670 = vmatprep.subr.mxu0 0.0
  %8671 = vmatpush1.msra.mxu0 0.0
  %8672 = vmatprep.subr.mxu0 0.0
  %8673 = vmatpush1.msra.mxu0 0.0
  %8674 = vmatprep.subr.mxu0 0.0
  %8675 = vmatpush1.msra.mxu0 0.0
  %8676 = vmatprep.subr.mxu0 0.0
  %8677 = vmatpush1.msra.mxu0 0.0
  %8678 = vmatprep.subr.mxu0 0.0
  %8679 = vmatpush1.msra.mxu0 0.0
  %8680 = vmatprep.subr.mxu0 0.0
  %8681 = vmatpush1.msra.mxu0 0.0
  %8682 = vmatprep.subr.mxu0 0.0
  %8683 = vmatpush1.msra.mxu0 0.0
  %8684 = vmatprep.subr.mxu0 0.0
  %8685 = vmatpush1.msra.mxu0 0.0
  %8686 = vmatprep.subr.mxu0 0.0
  %8687 = vmatpush1.msra.mxu0 0.0
  %8688 = vmatprep.subr.mxu0 0.0
  %8689 = vmatpush1.msra.mxu0 0.0
  %8690 = vmatprep.subr.mxu0 0.0
  %8691 = vmatpush1.msra.mxu0 0.0
  %8692 = vmatprep.subr.mxu0 0.0
  %8693 = vmatpush1.msra.mxu0 0.0
  %8694 = vmatprep.subr.mxu0 0.0
  %8695 = vmatpush1.msra.mxu0 0.0
  %8696 = vmatprep.subr.mxu0 0.0
  %8697 = vmatpush1.msra.mxu0 0.0
  %8698 = vmatprep.subr.mxu0 0.0
  %8699 = vmatpush1.msra.mxu0 0.0
  %8700 = vmatprep.mubr.f32.mxu0 0.0
  %8701 = vmatmul.mubr.f32.gmra.mrb[0].mxu0 %v8603
  %v8702 = vpop.f32.mrb[0].mxu0
  %v8703 = vadd.f32 0.0, %v8702
  %v8704 = vpop.f32.mrb[0].mxu0
  %8705 = vmatprep.mubr.f32.mxu0 0.0
  %8706 = vmatmul.mubr.f32.gmra.mrb[0].mxu0 %v8604
  %v8707 = vpop.f32.mrb[0].mxu0
  %v8708 = vadd.f32 0.0, %v8707
  %v8709 = vpop.f32.mrb[0].mxu0
  %8710 = vmatprep.mubr.f32.mxu0 0.0
  %8711 = vmatmul.mubr.f32.gmra.mrb[0].mxu0 %v8605
  %v8712 = vpop.f32.mrb[0].mxu0
  %v8713 = vadd.f32 0.0, %v8712
  %v8714 = vpop.f32.mrb[0].mxu0
  %8715 = vmatprep.mubr.f32.mxu0 0.0
  %8716 = vmatmul.mubr.f32.gmra.mrb[0].mxu0 %v8606
  %v8717 = vpop.f32.mrb[0].mxu0
  %v8718 = vadd.f32 0.0, %v8717
  %v8719 = vpop.f32.mrb[0].mxu0
  %8720 = vmatprep.mubr.f32.mxu0 0.0
  %8721 = vmatmul.mubr.f32.gmra.mrb[0].mxu0 %v8607
  %v8722 = vpop.f32.mrb[0].mxu0
  %v8723 = vadd.f32 0.0, %v8722
  %v8724 = vpop.f32.mrb[0].mxu0
  %8725 = vmatprep.mubr.f32.mxu0 0.0
  %8726 = vmatmul.mubr.f32.gmra.mrb[0].mxu0 %v8608
  %v8727 = vpop.f32.mrb[0].mxu0
  %v8728 = vadd.f32 0.0, %v8727
  %v8729 = vpop.f32.mrb[0].mxu0
  %8730 = vmatprep.mubr.f32.mxu0 0.0
  %8731 = vmatmul.mubr.f32.gmra.mrb[0].mxu0 %v8609
  %v8732 = vpop.f32.mrb[0].mxu0
  %v8733 = vadd.f32 0.0, %v8732
  %v8734 = vpop.f32.mrb[0].mxu0
  %8735 = vmatprep.mubr.f32.mxu0 0.0
  %8736 = vmatmul.mubr.f32.gmra.mrb[0].mxu0 %v8610
  %v8737 = vpop.f32.mrb[0].mxu0
  %v8738 = vadd.f32 0.0, %v8737
  %v8739 = vpop.f32.mrb[0].mxu0
  %8740 = vmatprep.mubr.f32.mxu0 0.0
  %8741 = vmatmul.mubr.f32.gmra.mrb[0].mxu0 %v8611
  %v8742 = vpop.f32.mrb[0].mxu0
  %v8743 = vadd.f32 0.0, %v8742
  %v8744 = vpop.f32.mrb[0].mxu0
  %8745 = vmatprep.mubr.f32.mxu0 0.0
  %8746 = vmatmul.mubr.f32.gmra.mrb[0].mxu0 %v8612
  %v8747 = vpop.f32.mrb[0].mxu0
  %v8748 = vadd.f32 0.0, %v8747
  %v8749 = vpop.f32.mrb[0].mxu0
  %8750 = vmatprep.mubr.f32.mxu0 0.0
  %8751 = vmatmul.mubr.f32.gmra.mrb[0].mxu0 %v8613
  %v8752 = vpop.f32.mrb[0].mxu0
  %v8753 = vadd.f32 0.0, %v8752
  %v8754 = vpop.f32.mrb[0].mxu0
  %8755 = vmatprep.mubr.f32.mxu0 0.0
  %8756 = vmatmul.mubr.f32.gmra.mrb[0].mxu0 %v8614
  %v8757 = vpop.f32.mrb[0].mxu0
  %v8758 = vadd.f32 0.0, %v8757
  %v8759 = vpop.f32.mrb[0].mxu0
  %8760 = vmatprep.mubr.f32.mxu0 0.0
  %8761 = vmatmul.mubr.f32.gmra.mrb[0].mxu0 %v8615
  %v8762 = vpop.f32.mrb[0].mxu0
  %v8763 = vadd.f32 0.0, %v8762
  %v8764 = vpop.f32.mrb[0].mxu0
  %8765 = vmatprep.mubr.f32.mxu0 0.0
  %8766 = vmatmul.mubr.f32.gmra.mrb[0].mxu0 %v8616
  %v8767 = vpop.f32.mrb[0].mxu0
  %v8768 = vadd.f32 0.0, %v8767
  %v8769 = vpop.f32.mrb[0].mxu0
  %8770 = vmatprep.mubr.f32.mxu0 0.0
  %8771 = vmatmul.mubr.f32.gmra.mrb[0].mxu0 %v8617
  %v8772 = vpop.f32.mrb[0].mxu0
  %v8773 = vadd.f32 0.0, %v8772
  %v8774 = vpop.f32.mrb[0].mxu0
  %8775 = vmatprep.mubr.f32.mxu0 0.0
  %8776 = vmatmul.mubr.f32.gmra.mrb[0].mxu0 %v8618
  %v8777 = vpop.f32.mrb[0].mxu0
  %v8778 = vadd.f32 0.0, %v8777
  %v8779 = vpop.f32.mrb[0].mxu0
  %8780 = vdwg.mxu0
  %8781 = vmatprep.subr.mxu0 0.0
  %8782 = vmatpush1.msra.mxu0 %v8703
  %8783 = vmatprep.subr.mxu0 0.0
  %8784 = vmatpush1.msra.mxu0 %v8708
  %8785 = vmatprep.subr.mxu0 0.0
  %8786 = vmatpush1.msra.mxu0 %v8713
  %8787 = vmatprep.subr.mxu0 0.0
  %8788 = vmatpush1.msra.mxu0 %v8718
  %8789 = vmatprep.subr.mxu0 0.0
  %8790 = vmatpush1.msra.mxu0 %v8723
  %8791 = vmatprep.subr.mxu0 0.0
  %8792 = vmatpush1.msra.mxu0 %v8728
  %8793 = vmatprep.subr.mxu0 0.0
  %8794 = vmatpush1.msra.mxu0 %v8733
  %8795 = vmatprep.subr.mxu0 0.0
  %8796 = vmatpush1.msra.mxu0 %v8738
  %8797 = vmatprep.subr.mxu0 0.0
  %8798 = vmatpush1.msra.mxu0 %v8743
  %8799 = vmatprep.subr.mxu0 0.0
  %8800 = vmatpush1.msra.mxu0 %v8748
  %8801 = vmatprep.subr.mxu0 0.0
  %8802 = vmatpush1.msra.mxu0 %v8753
  %8803 = vmatprep.subr.mxu0 0.0
  %8804 = vmatpush1.msra.mxu0 %v8758
  %8805 = vmatprep.subr.mxu0 0.0
  %8806 = vmatpush1.msra.mxu0 %v8763
  %8807 = vmatprep.subr.mxu0 0.0
  %8808 = vmatpush1.msra.mxu0 %v8768
  %8809 = vmatprep.subr.mxu0 0.0
  %8810 = vmatpush1.msra.mxu0 %v8773
  %8811 = vmatprep.subr.mxu0 0.0
  %8812 = vmatpush1.msra.mxu0 %v8778
  %8813 = vmatprep.subr.mxu0 0.0
  %8814 = vmatpush1.msra.mxu0 0.0
  %8815 = vmatprep.subr.mxu0 0.0
  %8816 = vmatpush1.msra.mxu0 0.0
  %8817 = vmatprep.subr.mxu0 0.0
  %8818 = vmatpush1.msra.mxu0 0.0
  %8819 = vmatprep.subr.mxu0 0.0
  %8820 = vmatpush1.msra.mxu0 0.0
  %8821 = vmatprep.subr.mxu0 0.0
  %8822 = vmatpush1.msra.mxu0 0.0
  %8823 = vmatprep.subr.mxu0 0.0
  %8824 = vmatpush1.msra.mxu0 0.0
  %8825 = vmatprep.subr.mxu0 0.0
  %8826 = vmatpush1.msra.mxu0 0.0
  %8827 = vmatprep.subr.mxu0 0.0
  %8828 = vmatpush1.msra.mxu0 0.0
  %8829 = vmatprep.subr.mxu0 0.0
  %8830 = vmatpush1.msra.mxu0 0.0
  %8831 = vmatprep.subr.mxu0 0.0
  %8832 = vmatpush1.msra.mxu0 0.0
  %8833 = vmatprep.subr.mxu0 0.0
  %8834 = vmatpush1.msra.mxu0 0.0
  %8835 = vmatprep.subr.mxu0 0.0
  %8836 = vmatpush1.msra.mxu0 0.0
  %8837 = vmatprep.subr.mxu0 0.0
  %8838 = vmatpush1.msra.mxu0 0.0
  %8839 = vmatprep.subr.mxu0 0.0
  %8840 = vmatpush1.msra.mxu0 0.0
  %8841 = vmatprep.subr.mxu0 0.0
  %8842 = vmatpush1.msra.mxu0 0.0
  %8843 = vmatprep.subr.mxu0 0.0
  %8844 = vmatpush1.msra.mxu0 0.0
  %8845 = vmatprep.mubr.f32.mxu0 0.0
  %8846 = vmatmul.mubr.f32.gmra.mrb[0].mxu0 %v26
  %v8847 = vpop.f32.mrb[0].mxu0
  %v8848 = vadd.f32 %v7421, %v8847
  %v8849 = vpop.f32.mrb[0].mxu0
  %8850 = vmatprep.mubr.f32.mxu0 0.0
  %8851 = vmatmul.mubr.f32.gmra.mrb[0].mxu0 %v27
  %v8852 = vpop.f32.mrb[0].mxu0
  %v8853 = vadd.f32 %v7427, %v8852
  %v8854 = vpop.f32.mrb[0].mxu0
  %8855 = vmatprep.mubr.f32.mxu0 0.0
  %8856 = vmatmul.mubr.f32.gmra.mrb[0].mxu0 %v28
  %v8857 = vpop.f32.mrb[0].mxu0
  %v8858 = vadd.f32 %v7433, %v8857
  %v8859 = vpop.f32.mrb[0].mxu0
  %8860 = vmatprep.mubr.f32.mxu0 0.0
  %8861 = vmatmul.mubr.f32.gmra.mrb[0].mxu0 %v29
  %v8862 = vpop.f32.mrb[0].mxu0
  %v8863 = vadd.f32 %v7439, %v8862
  %v8864 = vpop.f32.mrb[0].mxu0
  %8865 = vmatprep.mubr.f32.mxu0 0.0
  %8866 = vmatmul.mubr.f32.gmra.mrb[0].mxu0 %v30
  %v8867 = vpop.f32.mrb[0].mxu0
  %v8868 = vadd.f32 %v7445, %v8867
  %v8869 = vpop.f32.mrb[0].mxu0
  %8870 = vmatprep.mubr.f32.mxu0 0.0
  %8871 = vmatmul.mubr.f32.gmra.mrb[0].mxu0 %v31
  %v8872 = vpop.f32.mrb[0].mxu0
  %v8873 = vadd.f32 %v7451, %v8872
  %v8874 = vpop.f32.mrb[0].mxu0
  %8875 = vmatprep.mubr.f32.mxu0 0.0
  %8876 = vmatmul.mubr.f32.gmra.mrb[0].mxu0 %v32
  %v8877 = vpop.f32.mrb[0].mxu0
  %v8878 = vadd.f32 %v7457, %v8877
  %v8879 = vpop.f32.mrb[0].mxu0
  %8880 = vmatprep.mubr.f32.mxu0 0.0
  %8881 = vmatmul.mubr.f32.gmra.mrb[0].mxu0 %v33
  %v8882 = vpop.f32.mrb[0].mxu0
  %v8883 = vadd.f32 %v7463, %v8882
  %v8884 = vpop.f32.mrb[0].mxu0
  %8885 = vmatprep.mubr.f32.mxu0 0.0
  %8886 = vmatmul.mubr.f32.gmra.mrb[0].mxu0 %v34
  %v8887 = vpop.f32.mrb[0].mxu0
  %v8888 = vadd.f32 %v7469, %v8887
  %v8889 = vpop.f32.mrb[0].mxu0
  %8890 = vmatprep.mubr.f32.mxu0 0.0
  %8891 = vmatmul.mubr.f32.gmra.mrb[0].mxu0 %v35
  %v8892 = vpop.f32.mrb[0].mxu0
  %v8893 = vadd.f32 %v7475, %v8892
  %v8894 = vpop.f32.mrb[0].mxu0
  %8895 = vmatprep.mubr.f32.mxu0 0.0
  %8896 = vmatmul.mubr.f32.gmra.mrb[0].mxu0 %v36
  %v8897 = vpop.f32.mrb[0].mxu0
  %v8898 = vadd.f32 %v7481, %v8897
  %v8899 = vpop.f32.mrb[0].mxu0
  %8900 = vmatprep.mubr.f32.mxu0 0.0
  %8901 = vmatmul.mubr.f32.gmra.mrb[0].mxu0 %v37
  %v8902 = vpop.f32.mrb[0].mxu0
  %v8903 = vadd.f32 %v7487, %v8902
  %v8904 = vpop.f32.mrb[0].mxu0
  %8905 = vmatprep.mubr.f32.mxu0 0.0
  %8906 = vmatmul.mubr.f32.gmra.mrb[0].mxu0 %v38
  %v8907 = vpop.f32.mrb[0].mxu0
  %v8908 = vadd.f32 %v7493, %v8907
  %v8909 = vpop.f32.mrb[0].mxu0
  %8910 = vmatprep.mubr.f32.mxu0 0.0
  %8911 = vmatmul.mubr.f32.gmra.mrb[0].mxu0 %v39
  %v8912 = vpop.f32.mrb[0].mxu0
  %v8913 = vadd.f32 %v7499, %v8912
  %v8914 = vpop.f32.mrb[0].mxu0
  %8915 = vmatprep.mubr.f32.mxu0 0.0
  %8916 = vmatmul.mubr.f32.gmra.mrb[0].mxu0 %v40
  %v8917 = vpop.f32.mrb[0].mxu0
  %v8918 = vadd.f32 %v7505, %v8917
  %v8919 = vpop.f32.mrb[0].mxu0
  %8920 = vmatprep.mubr.f32.mxu0 0.0
  %8921 = vmatmul.mubr.f32.gmra.mrb[0].mxu0 %v41
  %v8922 = vpop.f32.mrb[0].mxu0
  %v8923 = vadd.f32 %v7511, %v8922
  %v8924 = vpop.f32.mrb[0].mxu0
  %8925 = vdwg.mxu0
  %v8926 = vmax.f32 %v8848, 0.0
  %v8927 = vmax.f32 %v8853, 0.0
  %v8928 = vmax.f32 %v8858, 0.0
  %v8929 = vmax.f32 %v8863, 0.0
  %v8930 = vmax.f32 %v8868, 0.0
  %v8931 = vmax.f32 %v8873, 0.0
  %v8932 = vmax.f32 %v8878, 0.0
  %v8933 = vmax.f32 %v8883, 0.0
  %v8934 = vmax.f32 %v8888, 0.0
  %v8935 = vmax.f32 %v8893, 0.0
  %v8936 = vmax.f32 %v8898, 0.0
  %v8937 = vmax.f32 %v8903, 0.0
  %v8938 = vmax.f32 %v8908, 0.0
  %v8939 = vmax.f32 %v8913, 0.0
  %v8940 = vmax.f32 %v8918, 0.0
  %v8941 = vmax.f32 %v8923, 0.0
  %s8942 = scalar_lea.vmem %s3, 1920
  %v8943 = vld [vmem:[%s8942] sm:$0xff]
  %v8944 = vld [vmem:[%s8942 + $0x8] sm:$0xff]
  %v8945 = vld [vmem:[%s8942 + $0x10] sm:$0xff]
  %v8946 = vld [vmem:[%s8942 + $0x18] sm:$0xff]
  %v8947 = vld [vmem:[%s8942 + $0x20] sm:$0xff]
  %v8948 = vld [vmem:[%s8942 + $0x28] sm:$0xff]
  %v8949 = vld [vmem:[%s8942 + $0x30] sm:$0xff]
  %v8950 = vld [vmem:[%s8942 + $0x38] sm:$0xff]
  %v8951 = vld [vmem:[%s8942 + $0x40] sm:$0xff]
  %v8952 = vld [vmem:[%s8942 + $0x48] sm:$0xff]
  %v8953 = vld [vmem:[%s8942 + $0x50] sm:$0xff]
  %v8954 = vld [vmem:[%s8942 + $0x58] sm:$0xff]
  %v8955 = vld [vmem:[%s8942 + $0x60] sm:$0xff]
  %v8956 = vld [vmem:[%s8942 + $0x68] sm:$0xff]
  %v8957 = vld [vmem:[%s8942 + $0x70] sm:$0xff]
  %v8958 = vld [vmem:[%s8942 + $0x78] sm:$0xff]
  %8959 = vmatprep.subr.mxu0 0.0
  %8960 = vmatpush1.msra.mxu0 %v8943
  %8961 = vmatprep.subr.mxu0 0.0
  %8962 = vmatpush1.msra.mxu0 %v8944
  %8963 = vmatprep.subr.mxu0 0.0
  %8964 = vmatpush1.msra.mxu0 %v8945
  %8965 = vmatprep.subr.mxu0 0.0
  %8966 = vmatpush1.msra.mxu0 %v8946
  %8967 = vmatprep.subr.mxu0 0.0
  %8968 = vmatpush1.msra.mxu0 %v8947
  %8969 = vmatprep.subr.mxu0 0.0
  %8970 = vmatpush1.msra.mxu0 %v8948
  %8971 = vmatprep.subr.mxu0 0.0
  %8972 = vmatpush1.msra.mxu0 %v8949
  %8973 = vmatprep.subr.mxu0 0.0
  %8974 = vmatpush1.msra.mxu0 %v8950
  %8975 = vmatprep.subr.mxu0 0.0
  %8976 = vmatpush1.msra.mxu0 %v8951
  %8977 = vmatprep.subr.mxu0 0.0
  %8978 = vmatpush1.msra.mxu0 %v8952
  %8979 = vmatprep.subr.mxu0 0.0
  %8980 = vmatpush1.msra.mxu0 %v8953
  %8981 = vmatprep.subr.mxu0 0.0
  %8982 = vmatpush1.msra.mxu0 %v8954
  %8983 = vmatprep.subr.mxu0 0.0
  %8984 = vmatpush1.msra.mxu0 %v8955
  %8985 = vmatprep.subr.mxu0 0.0
  %8986 = vmatpush1.msra.mxu0 %v8956
  %8987 = vmatprep.subr.mxu0 0.0
  %8988 = vmatpush1.msra.mxu0 %v8957
  %8989 = vmatprep.subr.mxu0 0.0
  %8990 = vmatpush1.msra.mxu0 %v8958
  %8991 = vmatprep.subr.mxu0 0.0
  %8992 = vmatpush1.msra.mxu0 0.0
  %8993 = vmatprep.subr.mxu0 0.0
  %8994 = vmatpush1.msra.mxu0 0.0
  %8995 = vmatprep.subr.mxu0 0.0
  %8996 = vmatpush1.msra.mxu0 0.0
  %8997 = vmatprep.subr.mxu0 0.0
  %8998 = vmatpush1.msra.mxu0 0.0
  %8999 = vmatprep.subr.mxu0 0.0
  %9000 = vmatpush1.msra.mxu0 0.0
  %9001 = vmatprep.subr.mxu0 0.0
  %9002 = vmatpush1.msra.mxu0 0.0
  %9003 = vmatprep.subr.mxu0 0.0
  %9004 = vmatpush1.msra.mxu0 0.0
  %9005 = vmatprep.subr.mxu0 0.0
  %9006 = vmatpush1.msra.mxu0 0.0
  %9007 = vmatprep.subr.mxu0 0.0
  %9008 = vmatpush1.msra.mxu0 0.0
  %9009 = vmatprep.subr.mxu0 0.0
  %9010 = vmatpush1.msra.mxu0 0.0
  %9011 = vmatprep.subr.mxu0 0.0
  %9012 = vmatpush1.msra.mxu0 0.0
  %9013 = vmatprep.subr.mxu0 0.0
  %9014 = vmatpush1.msra.mxu0 0.0
  %9015 = vmatprep.subr.mxu0 0.0
  %9016 = vmatpush1.msra.mxu0 0.0
  %9017 = vmatprep.subr.mxu0 0.0
  %9018 = vmatpush1.msra.mxu0 0.0
  %9019 = vmatprep.subr.mxu0 0.0
  %9020 = vmatpush1.msra.mxu0 0.0
  %9021 = vmatprep.subr.mxu0 0.0
  %9022 = vmatpush1.msra.mxu0 0.0
  %9023 = vmatprep.mubr.f32.mxu0 0.0
  %9024 = vmatmul.mubr.f32.gmra.mrb[0].mxu0 %v8926
  %v9025 = vpop.f32.mrb[0].mxu0
  %v9026 = vadd.f32 0.0, %v9025
  %v9027 = vpop.f32.mrb[0].mxu0
  %9028 = vmatprep.mubr.f32.mxu0 0.0
  %9029 = vmatmul.mubr.f32.gmra.mrb[0].mxu0 %v8927
  %v9030 = vpop.f32.mrb[0].mxu0
  %v9031 = vadd.f32 0.0, %v9030
  %v9032 = vpop.f32.mrb[0].mxu0
  %9033 = vmatprep.mubr.f32.mxu0 0.0
  %9034 = vmatmul.mubr.f32.gmra.mrb[0].mxu0 %v8928
  %v9035 = vpop.f32.mrb[0].mxu0
  %v9036 = vadd.f32 0.0, %v9035
  %v9037 = vpop.f32.mrb[0].mxu0
  %9038 = vmatprep.mubr.f32.mxu0 0.0
  %9039 = vmatmul.mubr.f32.gmra.mrb[0].mxu0 %v8929
  %v9040 = vpop.f32.mrb[0].mxu0
  %v9041 = vadd.f32 0.0, %v9040
  %v9042 = vpop.f32.mrb[0].mxu0
  %9043 = vmatprep.mubr.f32.mxu0 0.0
  %9044 = vmatmul.mubr.f32.gmra.mrb[0].mxu0 %v8930
  %v9045 = vpop.f32.mrb[0].mxu0
  %v9046 = vadd.f32 0.0, %v9045
  %v9047 = vpop.f32.mrb[0].mxu0
  %9048 = vmatprep.mubr.f32.mxu0 0.0
  %9049 = vmatmul.mubr.f32.gmra.mrb[0].mxu0 %v8931
  %v9050 = vpop.f32.mrb[0].mxu0
  %v9051 = vadd.f32 0.0, %v9050
  %v9052 = vpop.f32.mrb[0].mxu0
  %9053 = vmatprep.mubr.f32.mxu0 0.0
  %9054 = vmatmul.mubr.f32.gmra.mrb[0].mxu0 %v8932
  %v9055 = vpop.f32.mrb[0].mxu0
  %v9056 = vadd.f32 0.0, %v9055
  %v9057 = vpop.f32.mrb[0].mxu0
  %9058 = vmatprep.mubr.f32.mxu0 0.0
  %9059 = vmatmul.mubr.f32.gmra.mrb[0].mxu0 %v8933
  %v9060 = vpop.f32.mrb[0].mxu0
  %v9061 = vadd.f32 0.0, %v9060
  %v9062 = vpop.f32.mrb[0].mxu0
  %9063 = vmatprep.mubr.f32.mxu0 0.0
  %9064 = vmatmul.mubr.f32.gmra.mrb[0].mxu0 %v8934
  %v9065 = vpop.f32.mrb[0].mxu0
  %v9066 = vadd.f32 0.0, %v9065
  %v9067 = vpop.f32.mrb[0].mxu0
  %9068 = vmatprep.mubr.f32.mxu0 0.0
  %9069 = vmatmul.mubr.f32.gmra.mrb[0].mxu0 %v8935
  %v9070 = vpop.f32.mrb[0].mxu0
  %v9071 = vadd.f32 0.0, %v9070
  %v9072 = vpop.f32.mrb[0].mxu0
  %9073 = vmatprep.mubr.f32.mxu0 0.0
  %9074 = vmatmul.mubr.f32.gmra.mrb[0].mxu0 %v8936
  %v9075 = vpop.f32.mrb[0].mxu0
  %v9076 = vadd.f32 0.0, %v9075
  %v9077 = vpop.f32.mrb[0].mxu0
  %9078 = vmatprep.mubr.f32.mxu0 0.0
  %9079 = vmatmul.mubr.f32.gmra.mrb[0].mxu0 %v8937
  %v9080 = vpop.f32.mrb[0].mxu0
  %v9081 = vadd.f32 0.0, %v9080
  %v9082 = vpop.f32.mrb[0].mxu0
  %9083 = vmatprep.mubr.f32.mxu0 0.0
  %9084 = vmatmul.mubr.f32.gmra.mrb[0].mxu0 %v8938
  %v9085 = vpop.f32.mrb[0].mxu0
  %v9086 = vadd.f32 0.0, %v9085
  %v9087 = vpop.f32.mrb[0].mxu0
  %9088 = vmatprep.mubr.f32.mxu0 0.0
  %9089 = vmatmul.mubr.f32.gmra.mrb[0].mxu0 %v8939
  %v9090 = vpop.f32.mrb[0].mxu0
  %v9091 = vadd.f32 0.0, %v9090
  %v9092 = vpop.f32.mrb[0].mxu0
  %9093 = vmatprep.mubr.f32.mxu0 0.0
  %9094 = vmatmul.mubr.f32.gmra.mrb[0].mxu0 %v8940
  %v9095 = vpop.f32.mrb[0].mxu0
  %v9096 = vadd.f32 0.0, %v9095
  %v9097 = vpop.f32.mrb[0].mxu0
  %9098 = vmatprep.mubr.f32.mxu0 0.0
  %9099 = vmatmul.mubr.f32.gmra.mrb[0].mxu0 %v8941
  %v9100 = vpop.f32.mrb[0].mxu0
  %v9101 = vadd.f32 0.0, %v9100
  %v9102 = vpop.f32.mrb[0].mxu0
  %9103 = vdwg.mxu0
  %9104 = vmatprep.subr.mxu0 0.0
  %9105 = vmatpush1.msra.mxu0 %v9026
  %9106 = vmatprep.subr.mxu0 0.0
  %9107 = vmatpush1.msra.mxu0 %v9031
  %9108 = vmatprep.subr.mxu0 0.0
  %9109 = vmatpush1.msra.mxu0 %v9036
  %9110 = vmatprep.subr.mxu0 0.0
  %9111 = vmatpush1.msra.mxu0 %v9041
  %9112 = vmatprep.subr.mxu0 0.0
  %9113 = vmatpush1.msra.mxu0 %v9046
  %9114 = vmatprep.subr.mxu0 0.0
  %9115 = vmatpush1.msra.mxu0 %v9051
  %9116 = vmatprep.subr.mxu0 0.0
  %9117 = vmatpush1.msra.mxu0 %v9056
  %9118 = vmatprep.subr.mxu0 0.0
  %9119 = vmatpush1.msra.mxu0 %v9061
  %9120 = vmatprep.subr.mxu0 0.0
  %9121 = vmatpush1.msra.mxu0 %v9066
  %9122 = vmatprep.subr.mxu0 0.0
  %9123 = vmatpush1.msra.mxu0 %v9071
  %9124 = vmatprep.subr.mxu0 0.0
  %9125 = vmatpush1.msra.mxu0 %v9076
  %9126 = vmatprep.subr.mxu0 0.0
  %9127 = vmatpush1.msra.mxu0 %v9081
  %9128 = vmatprep.subr.mxu0 0.0
  %9129 = vmatpush1.msra.mxu0 %v9086
  %9130 = vmatprep.subr.mxu0 0.0
  %9131 = vmatpush1.msra.mxu0 %v9091
  %9132 = vmatprep.subr.mxu0 0.0
  %9133 = vmatpush1.msra.mxu0 %v9096
  %9134 = vmatprep.subr.mxu0 0.0
  %9135 = vmatpush1.msra.mxu0 %v9101
  %9136 = vmatprep.subr.mxu0 0.0
  %9137 = vmatpush1.msra.mxu0 0.0
  %9138 = vmatprep.subr.mxu0 0.0
  %9139 = vmatpush1.msra.mxu0 0.0
  %9140 = vmatprep.subr.mxu0 0.0
  %9141 = vmatpush1.msra.mxu0 0.0
  %9142 = vmatprep.subr.mxu0 0.0
  %9143 = vmatpush1.msra.mxu0 0.0
  %9144 = vmatprep.subr.mxu0 0.0
  %9145 = vmatpush1.msra.mxu0 0.0
  %9146 = vmatprep.subr.mxu0 0.0
  %9147 = vmatpush1.msra.mxu0 0.0
  %9148 = vmatprep.subr.mxu0 0.0
  %9149 = vmatpush1.msra.mxu0 0.0
  %9150 = vmatprep.subr.mxu0 0.0
  %9151 = vmatpush1.msra.mxu0 0.0
  %9152 = vmatprep.subr.mxu0 0.0
  %9153 = vmatpush1.msra.mxu0 0.0
  %9154 = vmatprep.subr.mxu0 0.0
  %9155 = vmatpush1.msra.mxu0 0.0
  %9156 = vmatprep.subr.mxu0 0.0
  %9157 = vmatpush1.msra.mxu0 0.0
  %9158 = vmatprep.subr.mxu0 0.0
  %9159 = vmatpush1.msra.mxu0 0.0
  %9160 = vmatprep.subr.mxu0 0.0
  %9161 = vmatpush1.msra.mxu0 0.0
  %9162 = vmatprep.subr.mxu0 0.0
  %9163 = vmatpush1.msra.mxu0 0.0
  %9164 = vmatprep.subr.mxu0 0.0
  %9165 = vmatpush1.msra.mxu0 0.0
  %9166 = vmatprep.subr.mxu0 0.0
  %9167 = vmatpush1.msra.mxu0 0.0
  %9168 = vmatprep.mubr.f32.mxu0 0.0
  %9169 = vmatmul.mubr.f32.gmra.mrb[0].mxu0 %v26
  %v9170 = vpop.f32.mrb[0].mxu0
  %v9171 = vadd.f32 %v7580, %v9170
  %v9172 = vpop.f32.mrb[0].mxu0
  %9173 = vmatprep.mubr.f32.mxu0 0.0
  %9174 = vmatmul.mubr.f32.gmra.mrb[0].mxu0 %v27
  %v9175 = vpop.f32.mrb[0].mxu0
  %v9176 = vadd.f32 %v7585, %v9175
  %v9177 = vpop.f32.mrb[0].mxu0
  %9178 = vmatprep.mubr.f32.mxu0 0.0
  %9179 = vmatmul.mubr.f32.gmra.mrb[0].mxu0 %v28
  %v9180 = vpop.f32.mrb[0].mxu0
  %v9181 = vadd.f32 %v7590, %v9180
  %v9182 = vpop.f32.mrb[0].mxu0
  %9183 = vmatprep.mubr.f32.mxu0 0.0
  %9184 = vmatmul.mubr.f32.gmra.mrb[0].mxu0 %v29
  %v9185 = vpop.f32.mrb[0].mxu0
  %v9186 = vadd.f32 %v7595, %v9185
  %v9187 = vpop.f32.mrb[0].mxu0
  %9188 = vmatprep.mubr.f32.mxu0 0.0
  %9189 = vmatmul.mubr.f32.gmra.mrb[0].mxu0 %v30
  %v9190 = vpop.f32.mrb[0].mxu0
  %v9191 = vadd.f32 %v7600, %v9190
  %v9192 = vpop.f32.mrb[0].mxu0
  %9193 = vmatprep.mubr.f32.mxu0 0.0
  %9194 = vmatmul.mubr.f32.gmra.mrb[0].mxu0 %v31
  %v9195 = vpop.f32.mrb[0].mxu0
  %v9196 = vadd.f32 %v7605, %v9195
  %v9197 = vpop.f32.mrb[0].mxu0
  %9198 = vmatprep.mubr.f32.mxu0 0.0
  %9199 = vmatmul.mubr.f32.gmra.mrb[0].mxu0 %v32
  %v9200 = vpop.f32.mrb[0].mxu0
  %v9201 = vadd.f32 %v7610, %v9200
  %v9202 = vpop.f32.mrb[0].mxu0
  %9203 = vmatprep.mubr.f32.mxu0 0.0
  %9204 = vmatmul.mubr.f32.gmra.mrb[0].mxu0 %v33
  %v9205 = vpop.f32.mrb[0].mxu0
  %v9206 = vadd.f32 %v7615, %v9205
  %v9207 = vpop.f32.mrb[0].mxu0
  %9208 = vmatprep.mubr.f32.mxu0 0.0
  %9209 = vmatmul.mubr.f32.gmra.mrb[0].mxu0 %v34
  %v9210 = vpop.f32.mrb[0].mxu0
  %v9211 = vadd.f32 %v7620, %v9210
  %v9212 = vpop.f32.mrb[0].mxu0
  %9213 = vmatprep.mubr.f32.mxu0 0.0
  %9214 = vmatmul.mubr.f32.gmra.mrb[0].mxu0 %v35
  %v9215 = vpop.f32.mrb[0].mxu0
  %v9216 = vadd.f32 %v7625, %v9215
  %v9217 = vpop.f32.mrb[0].mxu0
  %9218 = vmatprep.mubr.f32.mxu0 0.0
  %9219 = vmatmul.mubr.f32.gmra.mrb[0].mxu0 %v36
  %v9220 = vpop.f32.mrb[0].mxu0
  %v9221 = vadd.f32 %v7630, %v9220
  %v9222 = vpop.f32.mrb[0].mxu0
  %9223 = vmatprep.mubr.f32.mxu0 0.0
  %9224 = vmatmul.mubr.f32.gmra.mrb[0].mxu0 %v37
  %v9225 = vpop.f32.mrb[0].mxu0
  %v9226 = vadd.f32 %v7635, %v9225
  %v9227 = vpop.f32.mrb[0].mxu0
  %9228 = vmatprep.mubr.f32.mxu0 0.0
  %9229 = vmatmul.mubr.f32.gmra.mrb[0].mxu0 %v38
  %v9230 = vpop.f32.mrb[0].mxu0
  %v9231 = vadd.f32 %v7640, %v9230
  %v9232 = vpop.f32.mrb[0].mxu0
  %9233 = vmatprep.mubr.f32.mxu0 0.0
  %9234 = vmatmul.mubr.f32.gmra.mrb[0].mxu0 %v39
  %v9235 = vpop.f32.mrb[0].mxu0
  %v9236 = vadd.f32 %v7645, %v9235
  %v9237 = vpop.f32.mrb[0].mxu0
  %9238 = vmatprep.mubr.f32.mxu0 0.0
  %9239 = vmatmul.mubr.f32.gmra.mrb[0].mxu0 %v40
  %v9240 = vpop.f32.mrb[0].mxu0
  %v9241 = vadd.f32 %v7650, %v9240
  %v9242 = vpop.f32.mrb[0].mxu0
  %9243 = vmatprep.mubr.f32.mxu0 0.0
  %9244 = vmatmul.mubr.f32.gmra.mrb[0].mxu0 %v41
  %v9245 = vpop.f32.mrb[0].mxu0
  %v9246 = vadd.f32 %v7655, %v9245
  %v9247 = vpop.f32.mrb[0].mxu0
  %9248 = vdwg.mxu0
  %v9249 = vmax.f32 %v9171, 0.0
  %v9250 = vmax.f32 %v9176, 0.0
  %v9251 = vmax.f32 %v9181, 0.0
  %v9252 = vmax.f32 %v9186, 0.0
  %v9253 = vmax.f32 %v9191, 0.0
  %v9254 = vmax.f32 %v9196, 0.0
  %v9255 = vmax.f32 %v9201, 0.0
  %v9256 = vmax.f32 %v9206, 0.0
  %v9257 = vmax.f32 %v9211, 0.0
  %v9258 = vmax.f32 %v9216, 0.0
  %v9259 = vmax.f32 %v9221, 0.0
  %v9260 = vmax.f32 %v9226, 0.0
  %v9261 = vmax.f32 %v9231, 0.0
  %v9262 = vmax.f32 %v9236, 0.0
  %v9263 = vmax.f32 %v9241, 0.0
  %v9264 = vmax.f32 %v9246, 0.0
  %s9265 = scalar_lea.vmem %s5, 384
  %v9266 = vld [vmem:[%s9265] sm:$0xff]
  %v9267 = vld [vmem:[%s9265 + $0x8] sm:$0xff]
  %v9268 = vld [vmem:[%s9265 + $0x10] sm:$0xff]
  %v9269 = vld [vmem:[%s9265 + $0x18] sm:$0xff]
  %v9270 = vld [vmem:[%s9265 + $0x20] sm:$0xff]
  %v9271 = vld [vmem:[%s9265 + $0x28] sm:$0xff]
  %v9272 = vld [vmem:[%s9265 + $0x30] sm:$0xff]
  %v9273 = vld [vmem:[%s9265 + $0x38] sm:$0xff]
  %v9274 = vld [vmem:[%s9265 + $0x40] sm:$0xff]
  %v9275 = vld [vmem:[%s9265 + $0x48] sm:$0xff]
  %v9276 = vld [vmem:[%s9265 + $0x50] sm:$0xff]
  %v9277 = vld [vmem:[%s9265 + $0x58] sm:$0xff]
  %v9278 = vld [vmem:[%s9265 + $0x60] sm:$0xff]
  %v9279 = vld [vmem:[%s9265 + $0x68] sm:$0xff]
  %v9280 = vld [vmem:[%s9265 + $0x70] sm:$0xff]
  %v9281 = vld [vmem:[%s9265 + $0x78] sm:$0xff]
  %s9282 = scalar_lea.vmem %s6, 3
  %v9283 = vld [vmem:[%s9282] sm:$0x1]
  %v9285 = vlaneseq
  %v9286 = vshrl.u32 %v9285, 7
  %v9287 = vsub.s32 0, %v9286
  %v9288 = vrot.slane %v9283, %v9287
  %9290 = vmatprep.subr.mxu0 0.0
  %9291 = vmatpush1.msra.mxu0 %v9266
  %9292 = vmatprep.subr.mxu0 0.0
  %9293 = vmatpush1.msra.mxu0 %v9267
  %9294 = vmatprep.subr.mxu0 0.0
  %9295 = vmatpush1.msra.mxu0 %v9268
  %9296 = vmatprep.subr.mxu0 0.0
  %9297 = vmatpush1.msra.mxu0 %v9269
  %9298 = vmatprep.subr.mxu0 0.0
  %9299 = vmatpush1.msra.mxu0 %v9270
  %9300 = vmatprep.subr.mxu0 0.0
  %9301 = vmatpush1.msra.mxu0 %v9271
  %9302 = vmatprep.subr.mxu0 0.0
  %9303 = vmatpush1.msra.mxu0 %v9272
  %9304 = vmatprep.subr.mxu0 0.0
  %9305 = vmatpush1.msra.mxu0 %v9273
  %9306 = vmatprep.subr.mxu0 0.0
  %9307 = vmatpush1.msra.mxu0 %v9274
  %9308 = vmatprep.subr.mxu0 0.0
  %9309 = vmatpush1.msra.mxu0 %v9275
  %9310 = vmatprep.subr.mxu0 0.0
  %9311 = vmatpush1.msra.mxu0 %v9276
  %9312 = vmatprep.subr.mxu0 0.0
  %9313 = vmatpush1.msra.mxu0 %v9277
  %9314 = vmatprep.subr.mxu0 0.0
  %9315 = vmatpush1.msra.mxu0 %v9278
  %9316 = vmatprep.subr.mxu0 0.0
  %9317 = vmatpush1.msra.mxu0 %v9279
  %9318 = vmatprep.subr.mxu0 0.0
  %9319 = vmatpush1.msra.mxu0 %v9280
  %9320 = vmatprep.subr.mxu0 0.0
  %9321 = vmatpush1.msra.mxu0 %v9281
  %9322 = vmatprep.subr.mxu0 0.0
  %9323 = vmatpush1.msra.mxu0 0.0
  %9324 = vmatprep.subr.mxu0 0.0
  %9325 = vmatpush1.msra.mxu0 0.0
  %9326 = vmatprep.subr.mxu0 0.0
  %9327 = vmatpush1.msra.mxu0 0.0
  %9328 = vmatprep.subr.mxu0 0.0
  %9329 = vmatpush1.msra.mxu0 0.0
  %9330 = vmatprep.subr.mxu0 0.0
  %9331 = vmatpush1.msra.mxu0 0.0
  %9332 = vmatprep.subr.mxu0 0.0
  %9333 = vmatpush1.msra.mxu0 0.0
  %9334 = vmatprep.subr.mxu0 0.0
  %9335 = vmatpush1.msra.mxu0 0.0
  %9336 = vmatprep.subr.mxu0 0.0
  %9337 = vmatpush1.msra.mxu0 0.0
  %9338 = vmatprep.subr.mxu0 0.0
  %9339 = vmatpush1.msra.mxu0 0.0
  %9340 = vmatprep.subr.mxu0 0.0
  %9341 = vmatpush1.msra.mxu0 0.0
  %9342 = vmatprep.subr.mxu0 0.0
  %9343 = vmatpush1.msra.mxu0 0.0
  %9344 = vmatprep.subr.mxu0 0.0
  %9345 = vmatpush1.msra.mxu0 0.0
  %9346 = vmatprep.subr.mxu0 0.0
  %9347 = vmatpush1.msra.mxu0 0.0
  %9348 = vmatprep.subr.mxu0 0.0
  %9349 = vmatpush1.msra.mxu0 0.0
  %9350 = vmatprep.subr.mxu0 0.0
  %9351 = vmatpush1.msra.mxu0 0.0
  %9352 = vmatprep.subr.mxu0 0.0
  %9353 = vmatpush1.msra.mxu0 0.0
  %9354 = vmatprep.mubr.f32.mxu0 0.0
  %9355 = vmatmul.mubr.f32.gmra.mrb[0].mxu0 %v9249
  %v9356 = vpop.f32.mrb[0].mxu0
  %v9357 = vadd.f32 %v9288, %v9356
  %v9358 = vpop.f32.mrb[0].mxu0
  %9359 = vmatprep.mubr.f32.mxu0 0.0
  %9360 = vmatmul.mubr.f32.gmra.mrb[0].mxu0 %v9250
  %v9361 = vpop.f32.mrb[0].mxu0
  %v9362 = vadd.f32 %v9288, %v9361
  %v9363 = vpop.f32.mrb[0].mxu0
  %9364 = vmatprep.mubr.f32.mxu0 0.0
  %9365 = vmatmul.mubr.f32.gmra.mrb[0].mxu0 %v9251
  %v9366 = vpop.f32.mrb[0].mxu0
  %v9367 = vadd.f32 %v9288, %v9366
  %v9368 = vpop.f32.mrb[0].mxu0
  %9369 = vmatprep.mubr.f32.mxu0 0.0
  %9370 = vmatmul.mubr.f32.gmra.mrb[0].mxu0 %v9252
  %v9371 = vpop.f32.mrb[0].mxu0
  %v9372 = vadd.f32 %v9288, %v9371
  %v9373 = vpop.f32.mrb[0].mxu0
  %9374 = vmatprep.mubr.f32.mxu0 0.0
  %9375 = vmatmul.mubr.f32.gmra.mrb[0].mxu0 %v9253
  %v9376 = vpop.f32.mrb[0].mxu0
  %v9377 = vadd.f32 %v9288, %v9376
  %v9378 = vpop.f32.mrb[0].mxu0
  %9379 = vmatprep.mubr.f32.mxu0 0.0
  %9380 = vmatmul.mubr.f32.gmra.mrb[0].mxu0 %v9254
  %v9381 = vpop.f32.mrb[0].mxu0
  %v9382 = vadd.f32 %v9288, %v9381
  %v9383 = vpop.f32.mrb[0].mxu0
  %9384 = vmatprep.mubr.f32.mxu0 0.0
  %9385 = vmatmul.mubr.f32.gmra.mrb[0].mxu0 %v9255
  %v9386 = vpop.f32.mrb[0].mxu0
  %v9387 = vadd.f32 %v9288, %v9386
  %v9388 = vpop.f32.mrb[0].mxu0
  %9389 = vmatprep.mubr.f32.mxu0 0.0
  %9390 = vmatmul.mubr.f32.gmra.mrb[0].mxu0 %v9256
  %v9391 = vpop.f32.mrb[0].mxu0
  %v9392 = vadd.f32 %v9288, %v9391
  %v9393 = vpop.f32.mrb[0].mxu0
  %9394 = vmatprep.mubr.f32.mxu0 0.0
  %9395 = vmatmul.mubr.f32.gmra.mrb[0].mxu0 %v9257
  %v9396 = vpop.f32.mrb[0].mxu0
  %v9397 = vadd.f32 %v9288, %v9396
  %v9398 = vpop.f32.mrb[0].mxu0
  %9399 = vmatprep.mubr.f32.mxu0 0.0
  %9400 = vmatmul.mubr.f32.gmra.mrb[0].mxu0 %v9258
  %v9401 = vpop.f32.mrb[0].mxu0
  %v9402 = vadd.f32 %v9288, %v9401
  %v9403 = vpop.f32.mrb[0].mxu0
  %9404 = vmatprep.mubr.f32.mxu0 0.0
  %9405 = vmatmul.mubr.f32.gmra.mrb[0].mxu0 %v9259
  %v9406 = vpop.f32.mrb[0].mxu0
  %v9407 = vadd.f32 %v9288, %v9406
  %v9408 = vpop.f32.mrb[0].mxu0
  %9409 = vmatprep.mubr.f32.mxu0 0.0
  %9410 = vmatmul.mubr.f32.gmra.mrb[0].mxu0 %v9260
  %v9411 = vpop.f32.mrb[0].mxu0
  %v9412 = vadd.f32 %v9288, %v9411
  %v9413 = vpop.f32.mrb[0].mxu0
  %9414 = vmatprep.mubr.f32.mxu0 0.0
  %9415 = vmatmul.mubr.f32.gmra.mrb[0].mxu0 %v9261
  %v9416 = vpop.f32.mrb[0].mxu0
  %v9417 = vadd.f32 %v9288, %v9416
  %v9418 = vpop.f32.mrb[0].mxu0
  %9419 = vmatprep.mubr.f32.mxu0 0.0
  %9420 = vmatmul.mubr.f32.gmra.mrb[0].mxu0 %v9262
  %v9421 = vpop.f32.mrb[0].mxu0
  %v9422 = vadd.f32 %v9288, %v9421
  %v9423 = vpop.f32.mrb[0].mxu0
  %9424 = vmatprep.mubr.f32.mxu0 0.0
  %9425 = vmatmul.mubr.f32.gmra.mrb[0].mxu0 %v9263
  %v9426 = vpop.f32.mrb[0].mxu0
  %v9427 = vadd.f32 %v9288, %v9426
  %v9428 = vpop.f32.mrb[0].mxu0
  %9429 = vmatprep.mubr.f32.mxu0 0.0
  %9430 = vmatmul.mubr.f32.gmra.mrb[0].mxu0 %v9264
  %v9431 = vpop.f32.mrb[0].mxu0
  %v9432 = vadd.f32 %v9288, %v9431
  %v9433 = vpop.f32.mrb[0].mxu0
  %9434 = vdwg.mxu0
  %v9435 = vmax.f32 %v9357, 0.0
  %v9436 = vmax.f32 %v9362, 0.0
  %v9437 = vmax.f32 %v9367, 0.0
  %v9438 = vmax.f32 %v9372, 0.0
  %v9439 = vmax.f32 %v9377, 0.0
  %v9440 = vmax.f32 %v9382, 0.0
  %v9441 = vmax.f32 %v9387, 0.0
  %v9442 = vmax.f32 %v9392, 0.0
  %v9443 = vmax.f32 %v9397, 0.0
  %v9444 = vmax.f32 %v9402, 0.0
  %v9445 = vmax.f32 %v9407, 0.0
  %v9446 = vmax.f32 %v9412, 0.0
  %v9447 = vmax.f32 %v9417, 0.0
  %v9448 = vmax.f32 %v9422, 0.0
  %v9449 = vmax.f32 %v9427, 0.0
  %v9450 = vmax.f32 %v9432, 0.0
  %9451 = vst.msk [vmem:[%s7] sm:$0xff] %vm83, %v9435
  %9452 = vst.msk [vmem:[%s7 + $0x8] sm:$0xff] %vm83, %v9436
  %9453 = vst.msk [vmem:[%s7 + $0x10] sm:$0xff] %vm83, %v9437
  %9454 = vst.msk [vmem:[%s7 + $0x18] sm:$0xff] %vm83, %v9438
  %9455 = vst.msk [vmem:[%s7 + $0x20] sm:$0xff] %vm83, %v9439
  %9456 = vst.msk [vmem:[%s7 + $0x28] sm:$0xff] %vm83, %v9440
  %9457 = vst.msk [vmem:[%s7 + $0x30] sm:$0xff] %vm83, %v9441
  %9458 = vst.msk [vmem:[%s7 + $0x38] sm:$0xff] %vm83, %v9442
  %9459 = vst.msk [vmem:[%s7 + $0x40] sm:$0xff] %vm83, %v9443
  %9460 = vst.msk [vmem:[%s7 + $0x48] sm:$0xff] %vm83, %v9444
  %9461 = vst.msk [vmem:[%s7 + $0x50] sm:$0xff] %vm83, %v9445
  %9462 = vst.msk [vmem:[%s7 + $0x58] sm:$0xff] %vm83, %v9446
  %9463 = vst.msk [vmem:[%s7 + $0x60] sm:$0xff] %vm83, %v9447
  %9464 = vst.msk [vmem:[%s7 + $0x68] sm:$0xff] %vm83, %v9448
  %9465 = vst.msk [vmem:[%s7 + $0x70] sm:$0xff] %vm83, %v9449
  %9466 = vst.msk [vmem:[%s7 + $0x78] sm:$0xff] %vm83, %v9450
  // Predicated region
  $region30: #{gnn_arma_forward.1} parent=0 // pred_check
    _
  $region31: #{gnn_arma_forward.1} parent=0 // pred_check_branch
    %9468 = sbr.rel (0) target = $region33
  $region32: #{gnn_arma_forward.1} parent=0 // pred_region
    _
  $region33: #{gnn_arma_forward.1} parent=0 // pred_fallthru
    _
  // Predicated region
  $region34: #{gnn_arma_forward.1} parent=0 // pred_check
    _
  $region35: #{gnn_arma_forward.1} parent=0 // pred_check_branch
    %9470 = sbr.rel (0) target = $region37
  $region36: #{gnn_arma_forward.1} parent=0 // pred_region
    _
  $region37: #{gnn_arma_forward.1} parent=0 // pred_fallthru
    _

</llo_original>
